<compile_context>
chip_gen: v5e
topology: v5e:2x2
jax: 0.10.0
libtpu: 0.0.40
codegen_flags: <defaults>
</compile_context>

<pallas_src>
import jax
import jax.numpy as jnp
from jax.experimental import pallas as pl
from jax.experimental.pallas import tpu as pltpu

_EPS = 1e-5  # PyTorch GroupNorm default


# ----------------------------------------------------------------------------
# Kernel 1: 3x3x3 conv ('same', stride 1) + bias + GroupNorm partial statistics
# ----------------------------------------------------------------------------
def _conv3_stats_kernel(x0_ref, x1_ref, x2_ref, w_ref, bias_ref, y_ref, stats_ref):
    # x{0,1,2}_ref: (1, 1, Hp, Wp, Cin)  three depth-shifted planes (kd halo)
    # w_ref:        (27, Cin, Cout)  bf16      bias_ref: (1, Cout) f32
    # y_ref:        (1, 1, H, W, Cout)         stats_ref: (1, 1, 2, 128) f32
    H = y_ref.shape[2]
    W = y_ref.shape[3]
    Cin = x0_ref.shape[-1]
    Cout = y_ref.shape[-1]

    acc = jnp.zeros((H * W, Cout), jnp.float32)
    xrefs = (x0_ref, x1_ref, x2_ref)
    for kd in range(3):                       # 27-tap accumulation on the MXU
        xr = xrefs[kd]
        for kh in range(3):
            for kw in range(3):
                patch = xr[0, 0, kh:kh + H, kw:kw + W, :]          # (H, W, Cin)
                patch = patch.reshape(H * W, Cin).astype(jnp.bfloat16)
                acc = acc + jnp.dot(patch, w_ref[kd * 9 + kh * 3 + kw],
                                    preferred_element_type=jnp.float32)

    y = acc + bias_ref[0].astype(jnp.float32)                      # (H*W, Cout)

    # Single-pass sum / sum-of-squares partials for GroupNorm(num_groups=1).
    s_val = jnp.sum(y)
    ss_val = jnp.sum(y * y)
    y_ref[...] = y.reshape(y_ref.shape).astype(y_ref.dtype)
    stats_ref[...] = jnp.concatenate(
        [jnp.full((1, 1, 1, 128), s_val, jnp.float32),
         jnp.full((1, 1, 1, 128), ss_val, jnp.float32)], axis=2)


def conv3_stats(x, w, bias):
    """x: (N,D,H,W,Cin) NDHWC, w: (3,3,3,Cin,Cout), bias: (Cout,)."""
    N, D, H, W, Cin = x.shape
    Cout = w.shape[-1]
    Hp, Wp = H + 2, W + 2
    xp = jnp.pad(x, ((0, 0), (1, 1), (1, 1), (1, 1), (0, 0)))
    wr = w.reshape(27, Cin, Cout).astype(jnp.bfloat16)
    br = bias.reshape(1, Cout).astype(jnp.float32)

    # The same padded array bound 3x with depth-shifted index_maps (kd halo).
    x_specs = [
        pl.BlockSpec((1, 1, Hp, Wp, Cin), (lambda n, d, kd=kd: (n, d + kd, 0, 0, 0)))
        for kd in range(3)
    ]
    y, stats = pl.pallas_call(
        _conv3_stats_kernel,
        out_shape=(jax.ShapeDtypeStruct((N, D, H, W, Cout), x.dtype),
                   jax.ShapeDtypeStruct((N, D, 2, 128), jnp.float32)),
        grid=(N, D),
        in_specs=x_specs + [
            pl.BlockSpec((27, Cin, Cout), lambda n, d: (0, 0, 0)),
            pl.BlockSpec((1, Cout), lambda n, d: (0, 0)),
        ],
        out_specs=(pl.BlockSpec((1, 1, H, W, Cout), lambda n, d: (n, d, 0, 0, 0)),
                   pl.BlockSpec((1, 1, 2, 128), lambda n, d: (n, d, 0, 0))),
        compiler_params=pltpu.CompilerParams(
            dimension_semantics=("parallel", "parallel")),
    )(xp, xp, xp, wr, br)
    return y, stats


# ----------------------------------------------------------------------------
# Kernel 2: 1x1x1 shortcut conv + branch concat + residual add + GN statistics
# ----------------------------------------------------------------------------
def _shortcut_concat_kernel(x_ref, a_ref, b_ref, c_ref, w_ref, bias_ref,
                            z_ref, stats_ref):
    H = x_ref.shape[2]
    W = x_ref.shape[3]
    Cin = x_ref.shape[-1]
    C = z_ref.shape[-1]

    xs = x_ref[0, 0].reshape(H * W, Cin).astype(jnp.bfloat16)
    sc = jnp.dot(xs, w_ref[...], preferred_element_type=jnp.float32)  # (H*W, C)
    cat = jnp.concatenate([a_ref[0, 0], b_ref[0, 0], c_ref[0, 0]], axis=-1)
    cat = cat.reshape(H * W, C).astype(jnp.float32)
    z = sc + bias_ref[0].astype(jnp.float32) + cat

    s_val = jnp.sum(z)
    ss_val = jnp.sum(z * z)
    z_ref[...] = z.reshape(z_ref.shape).astype(z_ref.dtype)
    stats_ref[...] = jnp.concatenate(
        [jnp.full((1, 1, 1, 128), s_val, jnp.float32),
         jnp.full((1, 1, 1, 128), ss_val, jnp.float32)], axis=2)


def shortcut_concat_stats(x, a, b, c, ws, bs):
    N, D, H, W, Cin = x.shape
    C = ws.shape[-1]
    c1, c2, c3 = a.shape[-1], b.shape[-1], c.shape[-1]
    wr = ws.reshape(Cin, C).astype(jnp.bfloat16)
    br = bs.reshape(1, C).astype(jnp.float32)

    z, stats = pl.pallas_call(
        _shortcut_concat_kernel,
        out_shape=(jax.ShapeDtypeStruct((N, D, H, W, C), x.dtype),
                   jax.ShapeDtypeStruct((N, D, 2, 128), jnp.float32)),
        grid=(N, D),
        in_specs=[
            pl.BlockSpec((1, 1, H, W, Cin), lambda n, d: (n, d, 0, 0, 0)),
            pl.BlockSpec((1, 1, H, W, c1), lambda n, d: (n, d, 0, 0, 0)),
            pl.BlockSpec((1, 1, H, W, c2), lambda n, d: (n, d, 0, 0, 0)),
            pl.BlockSpec((1, 1, H, W, c3), lambda n, d: (n, d, 0, 0, 0)),
            pl.BlockSpec((Cin, C), lambda n, d: (0, 0)),
            pl.BlockSpec((1, C), lambda n, d: (0, 0)),
        ],
        out_specs=(pl.BlockSpec((1, 1, H, W, C), lambda n, d: (n, d, 0, 0, 0)),
                   pl.BlockSpec((1, 1, 2, 128), lambda n, d: (n, d, 0, 0))),
        compiler_params=pltpu.CompilerParams(
            dimension_semantics=("parallel", "parallel")),
    )(x, a, b, c, wr, br)
    return z, stats


# ----------------------------------------------------------------------------
# Kernel 3: per-(sample, channel) affine normalize + SiLU (spatially blocked)
# ----------------------------------------------------------------------------
def _norm_silu_kernel(y_ref, sc_ref, sh_ref, o_ref):
    y = y_ref[...].astype(jnp.float32)          # (1, 1, H, W, C)
    z = y * sc_ref[0, 0] + sh_ref[0, 0]         # broadcast (C,) over the block
    o_ref[...] = (z * jax.nn.sigmoid(z)).astype(o_ref.dtype)


def norm_silu(y, scale, shift):
    N, D, H, W, C = y.shape
    return pl.pallas_call(
        _norm_silu_kernel,
        out_shape=jax.ShapeDtypeStruct(y.shape, y.dtype),
        grid=(N, D),
        in_specs=[
            pl.BlockSpec((1, 1, H, W, C), lambda n, d: (n, d, 0, 0, 0)),
            pl.BlockSpec((1, 1, C), lambda n, d: (n, 0, 0)),
            pl.BlockSpec((1, 1, C), lambda n, d: (n, 0, 0)),
        ],
        out_specs=pl.BlockSpec((1, 1, H, W, C), lambda n, d: (n, d, 0, 0, 0)),
        compiler_params=pltpu.CompilerParams(
            dimension_semantics=("parallel", "parallel")),
    )(y, scale, shift)


def _gn_affine(stats, gamma, beta, shape, eps=_EPS):
    """Fold GroupNorm(1) stats + gamma/beta into per-(sample, channel) scale/shift."""
    N, D, H, W, C = shape
    cnt = float(D * H * W * C)
    s = jnp.sum(stats[:, :, 0, 0], axis=1)               # (N,)
    ss = jnp.sum(stats[:, :, 1, 0], axis=1)               # (N,)
    mean = s / cnt
    var = jnp.maximum(ss / cnt - mean * mean, 0.0)         # biased variance
    inv = jax.lax.rsqrt(var + eps)
    scale = inv[:, None] * gamma[None, :].astype(jnp.float32)       # (N, C)
    shift = beta[None, :].astype(jnp.float32) - mean[:, None] * scale
    return scale.reshape(N, 1, C), shift.reshape(N, 1, C)


# ----------------------------------------------------------------------------
# MultiResCNNBlock3D and StageBlock
# ----------------------------------------------------------------------------
def multires_cnn_block3d(x, p):
    # TODO(synk): MultiResCNNBlock3D source was not provided; this follows the
    # standard MultiRes design (cascaded 3x3x3 conv->GN->SiLU branches split by
    # filter_ratios [3,2,1], concatenated, plus a 1x1x1 residual projection and
    # a final GroupNorm + SiLU) — numerical parity with the PyTorch class is
    # unverified.
    y1, st1 = conv3_stats(x, p["w1"], p["b1"])
    a = norm_silu(y1, *_gn_affine(st1, p["g1"], p["be1"], y1.shape))
    y2, st2 = conv3_stats(a, p["w2"], p["b2"])
    b = norm_silu(y2, *_gn_affine(st2, p["g2"], p["be2"], y2.shape))
    y3, st3 = conv3_stats(b, p["w3"], p["b3"])
    c = norm_silu(y3, *_gn_affine(st3, p["g3"], p["be3"], y3.shape))
    z, stz = shortcut_concat_stats(x, a, b, c, p["ws"], p["bs"])
    return norm_silu(z, *_gn_affine(stz, p["gf"], p["bef"], z.shape))


def stage_block(x_ncdhw, params_list, channels_first=True):
    # ActivationCheckpointing only changes backward recompute; forward is identity.
    x = x_ncdhw
    if channels_first:
        x = jnp.transpose(x, (0, 2, 3, 4, 1))       # NCDHW -> NDHWC
    for p in params_list:                            # nn.Sequential of depth blocks
        x = multires_cnn_block3d(x, p)
    if channels_first:
        x = jnp.transpose(x, (0, 4, 1, 2, 3))       # NDHWC -> NCDHW
    return x


# ----------------------------------------------------------------------------
# Deterministic parameter init (config.in_channels == config.out_channels,
# filter_ratios = [3, 2, 1])
# ----------------------------------------------------------------------------
def init_stage_params(key, channels, depth):
    ratios = (3, 2, 1)
    tot = sum(ratios)
    c1 = max(channels * ratios[0] // tot, 1)
    c2 = max(channels * ratios[1] // tot, 1)
    c3 = channels - c1 - c2
    assert c3 >= 1

    def conv_w(k_, ksz, cin, cout):
        fan_in = float(ksz ** 3 * cin)
        return jax.random.normal(k_, (ksz, ksz, ksz, cin, cout), jnp.float32) / (fan_in ** 0.5)

    params_list = []
    for _ in range(depth):
        key, k0, k1, k2, k3 = jax.random.split(key, 5)
        params_list.append(dict(
            w1=conv_w(k0, 3, channels, c1), b1=jnp.zeros((c1,), jnp.float32),
            g1=jnp.ones((c1,), jnp.float32), be1=jnp.zeros((c1,), jnp.float32),
            w2=conv_w(k1, 3, c1, c2), b2=jnp.zeros((c2,), jnp.float32),
            g2=jnp.ones((c2,), jnp.float32), be2=jnp.zeros((c2,), jnp.float32),
            w3=conv_w(k2, 3, c2, c3), b3=jnp.zeros((c3,), jnp.float32),
            g3=jnp.ones((c3,), jnp.float32), be3=jnp.zeros((c3,), jnp.float32),
            ws=conv_w(k3, 1, channels, channels), bs=jnp.zeros((channels,), jnp.float32),
            gf=jnp.ones((channels,), jnp.float32), bef=jnp.zeros((channels,), jnp.float32),
        ))
    return params_list


if __name__ == "__main__":
    # TODO(synk): LatentDecoder and SwinV23DPatchSplitting were not provided in
    # the spec; only the StageBlock stack (the Decoder's compute backbone) is
    # implemented here.
    key = jax.random.PRNGKey(0)
    kx, kp = jax.random.split(key)

    N, C, D, H, W = 2, 8, 8, 8, 8   # small NCDHW input (PyTorch conv3d layout)
    depth = 2

    x = jax.random.normal(kx, (N, C, D, H, W), jnp.float32)
    params = init_stage_params(kp, C, depth)

    fn = jax.jit(lambda xx: stage_block(xx, params))
    out = fn(x)
    jax.block_until_ready(out)

    assert out.shape == (N, C, D, H, W)
    assert bool(jnp.all(jnp.isfinite(out)))
    print("KERNEL_OK")
</pallas_src>

<mosaic_0001>
module attributes {stable_mosaic.version = 11 : i64} {
  func.func @_conv3_stats_kernel(%arg0: i32, %arg1: i32, %arg2: memref<1x1x10x10x8xf32, #tpu.memory_space<vmem>>, %arg3: memref<1x1x10x10x8xf32, #tpu.memory_space<vmem>>, %arg4: memref<1x1x10x10x8xf32, #tpu.memory_space<vmem>>, %arg5: memref<27x8x4xbf16, #tpu.memory_space<vmem>>, %arg6: memref<1x4xf32, #tpu.memory_space<vmem>>, %arg7: memref<1x1x8x8x4xf32, #tpu.memory_space<vmem>>, %arg8: memref<1x1x2x128xf32, #tpu.memory_space<vmem>>) attributes {dimension_semantics = [#tpu.dimension_semantics<parallel>, #tpu.dimension_semantics<parallel>], iteration_bounds = array<i64: 2, 8>, scalar_prefetch = 0 : i64, scratch_operands = 0 : i64, tpu.core_type = #tpu.core_type<tc>, window_params = [{transform_indices = @transform_0, window_bounds = array<i64: 1, 1, 10, 10, 8>}, {transform_indices = @transform_1, window_bounds = array<i64: 1, 1, 10, 10, 8>}, {transform_indices = @transform_2, window_bounds = array<i64: 1, 1, 10, 10, 8>}, {pipeline_mode = #tpu.pipeline_mode<synchronous>, transform_indices = @transform_3, window_bounds = array<i64: 27, 8, 4>}, {pipeline_mode = #tpu.pipeline_mode<synchronous>, transform_indices = @transform_4, window_bounds = array<i64: 1, 4>}, {transform_indices = @transform_5, window_bounds = array<i64: 1, 1, 8, 8, 4>}, {transform_indices = @transform_6, window_bounds = array<i64: 1, 1, 2, 128>}]} {
    %cst = arith.constant 0.000000e+00 : f32
    %0 = vector.broadcast %cst : f32 to vector<64x4xf32>
    %c0 = arith.constant 0 : index
    %c0_0 = arith.constant 0 : index
    %c0_1 = arith.constant 0 : index
    %c0_2 = arith.constant 0 : index
    %c0_3 = arith.constant 0 : index
    %1 = vector.load %arg2[%c0, %c0_0, %c0_1, %c0_2, %c0_3] : memref<1x1x10x10x8xf32, #tpu.memory_space<vmem>>, vector<1x1x8x8x8xf32>
    %2 = vector.shape_cast %1 : vector<1x1x8x8x8xf32> to vector<8x8x8xf32>
    %3 = vector.shape_cast %2 : vector<8x8x8xf32> to vector<64x8xf32>
    %4 = arith.truncf %3 : vector<64x8xf32> to vector<64x8xbf16>
    %c0_4 = arith.constant 0 : index
    %c0_5 = arith.constant 0 : index
    %c0_6 = arith.constant 0 : index
    %5 = vector.load %arg5[%c0_4, %c0_5, %c0_6] : memref<27x8x4xbf16, #tpu.memory_space<vmem>>, vector<1x8x4xbf16>
    %6 = vector.shape_cast %5 : vector<1x8x4xbf16> to vector<8x4xbf16>
    %cst_7 = arith.constant dense<0.000000e+00> : vector<64x4xf32>
    %7 = tpu.matmul %4, %6, %cst_7 {dimension_numbers = #tpu.dot_dimension_numbers<[1], [0], [0], [1], [0, 0, 1, 1], [], []>} : vector<64x8xbf16>, vector<8x4xbf16>, vector<64x4xf32> -> vector<64x4xf32>
    %8 = arith.addf %0, %7 : vector<64x4xf32>
    %c0_8 = arith.constant 0 : index
    %c0_9 = arith.constant 0 : index
    %c0_10 = arith.constant 0 : index
    %c1 = arith.constant 1 : index
    %c0_11 = arith.constant 0 : index
    %9 = vector.load %arg2[%c0_8, %c0_9, %c0_10, %c1, %c0_11] : memref<1x1x10x10x8xf32, #tpu.memory_space<vmem>>, vector<1x1x8x8x8xf32>
    %10 = vector.shape_cast %9 : vector<1x1x8x8x8xf32> to vector<8x8x8xf32>
    %11 = vector.shape_cast %10 : vector<8x8x8xf32> to vector<64x8xf32>
    %12 = arith.truncf %11 : vector<64x8xf32> to vector<64x8xbf16>
    %c1_12 = arith.constant 1 : index
    %c0_13 = arith.constant 0 : index
    %c0_14 = arith.constant 0 : index
    %13 = vector.load %arg5[%c1_12, %c0_13, %c0_14] : memref<27x8x4xbf16, #tpu.memory_space<vmem>>, vector<1x8x4xbf16>
    %14 = vector.shape_cast %13 : vector<1x8x4xbf16> to vector<8x4xbf16>
    %cst_15 = arith.constant dense<0.000000e+00> : vector<64x4xf32>
    %15 = tpu.matmul %12, %14, %cst_15 {dimension_numbers = #tpu.dot_dimension_numbers<[1], [0], [0], [1], [0, 0, 1, 1], [], []>} : vector<64x8xbf16>, vector<8x4xbf16>, vector<64x4xf32> -> vector<64x4xf32>
    %16 = arith.addf %8, %15 : vector<64x4xf32>
    %c0_16 = arith.constant 0 : index
    %c0_17 = arith.constant 0 : index
    %c0_18 = arith.constant 0 : index
    %c2 = arith.constant 2 : index
    %c0_19 = arith.constant 0 : index
    %17 = vector.load %arg2[%c0_16, %c0_17, %c0_18, %c2, %c0_19] : memref<1x1x10x10x8xf32, #tpu.memory_space<vmem>>, vector<1x1x8x8x8xf32>
    %18 = vector.shape_cast %17 : vector<1x1x8x8x8xf32> to vector<8x8x8xf32>
    %19 = vector.shape_cast %18 : vector<8x8x8xf32> to vector<64x8xf32>
    %20 = arith.truncf %19 : vector<64x8xf32> to vector<64x8xbf16>
    %c2_20 = arith.constant 2 : index
    %c0_21 = arith.constant 0 : index
    %c0_22 = arith.constant 0 : index
    %21 = vector.load %arg5[%c2_20, %c0_21, %c0_22] : memref<27x8x4xbf16, #tpu.memory_space<vmem>>, vector<1x8x4xbf16>
    %22 = vector.shape_cast %21 : vector<1x8x4xbf16> to vector<8x4xbf16>
    %cst_23 = arith.constant dense<0.000000e+00> : vector<64x4xf32>
    %23 = tpu.matmul %20, %22, %cst_23 {dimension_numbers = #tpu.dot_dimension_numbers<[1], [0], [0], [1], [0, 0, 1, 1], [], []>} : vector<64x8xbf16>, vector<8x4xbf16>, vector<64x4xf32> -> vector<64x4xf32>
    %24 = arith.addf %16, %23 : vector<64x4xf32>
    %c0_24 = arith.constant 0 : index
    %c0_25 = arith.constant 0 : index
    %c1_26 = arith.constant 1 : index
    %c0_27 = arith.constant 0 : index
    %c0_28 = arith.constant 0 : index
    %25 = vector.load %arg2[%c0_24, %c0_25, %c1_26, %c0_27, %c0_28] : memref<1x1x10x10x8xf32, #tpu.memory_space<vmem>>, vector<1x1x8x8x8xf32>
    %26 = vector.shape_cast %25 : vector<1x1x8x8x8xf32> to vector<8x8x8xf32>
    %27 = vector.shape_cast %26 : vector<8x8x8xf32> to vector<64x8xf32>
    %28 = arith.truncf %27 : vector<64x8xf32> to vector<64x8xbf16>
    %c3 = arith.constant 3 : index
    %c0_29 = arith.constant 0 : index
    %c0_30 = arith.constant 0 : index
    %29 = vector.load %arg5[%c3, %c0_29, %c0_30] : memref<27x8x4xbf16, #tpu.memory_space<vmem>>, vector<1x8x4xbf16>
    %30 = vector.shape_cast %29 : vector<1x8x4xbf16> to vector<8x4xbf16>
    %cst_31 = arith.constant dense<0.000000e+00> : vector<64x4xf32>
    %31 = tpu.matmul %28, %30, %cst_31 {dimension_numbers = #tpu.dot_dimension_numbers<[1], [0], [0], [1], [0, 0, 1, 1], [], []>} : vector<64x8xbf16>, vector<8x4xbf16>, vector<64x4xf32> -> vector<64x4xf32>
    %32 = arith.addf %24, %31 : vector<64x4xf32>
    %c0_32 = arith.constant 0 : index
    %c0_33 = arith.constant 0 : index
    %c1_34 = arith.constant 1 : index
    %c1_35 = arith.constant 1 : index
    %c0_36 = arith.constant 0 : index
    %33 = vector.load %arg2[%c0_32, %c0_33, %c1_34, %c1_35, %c0_36] : memref<1x1x10x10x8xf32, #tpu.memory_space<vmem>>, vector<1x1x8x8x8xf32>
    %34 = vector.shape_cast %33 : vector<1x1x8x8x8xf32> to vector<8x8x8xf32>
    %35 = vector.shape_cast %34 : vector<8x8x8xf32> to vector<64x8xf32>
    %36 = arith.truncf %35 : vector<64x8xf32> to vector<64x8xbf16>
    %c4 = arith.constant 4 : index
    %c0_37 = arith.constant 0 : index
    %c0_38 = arith.constant 0 : index
    %37 = vector.load %arg5[%c4, %c0_37, %c0_38] : memref<27x8x4xbf16, #tpu.memory_space<vmem>>, vector<1x8x4xbf16>
    %38 = vector.shape_cast %37 : vector<1x8x4xbf16> to vector<8x4xbf16>
    %cst_39 = arith.constant dense<0.000000e+00> : vector<64x4xf32>
    %39 = tpu.matmul %36, %38, %cst_39 {dimension_numbers = #tpu.dot_dimension_numbers<[1], [0], [0], [1], [0, 0, 1, 1], [], []>} : vector<64x8xbf16>, vector<8x4xbf16>, vector<64x4xf32> -> vector<64x4xf32>
    %40 = arith.addf %32, %39 : vector<64x4xf32>
    %c0_40 = arith.constant 0 : index
    %c0_41 = arith.constant 0 : index
    %c1_42 = arith.constant 1 : index
    %c2_43 = arith.constant 2 : index
    %c0_44 = arith.constant 0 : index
    %41 = vector.load %arg2[%c0_40, %c0_41, %c1_42, %c2_43, %c0_44] : memref<1x1x10x10x8xf32, #tpu.memory_space<vmem>>, vector<1x1x8x8x8xf32>
    %42 = vector.shape_cast %41 : vector<1x1x8x8x8xf32> to vector<8x8x8xf32>
    %43 = vector.shape_cast %42 : vector<8x8x8xf32> to vector<64x8xf32>
    %44 = arith.truncf %43 : vector<64x8xf32> to vector<64x8xbf16>
    %c5 = arith.constant 5 : index
    %c0_45 = arith.constant 0 : index
    %c0_46 = arith.constant 0 : index
    %45 = vector.load %arg5[%c5, %c0_45, %c0_46] : memref<27x8x4xbf16, #tpu.memory_space<vmem>>, vector<1x8x4xbf16>
    %46 = vector.shape_cast %45 : vector<1x8x4xbf16> to vector<8x4xbf16>
    %cst_47 = arith.constant dense<0.000000e+00> : vector<64x4xf32>
    %47 = tpu.matmul %44, %46, %cst_47 {dimension_numbers = #tpu.dot_dimension_numbers<[1], [0], [0], [1], [0, 0, 1, 1], [], []>} : vector<64x8xbf16>, vector<8x4xbf16>, vector<64x4xf32> -> vector<64x4xf32>
    %48 = arith.addf %40, %47 : vector<64x4xf32>
    %c0_48 = arith.constant 0 : index
    %c0_49 = arith.constant 0 : index
    %c2_50 = arith.constant 2 : index
    %c0_51 = arith.constant 0 : index
    %c0_52 = arith.constant 0 : index
    %49 = vector.load %arg2[%c0_48, %c0_49, %c2_50, %c0_51, %c0_52] : memref<1x1x10x10x8xf32, #tpu.memory_space<vmem>>, vector<1x1x8x8x8xf32>
    %50 = vector.shape_cast %49 : vector<1x1x8x8x8xf32> to vector<8x8x8xf32>
    %51 = vector.shape_cast %50 : vector<8x8x8xf32> to vector<64x8xf32>
    %52 = arith.truncf %51 : vector<64x8xf32> to vector<64x8xbf16>
    %c6 = arith.constant 6 : index
    %c0_53 = arith.constant 0 : index
    %c0_54 = arith.constant 0 : index
    %53 = vector.load %arg5[%c6, %c0_53, %c0_54] : memref<27x8x4xbf16, #tpu.memory_space<vmem>>, vector<1x8x4xbf16>
    %54 = vector.shape_cast %53 : vector<1x8x4xbf16> to vector<8x4xbf16>
    %cst_55 = arith.constant dense<0.000000e+00> : vector<64x4xf32>
    %55 = tpu.matmul %52, %54, %cst_55 {dimension_numbers = #tpu.dot_dimension_numbers<[1], [0], [0], [1], [0, 0, 1, 1], [], []>} : vector<64x8xbf16>, vector<8x4xbf16>, vector<64x4xf32> -> vector<64x4xf32>
    %56 = arith.addf %48, %55 : vector<64x4xf32>
    %c0_56 = arith.constant 0 : index
    %c0_57 = arith.constant 0 : index
    %c2_58 = arith.constant 2 : index
    %c1_59 = arith.constant 1 : index
    %c0_60 = arith.constant 0 : index
    %57 = vector.load %arg2[%c0_56, %c0_57, %c2_58, %c1_59, %c0_60] : memref<1x1x10x10x8xf32, #tpu.memory_space<vmem>>, vector<1x1x8x8x8xf32>
    %58 = vector.shape_cast %57 : vector<1x1x8x8x8xf32> to vector<8x8x8xf32>
    %59 = vector.shape_cast %58 : vector<8x8x8xf32> to vector<64x8xf32>
    %60 = arith.truncf %59 : vector<64x8xf32> to vector<64x8xbf16>
    %c7 = arith.constant 7 : index
    %c0_61 = arith.constant 0 : index
    %c0_62 = arith.constant 0 : index
    %61 = vector.load %arg5[%c7, %c0_61, %c0_62] : memref<27x8x4xbf16, #tpu.memory_space<vmem>>, vector<1x8x4xbf16>
    %62 = vector.shape_cast %61 : vector<1x8x4xbf16> to vector<8x4xbf16>
    %cst_63 = arith.constant dense<0.000000e+00> : vector<64x4xf32>
    %63 = tpu.matmul %60, %62, %cst_63 {dimension_numbers = #tpu.dot_dimension_numbers<[1], [0], [0], [1], [0, 0, 1, 1], [], []>} : vector<64x8xbf16>, vector<8x4xbf16>, vector<64x4xf32> -> vector<64x4xf32>
    %64 = arith.addf %56, %63 : vector<64x4xf32>
    %c0_64 = arith.constant 0 : index
    %c0_65 = arith.constant 0 : index
    %c2_66 = arith.constant 2 : index
    %c2_67 = arith.constant 2 : index
    %c0_68 = arith.constant 0 : index
    %65 = vector.load %arg2[%c0_64, %c0_65, %c2_66, %c2_67, %c0_68] : memref<1x1x10x10x8xf32, #tpu.memory_space<vmem>>, vector<1x1x8x8x8xf32>
    %66 = vector.shape_cast %65 : vector<1x1x8x8x8xf32> to vector<8x8x8xf32>
    %67 = vector.shape_cast %66 : vector<8x8x8xf32> to vector<64x8xf32>
    %68 = arith.truncf %67 : vector<64x8xf32> to vector<64x8xbf16>
    %c8 = arith.constant 8 : index
    %c0_69 = arith.constant 0 : index
    %c0_70 = arith.constant 0 : index
    %69 = vector.load %arg5[%c8, %c0_69, %c0_70] : memref<27x8x4xbf16, #tpu.memory_space<vmem>>, vector<1x8x4xbf16>
    %70 = vector.shape_cast %69 : vector<1x8x4xbf16> to vector<8x4xbf16>
    %cst_71 = arith.constant dense<0.000000e+00> : vector<64x4xf32>
    %71 = tpu.matmul %68, %70, %cst_71 {dimension_numbers = #tpu.dot_dimension_numbers<[1], [0], [0], [1], [0, 0, 1, 1], [], []>} : vector<64x8xbf16>, vector<8x4xbf16>, vector<64x4xf32> -> vector<64x4xf32>
    %72 = arith.addf %64, %71 : vector<64x4xf32>
    %c0_72 = arith.constant 0 : index
    %c0_73 = arith.constant 0 : index
    %c0_74 = arith.constant 0 : index
    %c0_75 = arith.constant 0 : index
    %c0_76 = arith.constant 0 : index
    %73 = vector.load %arg3[%c0_72, %c0_73, %c0_74, %c0_75, %c0_76] : memref<1x1x10x10x8xf32, #tpu.memory_space<vmem>>, vector<1x1x8x8x8xf32>
    %74 = vector.shape_cast %73 : vector<1x1x8x8x8xf32> to vector<8x8x8xf32>
    %75 = vector.shape_cast %74 : vector<8x8x8xf32> to vector<64x8xf32>
    %76 = arith.truncf %75 : vector<64x8xf32> to vector<64x8xbf16>
    %c9 = arith.constant 9 : index
    %c0_77 = arith.constant 0 : index
    %c0_78 = arith.constant 0 : index
    %77 = vector.load %arg5[%c9, %c0_77, %c0_78] : memref<27x8x4xbf16, #tpu.memory_space<vmem>>, vector<1x8x4xbf16>
    %78 = vector.shape_cast %77 : vector<1x8x4xbf16> to vector<8x4xbf16>
    %cst_79 = arith.constant dense<0.000000e+00> : vector<64x4xf32>
    %79 = tpu.matmul %76, %78, %cst_79 {dimension_numbers = #tpu.dot_dimension_numbers<[1], [0], [0], [1], [0, 0, 1, 1], [], []>} : vector<64x8xbf16>, vector<8x4xbf16>, vector<64x4xf32> -> vector<64x4xf32>
    %80 = arith.addf %72, %79 : vector<64x4xf32>
    %c0_80 = arith.constant 0 : index
    %c0_81 = arith.constant 0 : index
    %c0_82 = arith.constant 0 : index
    %c1_83 = arith.constant 1 : index
    %c0_84 = arith.constant 0 : index
    %81 = vector.load %arg3[%c0_80, %c0_81, %c0_82, %c1_83, %c0_84] : memref<1x1x10x10x8xf32, #tpu.memory_space<vmem>>, vector<1x1x8x8x8xf32>
    %82 = vector.shape_cast %81 : vector<1x1x8x8x8xf32> to vector<8x8x8xf32>
    %83 = vector.shape_cast %82 : vector<8x8x8xf32> to vector<64x8xf32>
    %84 = arith.truncf %83 : vector<64x8xf32> to vector<64x8xbf16>
    %c10 = arith.constant 10 : index
    %c0_85 = arith.constant 0 : index
    %c0_86 = arith.constant 0 : index
    %85 = vector.load %arg5[%c10, %c0_85, %c0_86] : memref<27x8x4xbf16, #tpu.memory_space<vmem>>, vector<1x8x4xbf16>
    %86 = vector.shape_cast %85 : vector<1x8x4xbf16> to vector<8x4xbf16>
    %cst_87 = arith.constant dense<0.000000e+00> : vector<64x4xf32>
    %87 = tpu.matmul %84, %86, %cst_87 {dimension_numbers = #tpu.dot_dimension_numbers<[1], [0], [0], [1], [0, 0, 1, 1], [], []>} : vector<64x8xbf16>, vector<8x4xbf16>, vector<64x4xf32> -> vector<64x4xf32>
    %88 = arith.addf %80, %87 : vector<64x4xf32>
    %c0_88 = arith.constant 0 : index
    %c0_89 = arith.constant 0 : index
    %c0_90 = arith.constant 0 : index
    %c2_91 = arith.constant 2 : index
    %c0_92 = arith.constant 0 : index
    %89 = vector.load %arg3[%c0_88, %c0_89, %c0_90, %c2_91, %c0_92] : memref<1x1x10x10x8xf32, #tpu.memory_space<vmem>>, vector<1x1x8x8x8xf32>
    %90 = vector.shape_cast %89 : vector<1x1x8x8x8xf32> to vector<8x8x8xf32>
    %91 = vector.shape_cast %90 : vector<8x8x8xf32> to vector<64x8xf32>
    %92 = arith.truncf %91 : vector<64x8xf32> to vector<64x8xbf16>
    %c11 = arith.constant 11 : index
    %c0_93 = arith.constant 0 : index
    %c0_94 = arith.constant 0 : index
    %93 = vector.load %arg5[%c11, %c0_93, %c0_94] : memref<27x8x4xbf16, #tpu.memory_space<vmem>>, vector<1x8x4xbf16>
    %94 = vector.shape_cast %93 : vector<1x8x4xbf16> to vector<8x4xbf16>
    %cst_95 = arith.constant dense<0.000000e+00> : vector<64x4xf32>
    %95 = tpu.matmul %92, %94, %cst_95 {dimension_numbers = #tpu.dot_dimension_numbers<[1], [0], [0], [1], [0, 0, 1, 1], [], []>} : vector<64x8xbf16>, vector<8x4xbf16>, vector<64x4xf32> -> vector<64x4xf32>
    %96 = arith.addf %88, %95 : vector<64x4xf32>
    %c0_96 = arith.constant 0 : index
    %c0_97 = arith.constant 0 : index
    %c1_98 = arith.constant 1 : index
    %c0_99 = arith.constant 0 : index
    %c0_100 = arith.constant 0 : index
    %97 = vector.load %arg3[%c0_96, %c0_97, %c1_98, %c0_99, %c0_100] : memref<1x1x10x10x8xf32, #tpu.memory_space<vmem>>, vector<1x1x8x8x8xf32>
    %98 = vector.shape_cast %97 : vector<1x1x8x8x8xf32> to vector<8x8x8xf32>
    %99 = vector.shape_cast %98 : vector<8x8x8xf32> to vector<64x8xf32>
    %100 = arith.truncf %99 : vector<64x8xf32> to vector<64x8xbf16>
    %c12 = arith.constant 12 : index
    %c0_101 = arith.constant 0 : index
    %c0_102 = arith.constant 0 : index
    %101 = vector.load %arg5[%c12, %c0_101, %c0_102] : memref<27x8x4xbf16, #tpu.memory_space<vmem>>, vector<1x8x4xbf16>
    %102 = vector.shape_cast %101 : vector<1x8x4xbf16> to vector<8x4xbf16>
    %cst_103 = arith.constant dense<0.000000e+00> : vector<64x4xf32>
    %103 = tpu.matmul %100, %102, %cst_103 {dimension_numbers = #tpu.dot_dimension_numbers<[1], [0], [0], [1], [0, 0, 1, 1], [], []>} : vector<64x8xbf16>, vector<8x4xbf16>, vector<64x4xf32> -> vector<64x4xf32>
    %104 = arith.addf %96, %103 : vector<64x4xf32>
    %c0_104 = arith.constant 0 : index
    %c0_105 = arith.constant 0 : index
    %c1_106 = arith.constant 1 : index
    %c1_107 = arith.constant 1 : index
    %c0_108 = arith.constant 0 : index
    %105 = vector.load %arg3[%c0_104, %c0_105, %c1_106, %c1_107, %c0_108] : memref<1x1x10x10x8xf32, #tpu.memory_space<vmem>>, vector<1x1x8x8x8xf32>
    %106 = vector.shape_cast %105 : vector<1x1x8x8x8xf32> to vector<8x8x8xf32>
    %107 = vector.shape_cast %106 : vector<8x8x8xf32> to vector<64x8xf32>
    %108 = arith.truncf %107 : vector<64x8xf32> to vector<64x8xbf16>
    %c13 = arith.constant 13 : index
    %c0_109 = arith.constant 0 : index
    %c0_110 = arith.constant 0 : index
    %109 = vector.load %arg5[%c13, %c0_109, %c0_110] : memref<27x8x4xbf16, #tpu.memory_space<vmem>>, vector<1x8x4xbf16>
    %110 = vector.shape_cast %109 : vector<1x8x4xbf16> to vector<8x4xbf16>
    %cst_111 = arith.constant dense<0.000000e+00> : vector<64x4xf32>
    %111 = tpu.matmul %108, %110, %cst_111 {dimension_numbers = #tpu.dot_dimension_numbers<[1], [0], [0], [1], [0, 0, 1, 1], [], []>} : vector<64x8xbf16>, vector<8x4xbf16>, vector<64x4xf32> -> vector<64x4xf32>
    %112 = arith.addf %104, %111 : vector<64x4xf32>
    %c0_112 = arith.constant 0 : index
    %c0_113 = arith.constant 0 : index
    %c1_114 = arith.constant 1 : index
    %c2_115 = arith.constant 2 : index
    %c0_116 = arith.constant 0 : index
    %113 = vector.load %arg3[%c0_112, %c0_113, %c1_114, %c2_115, %c0_116] : memref<1x1x10x10x8xf32, #tpu.memory_space<vmem>>, vector<1x1x8x8x8xf32>
    %114 = vector.shape_cast %113 : vector<1x1x8x8x8xf32> to vector<8x8x8xf32>
    %115 = vector.shape_cast %114 : vector<8x8x8xf32> to vector<64x8xf32>
    %116 = arith.truncf %115 : vector<64x8xf32> to vector<64x8xbf16>
    %c14 = arith.constant 14 : index
    %c0_117 = arith.constant 0 : index
    %c0_118 = arith.constant 0 : index
    %117 = vector.load %arg5[%c14, %c0_117, %c0_118] : memref<27x8x4xbf16, #tpu.memory_space<vmem>>, vector<1x8x4xbf16>
    %118 = vector.shape_cast %117 : vector<1x8x4xbf16> to vector<8x4xbf16>
    %cst_119 = arith.constant dense<0.000000e+00> : vector<64x4xf32>
    %119 = tpu.matmul %116, %118, %cst_119 {dimension_numbers = #tpu.dot_dimension_numbers<[1], [0], [0], [1], [0, 0, 1, 1], [], []>} : vector<64x8xbf16>, vector<8x4xbf16>, vector<64x4xf32> -> vector<64x4xf32>
    %120 = arith.addf %112, %119 : vector<64x4xf32>
    %c0_120 = arith.constant 0 : index
    %c0_121 = arith.constant 0 : index
    %c2_122 = arith.constant 2 : index
    %c0_123 = arith.constant 0 : index
    %c0_124 = arith.constant 0 : index
    %121 = vector.load %arg3[%c0_120, %c0_121, %c2_122, %c0_123, %c0_124] : memref<1x1x10x10x8xf32, #tpu.memory_space<vmem>>, vector<1x1x8x8x8xf32>
    %122 = vector.shape_cast %121 : vector<1x1x8x8x8xf32> to vector<8x8x8xf32>
    %123 = vector.shape_cast %122 : vector<8x8x8xf32> to vector<64x8xf32>
    %124 = arith.truncf %123 : vector<64x8xf32> to vector<64x8xbf16>
    %c15 = arith.constant 15 : index
    %c0_125 = arith.constant 0 : index
    %c0_126 = arith.constant 0 : index
    %125 = vector.load %arg5[%c15, %c0_125, %c0_126] : memref<27x8x4xbf16, #tpu.memory_space<vmem>>, vector<1x8x4xbf16>
    %126 = vector.shape_cast %125 : vector<1x8x4xbf16> to vector<8x4xbf16>
    %cst_127 = arith.constant dense<0.000000e+00> : vector<64x4xf32>
    %127 = tpu.matmul %124, %126, %cst_127 {dimension_numbers = #tpu.dot_dimension_numbers<[1], [0], [0], [1], [0, 0, 1, 1], [], []>} : vector<64x8xbf16>, vector<8x4xbf16>, vector<64x4xf32> -> vector<64x4xf32>
    %128 = arith.addf %120, %127 : vector<64x4xf32>
    %c0_128 = arith.constant 0 : index
    %c0_129 = arith.constant 0 : index
    %c2_130 = arith.constant 2 : index
    %c1_131 = arith.constant 1 : index
    %c0_132 = arith.constant 0 : index
    %129 = vector.load %arg3[%c0_128, %c0_129, %c2_130, %c1_131, %c0_132] : memref<1x1x10x10x8xf32, #tpu.memory_space<vmem>>, vector<1x1x8x8x8xf32>
    %130 = vector.shape_cast %129 : vector<1x1x8x8x8xf32> to vector<8x8x8xf32>
    %131 = vector.shape_cast %130 : vector<8x8x8xf32> to vector<64x8xf32>
    %132 = arith.truncf %131 : vector<64x8xf32> to vector<64x8xbf16>
    %c16 = arith.constant 16 : index
    %c0_133 = arith.constant 0 : index
    %c0_134 = arith.constant 0 : index
    %133 = vector.load %arg5[%c16, %c0_133, %c0_134] : memref<27x8x4xbf16, #tpu.memory_space<vmem>>, vector<1x8x4xbf16>
    %134 = vector.shape_cast %133 : vector<1x8x4xbf16> to vector<8x4xbf16>
    %cst_135 = arith.constant dense<0.000000e+00> : vector<64x4xf32>
    %135 = tpu.matmul %132, %134, %cst_135 {dimension_numbers = #tpu.dot_dimension_numbers<[1], [0], [0], [1], [0, 0, 1, 1], [], []>} : vector<64x8xbf16>, vector<8x4xbf16>, vector<64x4xf32> -> vector<64x4xf32>
    %136 = arith.addf %128, %135 : vector<64x4xf32>
    %c0_136 = arith.constant 0 : index
    %c0_137 = arith.constant 0 : index
    %c2_138 = arith.constant 2 : index
    %c2_139 = arith.constant 2 : index
    %c0_140 = arith.constant 0 : index
    %137 = vector.load %arg3[%c0_136, %c0_137, %c2_138, %c2_139, %c0_140] : memref<1x1x10x10x8xf32, #tpu.memory_space<vmem>>, vector<1x1x8x8x8xf32>
    %138 = vector.shape_cast %137 : vector<1x1x8x8x8xf32> to vector<8x8x8xf32>
    %139 = vector.shape_cast %138 : vector<8x8x8xf32> to vector<64x8xf32>
    %140 = arith.truncf %139 : vector<64x8xf32> to vector<64x8xbf16>
    %c17 = arith.constant 17 : index
    %c0_141 = arith.constant 0 : index
    %c0_142 = arith.constant 0 : index
    %141 = vector.load %arg5[%c17, %c0_141, %c0_142] : memref<27x8x4xbf16, #tpu.memory_space<vmem>>, vector<1x8x4xbf16>
    %142 = vector.shape_cast %141 : vector<1x8x4xbf16> to vector<8x4xbf16>
    %cst_143 = arith.constant dense<0.000000e+00> : vector<64x4xf32>
    %143 = tpu.matmul %140, %142, %cst_143 {dimension_numbers = #tpu.dot_dimension_numbers<[1], [0], [0], [1], [0, 0, 1, 1], [], []>} : vector<64x8xbf16>, vector<8x4xbf16>, vector<64x4xf32> -> vector<64x4xf32>
    %144 = arith.addf %136, %143 : vector<64x4xf32>
    %c0_144 = arith.constant 0 : index
    %c0_145 = arith.constant 0 : index
    %c0_146 = arith.constant 0 : index
    %c0_147 = arith.constant 0 : index
    %c0_148 = arith.constant 0 : index
    %145 = vector.load %arg4[%c0_144, %c0_145, %c0_146, %c0_147, %c0_148] : memref<1x1x10x10x8xf32, #tpu.memory_space<vmem>>, vector<1x1x8x8x8xf32>
    %146 = vector.shape_cast %145 : vector<1x1x8x8x8xf32> to vector<8x8x8xf32>
    %147 = vector.shape_cast %146 : vector<8x8x8xf32> to vector<64x8xf32>
    %148 = arith.truncf %147 : vector<64x8xf32> to vector<64x8xbf16>
    %c18 = arith.constant 18 : index
    %c0_149 = arith.constant 0 : index
    %c0_150 = arith.constant 0 : index
    %149 = vector.load %arg5[%c18, %c0_149, %c0_150] : memref<27x8x4xbf16, #tpu.memory_space<vmem>>, vector<1x8x4xbf16>
    %150 = vector.shape_cast %149 : vector<1x8x4xbf16> to vector<8x4xbf16>
    %cst_151 = arith.constant dense<0.000000e+00> : vector<64x4xf32>
    %151 = tpu.matmul %148, %150, %cst_151 {dimension_numbers = #tpu.dot_dimension_numbers<[1], [0], [0], [1], [0, 0, 1, 1], [], []>} : vector<64x8xbf16>, vector<8x4xbf16>, vector<64x4xf32> -> vector<64x4xf32>
    %152 = arith.addf %144, %151 : vector<64x4xf32>
    %c0_152 = arith.constant 0 : index
    %c0_153 = arith.constant 0 : index
    %c0_154 = arith.constant 0 : index
    %c1_155 = arith.constant 1 : index
    %c0_156 = arith.constant 0 : index
    %153 = vector.load %arg4[%c0_152, %c0_153, %c0_154, %c1_155, %c0_156] : memref<1x1x10x10x8xf32, #tpu.memory_space<vmem>>, vector<1x1x8x8x8xf32>
    %154 = vector.shape_cast %153 : vector<1x1x8x8x8xf32> to vector<8x8x8xf32>
    %155 = vector.shape_cast %154 : vector<8x8x8xf32> to vector<64x8xf32>
    %156 = arith.truncf %155 : vector<64x8xf32> to vector<64x8xbf16>
    %c19 = arith.constant 19 : index
    %c0_157 = arith.constant 0 : index
    %c0_158 = arith.constant 0 : index
    %157 = vector.load %arg5[%c19, %c0_157, %c0_158] : memref<27x8x4xbf16, #tpu.memory_space<vmem>>, vector<1x8x4xbf16>
    %158 = vector.shape_cast %157 : vector<1x8x4xbf16> to vector<8x4xbf16>
    %cst_159 = arith.constant dense<0.000000e+00> : vector<64x4xf32>
    %159 = tpu.matmul %156, %158, %cst_159 {dimension_numbers = #tpu.dot_dimension_numbers<[1], [0], [0], [1], [0, 0, 1, 1], [], []>} : vector<64x8xbf16>, vector<8x4xbf16>, vector<64x4xf32> -> vector<64x4xf32>
    %160 = arith.addf %152, %159 : vector<64x4xf32>
    %c0_160 = arith.constant 0 : index
    %c0_161 = arith.constant 0 : index
    %c0_162 = arith.constant 0 : index
    %c2_163 = arith.constant 2 : index
    %c0_164 = arith.constant 0 : index
    %161 = vector.load %arg4[%c0_160, %c0_161, %c0_162, %c2_163, %c0_164] : memref<1x1x10x10x8xf32, #tpu.memory_space<vmem>>, vector<1x1x8x8x8xf32>
    %162 = vector.shape_cast %161 : vector<1x1x8x8x8xf32> to vector<8x8x8xf32>
    %163 = vector.shape_cast %162 : vector<8x8x8xf32> to vector<64x8xf32>
    %164 = arith.truncf %163 : vector<64x8xf32> to vector<64x8xbf16>
    %c20 = arith.constant 20 : index
    %c0_165 = arith.constant 0 : index
    %c0_166 = arith.constant 0 : index
    %165 = vector.load %arg5[%c20, %c0_165, %c0_166] : memref<27x8x4xbf16, #tpu.memory_space<vmem>>, vector<1x8x4xbf16>
    %166 = vector.shape_cast %165 : vector<1x8x4xbf16> to vector<8x4xbf16>
    %cst_167 = arith.constant dense<0.000000e+00> : vector<64x4xf32>
    %167 = tpu.matmul %164, %166, %cst_167 {dimension_numbers = #tpu.dot_dimension_numbers<[1], [0], [0], [1], [0, 0, 1, 1], [], []>} : vector<64x8xbf16>, vector<8x4xbf16>, vector<64x4xf32> -> vector<64x4xf32>
    %168 = arith.addf %160, %167 : vector<64x4xf32>
    %c0_168 = arith.constant 0 : index
    %c0_169 = arith.constant 0 : index
    %c1_170 = arith.constant 1 : index
    %c0_171 = arith.constant 0 : index
    %c0_172 = arith.constant 0 : index
    %169 = vector.load %arg4[%c0_168, %c0_169, %c1_170, %c0_171, %c0_172] : memref<1x1x10x10x8xf32, #tpu.memory_space<vmem>>, vector<1x1x8x8x8xf32>
    %170 = vector.shape_cast %169 : vector<1x1x8x8x8xf32> to vector<8x8x8xf32>
    %171 = vector.shape_cast %170 : vector<8x8x8xf32> to vector<64x8xf32>
    %172 = arith.truncf %171 : vector<64x8xf32> to vector<64x8xbf16>
    %c21 = arith.constant 21 : index
    %c0_173 = arith.constant 0 : index
    %c0_174 = arith.constant 0 : index
    %173 = vector.load %arg5[%c21, %c0_173, %c0_174] : memref<27x8x4xbf16, #tpu.memory_space<vmem>>, vector<1x8x4xbf16>
    %174 = vector.shape_cast %173 : vector<1x8x4xbf16> to vector<8x4xbf16>
    %cst_175 = arith.constant dense<0.000000e+00> : vector<64x4xf32>
    %175 = tpu.matmul %172, %174, %cst_175 {dimension_numbers = #tpu.dot_dimension_numbers<[1], [0], [0], [1], [0, 0, 1, 1], [], []>} : vector<64x8xbf16>, vector<8x4xbf16>, vector<64x4xf32> -> vector<64x4xf32>
    %176 = arith.addf %168, %175 : vector<64x4xf32>
    %c0_176 = arith.constant 0 : index
    %c0_177 = arith.constant 0 : index
    %c1_178 = arith.constant 1 : index
    %c1_179 = arith.constant 1 : index
    %c0_180 = arith.constant 0 : index
    %177 = vector.load %arg4[%c0_176, %c0_177, %c1_178, %c1_179, %c0_180] : memref<1x1x10x10x8xf32, #tpu.memory_space<vmem>>, vector<1x1x8x8x8xf32>
    %178 = vector.shape_cast %177 : vector<1x1x8x8x8xf32> to vector<8x8x8xf32>
    %179 = vector.shape_cast %178 : vector<8x8x8xf32> to vector<64x8xf32>
    %180 = arith.truncf %179 : vector<64x8xf32> to vector<64x8xbf16>
    %c22 = arith.constant 22 : index
    %c0_181 = arith.constant 0 : index
    %c0_182 = arith.constant 0 : index
    %181 = vector.load %arg5[%c22, %c0_181, %c0_182] : memref<27x8x4xbf16, #tpu.memory_space<vmem>>, vector<1x8x4xbf16>
    %182 = vector.shape_cast %181 : vector<1x8x4xbf16> to vector<8x4xbf16>
    %cst_183 = arith.constant dense<0.000000e+00> : vector<64x4xf32>
    %183 = tpu.matmul %180, %182, %cst_183 {dimension_numbers = #tpu.dot_dimension_numbers<[1], [0], [0], [1], [0, 0, 1, 1], [], []>} : vector<64x8xbf16>, vector<8x4xbf16>, vector<64x4xf32> -> vector<64x4xf32>
    %184 = arith.addf %176, %183 : vector<64x4xf32>
    %c0_184 = arith.constant 0 : index
    %c0_185 = arith.constant 0 : index
    %c1_186 = arith.constant 1 : index
    %c2_187 = arith.constant 2 : index
    %c0_188 = arith.constant 0 : index
    %185 = vector.load %arg4[%c0_184, %c0_185, %c1_186, %c2_187, %c0_188] : memref<1x1x10x10x8xf32, #tpu.memory_space<vmem>>, vector<1x1x8x8x8xf32>
    %186 = vector.shape_cast %185 : vector<1x1x8x8x8xf32> to vector<8x8x8xf32>
    %187 = vector.shape_cast %186 : vector<8x8x8xf32> to vector<64x8xf32>
    %188 = arith.truncf %187 : vector<64x8xf32> to vector<64x8xbf16>
    %c23 = arith.constant 23 : index
    %c0_189 = arith.constant 0 : index
    %c0_190 = arith.constant 0 : index
    %189 = vector.load %arg5[%c23, %c0_189, %c0_190] : memref<27x8x4xbf16, #tpu.memory_space<vmem>>, vector<1x8x4xbf16>
    %190 = vector.shape_cast %189 : vector<1x8x4xbf16> to vector<8x4xbf16>
    %cst_191 = arith.constant dense<0.000000e+00> : vector<64x4xf32>
    %191 = tpu.matmul %188, %190, %cst_191 {dimension_numbers = #tpu.dot_dimension_numbers<[1], [0], [0], [1], [0, 0, 1, 1], [], []>} : vector<64x8xbf16>, vector<8x4xbf16>, vector<64x4xf32> -> vector<64x4xf32>
    %192 = arith.addf %184, %191 : vector<64x4xf32>
    %c0_192 = arith.constant 0 : index
    %c0_193 = arith.constant 0 : index
    %c2_194 = arith.constant 2 : index
    %c0_195 = arith.constant 0 : index
    %c0_196 = arith.constant 0 : index
    %193 = vector.load %arg4[%c0_192, %c0_193, %c2_194, %c0_195, %c0_196] : memref<1x1x10x10x8xf32, #tpu.memory_space<vmem>>, vector<1x1x8x8x8xf32>
    %194 = vector.shape_cast %193 : vector<1x1x8x8x8xf32> to vector<8x8x8xf32>
    %195 = vector.shape_cast %194 : vector<8x8x8xf32> to vector<64x8xf32>
    %196 = arith.truncf %195 : vector<64x8xf32> to vector<64x8xbf16>
    %c24 = arith.constant 24 : index
    %c0_197 = arith.constant 0 : index
    %c0_198 = arith.constant 0 : index
    %197 = vector.load %arg5[%c24, %c0_197, %c0_198] : memref<27x8x4xbf16, #tpu.memory_space<vmem>>, vector<1x8x4xbf16>
    %198 = vector.shape_cast %197 : vector<1x8x4xbf16> to vector<8x4xbf16>
    %cst_199 = arith.constant dense<0.000000e+00> : vector<64x4xf32>
    %199 = tpu.matmul %196, %198, %cst_199 {dimension_numbers = #tpu.dot_dimension_numbers<[1], [0], [0], [1], [0, 0, 1, 1], [], []>} : vector<64x8xbf16>, vector<8x4xbf16>, vector<64x4xf32> -> vector<64x4xf32>
    %200 = arith.addf %192, %199 : vector<64x4xf32>
    %c0_200 = arith.constant 0 : index
    %c0_201 = arith.constant 0 : index
    %c2_202 = arith.constant 2 : index
    %c1_203 = arith.constant 1 : index
    %c0_204 = arith.constant 0 : index
    %201 = vector.load %arg4[%c0_200, %c0_201, %c2_202, %c1_203, %c0_204] : memref<1x1x10x10x8xf32, #tpu.memory_space<vmem>>, vector<1x1x8x8x8xf32>
    %202 = vector.shape_cast %201 : vector<1x1x8x8x8xf32> to vector<8x8x8xf32>
    %203 = vector.shape_cast %202 : vector<8x8x8xf32> to vector<64x8xf32>
    %204 = arith.truncf %203 : vector<64x8xf32> to vector<64x8xbf16>
    %c25 = arith.constant 25 : index
    %c0_205 = arith.constant 0 : index
    %c0_206 = arith.constant 0 : index
    %205 = vector.load %arg5[%c25, %c0_205, %c0_206] : memref<27x8x4xbf16, #tpu.memory_space<vmem>>, vector<1x8x4xbf16>
    %206 = vector.shape_cast %205 : vector<1x8x4xbf16> to vector<8x4xbf16>
    %cst_207 = arith.constant dense<0.000000e+00> : vector<64x4xf32>
    %207 = tpu.matmul %204, %206, %cst_207 {dimension_numbers = #tpu.dot_dimension_numbers<[1], [0], [0], [1], [0, 0, 1, 1], [], []>} : vector<64x8xbf16>, vector<8x4xbf16>, vector<64x4xf32> -> vector<64x4xf32>
    %208 = arith.addf %200, %207 : vector<64x4xf32>
    %c0_208 = arith.constant 0 : index
    %c0_209 = arith.constant 0 : index
    %c2_210 = arith.constant 2 : index
    %c2_211 = arith.constant 2 : index
    %c0_212 = arith.constant 0 : index
    %209 = vector.load %arg4[%c0_208, %c0_209, %c2_210, %c2_211, %c0_212] : memref<1x1x10x10x8xf32, #tpu.memory_space<vmem>>, vector<1x1x8x8x8xf32>
    %210 = vector.shape_cast %209 : vector<1x1x8x8x8xf32> to vector<8x8x8xf32>
    %211 = vector.shape_cast %210 : vector<8x8x8xf32> to vector<64x8xf32>
    %212 = arith.truncf %211 : vector<64x8xf32> to vector<64x8xbf16>
    %c26 = arith.constant 26 : index
    %c0_213 = arith.constant 0 : index
    %c0_214 = arith.constant 0 : index
    %213 = vector.load %arg5[%c26, %c0_213, %c0_214] : memref<27x8x4xbf16, #tpu.memory_space<vmem>>, vector<1x8x4xbf16>
    %214 = vector.shape_cast %213 : vector<1x8x4xbf16> to vector<8x4xbf16>
    %cst_215 = arith.constant dense<0.000000e+00> : vector<64x4xf32>
    %215 = tpu.matmul %212, %214, %cst_215 {dimension_numbers = #tpu.dot_dimension_numbers<[1], [0], [0], [1], [0, 0, 1, 1], [], []>} : vector<64x8xbf16>, vector<8x4xbf16>, vector<64x4xf32> -> vector<64x4xf32>
    %216 = arith.addf %208, %215 : vector<64x4xf32>
    %c0_216 = arith.constant 0 : index
    %c0_217 = arith.constant 0 : index
    %217 = vector.load %arg6[%c0_216, %c0_217] : memref<1x4xf32, #tpu.memory_space<vmem>>, vector<1x4xf32>
    %218 = vector.shape_cast %217 : vector<1x4xf32> to vector<4xf32>
    %219 = vector.shape_cast %218 : vector<4xf32> to vector<1x4xf32>
    %220 = vector.broadcast %219 : vector<1x4xf32> to vector<64x4xf32>
    %221 = arith.addf %216, %220 : vector<64x4xf32>
    %222 = vector.shape_cast %221 : vector<64x4xf32> to vector<1x64x4xf32>
    %cst_218 = arith.constant dense<0.000000e+00> : vector<1xf32>
    %223 = vector.multi_reduction <add>, %222, %cst_218 [1, 2] : vector<1x64x4xf32> to vector<1xf32>
    %224 = vector.shape_cast %223 : vector<1xf32> to vector<1x1x1xf32>
    %225 = vector.extract %224[0, 0, 0] : f32 from vector<1x1x1xf32>
    %226 = arith.mulf %221, %221 : vector<64x4xf32>
    %227 = vector.shape_cast %226 : vector<64x4xf32> to vector<1x64x4xf32>
    %cst_219 = arith.constant dense<0.000000e+00> : vector<1xf32>
    %228 = vector.multi_reduction <add>, %227, %cst_219 [1, 2] : vector<1x64x4xf32> to vector<1xf32>
    %229 = vector.shape_cast %228 : vector<1xf32> to vector<1x1x1xf32>
    %230 = vector.extract %229[0, 0, 0] : f32 from vector<1x1x1xf32>
    %231 = vector.shape_cast %221 : vector<64x4xf32> to vector<1x1x8x8x4xf32>
    %c0_220 = arith.constant 0 : index
    %c0_221 = arith.constant 0 : index
    %c0_222 = arith.constant 0 : index
    %c0_223 = arith.constant 0 : index
    %c0_224 = arith.constant 0 : index
    %232 = vector.load %arg7[%c0_220, %c0_221, %c0_222, %c0_223, %c0_224] : memref<1x1x8x8x4xf32, #tpu.memory_space<vmem>>, vector<1x1x8x8x4xf32>
    tpu.vector_store %arg7[%c0_220, %c0_221, %c0_222, %c0_223, %c0_224], %231 {strides = array<i32>} : memref<1x1x8x8x4xf32, #tpu.memory_space<vmem>>, vector<1x1x8x8x4xf32>,
    %233 = vector.broadcast %225 : f32 to vector<1x1x1x128xf32>
    %234 = vector.broadcast %230 : f32 to vector<1x1x1x128xf32>
    %235 = tpu.concatenate %233, %234 in 2 : vector<1x1x1x128xf32>, vector<1x1x1x128xf32> -> vector<1x1x2x128xf32>
    %c0_225 = arith.constant 0 : index
    %c0_226 = arith.constant 0 : index
    %c0_227 = arith.constant 0 : index
    %c0_228 = arith.constant 0 : index
    %236 = vector.load %arg8[%c0_225, %c0_226, %c0_227, %c0_228] : memref<1x1x2x128xf32, #tpu.memory_space<vmem>>, vector<1x1x2x128xf32>
    tpu.vector_store %arg8[%c0_225, %c0_226, %c0_227, %c0_228], %235 {strides = array<i32>} : memref<1x1x2x128xf32, #tpu.memory_space<vmem>>, vector<1x1x2x128xf32>,
    return
  }
  func.func @transform_0(%arg0: i32, %arg1: i32) -> (i32, i32, i32, i32, i32) {
    %c0_i32 = arith.constant 0 : i32
    %0 = arith.addi %arg1, %c0_i32 : i32
    %c0_i32_0 = arith.constant 0 : i32
    %c0_i32_1 = arith.constant 0 : i32
    %c0_i32_2 = arith.constant 0 : i32
    %c0_i32_3 = arith.constant 0 : i32
    return %arg0, %0, %c0_i32_0, %c0_i32_1, %c0_i32_2 : i32, i32, i32, i32, i32
  }
  func.func @transform_1(%arg0: i32, %arg1: i32) -> (i32, i32, i32, i32, i32) {
    %c1_i32 = arith.constant 1 : i32
    %0 = arith.addi %arg1, %c1_i32 : i32
    %c0_i32 = arith.constant 0 : i32
    %c0_i32_0 = arith.constant 0 : i32
    %c0_i32_1 = arith.constant 0 : i32
    %c0_i32_2 = arith.constant 0 : i32
    return %arg0, %0, %c0_i32, %c0_i32_0, %c0_i32_1 : i32, i32, i32, i32, i32
  }
  func.func @transform_2(%arg0: i32, %arg1: i32) -> (i32, i32, i32, i32, i32) {
    %c2_i32 = arith.constant 2 : i32
    %0 = arith.addi %arg1, %c2_i32 : i32
    %c0_i32 = arith.constant 0 : i32
    %c0_i32_0 = arith.constant 0 : i32
    %c0_i32_1 = arith.constant 0 : i32
    %c0_i32_2 = arith.constant 0 : i32
    return %arg0, %0, %c0_i32, %c0_i32_0, %c0_i32_1 : i32, i32, i32, i32, i32
  }
  func.func @transform_3(%arg0: i32, %arg1: i32) -> (i32, i32, i32) {
    %c0_i32 = arith.constant 0 : i32
    %c0_i32_0 = arith.constant 0 : i32
    %c0_i32_1 = arith.constant 0 : i32
    %c0_i32_2 = arith.constant 0 : i32
    return %c0_i32, %c0_i32_0, %c0_i32_1 : i32, i32, i32
  }
  func.func @transform_4(%arg0: i32, %arg1: i32) -> (i32, i32) {
    %c0_i32 = arith.constant 0 : i32
    %c0_i32_0 = arith.constant 0 : i32
    %c0_i32_1 = arith.constant 0 : i32
    return %c0_i32, %c0_i32_0 : i32, i32
  }
  func.func @transform_5(%arg0: i32, %arg1: i32) -> (i32, i32, i32, i32, i32) {
    %c0_i32 = arith.constant 0 : i32
    %c0_i32_0 = arith.constant 0 : i32
    %c0_i32_1 = arith.constant 0 : i32
    %c0_i32_2 = arith.constant 0 : i32
    return %arg0, %arg1, %c0_i32, %c0_i32_0, %c0_i32_1 : i32, i32, i32, i32, i32
  }
  func.func @transform_6(%arg0: i32, %arg1: i32) -> (i32, i32, i32, i32) {
    %c0_i32 = arith.constant 0 : i32
    %c0_i32_0 = arith.constant 0 : i32
    %c0_i32_1 = arith.constant 0 : i32
    return %arg0, %arg1, %c0_i32, %c0_i32_0 : i32, i32, i32, i32
  }
}

module attributes {stable_mosaic.version = 11 : i64} {
  func.func @_norm_silu_kernel(%arg0: i32, %arg1: i32, %arg2: memref<1x1x8x8x4xf32, #tpu.memory_space<vmem>>, %arg3: memref<1x1x4xf32, #tpu.memory_space<vmem>>, %arg4: memref<1x1x4xf32, #tpu.memory_space<vmem>>, %arg5: memref<1x1x8x8x4xf32, #tpu.memory_space<vmem>>) attributes {dimension_semantics = [#tpu.dimension_semantics<parallel>, #tpu.dimension_semantics<parallel>], iteration_bounds = array<i64: 2, 8>, scalar_prefetch = 0 : i64, scratch_operands = 0 : i64, tpu.core_type = #tpu.core_type<tc>, window_params = [{transform_indices = @transform_0, window_bounds = array<i64: 1, 1, 8, 8, 4>}, {transform_indices = @transform_1, window_bounds = array<i64: 1, 1, 4>}, {transform_indices = @transform_2, window_bounds = array<i64: 1, 1, 4>}, {transform_indices = @transform_3, window_bounds = array<i64: 1, 1, 8, 8, 4>}]} {
    %c0 = arith.constant 0 : index
    %c0_0 = arith.constant 0 : index
    %c0_1 = arith.constant 0 : index
    %c0_2 = arith.constant 0 : index
    %c0_3 = arith.constant 0 : index
    %0 = vector.load %arg2[%c0, %c0_0, %c0_1, %c0_2, %c0_3] : memref<1x1x8x8x4xf32, #tpu.memory_space<vmem>>, vector<1x1x8x8x4xf32>
    %c0_4 = arith.constant 0 : index
    %c0_5 = arith.constant 0 : index
    %c0_6 = arith.constant 0 : index
    %1 = vector.load %arg3[%c0_4, %c0_5, %c0_6] : memref<1x1x4xf32, #tpu.memory_space<vmem>>, vector<1x1x4xf32>
    %2 = vector.shape_cast %1 : vector<1x1x4xf32> to vector<4xf32>
    %3 = vector.shape_cast %2 : vector<4xf32> to vector<1x1x1x1x4xf32>
    %4 = vector.broadcast %3 : vector<1x1x1x1x4xf32> to vector<1x1x8x8x4xf32>
    %5 = arith.mulf %0, %4 : vector<1x1x8x8x4xf32>
    %c0_7 = arith.constant 0 : index
    %c0_8 = arith.constant 0 : index
    %c0_9 = arith.constant 0 : index
    %6 = vector.load %arg4[%c0_7, %c0_8, %c0_9] : memref<1x1x4xf32, #tpu.memory_space<vmem>>, vector<1x1x4xf32>
    %7 = vector.shape_cast %6 : vector<1x1x4xf32> to vector<4xf32>
    %8 = vector.shape_cast %7 : vector<4xf32> to vector<1x1x1x1x4xf32>
    %9 = vector.broadcast %8 : vector<1x1x1x1x4xf32> to vector<1x1x8x8x4xf32>
    %10 = arith.addf %5, %9 : vector<1x1x8x8x4xf32>
    %11 = arith.negf %10 : vector<1x1x8x8x4xf32>
    %12 = math.exp %11 : vector<1x1x8x8x4xf32>
    %cst = arith.constant 1.000000e+00 : f32
    %13 = vector.broadcast %cst : f32 to vector<1x1x8x8x4xf32>
    %14 = arith.addf %13, %12 : vector<1x1x8x8x4xf32>
    %15 = arith.divf %13, %14 : vector<1x1x8x8x4xf32>
    %16 = arith.mulf %10, %15 : vector<1x1x8x8x4xf32>
    %c0_10 = arith.constant 0 : index
    %c0_11 = arith.constant 0 : index
    %c0_12 = arith.constant 0 : index
    %c0_13 = arith.constant 0 : index
    %c0_14 = arith.constant 0 : index
    %17 = vector.load %arg5[%c0_10, %c0_11, %c0_12, %c0_13, %c0_14] : memref<1x1x8x8x4xf32, #tpu.memory_space<vmem>>, vector<1x1x8x8x4xf32>
    tpu.vector_store %arg5[%c0_10, %c0_11, %c0_12, %c0_13, %c0_14], %16 {strides = array<i32>} : memref<1x1x8x8x4xf32, #tpu.memory_space<vmem>>, vector<1x1x8x8x4xf32>,
    return
  }
  func.func @transform_0(%arg0: i32, %arg1: i32) -> (i32, i32, i32, i32, i32) {
    %c0_i32 = arith.constant 0 : i32
    %c0_i32_0 = arith.constant 0 : i32
    %c0_i32_1 = arith.constant 0 : i32
    %c0_i32_2 = arith.constant 0 : i32
    return %arg0, %arg1, %c0_i32, %c0_i32_0, %c0_i32_1 : i32, i32, i32, i32, i32
  }
  func.func @transform_1(%arg0: i32, %arg1: i32) -> (i32, i32, i32) {
    %c0_i32 = arith.constant 0 : i32
    %c0_i32_0 = arith.constant 0 : i32
    %c0_i32_1 = arith.constant 0 : i32
    return %arg0, %c0_i32, %c0_i32_0 : i32, i32, i32
  }
  func.func @transform_2(%arg0: i32, %arg1: i32) -> (i32, i32, i32) {
    %c0_i32 = arith.constant 0 : i32
    %c0_i32_0 = arith.constant 0 : i32
    %c0_i32_1 = arith.constant 0 : i32
    return %arg0, %c0_i32, %c0_i32_0 : i32, i32, i32
  }
  func.func @transform_3(%arg0: i32, %arg1: i32) -> (i32, i32, i32, i32, i32) {
    %c0_i32 = arith.constant 0 : i32
    %c0_i32_0 = arith.constant 0 : i32
    %c0_i32_1 = arith.constant 0 : i32
    %c0_i32_2 = arith.constant 0 : i32
    return %arg0, %arg1, %c0_i32, %c0_i32_0, %c0_i32_1 : i32, i32, i32, i32, i32
  }
}

module attributes {stable_mosaic.version = 11 : i64} {
  func.func @_conv3_stats_kernel(%arg0: i32, %arg1: i32, %arg2: memref<1x1x10x10x4xf32, #tpu.memory_space<vmem>>, %arg3: memref<1x1x10x10x4xf32, #tpu.memory_space<vmem>>, %arg4: memref<1x1x10x10x4xf32, #tpu.memory_space<vmem>>, %arg5: memref<27x4x2xbf16, #tpu.memory_space<vmem>>, %arg6: memref<1x2xf32, #tpu.memory_space<vmem>>, %arg7: memref<1x1x8x8x2xf32, #tpu.memory_space<vmem>>, %arg8: memref<1x1x2x128xf32, #tpu.memory_space<vmem>>) attributes {dimension_semantics = [#tpu.dimension_semantics<parallel>, #tpu.dimension_semantics<parallel>], iteration_bounds = array<i64: 2, 8>, scalar_prefetch = 0 : i64, scratch_operands = 0 : i64, tpu.core_type = #tpu.core_type<tc>, window_params = [{transform_indices = @transform_0, window_bounds = array<i64: 1, 1, 10, 10, 4>}, {transform_indices = @transform_1, window_bounds = array<i64: 1, 1, 10, 10, 4>}, {transform_indices = @transform_2, window_bounds = array<i64: 1, 1, 10, 10, 4>}, {pipeline_mode = #tpu.pipeline_mode<synchronous>, transform_indices = @transform_3, window_bounds = array<i64: 27, 4, 2>}, {pipeline_mode = #tpu.pipeline_mode<synchronous>, transform_indices = @transform_4, window_bounds = array<i64: 1, 2>}, {transform_indices = @transform_5, window_bounds = array<i64: 1, 1, 8, 8, 2>}, {transform_indices = @transform_6, window_bounds = array<i64: 1, 1, 2, 128>}]} {
    %cst = arith.constant 0.000000e+00 : f32
    %0 = vector.broadcast %cst : f32 to vector<64x2xf32>
    %c0 = arith.constant 0 : index
    %c0_0 = arith.constant 0 : index
    %c0_1 = arith.constant 0 : index
    %c0_2 = arith.constant 0 : index
    %c0_3 = arith.constant 0 : index
    %1 = vector.load %arg2[%c0, %c0_0, %c0_1, %c0_2, %c0_3] : memref<1x1x10x10x4xf32, #tpu.memory_space<vmem>>, vector<1x1x8x8x4xf32>
    %2 = vector.shape_cast %1 : vector<1x1x8x8x4xf32> to vector<8x8x4xf32>
    %3 = vector.shape_cast %2 : vector<8x8x4xf32> to vector<64x4xf32>
    %4 = arith.truncf %3 : vector<64x4xf32> to vector<64x4xbf16>
    %c0_4 = arith.constant 0 : index
    %c0_5 = arith.constant 0 : index
    %c0_6 = arith.constant 0 : index
    %5 = vector.load %arg5[%c0_4, %c0_5, %c0_6] : memref<27x4x2xbf16, #tpu.memory_space<vmem>>, vector<1x4x2xbf16>
    %6 = vector.shape_cast %5 : vector<1x4x2xbf16> to vector<4x2xbf16>
    %cst_7 = arith.constant dense<0.000000e+00> : vector<64x2xf32>
    %7 = tpu.matmul %4, %6, %cst_7 {dimension_numbers = #tpu.dot_dimension_numbers<[1], [0], [0], [1], [0, 0, 1, 1], [], []>} : vector<64x4xbf16>, vector<4x2xbf16>, vector<64x2xf32> -> vector<64x2xf32>
    %8 = arith.addf %0, %7 : vector<64x2xf32>
    %c0_8 = arith.constant 0 : index
    %c0_9 = arith.constant 0 : index
    %c0_10 = arith.constant 0 : index
    %c1 = arith.constant 1 : index
    %c0_11 = arith.constant 0 : index
    %9 = vector.load %arg2[%c0_8, %c0_9, %c0_10, %c1, %c0_11] : memref<1x1x10x10x4xf32, #tpu.memory_space<vmem>>, vector<1x1x8x8x4xf32>
    %10 = vector.shape_cast %9 : vector<1x1x8x8x4xf32> to vector<8x8x4xf32>
    %11 = vector.shape_cast %10 : vector<8x8x4xf32> to vector<64x4xf32>
    %12 = arith.truncf %11 : vector<64x4xf32> to vector<64x4xbf16>
    %c1_12 = arith.constant 1 : index
    %c0_13 = arith.constant 0 : index
    %c0_14 = arith.constant 0 : index
    %13 = vector.load %arg5[%c1_12, %c0_13, %c0_14] : memref<27x4x2xbf16, #tpu.memory_space<vmem>>, vector<1x4x2xbf16>
    %14 = vector.shape_cast %13 : vector<1x4x2xbf16> to vector<4x2xbf16>
    %cst_15 = arith.constant dense<0.000000e+00> : vector<64x2xf32>
    %15 = tpu.matmul %12, %14, %cst_15 {dimension_numbers = #tpu.dot_dimension_numbers<[1], [0], [0], [1], [0, 0, 1, 1], [], []>} : vector<64x4xbf16>, vector<4x2xbf16>, vector<64x2xf32> -> vector<64x2xf32>
    %16 = arith.addf %8, %15 : vector<64x2xf32>
    %c0_16 = arith.constant 0 : index
    %c0_17 = arith.constant 0 : index
    %c0_18 = arith.constant 0 : index
    %c2 = arith.constant 2 : index
    %c0_19 = arith.constant 0 : index
    %17 = vector.load %arg2[%c0_16, %c0_17, %c0_18, %c2, %c0_19] : memref<1x1x10x10x4xf32, #tpu.memory_space<vmem>>, vector<1x1x8x8x4xf32>
    %18 = vector.shape_cast %17 : vector<1x1x8x8x4xf32> to vector<8x8x4xf32>
    %19 = vector.shape_cast %18 : vector<8x8x4xf32> to vector<64x4xf32>
    %20 = arith.truncf %19 : vector<64x4xf32> to vector<64x4xbf16>
    %c2_20 = arith.constant 2 : index
    %c0_21 = arith.constant 0 : index
    %c0_22 = arith.constant 0 : index
    %21 = vector.load %arg5[%c2_20, %c0_21, %c0_22] : memref<27x4x2xbf16, #tpu.memory_space<vmem>>, vector<1x4x2xbf16>
    %22 = vector.shape_cast %21 : vector<1x4x2xbf16> to vector<4x2xbf16>
    %cst_23 = arith.constant dense<0.000000e+00> : vector<64x2xf32>
    %23 = tpu.matmul %20, %22, %cst_23 {dimension_numbers = #tpu.dot_dimension_numbers<[1], [0], [0], [1], [0, 0, 1, 1], [], []>} : vector<64x4xbf16>, vector<4x2xbf16>, vector<64x2xf32> -> vector<64x2xf32>
    %24 = arith.addf %16, %23 : vector<64x2xf32>
    %c0_24 = arith.constant 0 : index
    %c0_25 = arith.constant 0 : index
    %c1_26 = arith.constant 1 : index
    %c0_27 = arith.constant 0 : index
    %c0_28 = arith.constant 0 : index
    %25 = vector.load %arg2[%c0_24, %c0_25, %c1_26, %c0_27, %c0_28] : memref<1x1x10x10x4xf32, #tpu.memory_space<vmem>>, vector<1x1x8x8x4xf32>
    %26 = vector.shape_cast %25 : vector<1x1x8x8x4xf32> to vector<8x8x4xf32>
    %27 = vector.shape_cast %26 : vector<8x8x4xf32> to vector<64x4xf32>
    %28 = arith.truncf %27 : vector<64x4xf32> to vector<64x4xbf16>
    %c3 = arith.constant 3 : index
    %c0_29 = arith.constant 0 : index
    %c0_30 = arith.constant 0 : index
    %29 = vector.load %arg5[%c3, %c0_29, %c0_30] : memref<27x4x2xbf16, #tpu.memory_space<vmem>>, vector<1x4x2xbf16>
    %30 = vector.shape_cast %29 : vector<1x4x2xbf16> to vector<4x2xbf16>
    %cst_31 = arith.constant dense<0.000000e+00> : vector<64x2xf32>
    %31 = tpu.matmul %28, %30, %cst_31 {dimension_numbers = #tpu.dot_dimension_numbers<[1], [0], [0], [1], [0, 0, 1, 1], [], []>} : vector<64x4xbf16>, vector<4x2xbf16>, vector<64x2xf32> -> vector<64x2xf32>
    %32 = arith.addf %24, %31 : vector<64x2xf32>
    %c0_32 = arith.constant 0 : index
    %c0_33 = arith.constant 0 : index
    %c1_34 = arith.constant 1 : index
    %c1_35 = arith.constant 1 : index
    %c0_36 = arith.constant 0 : index
    %33 = vector.load %arg2[%c0_32, %c0_33, %c1_34, %c1_35, %c0_36] : memref<1x1x10x10x4xf32, #tpu.memory_space<vmem>>, vector<1x1x8x8x4xf32>
    %34 = vector.shape_cast %33 : vector<1x1x8x8x4xf32> to vector<8x8x4xf32>
    %35 = vector.shape_cast %34 : vector<8x8x4xf32> to vector<64x4xf32>
    %36 = arith.truncf %35 : vector<64x4xf32> to vector<64x4xbf16>
    %c4 = arith.constant 4 : index
    %c0_37 = arith.constant 0 : index
    %c0_38 = arith.constant 0 : index
    %37 = vector.load %arg5[%c4, %c0_37, %c0_38] : memref<27x4x2xbf16, #tpu.memory_space<vmem>>, vector<1x4x2xbf16>
    %38 = vector.shape_cast %37 : vector<1x4x2xbf16> to vector<4x2xbf16>
    %cst_39 = arith.constant dense<0.000000e+00> : vector<64x2xf32>
    %39 = tpu.matmul %36, %38, %cst_39 {dimension_numbers = #tpu.dot_dimension_numbers<[1], [0], [0], [1], [0, 0, 1, 1], [], []>} : vector<64x4xbf16>, vector<4x2xbf16>, vector<64x2xf32> -> vector<64x2xf32>
    %40 = arith.addf %32, %39 : vector<64x2xf32>
    %c0_40 = arith.constant 0 : index
    %c0_41 = arith.constant 0 : index
    %c1_42 = arith.constant 1 : index
    %c2_43 = arith.constant 2 : index
    %c0_44 = arith.constant 0 : index
    %41 = vector.load %arg2[%c0_40, %c0_41, %c1_42, %c2_43, %c0_44] : memref<1x1x10x10x4xf32, #tpu.memory_space<vmem>>, vector<1x1x8x8x4xf32>
    %42 = vector.shape_cast %41 : vector<1x1x8x8x4xf32> to vector<8x8x4xf32>
    %43 = vector.shape_cast %42 : vector<8x8x4xf32> to vector<64x4xf32>
    %44 = arith.truncf %43 : vector<64x4xf32> to vector<64x4xbf16>
    %c5 = arith.constant 5 : index
    %c0_45 = arith.constant 0 : index
    %c0_46 = arith.constant 0 : index
    %45 = vector.load %arg5[%c5, %c0_45, %c0_46] : memref<27x4x2xbf16, #tpu.memory_space<vmem>>, vector<1x4x2xbf16>
    %46 = vector.shape_cast %45 : vector<1x4x2xbf16> to vector<4x2xbf16>
    %cst_47 = arith.constant dense<0.000000e+00> : vector<64x2xf32>
    %47 = tpu.matmul %44, %46, %cst_47 {dimension_numbers = #tpu.dot_dimension_numbers<[1], [0], [0], [1], [0, 0, 1, 1], [], []>} : vector<64x4xbf16>, vector<4x2xbf16>, vector<64x2xf32> -> vector<64x2xf32>
    %48 = arith.addf %40, %47 : vector<64x2xf32>
    %c0_48 = arith.constant 0 : index
    %c0_49 = arith.constant 0 : index
    %c2_50 = arith.constant 2 : index
    %c0_51 = arith.constant 0 : index
    %c0_52 = arith.constant 0 : index
    %49 = vector.load %arg2[%c0_48, %c0_49, %c2_50, %c0_51, %c0_52] : memref<1x1x10x10x4xf32, #tpu.memory_space<vmem>>, vector<1x1x8x8x4xf32>
    %50 = vector.shape_cast %49 : vector<1x1x8x8x4xf32> to vector<8x8x4xf32>
    %51 = vector.shape_cast %50 : vector<8x8x4xf32> to vector<64x4xf32>
    %52 = arith.truncf %51 : vector<64x4xf32> to vector<64x4xbf16>
    %c6 = arith.constant 6 : index
    %c0_53 = arith.constant 0 : index
    %c0_54 = arith.constant 0 : index
    %53 = vector.load %arg5[%c6, %c0_53, %c0_54] : memref<27x4x2xbf16, #tpu.memory_space<vmem>>, vector<1x4x2xbf16>
    %54 = vector.shape_cast %53 : vector<1x4x2xbf16> to vector<4x2xbf16>
    %cst_55 = arith.constant dense<0.000000e+00> : vector<64x2xf32>
    %55 = tpu.matmul %52, %54, %cst_55 {dimension_numbers = #tpu.dot_dimension_numbers<[1], [0], [0], [1], [0, 0, 1, 1], [], []>} : vector<64x4xbf16>, vector<4x2xbf16>, vector<64x2xf32> -> vector<64x2xf32>
    %56 = arith.addf %48, %55 : vector<64x2xf32>
    %c0_56 = arith.constant 0 : index
    %c0_57 = arith.constant 0 : index
    %c2_58 = arith.constant 2 : index
    %c1_59 = arith.constant 1 : index
    %c0_60 = arith.constant 0 : index
    %57 = vector.load %arg2[%c0_56, %c0_57, %c2_58, %c1_59, %c0_60] : memref<1x1x10x10x4xf32, #tpu.memory_space<vmem>>, vector<1x1x8x8x4xf32>
    %58 = vector.shape_cast %57 : vector<1x1x8x8x4xf32> to vector<8x8x4xf32>
    %59 = vector.shape_cast %58 : vector<8x8x4xf32> to vector<64x4xf32>
    %60 = arith.truncf %59 : vector<64x4xf32> to vector<64x4xbf16>
    %c7 = arith.constant 7 : index
    %c0_61 = arith.constant 0 : index
    %c0_62 = arith.constant 0 : index
    %61 = vector.load %arg5[%c7, %c0_61, %c0_62] : memref<27x4x2xbf16, #tpu.memory_space<vmem>>, vector<1x4x2xbf16>
    %62 = vector.shape_cast %61 : vector<1x4x2xbf16> to vector<4x2xbf16>
    %cst_63 = arith.constant dense<0.000000e+00> : vector<64x2xf32>
    %63 = tpu.matmul %60, %62, %cst_63 {dimension_numbers = #tpu.dot_dimension_numbers<[1], [0], [0], [1], [0, 0, 1, 1], [], []>} : vector<64x4xbf16>, vector<4x2xbf16>, vector<64x2xf32> -> vector<64x2xf32>
    %64 = arith.addf %56, %63 : vector<64x2xf32>
    %c0_64 = arith.constant 0 : index
    %c0_65 = arith.constant 0 : index
    %c2_66 = arith.constant 2 : index
    %c2_67 = arith.constant 2 : index
    %c0_68 = arith.constant 0 : index
    %65 = vector.load %arg2[%c0_64, %c0_65, %c2_66, %c2_67, %c0_68] : memref<1x1x10x10x4xf32, #tpu.memory_space<vmem>>, vector<1x1x8x8x4xf32>
    %66 = vector.shape_cast %65 : vector<1x1x8x8x4xf32> to vector<8x8x4xf32>
    %67 = vector.shape_cast %66 : vector<8x8x4xf32> to vector<64x4xf32>
    %68 = arith.truncf %67 : vector<64x4xf32> to vector<64x4xbf16>
    %c8 = arith.constant 8 : index
    %c0_69 = arith.constant 0 : index
    %c0_70 = arith.constant 0 : index
    %69 = vector.load %arg5[%c8, %c0_69, %c0_70] : memref<27x4x2xbf16, #tpu.memory_space<vmem>>, vector<1x4x2xbf16>
    %70 = vector.shape_cast %69 : vector<1x4x2xbf16> to vector<4x2xbf16>
    %cst_71 = arith.constant dense<0.000000e+00> : vector<64x2xf32>
    %71 = tpu.matmul %68, %70, %cst_71 {dimension_numbers = #tpu.dot_dimension_numbers<[1], [0], [0], [1], [0, 0, 1, 1], [], []>} : vector<64x4xbf16>, vector<4x2xbf16>, vector<64x2xf32> -> vector<64x2xf32>
    %72 = arith.addf %64, %71 : vector<64x2xf32>
    %c0_72 = arith.constant 0 : index
    %c0_73 = arith.constant 0 : index
    %c0_74 = arith.constant 0 : index
    %c0_75 = arith.constant 0 : index
    %c0_76 = arith.constant 0 : index
    %73 = vector.load %arg3[%c0_72, %c0_73, %c0_74, %c0_75, %c0_76] : memref<1x1x10x10x4xf32, #tpu.memory_space<vmem>>, vector<1x1x8x8x4xf32>
    %74 = vector.shape_cast %73 : vector<1x1x8x8x4xf32> to vector<8x8x4xf32>
    %75 = vector.shape_cast %74 : vector<8x8x4xf32> to vector<64x4xf32>
    %76 = arith.truncf %75 : vector<64x4xf32> to vector<64x4xbf16>
    %c9 = arith.constant 9 : index
    %c0_77 = arith.constant 0 : index
    %c0_78 = arith.constant 0 : index
    %77 = vector.load %arg5[%c9, %c0_77, %c0_78] : memref<27x4x2xbf16, #tpu.memory_space<vmem>>, vector<1x4x2xbf16>
    %78 = vector.shape_cast %77 : vector<1x4x2xbf16> to vector<4x2xbf16>
    %cst_79 = arith.constant dense<0.000000e+00> : vector<64x2xf32>
    %79 = tpu.matmul %76, %78, %cst_79 {dimension_numbers = #tpu.dot_dimension_numbers<[1], [0], [0], [1], [0, 0, 1, 1], [], []>} : vector<64x4xbf16>, vector<4x2xbf16>, vector<64x2xf32> -> vector<64x2xf32>
    %80 = arith.addf %72, %79 : vector<64x2xf32>
    %c0_80 = arith.constant 0 : index
    %c0_81 = arith.constant 0 : index
    %c0_82 = arith.constant 0 : index
    %c1_83 = arith.constant 1 : index
    %c0_84 = arith.constant 0 : index
    %81 = vector.load %arg3[%c0_80, %c0_81, %c0_82, %c1_83, %c0_84] : memref<1x1x10x10x4xf32, #tpu.memory_space<vmem>>, vector<1x1x8x8x4xf32>
    %82 = vector.shape_cast %81 : vector<1x1x8x8x4xf32> to vector<8x8x4xf32>
    %83 = vector.shape_cast %82 : vector<8x8x4xf32> to vector<64x4xf32>
    %84 = arith.truncf %83 : vector<64x4xf32> to vector<64x4xbf16>
    %c10 = arith.constant 10 : index
    %c0_85 = arith.constant 0 : index
    %c0_86 = arith.constant 0 : index
    %85 = vector.load %arg5[%c10, %c0_85, %c0_86] : memref<27x4x2xbf16, #tpu.memory_space<vmem>>, vector<1x4x2xbf16>
    %86 = vector.shape_cast %85 : vector<1x4x2xbf16> to vector<4x2xbf16>
    %cst_87 = arith.constant dense<0.000000e+00> : vector<64x2xf32>
    %87 = tpu.matmul %84, %86, %cst_87 {dimension_numbers = #tpu.dot_dimension_numbers<[1], [0], [0], [1], [0, 0, 1, 1], [], []>} : vector<64x4xbf16>, vector<4x2xbf16>, vector<64x2xf32> -> vector<64x2xf32>
    %88 = arith.addf %80, %87 : vector<64x2xf32>
    %c0_88 = arith.constant 0 : index
    %c0_89 = arith.constant 0 : index
    %c0_90 = arith.constant 0 : index
    %c2_91 = arith.constant 2 : index
    %c0_92 = arith.constant 0 : index
    %89 = vector.load %arg3[%c0_88, %c0_89, %c0_90, %c2_91, %c0_92] : memref<1x1x10x10x4xf32, #tpu.memory_space<vmem>>, vector<1x1x8x8x4xf32>
    %90 = vector.shape_cast %89 : vector<1x1x8x8x4xf32> to vector<8x8x4xf32>
    %91 = vector.shape_cast %90 : vector<8x8x4xf32> to vector<64x4xf32>
    %92 = arith.truncf %91 : vector<64x4xf32> to vector<64x4xbf16>
    %c11 = arith.constant 11 : index
    %c0_93 = arith.constant 0 : index
    %c0_94 = arith.constant 0 : index
    %93 = vector.load %arg5[%c11, %c0_93, %c0_94] : memref<27x4x2xbf16, #tpu.memory_space<vmem>>, vector<1x4x2xbf16>
    %94 = vector.shape_cast %93 : vector<1x4x2xbf16> to vector<4x2xbf16>
    %cst_95 = arith.constant dense<0.000000e+00> : vector<64x2xf32>
    %95 = tpu.matmul %92, %94, %cst_95 {dimension_numbers = #tpu.dot_dimension_numbers<[1], [0], [0], [1], [0, 0, 1, 1], [], []>} : vector<64x4xbf16>, vector<4x2xbf16>, vector<64x2xf32> -> vector<64x2xf32>
    %96 = arith.addf %88, %95 : vector<64x2xf32>
    %c0_96 = arith.constant 0 : index
    %c0_97 = arith.constant 0 : index
    %c1_98 = arith.constant 1 : index
    %c0_99 = arith.constant 0 : index
    %c0_100 = arith.constant 0 : index
    %97 = vector.load %arg3[%c0_96, %c0_97, %c1_98, %c0_99, %c0_100] : memref<1x1x10x10x4xf32, #tpu.memory_space<vmem>>, vector<1x1x8x8x4xf32>
    %98 = vector.shape_cast %97 : vector<1x1x8x8x4xf32> to vector<8x8x4xf32>
    %99 = vector.shape_cast %98 : vector<8x8x4xf32> to vector<64x4xf32>
    %100 = arith.truncf %99 : vector<64x4xf32> to vector<64x4xbf16>
    %c12 = arith.constant 12 : index
    %c0_101 = arith.constant 0 : index
    %c0_102 = arith.constant 0 : index
    %101 = vector.load %arg5[%c12, %c0_101, %c0_102] : memref<27x4x2xbf16, #tpu.memory_space<vmem>>, vector<1x4x2xbf16>
    %102 = vector.shape_cast %101 : vector<1x4x2xbf16> to vector<4x2xbf16>
    %cst_103 = arith.constant dense<0.000000e+00> : vector<64x2xf32>
    %103 = tpu.matmul %100, %102, %cst_103 {dimension_numbers = #tpu.dot_dimension_numbers<[1], [0], [0], [1], [0, 0, 1, 1], [], []>} : vector<64x4xbf16>, vector<4x2xbf16>, vector<64x2xf32> -> vector<64x2xf32>
    %104 = arith.addf %96, %103 : vector<64x2xf32>
    %c0_104 = arith.constant 0 : index
    %c0_105 = arith.constant 0 : index
    %c1_106 = arith.constant 1 : index
    %c1_107 = arith.constant 1 : index
    %c0_108 = arith.constant 0 : index
    %105 = vector.load %arg3[%c0_104, %c0_105, %c1_106, %c1_107, %c0_108] : memref<1x1x10x10x4xf32, #tpu.memory_space<vmem>>, vector<1x1x8x8x4xf32>
    %106 = vector.shape_cast %105 : vector<1x1x8x8x4xf32> to vector<8x8x4xf32>
    %107 = vector.shape_cast %106 : vector<8x8x4xf32> to vector<64x4xf32>
    %108 = arith.truncf %107 : vector<64x4xf32> to vector<64x4xbf16>
    %c13 = arith.constant 13 : index
    %c0_109 = arith.constant 0 : index
    %c0_110 = arith.constant 0 : index
    %109 = vector.load %arg5[%c13, %c0_109, %c0_110] : memref<27x4x2xbf16, #tpu.memory_space<vmem>>, vector<1x4x2xbf16>
    %110 = vector.shape_cast %109 : vector<1x4x2xbf16> to vector<4x2xbf16>
    %cst_111 = arith.constant dense<0.000000e+00> : vector<64x2xf32>
    %111 = tpu.matmul %108, %110, %cst_111 {dimension_numbers = #tpu.dot_dimension_numbers<[1], [0], [0], [1], [0, 0, 1, 1], [], []>} : vector<64x4xbf16>, vector<4x2xbf16>, vector<64x2xf32> -> vector<64x2xf32>
    %112 = arith.addf %104, %111 : vector<64x2xf32>
    %c0_112 = arith.constant 0 : index
    %c0_113 = arith.constant 0 : index
    %c1_114 = arith.constant 1 : index
    %c2_115 = arith.constant 2 : index
    %c0_116 = arith.constant 0 : index
    %113 = vector.load %arg3[%c0_112, %c0_113, %c1_114, %c2_115, %c0_116] : memref<1x1x10x10x4xf32, #tpu.memory_space<vmem>>, vector<1x1x8x8x4xf32>
    %114 = vector.shape_cast %113 : vector<1x1x8x8x4xf32> to vector<8x8x4xf32>
    %115 = vector.shape_cast %114 : vector<8x8x4xf32> to vector<64x4xf32>
    %116 = arith.truncf %115 : vector<64x4xf32> to vector<64x4xbf16>
    %c14 = arith.constant 14 : index
    %c0_117 = arith.constant 0 : index
    %c0_118 = arith.constant 0 : index
    %117 = vector.load %arg5[%c14, %c0_117, %c0_118] : memref<27x4x2xbf16, #tpu.memory_space<vmem>>, vector<1x4x2xbf16>
    %118 = vector.shape_cast %117 : vector<1x4x2xbf16> to vector<4x2xbf16>
    %cst_119 = arith.constant dense<0.000000e+00> : vector<64x2xf32>
    %119 = tpu.matmul %116, %118, %cst_119 {dimension_numbers = #tpu.dot_dimension_numbers<[1], [0], [0], [1], [0, 0, 1, 1], [], []>} : vector<64x4xbf16>, vector<4x2xbf16>, vector<64x2xf32> -> vector<64x2xf32>
    %120 = arith.addf %112, %119 : vector<64x2xf32>
    %c0_120 = arith.constant 0 : index
    %c0_121 = arith.constant 0 : index
    %c2_122 = arith.constant 2 : index
    %c0_123 = arith.constant 0 : index
    %c0_124 = arith.constant 0 : index
    %121 = vector.load %arg3[%c0_120, %c0_121, %c2_122, %c0_123, %c0_124] : memref<1x1x10x10x4xf32, #tpu.memory_space<vmem>>, vector<1x1x8x8x4xf32>
    %122 = vector.shape_cast %121 : vector<1x1x8x8x4xf32> to vector<8x8x4xf32>
    %123 = vector.shape_cast %122 : vector<8x8x4xf32> to vector<64x4xf32>
    %124 = arith.truncf %123 : vector<64x4xf32> to vector<64x4xbf16>
    %c15 = arith.constant 15 : index
    %c0_125 = arith.constant 0 : index
    %c0_126 = arith.constant 0 : index
    %125 = vector.load %arg5[%c15, %c0_125, %c0_126] : memref<27x4x2xbf16, #tpu.memory_space<vmem>>, vector<1x4x2xbf16>
    %126 = vector.shape_cast %125 : vector<1x4x2xbf16> to vector<4x2xbf16>
    %cst_127 = arith.constant dense<0.000000e+00> : vector<64x2xf32>
    %127 = tpu.matmul %124, %126, %cst_127 {dimension_numbers = #tpu.dot_dimension_numbers<[1], [0], [0], [1], [0, 0, 1, 1], [], []>} : vector<64x4xbf16>, vector<4x2xbf16>, vector<64x2xf32> -> vector<64x2xf32>
    %128 = arith.addf %120, %127 : vector<64x2xf32>
    %c0_128 = arith.constant 0 : index
    %c0_129 = arith.constant 0 : index
    %c2_130 = arith.constant 2 : index
    %c1_131 = arith.constant 1 : index
    %c0_132 = arith.constant 0 : index
    %129 = vector.load %arg3[%c0_128, %c0_129, %c2_130, %c1_131, %c0_132] : memref<1x1x10x10x4xf32, #tpu.memory_space<vmem>>, vector<1x1x8x8x4xf32>
    %130 = vector.shape_cast %129 : vector<1x1x8x8x4xf32> to vector<8x8x4xf32>
    %131 = vector.shape_cast %130 : vector<8x8x4xf32> to vector<64x4xf32>
    %132 = arith.truncf %131 : vector<64x4xf32> to vector<64x4xbf16>
    %c16 = arith.constant 16 : index
    %c0_133 = arith.constant 0 : index
    %c0_134 = arith.constant 0 : index
    %133 = vector.load %arg5[%c16, %c0_133, %c0_134] : memref<27x4x2xbf16, #tpu.memory_space<vmem>>, vector<1x4x2xbf16>
    %134 = vector.shape_cast %133 : vector<1x4x2xbf16> to vector<4x2xbf16>
    %cst_135 = arith.constant dense<0.000000e+00> : vector<64x2xf32>
    %135 = tpu.matmul %132, %134, %cst_135 {dimension_numbers = #tpu.dot_dimension_numbers<[1], [0], [0], [1], [0, 0, 1, 1], [], []>} : vector<64x4xbf16>, vector<4x2xbf16>, vector<64x2xf32> -> vector<64x2xf32>
    %136 = arith.addf %128, %135 : vector<64x2xf32>
    %c0_136 = arith.constant 0 : index
    %c0_137 = arith.constant 0 : index
    %c2_138 = arith.constant 2 : index
    %c2_139 = arith.constant 2 : index
    %c0_140 = arith.constant 0 : index
    %137 = vector.load %arg3[%c0_136, %c0_137, %c2_138, %c2_139, %c0_140] : memref<1x1x10x10x4xf32, #tpu.memory_space<vmem>>, vector<1x1x8x8x4xf32>
    %138 = vector.shape_cast %137 : vector<1x1x8x8x4xf32> to vector<8x8x4xf32>
    %139 = vector.shape_cast %138 : vector<8x8x4xf32> to vector<64x4xf32>
    %140 = arith.truncf %139 : vector<64x4xf32> to vector<64x4xbf16>
    %c17 = arith.constant 17 : index
    %c0_141 = arith.constant 0 : index
    %c0_142 = arith.constant 0 : index
    %141 = vector.load %arg5[%c17, %c0_141, %c0_142] : memref<27x4x2xbf16, #tpu.memory_space<vmem>>, vector<1x4x2xbf16>
    %142 = vector.shape_cast %141 : vector<1x4x2xbf16> to vector<4x2xbf16>
    %cst_143 = arith.constant dense<0.000000e+00> : vector<64x2xf32>
    %143 = tpu.matmul %140, %142, %cst_143 {dimension_numbers = #tpu.dot_dimension_numbers<[1], [0], [0], [1], [0, 0, 1, 1], [], []>} : vector<64x4xbf16>, vector<4x2xbf16>, vector<64x2xf32> -> vector<64x2xf32>
    %144 = arith.addf %136, %143 : vector<64x2xf32>
    %c0_144 = arith.constant 0 : index
    %c0_145 = arith.constant 0 : index
    %c0_146 = arith.constant 0 : index
    %c0_147 = arith.constant 0 : index
    %c0_148 = arith.constant 0 : index
    %145 = vector.load %arg4[%c0_144, %c0_145, %c0_146, %c0_147, %c0_148] : memref<1x1x10x10x4xf32, #tpu.memory_space<vmem>>, vector<1x1x8x8x4xf32>
    %146 = vector.shape_cast %145 : vector<1x1x8x8x4xf32> to vector<8x8x4xf32>
    %147 = vector.shape_cast %146 : vector<8x8x4xf32> to vector<64x4xf32>
    %148 = arith.truncf %147 : vector<64x4xf32> to vector<64x4xbf16>
    %c18 = arith.constant 18 : index
    %c0_149 = arith.constant 0 : index
    %c0_150 = arith.constant 0 : index
    %149 = vector.load %arg5[%c18, %c0_149, %c0_150] : memref<27x4x2xbf16, #tpu.memory_space<vmem>>, vector<1x4x2xbf16>
    %150 = vector.shape_cast %149 : vector<1x4x2xbf16> to vector<4x2xbf16>
    %cst_151 = arith.constant dense<0.000000e+00> : vector<64x2xf32>
    %151 = tpu.matmul %148, %150, %cst_151 {dimension_numbers = #tpu.dot_dimension_numbers<[1], [0], [0], [1], [0, 0, 1, 1], [], []>} : vector<64x4xbf16>, vector<4x2xbf16>, vector<64x2xf32> -> vector<64x2xf32>
    %152 = arith.addf %144, %151 : vector<64x2xf32>
    %c0_152 = arith.constant 0 : index
    %c0_153 = arith.constant 0 : index
    %c0_154 = arith.constant 0 : index
    %c1_155 = arith.constant 1 : index
    %c0_156 = arith.constant 0 : index
    %153 = vector.load %arg4[%c0_152, %c0_153, %c0_154, %c1_155, %c0_156] : memref<1x1x10x10x4xf32, #tpu.memory_space<vmem>>, vector<1x1x8x8x4xf32>
    %154 = vector.shape_cast %153 : vector<1x1x8x8x4xf32> to vector<8x8x4xf32>
    %155 = vector.shape_cast %154 : vector<8x8x4xf32> to vector<64x4xf32>
    %156 = arith.truncf %155 : vector<64x4xf32> to vector<64x4xbf16>
    %c19 = arith.constant 19 : index
    %c0_157 = arith.constant 0 : index
    %c0_158 = arith.constant 0 : index
    %157 = vector.load %arg5[%c19, %c0_157, %c0_158] : memref<27x4x2xbf16, #tpu.memory_space<vmem>>, vector<1x4x2xbf16>
    %158 = vector.shape_cast %157 : vector<1x4x2xbf16> to vector<4x2xbf16>
    %cst_159 = arith.constant dense<0.000000e+00> : vector<64x2xf32>
    %159 = tpu.matmul %156, %158, %cst_159 {dimension_numbers = #tpu.dot_dimension_numbers<[1], [0], [0], [1], [0, 0, 1, 1], [], []>} : vector<64x4xbf16>, vector<4x2xbf16>, vector<64x2xf32> -> vector<64x2xf32>
    %160 = arith.addf %152, %159 : vector<64x2xf32>
    %c0_160 = arith.constant 0 : index
    %c0_161 = arith.constant 0 : index
    %c0_162 = arith.constant 0 : index
    %c2_163 = arith.constant 2 : index
    %c0_164 = arith.constant 0 : index
    %161 = vector.load %arg4[%c0_160, %c0_161, %c0_162, %c2_163, %c0_164] : memref<1x1x10x10x4xf32, #tpu.memory_space<vmem>>, vector<1x1x8x8x4xf32>
    %162 = vector.shape_cast %161 : vector<1x1x8x8x4xf32> to vector<8x8x4xf32>
    %163 = vector.shape_cast %162 : vector<8x8x4xf32> to vector<64x4xf32>
    %164 = arith.truncf %163 : vector<64x4xf32> to vector<64x4xbf16>
    %c20 = arith.constant 20 : index
    %c0_165 = arith.constant 0 : index
    %c0_166 = arith.constant 0 : index
    %165 = vector.load %arg5[%c20, %c0_165, %c0_166] : memref<27x4x2xbf16, #tpu.memory_space<vmem>>, vector<1x4x2xbf16>
    %166 = vector.shape_cast %165 : vector<1x4x2xbf16> to vector<4x2xbf16>
    %cst_167 = arith.constant dense<0.000000e+00> : vector<64x2xf32>
    %167 = tpu.matmul %164, %166, %cst_167 {dimension_numbers = #tpu.dot_dimension_numbers<[1], [0], [0], [1], [0, 0, 1, 1], [], []>} : vector<64x4xbf16>, vector<4x2xbf16>, vector<64x2xf32> -> vector<64x2xf32>
    %168 = arith.addf %160, %167 : vector<64x2xf32>
    %c0_168 = arith.constant 0 : index
    %c0_169 = arith.constant 0 : index
    %c1_170 = arith.constant 1 : index
    %c0_171 = arith.constant 0 : index
    %c0_172 = arith.constant 0 : index
    %169 = vector.load %arg4[%c0_168, %c0_169, %c1_170, %c0_171, %c0_172] : memref<1x1x10x10x4xf32, #tpu.memory_space<vmem>>, vector<1x1x8x8x4xf32>
    %170 = vector.shape_cast %169 : vector<1x1x8x8x4xf32> to vector<8x8x4xf32>
    %171 = vector.shape_cast %170 : vector<8x8x4xf32> to vector<64x4xf32>
    %172 = arith.truncf %171 : vector<64x4xf32> to vector<64x4xbf16>
    %c21 = arith.constant 21 : index
    %c0_173 = arith.constant 0 : index
    %c0_174 = arith.constant 0 : index
    %173 = vector.load %arg5[%c21, %c0_173, %c0_174] : memref<27x4x2xbf16, #tpu.memory_space<vmem>>, vector<1x4x2xbf16>
    %174 = vector.shape_cast %173 : vector<1x4x2xbf16> to vector<4x2xbf16>
    %cst_175 = arith.constant dense<0.000000e+00> : vector<64x2xf32>
    %175 = tpu.matmul %172, %174, %cst_175 {dimension_numbers = #tpu.dot_dimension_numbers<[1], [0], [0], [1], [0, 0, 1, 1], [], []>} : vector<64x4xbf16>, vector<4x2xbf16>, vector<64x2xf32> -> vector<64x2xf32>
    %176 = arith.addf %168, %175 : vector<64x2xf32>
    %c0_176 = arith.constant 0 : index
    %c0_177 = arith.constant 0 : index
    %c1_178 = arith.constant 1 : index
    %c1_179 = arith.constant 1 : index
    %c0_180 = arith.constant 0 : index
    %177 = vector.load %arg4[%c0_176, %c0_177, %c1_178, %c1_179, %c0_180] : memref<1x1x10x10x4xf32, #tpu.memory_space<vmem>>, vector<1x1x8x8x4xf32>
    %178 = vector.shape_cast %177 : vector<1x1x8x8x4xf32> to vector<8x8x4xf32>
    %179 = vector.shape_cast %178 : vector<8x8x4xf32> to vector<64x4xf32>
    %180 = arith.truncf %179 : vector<64x4xf32> to vector<64x4xbf16>
    %c22 = arith.constant 22 : index
    %c0_181 = arith.constant 0 : index
    %c0_182 = arith.constant 0 : index
    %181 = vector.load %arg5[%c22, %c0_181, %c0_182] : memref<27x4x2xbf16, #tpu.memory_space<vmem>>, vector<1x4x2xbf16>
    %182 = vector.shape_cast %181 : vector<1x4x2xbf16> to vector<4x2xbf16>
    %cst_183 = arith.constant dense<0.000000e+00> : vector<64x2xf32>
    %183 = tpu.matmul %180, %182, %cst_183 {dimension_numbers = #tpu.dot_dimension_numbers<[1], [0], [0], [1], [0, 0, 1, 1], [], []>} : vector<64x4xbf16>, vector<4x2xbf16>, vector<64x2xf32> -> vector<64x2xf32>
    %184 = arith.addf %176, %183 : vector<64x2xf32>
    %c0_184 = arith.constant 0 : index
    %c0_185 = arith.constant 0 : index
    %c1_186 = arith.constant 1 : index
    %c2_187 = arith.constant 2 : index
    %c0_188 = arith.constant 0 : index
    %185 = vector.load %arg4[%c0_184, %c0_185, %c1_186, %c2_187, %c0_188] : memref<1x1x10x10x4xf32, #tpu.memory_space<vmem>>, vector<1x1x8x8x4xf32>
    %186 = vector.shape_cast %185 : vector<1x1x8x8x4xf32> to vector<8x8x4xf32>
    %187 = vector.shape_cast %186 : vector<8x8x4xf32> to vector<64x4xf32>
    %188 = arith.truncf %187 : vector<64x4xf32> to vector<64x4xbf16>
    %c23 = arith.constant 23 : index
    %c0_189 = arith.constant 0 : index
    %c0_190 = arith.constant 0 : index
    %189 = vector.load %arg5[%c23, %c0_189, %c0_190] : memref<27x4x2xbf16, #tpu.memory_space<vmem>>, vector<1x4x2xbf16>
    %190 = vector.shape_cast %189 : vector<1x4x2xbf16> to vector<4x2xbf16>
    %cst_191 = arith.constant dense<0.000000e+00> : vector<64x2xf32>
    %191 = tpu.matmul %188, %190, %cst_191 {dimension_numbers = #tpu.dot_dimension_numbers<[1], [0], [0], [1], [0, 0, 1, 1], [], []>} : vector<64x4xbf16>, vector<4x2xbf16>, vector<64x2xf32> -> vector<64x2xf32>
    %192 = arith.addf %184, %191 : vector<64x2xf32>
    %c0_192 = arith.constant 0 : index
    %c0_193 = arith.constant 0 : index
    %c2_194 = arith.constant 2 : index
    %c0_195 = arith.constant 0 : index
    %c0_196 = arith.constant 0 : index
    %193 = vector.load %arg4[%c0_192, %c0_193, %c2_194, %c0_195, %c0_196] : memref<1x1x10x10x4xf32, #tpu.memory_space<vmem>>, vector<1x1x8x8x4xf32>
    %194 = vector.shape_cast %193 : vector<1x1x8x8x4xf32> to vector<8x8x4xf32>
    %195 = vector.shape_cast %194 : vector<8x8x4xf32> to vector<64x4xf32>
    %196 = arith.truncf %195 : vector<64x4xf32> to vector<64x4xbf16>
    %c24 = arith.constant 24 : index
    %c0_197 = arith.constant 0 : index
    %c0_198 = arith.constant 0 : index
    %197 = vector.load %arg5[%c24, %c0_197, %c0_198] : memref<27x4x2xbf16, #tpu.memory_space<vmem>>, vector<1x4x2xbf16>
    %198 = vector.shape_cast %197 : vector<1x4x2xbf16> to vector<4x2xbf16>
    %cst_199 = arith.constant dense<0.000000e+00> : vector<64x2xf32>
    %199 = tpu.matmul %196, %198, %cst_199 {dimension_numbers = #tpu.dot_dimension_numbers<[1], [0], [0], [1], [0, 0, 1, 1], [], []>} : vector<64x4xbf16>, vector<4x2xbf16>, vector<64x2xf32> -> vector<64x2xf32>
    %200 = arith.addf %192, %199 : vector<64x2xf32>
    %c0_200 = arith.constant 0 : index
    %c0_201 = arith.constant 0 : index
    %c2_202 = arith.constant 2 : index
    %c1_203 = arith.constant 1 : index
    %c0_204 = arith.constant 0 : index
    %201 = vector.load %arg4[%c0_200, %c0_201, %c2_202, %c1_203, %c0_204] : memref<1x1x10x10x4xf32, #tpu.memory_space<vmem>>, vector<1x1x8x8x4xf32>
    %202 = vector.shape_cast %201 : vector<1x1x8x8x4xf32> to vector<8x8x4xf32>
    %203 = vector.shape_cast %202 : vector<8x8x4xf32> to vector<64x4xf32>
    %204 = arith.truncf %203 : vector<64x4xf32> to vector<64x4xbf16>
    %c25 = arith.constant 25 : index
    %c0_205 = arith.constant 0 : index
    %c0_206 = arith.constant 0 : index
    %205 = vector.load %arg5[%c25, %c0_205, %c0_206] : memref<27x4x2xbf16, #tpu.memory_space<vmem>>, vector<1x4x2xbf16>
    %206 = vector.shape_cast %205 : vector<1x4x2xbf16> to vector<4x2xbf16>
    %cst_207 = arith.constant dense<0.000000e+00> : vector<64x2xf32>
    %207 = tpu.matmul %204, %206, %cst_207 {dimension_numbers = #tpu.dot_dimension_numbers<[1], [0], [0], [1], [0, 0, 1, 1], [], []>} : vector<64x4xbf16>, vector<4x2xbf16>, vector<64x2xf32> -> vector<64x2xf32>
    %208 = arith.addf %200, %207 : vector<64x2xf32>
    %c0_208 = arith.constant 0 : index
    %c0_209 = arith.constant 0 : index
    %c2_210 = arith.constant 2 : index
    %c2_211 = arith.constant 2 : index
    %c0_212 = arith.constant 0 : index
    %209 = vector.load %arg4[%c0_208, %c0_209, %c2_210, %c2_211, %c0_212] : memref<1x1x10x10x4xf32, #tpu.memory_space<vmem>>, vector<1x1x8x8x4xf32>
    %210 = vector.shape_cast %209 : vector<1x1x8x8x4xf32> to vector<8x8x4xf32>
    %211 = vector.shape_cast %210 : vector<8x8x4xf32> to vector<64x4xf32>
    %212 = arith.truncf %211 : vector<64x4xf32> to vector<64x4xbf16>
    %c26 = arith.constant 26 : index
    %c0_213 = arith.constant 0 : index
    %c0_214 = arith.constant 0 : index
    %213 = vector.load %arg5[%c26, %c0_213, %c0_214] : memref<27x4x2xbf16, #tpu.memory_space<vmem>>, vector<1x4x2xbf16>
    %214 = vector.shape_cast %213 : vector<1x4x2xbf16> to vector<4x2xbf16>
    %cst_215 = arith.constant dense<0.000000e+00> : vector<64x2xf32>
    %215 = tpu.matmul %212, %214, %cst_215 {dimension_numbers = #tpu.dot_dimension_numbers<[1], [0], [0], [1], [0, 0, 1, 1], [], []>} : vector<64x4xbf16>, vector<4x2xbf16>, vector<64x2xf32> -> vector<64x2xf32>
    %216 = arith.addf %208, %215 : vector<64x2xf32>
    %c0_216 = arith.constant 0 : index
    %c0_217 = arith.constant 0 : index
    %217 = vector.load %arg6[%c0_216, %c0_217] : memref<1x2xf32, #tpu.memory_space<vmem>>, vector<1x2xf32>
    %218 = vector.shape_cast %217 : vector<1x2xf32> to vector<2xf32>
    %219 = vector.shape_cast %218 : vector<2xf32> to vector<1x2xf32>
    %220 = vector.broadcast %219 : vector<1x2xf32> to vector<64x2xf32>
    %221 = arith.addf %216, %220 : vector<64x2xf32>
    %222 = vector.shape_cast %221 : vector<64x2xf32> to vector<1x64x2xf32>
    %cst_218 = arith.constant dense<0.000000e+00> : vector<1xf32>
    %223 = vector.multi_reduction <add>, %222, %cst_218 [1, 2] : vector<1x64x2xf32> to vector<1xf32>
    %224 = vector.shape_cast %223 : vector<1xf32> to vector<1x1x1xf32>
    %225 = vector.extract %224[0, 0, 0] : f32 from vector<1x1x1xf32>
    %226 = arith.mulf %221, %221 : vector<64x2xf32>
    %227 = vector.shape_cast %226 : vector<64x2xf32> to vector<1x64x2xf32>
    %cst_219 = arith.constant dense<0.000000e+00> : vector<1xf32>
    %228 = vector.multi_reduction <add>, %227, %cst_219 [1, 2] : vector<1x64x2xf32> to vector<1xf32>
    %229 = vector.shape_cast %228 : vector<1xf32> to vector<1x1x1xf32>
    %230 = vector.extract %229[0, 0, 0] : f32 from vector<1x1x1xf32>
    %231 = vector.shape_cast %221 : vector<64x2xf32> to vector<1x1x8x8x2xf32>
    %c0_220 = arith.constant 0 : index
    %c0_221 = arith.constant 0 : index
    %c0_222 = arith.constant 0 : index
    %c0_223 = arith.constant 0 : index
    %c0_224 = arith.constant 0 : index
    %232 = vector.load %arg7[%c0_220, %c0_221, %c0_222, %c0_223, %c0_224] : memref<1x1x8x8x2xf32, #tpu.memory_space<vmem>>, vector<1x1x8x8x2xf32>
    tpu.vector_store %arg7[%c0_220, %c0_221, %c0_222, %c0_223, %c0_224], %231 {strides = array<i32>} : memref<1x1x8x8x2xf32, #tpu.memory_space<vmem>>, vector<1x1x8x8x2xf32>,
    %233 = vector.broadcast %225 : f32 to vector<1x1x1x128xf32>
    %234 = vector.broadcast %230 : f32 to vector<1x1x1x128xf32>
    %235 = tpu.concatenate %233, %234 in 2 : vector<1x1x1x128xf32>, vector<1x1x1x128xf32> -> vector<1x1x2x128xf32>
    %c0_225 = arith.constant 0 : index
    %c0_226 = arith.constant 0 : index
    %c0_227 = arith.constant 0 : index
    %c0_228 = arith.constant 0 : index
    %236 = vector.load %arg8[%c0_225, %c0_226, %c0_227, %c0_228] : memref<1x1x2x128xf32, #tpu.memory_space<vmem>>, vector<1x1x2x128xf32>
    tpu.vector_store %arg8[%c0_225, %c0_226, %c0_227, %c0_228], %235 {strides = array<i32>} : memref<1x1x2x128xf32, #tpu.memory_space<vmem>>, vector<1x1x2x128xf32>,
    return
  }
  func.func @transform_0(%arg0: i32, %arg1: i32) -> (i32, i32, i32, i32, i32) {
    %c0_i32 = arith.constant 0 : i32
    %0 = arith.addi %arg1, %c0_i32 : i32
    %c0_i32_0 = arith.constant 0 : i32
    %c0_i32_1 = arith.constant 0 : i32
    %c0_i32_2 = arith.constant 0 : i32
    %c0_i32_3 = arith.constant 0 : i32
    return %arg0, %0, %c0_i32_0, %c0_i32_1, %c0_i32_2 : i32, i32, i32, i32, i32
  }
  func.func @transform_1(%arg0: i32, %arg1: i32) -> (i32, i32, i32, i32, i32) {
    %c1_i32 = arith.constant 1 : i32
    %0 = arith.addi %arg1, %c1_i32 : i32
    %c0_i32 = arith.constant 0 : i32
    %c0_i32_0 = arith.constant 0 : i32
    %c0_i32_1 = arith.constant 0 : i32
    %c0_i32_2 = arith.constant 0 : i32
    return %arg0, %0, %c0_i32, %c0_i32_0, %c0_i32_1 : i32, i32, i32, i32, i32
  }
  func.func @transform_2(%arg0: i32, %arg1: i32) -> (i32, i32, i32, i32, i32) {
    %c2_i32 = arith.constant 2 : i32
    %0 = arith.addi %arg1, %c2_i32 : i32
    %c0_i32 = arith.constant 0 : i32
    %c0_i32_0 = arith.constant 0 : i32
    %c0_i32_1 = arith.constant 0 : i32
    %c0_i32_2 = arith.constant 0 : i32
    return %arg0, %0, %c0_i32, %c0_i32_0, %c0_i32_1 : i32, i32, i32, i32, i32
  }
  func.func @transform_3(%arg0: i32, %arg1: i32) -> (i32, i32, i32) {
    %c0_i32 = arith.constant 0 : i32
    %c0_i32_0 = arith.constant 0 : i32
    %c0_i32_1 = arith.constant 0 : i32
    %c0_i32_2 = arith.constant 0 : i32
    return %c0_i32, %c0_i32_0, %c0_i32_1 : i32, i32, i32
  }
  func.func @transform_4(%arg0: i32, %arg1: i32) -> (i32, i32) {
    %c0_i32 = arith.constant 0 : i32
    %c0_i32_0 = arith.constant 0 : i32
    %c0_i32_1 = arith.constant 0 : i32
    return %c0_i32, %c0_i32_0 : i32, i32
  }
  func.func @transform_5(%arg0: i32, %arg1: i32) -> (i32, i32, i32, i32, i32) {
    %c0_i32 = arith.constant 0 : i32
    %c0_i32_0 = arith.constant 0 : i32
    %c0_i32_1 = arith.constant 0 : i32
    %c0_i32_2 = arith.constant 0 : i32
    return %arg0, %arg1, %c0_i32, %c0_i32_0, %c0_i32_1 : i32, i32, i32, i32, i32
  }
  func.func @transform_6(%arg0: i32, %arg1: i32) -> (i32, i32, i32, i32) {
    %c0_i32 = arith.constant 0 : i32
    %c0_i32_0 = arith.constant 0 : i32
    %c0_i32_1 = arith.constant 0 : i32
    return %arg0, %arg1, %c0_i32, %c0_i32_0 : i32, i32, i32, i32
  }
}

module attributes {stable_mosaic.version = 11 : i64} {
  func.func @_norm_silu_kernel(%arg0: i32, %arg1: i32, %arg2: memref<1x1x8x8x2xf32, #tpu.memory_space<vmem>>, %arg3: memref<1x1x2xf32, #tpu.memory_space<vmem>>, %arg4: memref<1x1x2xf32, #tpu.memory_space<vmem>>, %arg5: memref<1x1x8x8x2xf32, #tpu.memory_space<vmem>>) attributes {dimension_semantics = [#tpu.dimension_semantics<parallel>, #tpu.dimension_semantics<parallel>], iteration_bounds = array<i64: 2, 8>, scalar_prefetch = 0 : i64, scratch_operands = 0 : i64, tpu.core_type = #tpu.core_type<tc>, window_params = [{transform_indices = @transform_0, window_bounds = array<i64: 1, 1, 8, 8, 2>}, {transform_indices = @transform_1, window_bounds = array<i64: 1, 1, 2>}, {transform_indices = @transform_2, window_bounds = array<i64: 1, 1, 2>}, {transform_indices = @transform_3, window_bounds = array<i64: 1, 1, 8, 8, 2>}]} {
    %c0 = arith.constant 0 : index
    %c0_0 = arith.constant 0 : index
    %c0_1 = arith.constant 0 : index
    %c0_2 = arith.constant 0 : index
    %c0_3 = arith.constant 0 : index
    %0 = vector.load %arg2[%c0, %c0_0, %c0_1, %c0_2, %c0_3] : memref<1x1x8x8x2xf32, #tpu.memory_space<vmem>>, vector<1x1x8x8x2xf32>
    %c0_4 = arith.constant 0 : index
    %c0_5 = arith.constant 0 : index
    %c0_6 = arith.constant 0 : index
    %1 = vector.load %arg3[%c0_4, %c0_5, %c0_6] : memref<1x1x2xf32, #tpu.memory_space<vmem>>, vector<1x1x2xf32>
    %2 = vector.shape_cast %1 : vector<1x1x2xf32> to vector<2xf32>
    %3 = vector.shape_cast %2 : vector<2xf32> to vector<1x1x1x1x2xf32>
    %4 = vector.broadcast %3 : vector<1x1x1x1x2xf32> to vector<1x1x8x8x2xf32>
    %5 = arith.mulf %0, %4 : vector<1x1x8x8x2xf32>
    %c0_7 = arith.constant 0 : index
    %c0_8 = arith.constant 0 : index
    %c0_9 = arith.constant 0 : index
    %6 = vector.load %arg4[%c0_7, %c0_8, %c0_9] : memref<1x1x2xf32, #tpu.memory_space<vmem>>, vector<1x1x2xf32>
    %7 = vector.shape_cast %6 : vector<1x1x2xf32> to vector<2xf32>
    %8 = vector.shape_cast %7 : vector<2xf32> to vector<1x1x1x1x2xf32>
    %9 = vector.broadcast %8 : vector<1x1x1x1x2xf32> to vector<1x1x8x8x2xf32>
    %10 = arith.addf %5, %9 : vector<1x1x8x8x2xf32>
    %11 = arith.negf %10 : vector<1x1x8x8x2xf32>
    %12 = math.exp %11 : vector<1x1x8x8x2xf32>
    %cst = arith.constant 1.000000e+00 : f32
    %13 = vector.broadcast %cst : f32 to vector<1x1x8x8x2xf32>
    %14 = arith.addf %13, %12 : vector<1x1x8x8x2xf32>
    %15 = arith.divf %13, %14 : vector<1x1x8x8x2xf32>
    %16 = arith.mulf %10, %15 : vector<1x1x8x8x2xf32>
    %c0_10 = arith.constant 0 : index
    %c0_11 = arith.constant 0 : index
    %c0_12 = arith.constant 0 : index
    %c0_13 = arith.constant 0 : index
    %c0_14 = arith.constant 0 : index
    %17 = vector.load %arg5[%c0_10, %c0_11, %c0_12, %c0_13, %c0_14] : memref<1x1x8x8x2xf32, #tpu.memory_space<vmem>>, vector<1x1x8x8x2xf32>
    tpu.vector_store %arg5[%c0_10, %c0_11, %c0_12, %c0_13, %c0_14], %16 {strides = array<i32>} : memref<1x1x8x8x2xf32, #tpu.memory_space<vmem>>, vector<1x1x8x8x2xf32>,
    return
  }
  func.func @transform_0(%arg0: i32, %arg1: i32) -> (i32, i32, i32, i32, i32) {
    %c0_i32 = arith.constant 0 : i32
    %c0_i32_0 = arith.constant 0 : i32
    %c0_i32_1 = arith.constant 0 : i32
    %c0_i32_2 = arith.constant 0 : i32
    return %arg0, %arg1, %c0_i32, %c0_i32_0, %c0_i32_1 : i32, i32, i32, i32, i32
  }
  func.func @transform_1(%arg0: i32, %arg1: i32) -> (i32, i32, i32) {
    %c0_i32 = arith.constant 0 : i32
    %c0_i32_0 = arith.constant 0 : i32
    %c0_i32_1 = arith.constant 0 : i32
    return %arg0, %c0_i32, %c0_i32_0 : i32, i32, i32
  }
  func.func @transform_2(%arg0: i32, %arg1: i32) -> (i32, i32, i32) {
    %c0_i32 = arith.constant 0 : i32
    %c0_i32_0 = arith.constant 0 : i32
    %c0_i32_1 = arith.constant 0 : i32
    return %arg0, %c0_i32, %c0_i32_0 : i32, i32, i32
  }
  func.func @transform_3(%arg0: i32, %arg1: i32) -> (i32, i32, i32, i32, i32) {
    %c0_i32 = arith.constant 0 : i32
    %c0_i32_0 = arith.constant 0 : i32
    %c0_i32_1 = arith.constant 0 : i32
    %c0_i32_2 = arith.constant 0 : i32
    return %arg0, %arg1, %c0_i32, %c0_i32_0, %c0_i32_1 : i32, i32, i32, i32, i32
  }
}

module attributes {stable_mosaic.version = 11 : i64} {
  func.func @_conv3_stats_kernel(%arg0: i32, %arg1: i32, %arg2: memref<1x1x10x10x2xf32, #tpu.memory_space<vmem>>, %arg3: memref<1x1x10x10x2xf32, #tpu.memory_space<vmem>>, %arg4: memref<1x1x10x10x2xf32, #tpu.memory_space<vmem>>, %arg5: memref<27x2x2xbf16, #tpu.memory_space<vmem>>, %arg6: memref<1x2xf32, #tpu.memory_space<vmem>>, %arg7: memref<1x1x8x8x2xf32, #tpu.memory_space<vmem>>, %arg8: memref<1x1x2x128xf32, #tpu.memory_space<vmem>>) attributes {dimension_semantics = [#tpu.dimension_semantics<parallel>, #tpu.dimension_semantics<parallel>], iteration_bounds = array<i64: 2, 8>, scalar_prefetch = 0 : i64, scratch_operands = 0 : i64, tpu.core_type = #tpu.core_type<tc>, window_params = [{transform_indices = @transform_0, window_bounds = array<i64: 1, 1, 10, 10, 2>}, {transform_indices = @transform_1, window_bounds = array<i64: 1, 1, 10, 10, 2>}, {transform_indices = @transform_2, window_bounds = array<i64: 1, 1, 10, 10, 2>}, {pipeline_mode = #tpu.pipeline_mode<synchronous>, transform_indices = @transform_3, window_bounds = array<i64: 27, 2, 2>}, {pipeline_mode = #tpu.pipeline_mode<synchronous>, transform_indices = @transform_4, window_bounds = array<i64: 1, 2>}, {transform_indices = @transform_5, window_bounds = array<i64: 1, 1, 8, 8, 2>}, {transform_indices = @transform_6, window_bounds = array<i64: 1, 1, 2, 128>}]} {
    %cst = arith.constant 0.000000e+00 : f32
    %0 = vector.broadcast %cst : f32 to vector<64x2xf32>
    %c0 = arith.constant 0 : index
    %c0_0 = arith.constant 0 : index
    %c0_1 = arith.constant 0 : index
    %c0_2 = arith.constant 0 : index
    %c0_3 = arith.constant 0 : index
    %1 = vector.load %arg2[%c0, %c0_0, %c0_1, %c0_2, %c0_3] : memref<1x1x10x10x2xf32, #tpu.memory_space<vmem>>, vector<1x1x8x8x2xf32>
    %2 = vector.shape_cast %1 : vector<1x1x8x8x2xf32> to vector<8x8x2xf32>
    %3 = vector.shape_cast %2 : vector<8x8x2xf32> to vector<64x2xf32>
    %4 = arith.truncf %3 : vector<64x2xf32> to vector<64x2xbf16>
    %c0_4 = arith.constant 0 : index
    %c0_5 = arith.constant 0 : index
    %c0_6 = arith.constant 0 : index
    %5 = vector.load %arg5[%c0_4, %c0_5, %c0_6] : memref<27x2x2xbf16, #tpu.memory_space<vmem>>, vector<1x2x2xbf16>
    %6 = vector.shape_cast %5 : vector<1x2x2xbf16> to vector<2x2xbf16>
    %cst_7 = arith.constant dense<0.000000e+00> : vector<64x2xf32>
    %7 = tpu.matmul %4, %6, %cst_7 {dimension_numbers = #tpu.dot_dimension_numbers<[1], [0], [0], [1], [0, 0, 1, 1], [], []>} : vector<64x2xbf16>, vector<2x2xbf16>, vector<64x2xf32> -> vector<64x2xf32>
    %8 = arith.addf %0, %7 : vector<64x2xf32>
    %c0_8 = arith.constant 0 : index
    %c0_9 = arith.constant 0 : index
    %c0_10 = arith.constant 0 : index
    %c1 = arith.constant 1 : index
    %c0_11 = arith.constant 0 : index
    %9 = vector.load %arg2[%c0_8, %c0_9, %c0_10, %c1, %c0_11] : memref<1x1x10x10x2xf32, #tpu.memory_space<vmem>>, vector<1x1x8x8x2xf32>
    %10 = vector.shape_cast %9 : vector<1x1x8x8x2xf32> to vector<8x8x2xf32>
    %11 = vector.shape_cast %10 : vector<8x8x2xf32> to vector<64x2xf32>
    %12 = arith.truncf %11 : vector<64x2xf32> to vector<64x2xbf16>
    %c1_12 = arith.constant 1 : index
    %c0_13 = arith.constant 0 : index
    %c0_14 = arith.constant 0 : index
    %13 = vector.load %arg5[%c1_12, %c0_13, %c0_14] : memref<27x2x2xbf16, #tpu.memory_space<vmem>>, vector<1x2x2xbf16>
    %14 = vector.shape_cast %13 : vector<1x2x2xbf16> to vector<2x2xbf16>
    %cst_15 = arith.constant dense<0.000000e+00> : vector<64x2xf32>
    %15 = tpu.matmul %12, %14, %cst_15 {dimension_numbers = #tpu.dot_dimension_numbers<[1], [0], [0], [1], [0, 0, 1, 1], [], []>} : vector<64x2xbf16>, vector<2x2xbf16>, vector<64x2xf32> -> vector<64x2xf32>
    %16 = arith.addf %8, %15 : vector<64x2xf32>
    %c0_16 = arith.constant 0 : index
    %c0_17 = arith.constant 0 : index
    %c0_18 = arith.constant 0 : index
    %c2 = arith.constant 2 : index
    %c0_19 = arith.constant 0 : index
    %17 = vector.load %arg2[%c0_16, %c0_17, %c0_18, %c2, %c0_19] : memref<1x1x10x10x2xf32, #tpu.memory_space<vmem>>, vector<1x1x8x8x2xf32>
    %18 = vector.shape_cast %17 : vector<1x1x8x8x2xf32> to vector<8x8x2xf32>
    %19 = vector.shape_cast %18 : vector<8x8x2xf32> to vector<64x2xf32>
    %20 = arith.truncf %19 : vector<64x2xf32> to vector<64x2xbf16>
    %c2_20 = arith.constant 2 : index
    %c0_21 = arith.constant 0 : index
    %c0_22 = arith.constant 0 : index
    %21 = vector.load %arg5[%c2_20, %c0_21, %c0_22] : memref<27x2x2xbf16, #tpu.memory_space<vmem>>, vector<1x2x2xbf16>
    %22 = vector.shape_cast %21 : vector<1x2x2xbf16> to vector<2x2xbf16>
    %cst_23 = arith.constant dense<0.000000e+00> : vector<64x2xf32>
    %23 = tpu.matmul %20, %22, %cst_23 {dimension_numbers = #tpu.dot_dimension_numbers<[1], [0], [0], [1], [0, 0, 1, 1], [], []>} : vector<64x2xbf16>, vector<2x2xbf16>, vector<64x2xf32> -> vector<64x2xf32>
    %24 = arith.addf %16, %23 : vector<64x2xf32>
    %c0_24 = arith.constant 0 : index
    %c0_25 = arith.constant 0 : index
    %c1_26 = arith.constant 1 : index
    %c0_27 = arith.constant 0 : index
    %c0_28 = arith.constant 0 : index
    %25 = vector.load %arg2[%c0_24, %c0_25, %c1_26, %c0_27, %c0_28] : memref<1x1x10x10x2xf32, #tpu.memory_space<vmem>>, vector<1x1x8x8x2xf32>
    %26 = vector.shape_cast %25 : vector<1x1x8x8x2xf32> to vector<8x8x2xf32>
    %27 = vector.shape_cast %26 : vector<8x8x2xf32> to vector<64x2xf32>
    %28 = arith.truncf %27 : vector<64x2xf32> to vector<64x2xbf16>
    %c3 = arith.constant 3 : index
    %c0_29 = arith.constant 0 : index
    %c0_30 = arith.constant 0 : index
    %29 = vector.load %arg5[%c3, %c0_29, %c0_30] : memref<27x2x2xbf16, #tpu.memory_space<vmem>>, vector<1x2x2xbf16>
    %30 = vector.shape_cast %29 : vector<1x2x2xbf16> to vector<2x2xbf16>
    %cst_31 = arith.constant dense<0.000000e+00> : vector<64x2xf32>
    %31 = tpu.matmul %28, %30, %cst_31 {dimension_numbers = #tpu.dot_dimension_numbers<[1], [0], [0], [1], [0, 0, 1, 1], [], []>} : vector<64x2xbf16>, vector<2x2xbf16>, vector<64x2xf32> -> vector<64x2xf32>
    %32 = arith.addf %24, %31 : vector<64x2xf32>
    %c0_32 = arith.constant 0 : index
    %c0_33 = arith.constant 0 : index
    %c1_34 = arith.constant 1 : index
    %c1_35 = arith.constant 1 : index
    %c0_36 = arith.constant 0 : index
    %33 = vector.load %arg2[%c0_32, %c0_33, %c1_34, %c1_35, %c0_36] : memref<1x1x10x10x2xf32, #tpu.memory_space<vmem>>, vector<1x1x8x8x2xf32>
    %34 = vector.shape_cast %33 : vector<1x1x8x8x2xf32> to vector<8x8x2xf32>
    %35 = vector.shape_cast %34 : vector<8x8x2xf32> to vector<64x2xf32>
    %36 = arith.truncf %35 : vector<64x2xf32> to vector<64x2xbf16>
    %c4 = arith.constant 4 : index
    %c0_37 = arith.constant 0 : index
    %c0_38 = arith.constant 0 : index
    %37 = vector.load %arg5[%c4, %c0_37, %c0_38] : memref<27x2x2xbf16, #tpu.memory_space<vmem>>, vector<1x2x2xbf16>
    %38 = vector.shape_cast %37 : vector<1x2x2xbf16> to vector<2x2xbf16>
    %cst_39 = arith.constant dense<0.000000e+00> : vector<64x2xf32>
    %39 = tpu.matmul %36, %38, %cst_39 {dimension_numbers = #tpu.dot_dimension_numbers<[1], [0], [0], [1], [0, 0, 1, 1], [], []>} : vector<64x2xbf16>, vector<2x2xbf16>, vector<64x2xf32> -> vector<64x2xf32>
    %40 = arith.addf %32, %39 : vector<64x2xf32>
    %c0_40 = arith.constant 0 : index
    %c0_41 = arith.constant 0 : index
    %c1_42 = arith.constant 1 : index
    %c2_43 = arith.constant 2 : index
    %c0_44 = arith.constant 0 : index
    %41 = vector.load %arg2[%c0_40, %c0_41, %c1_42, %c2_43, %c0_44] : memref<1x1x10x10x2xf32, #tpu.memory_space<vmem>>, vector<1x1x8x8x2xf32>
    %42 = vector.shape_cast %41 : vector<1x1x8x8x2xf32> to vector<8x8x2xf32>
    %43 = vector.shape_cast %42 : vector<8x8x2xf32> to vector<64x2xf32>
    %44 = arith.truncf %43 : vector<64x2xf32> to vector<64x2xbf16>
    %c5 = arith.constant 5 : index
    %c0_45 = arith.constant 0 : index
    %c0_46 = arith.constant 0 : index
    %45 = vector.load %arg5[%c5, %c0_45, %c0_46] : memref<27x2x2xbf16, #tpu.memory_space<vmem>>, vector<1x2x2xbf16>
    %46 = vector.shape_cast %45 : vector<1x2x2xbf16> to vector<2x2xbf16>
    %cst_47 = arith.constant dense<0.000000e+00> : vector<64x2xf32>
    %47 = tpu.matmul %44, %46, %cst_47 {dimension_numbers = #tpu.dot_dimension_numbers<[1], [0], [0], [1], [0, 0, 1, 1], [], []>} : vector<64x2xbf16>, vector<2x2xbf16>, vector<64x2xf32> -> vector<64x2xf32>
    %48 = arith.addf %40, %47 : vector<64x2xf32>
    %c0_48 = arith.constant 0 : index
    %c0_49 = arith.constant 0 : index
    %c2_50 = arith.constant 2 : index
    %c0_51 = arith.constant 0 : index
    %c0_52 = arith.constant 0 : index
    %49 = vector.load %arg2[%c0_48, %c0_49, %c2_50, %c0_51, %c0_52] : memref<1x1x10x10x2xf32, #tpu.memory_space<vmem>>, vector<1x1x8x8x2xf32>
    %50 = vector.shape_cast %49 : vector<1x1x8x8x2xf32> to vector<8x8x2xf32>
    %51 = vector.shape_cast %50 : vector<8x8x2xf32> to vector<64x2xf32>
    %52 = arith.truncf %51 : vector<64x2xf32> to vector<64x2xbf16>
    %c6 = arith.constant 6 : index
    %c0_53 = arith.constant 0 : index
    %c0_54 = arith.constant 0 : index
    %53 = vector.load %arg5[%c6, %c0_53, %c0_54] : memref<27x2x2xbf16, #tpu.memory_space<vmem>>, vector<1x2x2xbf16>
    %54 = vector.shape_cast %53 : vector<1x2x2xbf16> to vector<2x2xbf16>
    %cst_55 = arith.constant dense<0.000000e+00> : vector<64x2xf32>
    %55 = tpu.matmul %52, %54, %cst_55 {dimension_numbers = #tpu.dot_dimension_numbers<[1], [0], [0], [1], [0, 0, 1, 1], [], []>} : vector<64x2xbf16>, vector<2x2xbf16>, vector<64x2xf32> -> vector<64x2xf32>
    %56 = arith.addf %48, %55 : vector<64x2xf32>
    %c0_56 = arith.constant 0 : index
    %c0_57 = arith.constant 0 : index
    %c2_58 = arith.constant 2 : index
    %c1_59 = arith.constant 1 : index
    %c0_60 = arith.constant 0 : index
    %57 = vector.load %arg2[%c0_56, %c0_57, %c2_58, %c1_59, %c0_60] : memref<1x1x10x10x2xf32, #tpu.memory_space<vmem>>, vector<1x1x8x8x2xf32>
    %58 = vector.shape_cast %57 : vector<1x1x8x8x2xf32> to vector<8x8x2xf32>
    %59 = vector.shape_cast %58 : vector<8x8x2xf32> to vector<64x2xf32>
    %60 = arith.truncf %59 : vector<64x2xf32> to vector<64x2xbf16>
    %c7 = arith.constant 7 : index
    %c0_61 = arith.constant 0 : index
    %c0_62 = arith.constant 0 : index
    %61 = vector.load %arg5[%c7, %c0_61, %c0_62] : memref<27x2x2xbf16, #tpu.memory_space<vmem>>, vector<1x2x2xbf16>
    %62 = vector.shape_cast %61 : vector<1x2x2xbf16> to vector<2x2xbf16>
    %cst_63 = arith.constant dense<0.000000e+00> : vector<64x2xf32>
    %63 = tpu.matmul %60, %62, %cst_63 {dimension_numbers = #tpu.dot_dimension_numbers<[1], [0], [0], [1], [0, 0, 1, 1], [], []>} : vector<64x2xbf16>, vector<2x2xbf16>, vector<64x2xf32> -> vector<64x2xf32>
    %64 = arith.addf %56, %63 : vector<64x2xf32>
    %c0_64 = arith.constant 0 : index
    %c0_65 = arith.constant 0 : index
    %c2_66 = arith.constant 2 : index
    %c2_67 = arith.constant 2 : index
    %c0_68 = arith.constant 0 : index
    %65 = vector.load %arg2[%c0_64, %c0_65, %c2_66, %c2_67, %c0_68] : memref<1x1x10x10x2xf32, #tpu.memory_space<vmem>>, vector<1x1x8x8x2xf32>
    %66 = vector.shape_cast %65 : vector<1x1x8x8x2xf32> to vector<8x8x2xf32>
    %67 = vector.shape_cast %66 : vector<8x8x2xf32> to vector<64x2xf32>
    %68 = arith.truncf %67 : vector<64x2xf32> to vector<64x2xbf16>
    %c8 = arith.constant 8 : index
    %c0_69 = arith.constant 0 : index
    %c0_70 = arith.constant 0 : index
    %69 = vector.load %arg5[%c8, %c0_69, %c0_70] : memref<27x2x2xbf16, #tpu.memory_space<vmem>>, vector<1x2x2xbf16>
    %70 = vector.shape_cast %69 : vector<1x2x2xbf16> to vector<2x2xbf16>
    %cst_71 = arith.constant dense<0.000000e+00> : vector<64x2xf32>
    %71 = tpu.matmul %68, %70, %cst_71 {dimension_numbers = #tpu.dot_dimension_numbers<[1], [0], [0], [1], [0, 0, 1, 1], [], []>} : vector<64x2xbf16>, vector<2x2xbf16>, vector<64x2xf32> -> vector<64x2xf32>
    %72 = arith.addf %64, %71 : vector<64x2xf32>
    %c0_72 = arith.constant 0 : index
    %c0_73 = arith.constant 0 : index
    %c0_74 = arith.constant 0 : index
    %c0_75 = arith.constant 0 : index
    %c0_76 = arith.constant 0 : index
    %73 = vector.load %arg3[%c0_72, %c0_73, %c0_74, %c0_75, %c0_76] : memref<1x1x10x10x2xf32, #tpu.memory_space<vmem>>, vector<1x1x8x8x2xf32>
    %74 = vector.shape_cast %73 : vector<1x1x8x8x2xf32> to vector<8x8x2xf32>
    %75 = vector.shape_cast %74 : vector<8x8x2xf32> to vector<64x2xf32>
    %76 = arith.truncf %75 : vector<64x2xf32> to vector<64x2xbf16>
    %c9 = arith.constant 9 : index
    %c0_77 = arith.constant 0 : index
    %c0_78 = arith.constant 0 : index
    %77 = vector.load %arg5[%c9, %c0_77, %c0_78] : memref<27x2x2xbf16, #tpu.memory_space<vmem>>, vector<1x2x2xbf16>
    %78 = vector.shape_cast %77 : vector<1x2x2xbf16> to vector<2x2xbf16>
    %cst_79 = arith.constant dense<0.000000e+00> : vector<64x2xf32>
    %79 = tpu.matmul %76, %78, %cst_79 {dimension_numbers = #tpu.dot_dimension_numbers<[1], [0], [0], [1], [0, 0, 1, 1], [], []>} : vector<64x2xbf16>, vector<2x2xbf16>, vector<64x2xf32> -> vector<64x2xf32>
    %80 = arith.addf %72, %79 : vector<64x2xf32>
    %c0_80 = arith.constant 0 : index
    %c0_81 = arith.constant 0 : index
    %c0_82 = arith.constant 0 : index
    %c1_83 = arith.constant 1 : index
    %c0_84 = arith.constant 0 : index
    %81 = vector.load %arg3[%c0_80, %c0_81, %c0_82, %c1_83, %c0_84] : memref<1x1x10x10x2xf32, #tpu.memory_space<vmem>>, vector<1x1x8x8x2xf32>
    %82 = vector.shape_cast %81 : vector<1x1x8x8x2xf32> to vector<8x8x2xf32>
    %83 = vector.shape_cast %82 : vector<8x8x2xf32> to vector<64x2xf32>
    %84 = arith.truncf %83 : vector<64x2xf32> to vector<64x2xbf16>
    %c10 = arith.constant 10 : index
    %c0_85 = arith.constant 0 : index
    %c0_86 = arith.constant 0 : index
    %85 = vector.load %arg5[%c10, %c0_85, %c0_86] : memref<27x2x2xbf16, #tpu.memory_space<vmem>>, vector<1x2x2xbf16>
    %86 = vector.shape_cast %85 : vector<1x2x2xbf16> to vector<2x2xbf16>
    %cst_87 = arith.constant dense<0.000000e+00> : vector<64x2xf32>
    %87 = tpu.matmul %84, %86, %cst_87 {dimension_numbers = #tpu.dot_dimension_numbers<[1], [0], [0], [1], [0, 0, 1, 1], [], []>} : vector<64x2xbf16>, vector<2x2xbf16>, vector<64x2xf32> -> vector<64x2xf32>
    %88 = arith.addf %80, %87 : vector<64x2xf32>
    %c0_88 = arith.constant 0 : index
    %c0_89 = arith.constant 0 : index
    %c0_90 = arith.constant 0 : index
    %c2_91 = arith.constant 2 : index
    %c0_92 = arith.constant 0 : index
    %89 = vector.load %arg3[%c0_88, %c0_89, %c0_90, %c2_91, %c0_92] : memref<1x1x10x10x2xf32, #tpu.memory_space<vmem>>, vector<1x1x8x8x2xf32>
    %90 = vector.shape_cast %89 : vector<1x1x8x8x2xf32> to vector<8x8x2xf32>
    %91 = vector.shape_cast %90 : vector<8x8x2xf32> to vector<64x2xf32>
    %92 = arith.truncf %91 : vector<64x2xf32> to vector<64x2xbf16>
    %c11 = arith.constant 11 : index
    %c0_93 = arith.constant 0 : index
    %c0_94 = arith.constant 0 : index
    %93 = vector.load %arg5[%c11, %c0_93, %c0_94] : memref<27x2x2xbf16, #tpu.memory_space<vmem>>, vector<1x2x2xbf16>
    %94 = vector.shape_cast %93 : vector<1x2x2xbf16> to vector<2x2xbf16>
    %cst_95 = arith.constant dense<0.000000e+00> : vector<64x2xf32>
    %95 = tpu.matmul %92, %94, %cst_95 {dimension_numbers = #tpu.dot_dimension_numbers<[1], [0], [0], [1], [0, 0, 1, 1], [], []>} : vector<64x2xbf16>, vector<2x2xbf16>, vector<64x2xf32> -> vector<64x2xf32>
    %96 = arith.addf %88, %95 : vector<64x2xf32>
    %c0_96 = arith.constant 0 : index
    %c0_97 = arith.constant 0 : index
    %c1_98 = arith.constant 1 : index
    %c0_99 = arith.constant 0 : index
    %c0_100 = arith.constant 0 : index
    %97 = vector.load %arg3[%c0_96, %c0_97, %c1_98, %c0_99, %c0_100] : memref<1x1x10x10x2xf32, #tpu.memory_space<vmem>>, vector<1x1x8x8x2xf32>
    %98 = vector.shape_cast %97 : vector<1x1x8x8x2xf32> to vector<8x8x2xf32>
    %99 = vector.shape_cast %98 : vector<8x8x2xf32> to vector<64x2xf32>
    %100 = arith.truncf %99 : vector<64x2xf32> to vector<64x2xbf16>
    %c12 = arith.constant 12 : index
    %c0_101 = arith.constant 0 : index
    %c0_102 = arith.constant 0 : index
    %101 = vector.load %arg5[%c12, %c0_101, %c0_102] : memref<27x2x2xbf16, #tpu.memory_space<vmem>>, vector<1x2x2xbf16>
    %102 = vector.shape_cast %101 : vector<1x2x2xbf16> to vector<2x2xbf16>
    %cst_103 = arith.constant dense<0.000000e+00> : vector<64x2xf32>
    %103 = tpu.matmul %100, %102, %cst_103 {dimension_numbers = #tpu.dot_dimension_numbers<[1], [0], [0], [1], [0, 0, 1, 1], [], []>} : vector<64x2xbf16>, vector<2x2xbf16>, vector<64x2xf32> -> vector<64x2xf32>
    %104 = arith.addf %96, %103 : vector<64x2xf32>
    %c0_104 = arith.constant 0 : index
    %c0_105 = arith.constant 0 : index
    %c1_106 = arith.constant 1 : index
    %c1_107 = arith.constant 1 : index
    %c0_108 = arith.constant 0 : index
    %105 = vector.load %arg3[%c0_104, %c0_105, %c1_106, %c1_107, %c0_108] : memref<1x1x10x10x2xf32, #tpu.memory_space<vmem>>, vector<1x1x8x8x2xf32>
    %106 = vector.shape_cast %105 : vector<1x1x8x8x2xf32> to vector<8x8x2xf32>
    %107 = vector.shape_cast %106 : vector<8x8x2xf32> to vector<64x2xf32>
    %108 = arith.truncf %107 : vector<64x2xf32> to vector<64x2xbf16>
    %c13 = arith.constant 13 : index
    %c0_109 = arith.constant 0 : index
    %c0_110 = arith.constant 0 : index
    %109 = vector.load %arg5[%c13, %c0_109, %c0_110] : memref<27x2x2xbf16, #tpu.memory_space<vmem>>, vector<1x2x2xbf16>
    %110 = vector.shape_cast %109 : vector<1x2x2xbf16> to vector<2x2xbf16>
    %cst_111 = arith.constant dense<0.000000e+00> : vector<64x2xf32>
    %111 = tpu.matmul %108, %110, %cst_111 {dimension_numbers = #tpu.dot_dimension_numbers<[1], [0], [0], [1], [0, 0, 1, 1], [], []>} : vector<64x2xbf16>, vector<2x2xbf16>, vector<64x2xf32> -> vector<64x2xf32>
    %112 = arith.addf %104, %111 : vector<64x2xf32>
    %c0_112 = arith.constant 0 : index
    %c0_113 = arith.constant 0 : index
    %c1_114 = arith.constant 1 : index
    %c2_115 = arith.constant 2 : index
    %c0_116 = arith.constant 0 : index
    %113 = vector.load %arg3[%c0_112, %c0_113, %c1_114, %c2_115, %c0_116] : memref<1x1x10x10x2xf32, #tpu.memory_space<vmem>>, vector<1x1x8x8x2xf32>
    %114 = vector.shape_cast %113 : vector<1x1x8x8x2xf32> to vector<8x8x2xf32>
    %115 = vector.shape_cast %114 : vector<8x8x2xf32> to vector<64x2xf32>
    %116 = arith.truncf %115 : vector<64x2xf32> to vector<64x2xbf16>
    %c14 = arith.constant 14 : index
    %c0_117 = arith.constant 0 : index
    %c0_118 = arith.constant 0 : index
    %117 = vector.load %arg5[%c14, %c0_117, %c0_118] : memref<27x2x2xbf16, #tpu.memory_space<vmem>>, vector<1x2x2xbf16>
    %118 = vector.shape_cast %117 : vector<1x2x2xbf16> to vector<2x2xbf16>
    %cst_119 = arith.constant dense<0.000000e+00> : vector<64x2xf32>
    %119 = tpu.matmul %116, %118, %cst_119 {dimension_numbers = #tpu.dot_dimension_numbers<[1], [0], [0], [1], [0, 0, 1, 1], [], []>} : vector<64x2xbf16>, vector<2x2xbf16>, vector<64x2xf32> -> vector<64x2xf32>
    %120 = arith.addf %112, %119 : vector<64x2xf32>
    %c0_120 = arith.constant 0 : index
    %c0_121 = arith.constant 0 : index
    %c2_122 = arith.constant 2 : index
    %c0_123 = arith.constant 0 : index
    %c0_124 = arith.constant 0 : index
    %121 = vector.load %arg3[%c0_120, %c0_121, %c2_122, %c0_123, %c0_124] : memref<1x1x10x10x2xf32, #tpu.memory_space<vmem>>, vector<1x1x8x8x2xf32>
    %122 = vector.shape_cast %121 : vector<1x1x8x8x2xf32> to vector<8x8x2xf32>
    %123 = vector.shape_cast %122 : vector<8x8x2xf32> to vector<64x2xf32>
    %124 = arith.truncf %123 : vector<64x2xf32> to vector<64x2xbf16>
    %c15 = arith.constant 15 : index
    %c0_125 = arith.constant 0 : index
    %c0_126 = arith.constant 0 : index
    %125 = vector.load %arg5[%c15, %c0_125, %c0_126] : memref<27x2x2xbf16, #tpu.memory_space<vmem>>, vector<1x2x2xbf16>
    %126 = vector.shape_cast %125 : vector<1x2x2xbf16> to vector<2x2xbf16>
    %cst_127 = arith.constant dense<0.000000e+00> : vector<64x2xf32>
    %127 = tpu.matmul %124, %126, %cst_127 {dimension_numbers = #tpu.dot_dimension_numbers<[1], [0], [0], [1], [0, 0, 1, 1], [], []>} : vector<64x2xbf16>, vector<2x2xbf16>, vector<64x2xf32> -> vector<64x2xf32>
    %128 = arith.addf %120, %127 : vector<64x2xf32>
    %c0_128 = arith.constant 0 : index
    %c0_129 = arith.constant 0 : index
    %c2_130 = arith.constant 2 : index
    %c1_131 = arith.constant 1 : index
    %c0_132 = arith.constant 0 : index
    %129 = vector.load %arg3[%c0_128, %c0_129, %c2_130, %c1_131, %c0_132] : memref<1x1x10x10x2xf32, #tpu.memory_space<vmem>>, vector<1x1x8x8x2xf32>
    %130 = vector.shape_cast %129 : vector<1x1x8x8x2xf32> to vector<8x8x2xf32>
    %131 = vector.shape_cast %130 : vector<8x8x2xf32> to vector<64x2xf32>
    %132 = arith.truncf %131 : vector<64x2xf32> to vector<64x2xbf16>
    %c16 = arith.constant 16 : index
    %c0_133 = arith.constant 0 : index
    %c0_134 = arith.constant 0 : index
    %133 = vector.load %arg5[%c16, %c0_133, %c0_134] : memref<27x2x2xbf16, #tpu.memory_space<vmem>>, vector<1x2x2xbf16>
    %134 = vector.shape_cast %133 : vector<1x2x2xbf16> to vector<2x2xbf16>
    %cst_135 = arith.constant dense<0.000000e+00> : vector<64x2xf32>
    %135 = tpu.matmul %132, %134, %cst_135 {dimension_numbers = #tpu.dot_dimension_numbers<[1], [0], [0], [1], [0, 0, 1, 1], [], []>} : vector<64x2xbf16>, vector<2x2xbf16>, vector<64x2xf32> -> vector<64x2xf32>
    %136 = arith.addf %128, %135 : vector<64x2xf32>
    %c0_136 = arith.constant 0 : index
    %c0_137 = arith.constant 0 : index
    %c2_138 = arith.constant 2 : index
    %c2_139 = arith.constant 2 : index
    %c0_140 = arith.constant 0 : index
    %137 = vector.load %arg3[%c0_136, %c0_137, %c2_138, %c2_139, %c0_140] : memref<1x1x10x10x2xf32, #tpu.memory_space<vmem>>, vector<1x1x8x8x2xf32>
    %138 = vector.shape_cast %137 : vector<1x1x8x8x2xf32> to vector<8x8x2xf32>
    %139 = vector.shape_cast %138 : vector<8x8x2xf32> to vector<64x2xf32>
    %140 = arith.truncf %139 : vector<64x2xf32> to vector<64x2xbf16>
    %c17 = arith.constant 17 : index
    %c0_141 = arith.constant 0 : index
    %c0_142 = arith.constant 0 : index
    %141 = vector.load %arg5[%c17, %c0_141, %c0_142] : memref<27x2x2xbf16, #tpu.memory_space<vmem>>, vector<1x2x2xbf16>
    %142 = vector.shape_cast %141 : vector<1x2x2xbf16> to vector<2x2xbf16>
    %cst_143 = arith.constant dense<0.000000e+00> : vector<64x2xf32>
    %143 = tpu.matmul %140, %142, %cst_143 {dimension_numbers = #tpu.dot_dimension_numbers<[1], [0], [0], [1], [0, 0, 1, 1], [], []>} : vector<64x2xbf16>, vector<2x2xbf16>, vector<64x2xf32> -> vector<64x2xf32>
    %144 = arith.addf %136, %143 : vector<64x2xf32>
    %c0_144 = arith.constant 0 : index
    %c0_145 = arith.constant 0 : index
    %c0_146 = arith.constant 0 : index
    %c0_147 = arith.constant 0 : index
    %c0_148 = arith.constant 0 : index
    %145 = vector.load %arg4[%c0_144, %c0_145, %c0_146, %c0_147, %c0_148] : memref<1x1x10x10x2xf32, #tpu.memory_space<vmem>>, vector<1x1x8x8x2xf32>
    %146 = vector.shape_cast %145 : vector<1x1x8x8x2xf32> to vector<8x8x2xf32>
    %147 = vector.shape_cast %146 : vector<8x8x2xf32> to vector<64x2xf32>
    %148 = arith.truncf %147 : vector<64x2xf32> to vector<64x2xbf16>
    %c18 = arith.constant 18 : index
    %c0_149 = arith.constant 0 : index
    %c0_150 = arith.constant 0 : index
    %149 = vector.load %arg5[%c18, %c0_149, %c0_150] : memref<27x2x2xbf16, #tpu.memory_space<vmem>>, vector<1x2x2xbf16>
    %150 = vector.shape_cast %149 : vector<1x2x2xbf16> to vector<2x2xbf16>
    %cst_151 = arith.constant dense<0.000000e+00> : vector<64x2xf32>
    %151 = tpu.matmul %148, %150, %cst_151 {dimension_numbers = #tpu.dot_dimension_numbers<[1], [0], [0], [1], [0, 0, 1, 1], [], []>} : vector<64x2xbf16>, vector<2x2xbf16>, vector<64x2xf32> -> vector<64x2xf32>
    %152 = arith.addf %144, %151 : vector<64x2xf32>
    %c0_152 = arith.constant 0 : index
    %c0_153 = arith.constant 0 : index
    %c0_154 = arith.constant 0 : index
    %c1_155 = arith.constant 1 : index
    %c0_156 = arith.constant 0 : index
    %153 = vector.load %arg4[%c0_152, %c0_153, %c0_154, %c1_155, %c0_156] : memref<1x1x10x10x2xf32, #tpu.memory_space<vmem>>, vector<1x1x8x8x2xf32>
    %154 = vector.shape_cast %153 : vector<1x1x8x8x2xf32> to vector<8x8x2xf32>
    %155 = vector.shape_cast %154 : vector<8x8x2xf32> to vector<64x2xf32>
    %156 = arith.truncf %155 : vector<64x2xf32> to vector<64x2xbf16>
    %c19 = arith.constant 19 : index
    %c0_157 = arith.constant 0 : index
    %c0_158 = arith.constant 0 : index
    %157 = vector.load %arg5[%c19, %c0_157, %c0_158] : memref<27x2x2xbf16, #tpu.memory_space<vmem>>, vector<1x2x2xbf16>
    %158 = vector.shape_cast %157 : vector<1x2x2xbf16> to vector<2x2xbf16>
    %cst_159 = arith.constant dense<0.000000e+00> : vector<64x2xf32>
    %159 = tpu.matmul %156, %158, %cst_159 {dimension_numbers = #tpu.dot_dimension_numbers<[1], [0], [0], [1], [0, 0, 1, 1], [], []>} : vector<64x2xbf16>, vector<2x2xbf16>, vector<64x2xf32> -> vector<64x2xf32>
    %160 = arith.addf %152, %159 : vector<64x2xf32>
    %c0_160 = arith.constant 0 : index
    %c0_161 = arith.constant 0 : index
    %c0_162 = arith.constant 0 : index
    %c2_163 = arith.constant 2 : index
    %c0_164 = arith.constant 0 : index
    %161 = vector.load %arg4[%c0_160, %c0_161, %c0_162, %c2_163, %c0_164] : memref<1x1x10x10x2xf32, #tpu.memory_space<vmem>>, vector<1x1x8x8x2xf32>
    %162 = vector.shape_cast %161 : vector<1x1x8x8x2xf32> to vector<8x8x2xf32>
    %163 = vector.shape_cast %162 : vector<8x8x2xf32> to vector<64x2xf32>
    %164 = arith.truncf %163 : vector<64x2xf32> to vector<64x2xbf16>
    %c20 = arith.constant 20 : index
    %c0_165 = arith.constant 0 : index
    %c0_166 = arith.constant 0 : index
    %165 = vector.load %arg5[%c20, %c0_165, %c0_166] : memref<27x2x2xbf16, #tpu.memory_space<vmem>>, vector<1x2x2xbf16>
    %166 = vector.shape_cast %165 : vector<1x2x2xbf16> to vector<2x2xbf16>
    %cst_167 = arith.constant dense<0.000000e+00> : vector<64x2xf32>
    %167 = tpu.matmul %164, %166, %cst_167 {dimension_numbers = #tpu.dot_dimension_numbers<[1], [0], [0], [1], [0, 0, 1, 1], [], []>} : vector<64x2xbf16>, vector<2x2xbf16>, vector<64x2xf32> -> vector<64x2xf32>
    %168 = arith.addf %160, %167 : vector<64x2xf32>
    %c0_168 = arith.constant 0 : index
    %c0_169 = arith.constant 0 : index
    %c1_170 = arith.constant 1 : index
    %c0_171 = arith.constant 0 : index
    %c0_172 = arith.constant 0 : index
    %169 = vector.load %arg4[%c0_168, %c0_169, %c1_170, %c0_171, %c0_172] : memref<1x1x10x10x2xf32, #tpu.memory_space<vmem>>, vector<1x1x8x8x2xf32>
    %170 = vector.shape_cast %169 : vector<1x1x8x8x2xf32> to vector<8x8x2xf32>
    %171 = vector.shape_cast %170 : vector<8x8x2xf32> to vector<64x2xf32>
    %172 = arith.truncf %171 : vector<64x2xf32> to vector<64x2xbf16>
    %c21 = arith.constant 21 : index
    %c0_173 = arith.constant 0 : index
    %c0_174 = arith.constant 0 : index
    %173 = vector.load %arg5[%c21, %c0_173, %c0_174] : memref<27x2x2xbf16, #tpu.memory_space<vmem>>, vector<1x2x2xbf16>
    %174 = vector.shape_cast %173 : vector<1x2x2xbf16> to vector<2x2xbf16>
    %cst_175 = arith.constant dense<0.000000e+00> : vector<64x2xf32>
    %175 = tpu.matmul %172, %174, %cst_175 {dimension_numbers = #tpu.dot_dimension_numbers<[1], [0], [0], [1], [0, 0, 1, 1], [], []>} : vector<64x2xbf16>, vector<2x2xbf16>, vector<64x2xf32> -> vector<64x2xf32>
    %176 = arith.addf %168, %175 : vector<64x2xf32>
    %c0_176 = arith.constant 0 : index
    %c0_177 = arith.constant 0 : index
    %c1_178 = arith.constant 1 : index
    %c1_179 = arith.constant 1 : index
    %c0_180 = arith.constant 0 : index
    %177 = vector.load %arg4[%c0_176, %c0_177, %c1_178, %c1_179, %c0_180] : memref<1x1x10x10x2xf32, #tpu.memory_space<vmem>>, vector<1x1x8x8x2xf32>
    %178 = vector.shape_cast %177 : vector<1x1x8x8x2xf32> to vector<8x8x2xf32>
    %179 = vector.shape_cast %178 : vector<8x8x2xf32> to vector<64x2xf32>
    %180 = arith.truncf %179 : vector<64x2xf32> to vector<64x2xbf16>
    %c22 = arith.constant 22 : index
    %c0_181 = arith.constant 0 : index
    %c0_182 = arith.constant 0 : index
    %181 = vector.load %arg5[%c22, %c0_181, %c0_182] : memref<27x2x2xbf16, #tpu.memory_space<vmem>>, vector<1x2x2xbf16>
    %182 = vector.shape_cast %181 : vector<1x2x2xbf16> to vector<2x2xbf16>
    %cst_183 = arith.constant dense<0.000000e+00> : vector<64x2xf32>
    %183 = tpu.matmul %180, %182, %cst_183 {dimension_numbers = #tpu.dot_dimension_numbers<[1], [0], [0], [1], [0, 0, 1, 1], [], []>} : vector<64x2xbf16>, vector<2x2xbf16>, vector<64x2xf32> -> vector<64x2xf32>
    %184 = arith.addf %176, %183 : vector<64x2xf32>
    %c0_184 = arith.constant 0 : index
    %c0_185 = arith.constant 0 : index
    %c1_186 = arith.constant 1 : index
    %c2_187 = arith.constant 2 : index
    %c0_188 = arith.constant 0 : index
    %185 = vector.load %arg4[%c0_184, %c0_185, %c1_186, %c2_187, %c0_188] : memref<1x1x10x10x2xf32, #tpu.memory_space<vmem>>, vector<1x1x8x8x2xf32>
    %186 = vector.shape_cast %185 : vector<1x1x8x8x2xf32> to vector<8x8x2xf32>
    %187 = vector.shape_cast %186 : vector<8x8x2xf32> to vector<64x2xf32>
    %188 = arith.truncf %187 : vector<64x2xf32> to vector<64x2xbf16>
    %c23 = arith.constant 23 : index
    %c0_189 = arith.constant 0 : index
    %c0_190 = arith.constant 0 : index
    %189 = vector.load %arg5[%c23, %c0_189, %c0_190] : memref<27x2x2xbf16, #tpu.memory_space<vmem>>, vector<1x2x2xbf16>
    %190 = vector.shape_cast %189 : vector<1x2x2xbf16> to vector<2x2xbf16>
    %cst_191 = arith.constant dense<0.000000e+00> : vector<64x2xf32>
    %191 = tpu.matmul %188, %190, %cst_191 {dimension_numbers = #tpu.dot_dimension_numbers<[1], [0], [0], [1], [0, 0, 1, 1], [], []>} : vector<64x2xbf16>, vector<2x2xbf16>, vector<64x2xf32> -> vector<64x2xf32>
    %192 = arith.addf %184, %191 : vector<64x2xf32>
    %c0_192 = arith.constant 0 : index
    %c0_193 = arith.constant 0 : index
    %c2_194 = arith.constant 2 : index
    %c0_195 = arith.constant 0 : index
    %c0_196 = arith.constant 0 : index
    %193 = vector.load %arg4[%c0_192, %c0_193, %c2_194, %c0_195, %c0_196] : memref<1x1x10x10x2xf32, #tpu.memory_space<vmem>>, vector<1x1x8x8x2xf32>
    %194 = vector.shape_cast %193 : vector<1x1x8x8x2xf32> to vector<8x8x2xf32>
    %195 = vector.shape_cast %194 : vector<8x8x2xf32> to vector<64x2xf32>
    %196 = arith.truncf %195 : vector<64x2xf32> to vector<64x2xbf16>
    %c24 = arith.constant 24 : index
    %c0_197 = arith.constant 0 : index
    %c0_198 = arith.constant 0 : index
    %197 = vector.load %arg5[%c24, %c0_197, %c0_198] : memref<27x2x2xbf16, #tpu.memory_space<vmem>>, vector<1x2x2xbf16>
    %198 = vector.shape_cast %197 : vector<1x2x2xbf16> to vector<2x2xbf16>
    %cst_199 = arith.constant dense<0.000000e+00> : vector<64x2xf32>
    %199 = tpu.matmul %196, %198, %cst_199 {dimension_numbers = #tpu.dot_dimension_numbers<[1], [0], [0], [1], [0, 0, 1, 1], [], []>} : vector<64x2xbf16>, vector<2x2xbf16>, vector<64x2xf32> -> vector<64x2xf32>
    %200 = arith.addf %192, %199 : vector<64x2xf32>
    %c0_200 = arith.constant 0 : index
    %c0_201 = arith.constant 0 : index
    %c2_202 = arith.constant 2 : index
    %c1_203 = arith.constant 1 : index
    %c0_204 = arith.constant 0 : index
    %201 = vector.load %arg4[%c0_200, %c0_201, %c2_202, %c1_203, %c0_204] : memref<1x1x10x10x2xf32, #tpu.memory_space<vmem>>, vector<1x1x8x8x2xf32>
    %202 = vector.shape_cast %201 : vector<1x1x8x8x2xf32> to vector<8x8x2xf32>
    %203 = vector.shape_cast %202 : vector<8x8x2xf32> to vector<64x2xf32>
    %204 = arith.truncf %203 : vector<64x2xf32> to vector<64x2xbf16>
    %c25 = arith.constant 25 : index
    %c0_205 = arith.constant 0 : index
    %c0_206 = arith.constant 0 : index
    %205 = vector.load %arg5[%c25, %c0_205, %c0_206] : memref<27x2x2xbf16, #tpu.memory_space<vmem>>, vector<1x2x2xbf16>
    %206 = vector.shape_cast %205 : vector<1x2x2xbf16> to vector<2x2xbf16>
    %cst_207 = arith.constant dense<0.000000e+00> : vector<64x2xf32>
    %207 = tpu.matmul %204, %206, %cst_207 {dimension_numbers = #tpu.dot_dimension_numbers<[1], [0], [0], [1], [0, 0, 1, 1], [], []>} : vector<64x2xbf16>, vector<2x2xbf16>, vector<64x2xf32> -> vector<64x2xf32>
    %208 = arith.addf %200, %207 : vector<64x2xf32>
    %c0_208 = arith.constant 0 : index
    %c0_209 = arith.constant 0 : index
    %c2_210 = arith.constant 2 : index
    %c2_211 = arith.constant 2 : index
    %c0_212 = arith.constant 0 : index
    %209 = vector.load %arg4[%c0_208, %c0_209, %c2_210, %c2_211, %c0_212] : memref<1x1x10x10x2xf32, #tpu.memory_space<vmem>>, vector<1x1x8x8x2xf32>
    %210 = vector.shape_cast %209 : vector<1x1x8x8x2xf32> to vector<8x8x2xf32>
    %211 = vector.shape_cast %210 : vector<8x8x2xf32> to vector<64x2xf32>
    %212 = arith.truncf %211 : vector<64x2xf32> to vector<64x2xbf16>
    %c26 = arith.constant 26 : index
    %c0_213 = arith.constant 0 : index
    %c0_214 = arith.constant 0 : index
    %213 = vector.load %arg5[%c26, %c0_213, %c0_214] : memref<27x2x2xbf16, #tpu.memory_space<vmem>>, vector<1x2x2xbf16>
    %214 = vector.shape_cast %213 : vector<1x2x2xbf16> to vector<2x2xbf16>
    %cst_215 = arith.constant dense<0.000000e+00> : vector<64x2xf32>
    %215 = tpu.matmul %212, %214, %cst_215 {dimension_numbers = #tpu.dot_dimension_numbers<[1], [0], [0], [1], [0, 0, 1, 1], [], []>} : vector<64x2xbf16>, vector<2x2xbf16>, vector<64x2xf32> -> vector<64x2xf32>
    %216 = arith.addf %208, %215 : vector<64x2xf32>
    %c0_216 = arith.constant 0 : index
    %c0_217 = arith.constant 0 : index
    %217 = vector.load %arg6[%c0_216, %c0_217] : memref<1x2xf32, #tpu.memory_space<vmem>>, vector<1x2xf32>
    %218 = vector.shape_cast %217 : vector<1x2xf32> to vector<2xf32>
    %219 = vector.shape_cast %218 : vector<2xf32> to vector<1x2xf32>
    %220 = vector.broadcast %219 : vector<1x2xf32> to vector<64x2xf32>
    %221 = arith.addf %216, %220 : vector<64x2xf32>
    %222 = vector.shape_cast %221 : vector<64x2xf32> to vector<1x64x2xf32>
    %cst_218 = arith.constant dense<0.000000e+00> : vector<1xf32>
    %223 = vector.multi_reduction <add>, %222, %cst_218 [1, 2] : vector<1x64x2xf32> to vector<1xf32>
    %224 = vector.shape_cast %223 : vector<1xf32> to vector<1x1x1xf32>
    %225 = vector.extract %224[0, 0, 0] : f32 from vector<1x1x1xf32>
    %226 = arith.mulf %221, %221 : vector<64x2xf32>
    %227 = vector.shape_cast %226 : vector<64x2xf32> to vector<1x64x2xf32>
    %cst_219 = arith.constant dense<0.000000e+00> : vector<1xf32>
    %228 = vector.multi_reduction <add>, %227, %cst_219 [1, 2] : vector<1x64x2xf32> to vector<1xf32>
    %229 = vector.shape_cast %228 : vector<1xf32> to vector<1x1x1xf32>
    %230 = vector.extract %229[0, 0, 0] : f32 from vector<1x1x1xf32>
    %231 = vector.shape_cast %221 : vector<64x2xf32> to vector<1x1x8x8x2xf32>
    %c0_220 = arith.constant 0 : index
    %c0_221 = arith.constant 0 : index
    %c0_222 = arith.constant 0 : index
    %c0_223 = arith.constant 0 : index
    %c0_224 = arith.constant 0 : index
    %232 = vector.load %arg7[%c0_220, %c0_221, %c0_222, %c0_223, %c0_224] : memref<1x1x8x8x2xf32, #tpu.memory_space<vmem>>, vector<1x1x8x8x2xf32>
    tpu.vector_store %arg7[%c0_220, %c0_221, %c0_222, %c0_223, %c0_224], %231 {strides = array<i32>} : memref<1x1x8x8x2xf32, #tpu.memory_space<vmem>>, vector<1x1x8x8x2xf32>,
    %233 = vector.broadcast %225 : f32 to vector<1x1x1x128xf32>
    %234 = vector.broadcast %230 : f32 to vector<1x1x1x128xf32>
    %235 = tpu.concatenate %233, %234 in 2 : vector<1x1x1x128xf32>, vector<1x1x1x128xf32> -> vector<1x1x2x128xf32>
    %c0_225 = arith.constant 0 : index
    %c0_226 = arith.constant 0 : index
    %c0_227 = arith.constant 0 : index
    %c0_228 = arith.constant 0 : index
    %236 = vector.load %arg8[%c0_225, %c0_226, %c0_227, %c0_228] : memref<1x1x2x128xf32, #tpu.memory_space<vmem>>, vector<1x1x2x128xf32>
    tpu.vector_store %arg8[%c0_225, %c0_226, %c0_227, %c0_228], %235 {strides = array<i32>} : memref<1x1x2x128xf32, #tpu.memory_space<vmem>>, vector<1x1x2x128xf32>,
    return
  }
  func.func @transform_0(%arg0: i32, %arg1: i32) -> (i32, i32, i32, i32, i32) {
    %c0_i32 = arith.constant 0 : i32
    %0 = arith.addi %arg1, %c0_i32 : i32
    %c0_i32_0 = arith.constant 0 : i32
    %c0_i32_1 = arith.constant 0 : i32
    %c0_i32_2 = arith.constant 0 : i32
    %c0_i32_3 = arith.constant 0 : i32
    return %arg0, %0, %c0_i32_0, %c0_i32_1, %c0_i32_2 : i32, i32, i32, i32, i32
  }
  func.func @transform_1(%arg0: i32, %arg1: i32) -> (i32, i32, i32, i32, i32) {
    %c1_i32 = arith.constant 1 : i32
    %0 = arith.addi %arg1, %c1_i32 : i32
    %c0_i32 = arith.constant 0 : i32
    %c0_i32_0 = arith.constant 0 : i32
    %c0_i32_1 = arith.constant 0 : i32
    %c0_i32_2 = arith.constant 0 : i32
    return %arg0, %0, %c0_i32, %c0_i32_0, %c0_i32_1 : i32, i32, i32, i32, i32
  }
  func.func @transform_2(%arg0: i32, %arg1: i32) -> (i32, i32, i32, i32, i32) {
    %c2_i32 = arith.constant 2 : i32
    %0 = arith.addi %arg1, %c2_i32 : i32
    %c0_i32 = arith.constant 0 : i32
    %c0_i32_0 = arith.constant 0 : i32
    %c0_i32_1 = arith.constant 0 : i32
    %c0_i32_2 = arith.constant 0 : i32
    return %arg0, %0, %c0_i32, %c0_i32_0, %c0_i32_1 : i32, i32, i32, i32, i32
  }
  func.func @transform_3(%arg0: i32, %arg1: i32) -> (i32, i32, i32) {
    %c0_i32 = arith.constant 0 : i32
    %c0_i32_0 = arith.constant 0 : i32
    %c0_i32_1 = arith.constant 0 : i32
    %c0_i32_2 = arith.constant 0 : i32
    return %c0_i32, %c0_i32_0, %c0_i32_1 : i32, i32, i32
  }
  func.func @transform_4(%arg0: i32, %arg1: i32) -> (i32, i32) {
    %c0_i32 = arith.constant 0 : i32
    %c0_i32_0 = arith.constant 0 : i32
    %c0_i32_1 = arith.constant 0 : i32
    return %c0_i32, %c0_i32_0 : i32, i32
  }
  func.func @transform_5(%arg0: i32, %arg1: i32) -> (i32, i32, i32, i32, i32) {
    %c0_i32 = arith.constant 0 : i32
    %c0_i32_0 = arith.constant 0 : i32
    %c0_i32_1 = arith.constant 0 : i32
    %c0_i32_2 = arith.constant 0 : i32
    return %arg0, %arg1, %c0_i32, %c0_i32_0, %c0_i32_1 : i32, i32, i32, i32, i32
  }
  func.func @transform_6(%arg0: i32, %arg1: i32) -> (i32, i32, i32, i32) {
    %c0_i32 = arith.constant 0 : i32
    %c0_i32_0 = arith.constant 0 : i32
    %c0_i32_1 = arith.constant 0 : i32
    return %arg0, %arg1, %c0_i32, %c0_i32_0 : i32, i32, i32, i32
  }
}

module attributes {stable_mosaic.version = 11 : i64} {
  func.func @_shortcut_concat_kernel(%arg0: i32, %arg1: i32, %arg2: memref<1x1x8x8x8xf32, #tpu.memory_space<vmem>>, %arg3: memref<1x1x8x8x4xf32, #tpu.memory_space<vmem>>, %arg4: memref<1x1x8x8x2xf32, #tpu.memory_space<vmem>>, %arg5: memref<1x1x8x8x2xf32, #tpu.memory_space<vmem>>, %arg6: memref<8x8xbf16, #tpu.memory_space<vmem>>, %arg7: memref<1x8xf32, #tpu.memory_space<vmem>>, %arg8: memref<1x1x8x8x8xf32, #tpu.memory_space<vmem>>, %arg9: memref<1x1x2x128xf32, #tpu.memory_space<vmem>>) attributes {dimension_semantics = [#tpu.dimension_semantics<parallel>, #tpu.dimension_semantics<parallel>], iteration_bounds = array<i64: 2, 8>, scalar_prefetch = 0 : i64, scratch_operands = 0 : i64, tpu.core_type = #tpu.core_type<tc>, window_params = [{transform_indices = @transform_0, window_bounds = array<i64: 1, 1, 8, 8, 8>}, {transform_indices = @transform_1, window_bounds = array<i64: 1, 1, 8, 8, 4>}, {transform_indices = @transform_2, window_bounds = array<i64: 1, 1, 8, 8, 2>}, {transform_indices = @transform_3, window_bounds = array<i64: 1, 1, 8, 8, 2>}, {pipeline_mode = #tpu.pipeline_mode<synchronous>, transform_indices = @transform_4, window_bounds = array<i64: 8, 8>}, {pipeline_mode = #tpu.pipeline_mode<synchronous>, transform_indices = @transform_5, window_bounds = array<i64: 1, 8>}, {transform_indices = @transform_6, window_bounds = array<i64: 1, 1, 8, 8, 8>}, {transform_indices = @transform_7, window_bounds = array<i64: 1, 1, 2, 128>}]} {
    %c0 = arith.constant 0 : index
    %c0_0 = arith.constant 0 : index
    %c0_1 = arith.constant 0 : index
    %c0_2 = arith.constant 0 : index
    %c0_3 = arith.constant 0 : index
    %0 = vector.load %arg2[%c0, %c0_0, %c0_1, %c0_2, %c0_3] : memref<1x1x8x8x8xf32, #tpu.memory_space<vmem>>, vector<1x1x8x8x8xf32>
    %1 = vector.shape_cast %0 : vector<1x1x8x8x8xf32> to vector<8x8x8xf32>
    %2 = vector.shape_cast %1 : vector<8x8x8xf32> to vector<64x8xf32>
    %3 = arith.truncf %2 : vector<64x8xf32> to vector<64x8xbf16>
    %c0_4 = arith.constant 0 : index
    %c0_5 = arith.constant 0 : index
    %4 = vector.load %arg6[%c0_4, %c0_5] : memref<8x8xbf16, #tpu.memory_space<vmem>>, vector<8x8xbf16>
    %cst = arith.constant dense<0.000000e+00> : vector<64x8xf32>
    %5 = tpu.matmul %3, %4, %cst {dimension_numbers = #tpu.dot_dimension_numbers<[1], [0], [0], [1], [0, 0, 1, 1], [], []>} : vector<64x8xbf16>, vector<8x8xbf16>, vector<64x8xf32> -> vector<64x8xf32>
    %c0_6 = arith.constant 0 : index
    %c0_7 = arith.constant 0 : index
    %c0_8 = arith.constant 0 : index
    %c0_9 = arith.constant 0 : index
    %c0_10 = arith.constant 0 : index
    %6 = vector.load %arg3[%c0_6, %c0_7, %c0_8, %c0_9, %c0_10] : memref<1x1x8x8x4xf32, #tpu.memory_space<vmem>>, vector<1x1x8x8x4xf32>
    %7 = vector.shape_cast %6 : vector<1x1x8x8x4xf32> to vector<8x8x4xf32>
    %c0_11 = arith.constant 0 : index
    %c0_12 = arith.constant 0 : index
    %c0_13 = arith.constant 0 : index
    %c0_14 = arith.constant 0 : index
    %c0_15 = arith.constant 0 : index
    %8 = vector.load %arg4[%c0_11, %c0_12, %c0_13, %c0_14, %c0_15] : memref<1x1x8x8x2xf32, #tpu.memory_space<vmem>>, vector<1x1x8x8x2xf32>
    %9 = vector.shape_cast %8 : vector<1x1x8x8x2xf32> to vector<8x8x2xf32>
    %c0_16 = arith.constant 0 : index
    %c0_17 = arith.constant 0 : index
    %c0_18 = arith.constant 0 : index
    %c0_19 = arith.constant 0 : index
    %c0_20 = arith.constant 0 : index
    %10 = vector.load %arg5[%c0_16, %c0_17, %c0_18, %c0_19, %c0_20] : memref<1x1x8x8x2xf32, #tpu.memory_space<vmem>>, vector<1x1x8x8x2xf32>
    %11 = vector.shape_cast %10 : vector<1x1x8x8x2xf32> to vector<8x8x2xf32>
    %12 = tpu.concatenate %7, %9, %11 in 2 : vector<8x8x4xf32>, vector<8x8x2xf32>, vector<8x8x2xf32> -> vector<8x8x8xf32>
    %13 = vector.shape_cast %12 : vector<8x8x8xf32> to vector<64x8xf32>
    %c0_21 = arith.constant 0 : index
    %c0_22 = arith.constant 0 : index
    %14 = vector.load %arg7[%c0_21, %c0_22] : memref<1x8xf32, #tpu.memory_space<vmem>>, vector<1x8xf32>
    %15 = vector.shape_cast %14 : vector<1x8xf32> to vector<8xf32>
    %16 = vector.shape_cast %15 : vector<8xf32> to vector<1x8xf32>
    %17 = vector.broadcast %16 : vector<1x8xf32> to vector<64x8xf32>
    %18 = arith.addf %5, %17 : vector<64x8xf32>
    %19 = arith.addf %18, %13 : vector<64x8xf32>
    %20 = vector.shape_cast %19 : vector<64x8xf32> to vector<1x64x8xf32>
    %cst_23 = arith.constant dense<0.000000e+00> : vector<1xf32>
    %21 = vector.multi_reduction <add>, %20, %cst_23 [1, 2] : vector<1x64x8xf32> to vector<1xf32>
    %22 = vector.shape_cast %21 : vector<1xf32> to vector<1x1x1xf32>
    %23 = vector.extract %22[0, 0, 0] : f32 from vector<1x1x1xf32>
    %24 = arith.mulf %19, %19 : vector<64x8xf32>
    %25 = vector.shape_cast %24 : vector<64x8xf32> to vector<1x64x8xf32>
    %cst_24 = arith.constant dense<0.000000e+00> : vector<1xf32>
    %26 = vector.multi_reduction <add>, %25, %cst_24 [1, 2] : vector<1x64x8xf32> to vector<1xf32>
    %27 = vector.shape_cast %26 : vector<1xf32> to vector<1x1x1xf32>
    %28 = vector.extract %27[0, 0, 0] : f32 from vector<1x1x1xf32>
    %29 = vector.shape_cast %19 : vector<64x8xf32> to vector<1x1x8x8x8xf32>
    %c0_25 = arith.constant 0 : index
    %c0_26 = arith.constant 0 : index
    %c0_27 = arith.constant 0 : index
    %c0_28 = arith.constant 0 : index
    %c0_29 = arith.constant 0 : index
    %30 = vector.load %arg8[%c0_25, %c0_26, %c0_27, %c0_28, %c0_29] : memref<1x1x8x8x8xf32, #tpu.memory_space<vmem>>, vector<1x1x8x8x8xf32>
    tpu.vector_store %arg8[%c0_25, %c0_26, %c0_27, %c0_28, %c0_29], %29 {strides = array<i32>} : memref<1x1x8x8x8xf32, #tpu.memory_space<vmem>>, vector<1x1x8x8x8xf32>,
    %31 = vector.broadcast %23 : f32 to vector<1x1x1x128xf32>
    %32 = vector.broadcast %28 : f32 to vector<1x1x1x128xf32>
    %33 = tpu.concatenate %31, %32 in 2 : vector<1x1x1x128xf32>, vector<1x1x1x128xf32> -> vector<1x1x2x128xf32>
    %c0_30 = arith.constant 0 : index
    %c0_31 = arith.constant 0 : index
    %c0_32 = arith.constant 0 : index
    %c0_33 = arith.constant 0 : index
    %34 = vector.load %arg9[%c0_30, %c0_31, %c0_32, %c0_33] : memref<1x1x2x128xf32, #tpu.memory_space<vmem>>, vector<1x1x2x128xf32>
    tpu.vector_store %arg9[%c0_30, %c0_31, %c0_32, %c0_33], %33 {strides = array<i32>} : memref<1x1x2x128xf32, #tpu.memory_space<vmem>>, vector<1x1x2x128xf32>,
    return
  }
  func.func @transform_0(%arg0: i32, %arg1: i32) -> (i32, i32, i32, i32, i32) {
    %c0_i32 = arith.constant 0 : i32
    %c0_i32_0 = arith.constant 0 : i32
    %c0_i32_1 = arith.constant 0 : i32
    %c0_i32_2 = arith.constant 0 : i32
    return %arg0, %arg1, %c0_i32, %c0_i32_0, %c0_i32_1 : i32, i32, i32, i32, i32
  }
  func.func @transform_1(%arg0: i32, %arg1: i32) -> (i32, i32, i32, i32, i32) {
    %c0_i32 = arith.constant 0 : i32
    %c0_i32_0 = arith.constant 0 : i32
    %c0_i32_1 = arith.constant 0 : i32
    %c0_i32_2 = arith.constant 0 : i32
    return %arg0, %arg1, %c0_i32, %c0_i32_0, %c0_i32_1 : i32, i32, i32, i32, i32
  }
  func.func @transform_2(%arg0: i32, %arg1: i32) -> (i32, i32, i32, i32, i32) {
    %c0_i32 = arith.constant 0 : i32
    %c0_i32_0 = arith.constant 0 : i32
    %c0_i32_1 = arith.constant 0 : i32
    %c0_i32_2 = arith.constant 0 : i32
    return %arg0, %arg1, %c0_i32, %c0_i32_0, %c0_i32_1 : i32, i32, i32, i32, i32
  }
  func.func @transform_3(%arg0: i32, %arg1: i32) -> (i32, i32, i32, i32, i32) {
    %c0_i32 = arith.constant 0 : i32
    %c0_i32_0 = arith.constant 0 : i32
    %c0_i32_1 = arith.constant 0 : i32
    %c0_i32_2 = arith.constant 0 : i32
    return %arg0, %arg1, %c0_i32, %c0_i32_0, %c0_i32_1 : i32, i32, i32, i32, i32
  }
  func.func @transform_4(%arg0: i32, %arg1: i32) -> (i32, i32) {
    %c0_i32 = arith.constant 0 : i32
    %c0_i32_0 = arith.constant 0 : i32
    %c0_i32_1 = arith.constant 0 : i32
    return %c0_i32, %c0_i32_0 : i32, i32
  }
  func.func @transform_5(%arg0: i32, %arg1: i32) -> (i32, i32) {
    %c0_i32 = arith.constant 0 : i32
    %c0_i32_0 = arith.constant 0 : i32
    %c0_i32_1 = arith.constant 0 : i32
    return %c0_i32, %c0_i32_0 : i32, i32
  }
  func.func @transform_6(%arg0: i32, %arg1: i32) -> (i32, i32, i32, i32, i32) {
    %c0_i32 = arith.constant 0 : i32
    %c0_i32_0 = arith.constant 0 : i32
    %c0_i32_1 = arith.constant 0 : i32
    %c0_i32_2 = arith.constant 0 : i32
    return %arg0, %arg1, %c0_i32, %c0_i32_0, %c0_i32_1 : i32, i32, i32, i32, i32
  }
  func.func @transform_7(%arg0: i32, %arg1: i32) -> (i32, i32, i32, i32) {
    %c0_i32 = arith.constant 0 : i32
    %c0_i32_0 = arith.constant 0 : i32
    %c0_i32_1 = arith.constant 0 : i32
    return %arg0, %arg1, %c0_i32, %c0_i32_0 : i32, i32, i32, i32
  }
}

module attributes {stable_mosaic.version = 11 : i64} {
  func.func @_norm_silu_kernel(%arg0: i32, %arg1: i32, %arg2: memref<1x1x8x8x8xf32, #tpu.memory_space<vmem>>, %arg3: memref<1x1x8xf32, #tpu.memory_space<vmem>>, %arg4: memref<1x1x8xf32, #tpu.memory_space<vmem>>, %arg5: memref<1x1x8x8x8xf32, #tpu.memory_space<vmem>>) attributes {dimension_semantics = [#tpu.dimension_semantics<parallel>, #tpu.dimension_semantics<parallel>], iteration_bounds = array<i64: 2, 8>, scalar_prefetch = 0 : i64, scratch_operands = 0 : i64, tpu.core_type = #tpu.core_type<tc>, window_params = [{transform_indices = @transform_0, window_bounds = array<i64: 1, 1, 8, 8, 8>}, {transform_indices = @transform_1, window_bounds = array<i64: 1, 1, 8>}, {transform_indices = @transform_2, window_bounds = array<i64: 1, 1, 8>}, {transform_indices = @transform_3, window_bounds = array<i64: 1, 1, 8, 8, 8>}]} {
    %c0 = arith.constant 0 : index
    %c0_0 = arith.constant 0 : index
    %c0_1 = arith.constant 0 : index
    %c0_2 = arith.constant 0 : index
    %c0_3 = arith.constant 0 : index
    %0 = vector.load %arg2[%c0, %c0_0, %c0_1, %c0_2, %c0_3] : memref<1x1x8x8x8xf32, #tpu.memory_space<vmem>>, vector<1x1x8x8x8xf32>
    %c0_4 = arith.constant 0 : index
    %c0_5 = arith.constant 0 : index
    %c0_6 = arith.constant 0 : index
    %1 = vector.load %arg3[%c0_4, %c0_5, %c0_6] : memref<1x1x8xf32, #tpu.memory_space<vmem>>, vector<1x1x8xf32>
    %2 = vector.shape_cast %1 : vector<1x1x8xf32> to vector<8xf32>
    %3 = vector.shape_cast %2 : vector<8xf32> to vector<1x1x1x1x8xf32>
    %4 = vector.broadcast %3 : vector<1x1x1x1x8xf32> to vector<1x1x8x8x8xf32>
    %5 = arith.mulf %0, %4 : vector<1x1x8x8x8xf32>
    %c0_7 = arith.constant 0 : index
    %c0_8 = arith.constant 0 : index
    %c0_9 = arith.constant 0 : index
    %6 = vector.load %arg4[%c0_7, %c0_8, %c0_9] : memref<1x1x8xf32, #tpu.memory_space<vmem>>, vector<1x1x8xf32>
    %7 = vector.shape_cast %6 : vector<1x1x8xf32> to vector<8xf32>
    %8 = vector.shape_cast %7 : vector<8xf32> to vector<1x1x1x1x8xf32>
    %9 = vector.broadcast %8 : vector<1x1x1x1x8xf32> to vector<1x1x8x8x8xf32>
    %10 = arith.addf %5, %9 : vector<1x1x8x8x8xf32>
    %11 = arith.negf %10 : vector<1x1x8x8x8xf32>
    %12 = math.exp %11 : vector<1x1x8x8x8xf32>
    %cst = arith.constant 1.000000e+00 : f32
    %13 = vector.broadcast %cst : f32 to vector<1x1x8x8x8xf32>
    %14 = arith.addf %13, %12 : vector<1x1x8x8x8xf32>
    %15 = arith.divf %13, %14 : vector<1x1x8x8x8xf32>
    %16 = arith.mulf %10, %15 : vector<1x1x8x8x8xf32>
    %c0_10 = arith.constant 0 : index
    %c0_11 = arith.constant 0 : index
    %c0_12 = arith.constant 0 : index
    %c0_13 = arith.constant 0 : index
    %c0_14 = arith.constant 0 : index
    %17 = vector.load %arg5[%c0_10, %c0_11, %c0_12, %c0_13, %c0_14] : memref<1x1x8x8x8xf32, #tpu.memory_space<vmem>>, vector<1x1x8x8x8xf32>
    tpu.vector_store %arg5[%c0_10, %c0_11, %c0_12, %c0_13, %c0_14], %16 {strides = array<i32>} : memref<1x1x8x8x8xf32, #tpu.memory_space<vmem>>, vector<1x1x8x8x8xf32>,
    return
  }
  func.func @transform_0(%arg0: i32, %arg1: i32) -> (i32, i32, i32, i32, i32) {
    %c0_i32 = arith.constant 0 : i32
    %c0_i32_0 = arith.constant 0 : i32
    %c0_i32_1 = arith.constant 0 : i32
    %c0_i32_2 = arith.constant 0 : i32
    return %arg0, %arg1, %c0_i32, %c0_i32_0, %c0_i32_1 : i32, i32, i32, i32, i32
  }
  func.func @transform_1(%arg0: i32, %arg1: i32) -> (i32, i32, i32) {
    %c0_i32 = arith.constant 0 : i32
    %c0_i32_0 = arith.constant 0 : i32
    %c0_i32_1 = arith.constant 0 : i32
    return %arg0, %c0_i32, %c0_i32_0 : i32, i32, i32
  }
  func.func @transform_2(%arg0: i32, %arg1: i32) -> (i32, i32, i32) {
    %c0_i32 = arith.constant 0 : i32
    %c0_i32_0 = arith.constant 0 : i32
    %c0_i32_1 = arith.constant 0 : i32
    return %arg0, %c0_i32, %c0_i32_0 : i32, i32, i32
  }
  func.func @transform_3(%arg0: i32, %arg1: i32) -> (i32, i32, i32, i32, i32) {
    %c0_i32 = arith.constant 0 : i32
    %c0_i32_0 = arith.constant 0 : i32
    %c0_i32_1 = arith.constant 0 : i32
    %c0_i32_2 = arith.constant 0 : i32
    return %arg0, %arg1, %c0_i32, %c0_i32_0, %c0_i32_1 : i32, i32, i32, i32, i32
  }
}

</mosaic_0001>

<llo_original>
// kernel: _lambda_.17
$region0: #{_lambda_.17}
  #allocation0 [shape = 'u32[]', space=smem, size = 0x4, offset = 0x4, fixed_abs, tag = 'smem constant byte address 0x4 - core index']
  #allocation1 [shape = 'u32[72,128]{1,0:T(1,128)}', space=vmem, size = 0x9000, scoped, tag = 'internal scratch']
  %s0 = inlined_call_operand.vmem [shape: f32[2,8,8,8,4], index: 0, kind: input, shape index: {}]
  %s1 = inlined_call_operand.vmem [shape: f32[2,1,4], index: 1, kind: input, shape index: {}]
  %s2 = inlined_call_operand.vmem [shape: f32[2,1,4], index: 2, kind: input, shape index: {}]
  %s3 = inlined_call_operand.vmem [shape: f32[2,8,8,8,4], index: 3, kind: output, shape index: {}]
  %s4 = sld [smem:[#allocation0]]
  $region45: #{_lambda_.17} parent=0
    _
  %s6 = ssub.s32 1, %s4
  %s7 = scalar_select 0, %s6, %s4
  loop: start=0, step=1, limit=18
  $region2: #{_lambda_.17} parent=0 // loop_pre_header
    _
  $region3: #{_lambda_.17} parent=0 // loop_header
    %s9 = sphi 0, %s13
    %p10 = scmp.ge.s32.totalorder %s9, 18
    %s16 = sphi 0, %s28
    %s17 = sphi 0, %s24
    %s18 = sphi 0, %s16
    %s19 = sphi 0, %s17
    %s20 = sphi 0, %s18
    %s21 = sphi 0, %s19
    %s33 = sphi 0, %s35
    %s36 = sphi 0, %s33
    %s37 = sphi 0, %s36
    %s53 = sphi 0, %s37
    %s59 = sphi 0, %s61
    %s62 = sphi 0, %s59
    %s63 = sphi 0, %s62
    %s79 = sphi 0, %s63
    %s85 = sphi 0, %s87
    %s88 = sphi 0, %s85
    %s89 = sphi 0, %s88
    %s105 = sphi 0, %s89
    %s113 = sphi 0, %s115
    %s116 = sphi 0, %s113
    %s117 = sphi 0, %s116
    %s133 = sphi 0, %s117
  $region4: #{_lambda_.17} parent=0 // loop_header_branch
    %12 = sbr.rel (%p10) target = $region8
  $region5: #{_lambda_.17} parent=0 // loop_body
    %s14 = ssub.s32 %s9, 1
    %s15 = ssub.s32 %s9, 2
    %s22 = sadd.s32 1, %s17
    %p23 = scmp.ge.s32.totalorder %s22, 8
    %s24 = scalar_select %p23, 0, %s22
    %s25 = sadd.s32 1, %s16
    %s26 = scalar_select %p23, %s25, %s16
    %p27 = scmp.ge.s32.totalorder %s26, 2
    %s28 = scalar_select %p27, 0, %s26
    %s29 = ssub.s32 %s16, %s28
    %s30 = ssub.s32 %s17, %s24
    %s31 = sor.u32 %s29, %s30
    %p32 = scmp.eq.s32.totalorder %s31, 0
    %s34 = sadd.s32 %s33, 1
    %s35 = scalar_select %p32, %s33, %s34
    %p38 = pneg %p32
    %p39 = scmp.eq.s32.totalorder %s9, 15
    %p40 = por %p38, %p39
    %p41 = scmp.ne.s32.totalorder %s33, %s36
    %p42 = scmp.eq.s32.totalorder %s9, 0
    %p43 = por %p41, %p42
    %p44 = scmp.ne.s32.totalorder %s33, %s36
    %p45 = scmp.eq.s32.totalorder %s14, 15
    %p46 = por %p44, %p45
    %p47 = scmp.ne.s32.totalorder %s36, %s37
    %p48 = scmp.eq.s32.totalorder %s14, 0
    %p49 = por %p47, %p48
    %p50 = scmp.ne.s32.totalorder %s36, %s37
    %p51 = scmp.eq.s32.totalorder %s15, 15
    %p52 = por %p50, %p51
    %p54 = scmp.ne.s32.totalorder %s37, %s53
    %p55 = scmp.eq.s32.totalorder %s15, 0
    %p56 = por %p54, %p55
    %s57 = ssub.s32 %s16, %s28
    %p58 = scmp.eq.s32.totalorder %s57, 0
    %s60 = sadd.s32 %s59, 1
    %s61 = scalar_select %p58, %s59, %s60
    %p64 = pneg %p58
    %p65 = scmp.eq.s32.totalorder %s9, 15
    %p66 = por %p64, %p65
    %p67 = scmp.ne.s32.totalorder %s59, %s62
    %p68 = scmp.eq.s32.totalorder %s9, 0
    %p69 = por %p67, %p68
    %p70 = scmp.ne.s32.totalorder %s59, %s62
    %p71 = scmp.eq.s32.totalorder %s14, 15
    %p72 = por %p70, %p71
    %p73 = scmp.ne.s32.totalorder %s62, %s63
    %p74 = scmp.eq.s32.totalorder %s14, 0
    %p75 = por %p73, %p74
    %p76 = scmp.ne.s32.totalorder %s62, %s63
    %p77 = scmp.eq.s32.totalorder %s15, 15
    %p78 = por %p76, %p77
    %p80 = scmp.ne.s32.totalorder %s63, %s79
    %p81 = scmp.eq.s32.totalorder %s15, 0
    %p82 = por %p80, %p81
    %s83 = ssub.s32 %s16, %s28
    %p84 = scmp.eq.s32.totalorder %s83, 0
    %s86 = sadd.s32 %s85, 1
    %s87 = scalar_select %p84, %s85, %s86
    %p90 = pneg %p84
    %p91 = scmp.eq.s32.totalorder %s9, 15
    %p92 = por %p90, %p91
    %p93 = scmp.ne.s32.totalorder %s85, %s88
    %p94 = scmp.eq.s32.totalorder %s9, 0
    %p95 = por %p93, %p94
    %p96 = scmp.ne.s32.totalorder %s85, %s88
    %p97 = scmp.eq.s32.totalorder %s14, 15
    %p98 = por %p96, %p97
    %p99 = scmp.ne.s32.totalorder %s88, %s89
    %p100 = scmp.eq.s32.totalorder %s14, 0
    %p101 = por %p99, %p100
    %p102 = scmp.ne.s32.totalorder %s88, %s89
    %p103 = scmp.eq.s32.totalorder %s15, 15
    %p104 = por %p102, %p103
    %p106 = scmp.ne.s32.totalorder %s89, %s105
    %p107 = scmp.eq.s32.totalorder %s15, 0
    %p108 = por %p106, %p107
    %s109 = ssub.s32 %s16, %s28
    %s110 = ssub.s32 %s17, %s24
    %s111 = sor.u32 %s109, %s110
    %p112 = scmp.eq.s32.totalorder %s111, 0
    %s114 = sadd.s32 %s113, 1
    %s115 = scalar_select %p112, %s113, %s114
    %p118 = pneg %p112
    %p119 = scmp.eq.s32.totalorder %s9, 15
    %p120 = por %p118, %p119
    %p121 = scmp.ne.s32.totalorder %s113, %s116
    %p122 = scmp.eq.s32.totalorder %s9, 0
    %p123 = por %p121, %p122
    %p124 = scmp.ne.s32.totalorder %s113, %s116
    %p125 = scmp.eq.s32.totalorder %s14, 15
    %p126 = por %p124, %p125
    %p127 = scmp.ne.s32.totalorder %s116, %s117
    %p128 = scmp.eq.s32.totalorder %s14, 0
    %p129 = por %p127, %p128
    %p130 = scmp.ne.s32.totalorder %s116, %s117
    %p131 = scmp.eq.s32.totalorder %s15, 15
    %p132 = por %p130, %p131
    %p134 = scmp.ne.s32.totalorder %s117, %s133
    %p135 = scmp.eq.s32.totalorder %s15, 0
    %p136 = por %p134, %p135
    %p137 = scmp.le.s32.totalorder 1, %s9
    %p138 = scmp.lt.s32.totalorder %s9, 17
    %p139 = pnand %p137, %p138
    %p140 = pneg %p139
    // Predicated region
    $region9: #{_lambda_.17} parent=5 // pred_check
      _
    $region10: #{_lambda_.17} parent=5 // pred_check_branch
      %142 = sbr.rel (%p139) target = $region12
    $region11: #{_lambda_.17} parent=5 // pred_region
      %s143 = ssub.s32 %s9, 1
    $region12: #{_lambda_.17} parent=5 // pred_fallthru
      _
    %p144 = scmp.lt.s32.totalorder %s9, 16
    // Predicated region
    $region13: #{_lambda_.17} parent=5 // pred_check
      %p145 = pneg %p144
    $region14: #{_lambda_.17} parent=5 // pred_check_branch
      %147 = sbr.rel (%p145) target = $region16
    $region15: #{_lambda_.17} parent=5 // pred_region
      // Predicated region
      $region17: #{_lambda_.17} parent=15 // pred_check
        %p148 = pneg %p43
      $region18: #{_lambda_.17} parent=15 // pred_check_branch
        %150 = sbr.rel (%p148) target = $region20
      $region19: #{_lambda_.17} parent=15 // pred_region
        %p151 = scmp.lt.s32.totalorder %s16, 1
        %s152 = scalar_select %p151, %s16, 1
        %p153 = scmp.lt.s32.totalorder %s17, 7
        %s154 = scalar_select %p153, %s17, 7
        %s155 = smul.addr %s154, 8
        %s156 = smul.addr %s152, 64
        %s157 = sadd.s32 %s155, %s156
        %s158 = smul.addr %s157, 8
        %s159 = scalar_lea.vmem %s0, %s158
      $region20: #{_lambda_.17} parent=15 // pred_fallthru
        _
      // Predicated region
      $region21: #{_lambda_.17} parent=15 // pred_check
        %p160 = pneg %p69
      $region22: #{_lambda_.17} parent=15 // pred_check_branch
        %162 = sbr.rel (%p160) target = $region24
      $region23: #{_lambda_.17} parent=15 // pred_region
        %p163 = scmp.lt.s32.totalorder %s16, 1
        %s164 = scalar_select %p163, %s16, 1
        %s165 = scalar_lea.vmem %s1, %s164
      $region24: #{_lambda_.17} parent=15 // pred_fallthru
        _
      // Predicated region
      $region25: #{_lambda_.17} parent=15 // pred_check
        %p166 = pneg %p95
      $region26: #{_lambda_.17} parent=15 // pred_check_branch
        %168 = sbr.rel (%p166) target = $region28
      $region27: #{_lambda_.17} parent=15 // pred_region
        %p169 = scmp.lt.s32.totalorder %s16, 1
        %s170 = scalar_select %p169, %s16, 1
        %s171 = scalar_lea.vmem %s2, %s170
      $region28: #{_lambda_.17} parent=15 // pred_fallthru
        _
    $region16: #{_lambda_.17} parent=5 // pred_fallthru
      _
    %p172 = scmp.le.s32.totalorder 1, %s9
    %p173 = scmp.lt.s32.totalorder %s9, 17
    %p174 = pnand %p172, %p173
    %p175 = pneg %p174
    // Predicated region
    $region29: #{_lambda_.17} parent=5 // pred_check
      _
    $region30: #{_lambda_.17} parent=5 // pred_check_branch
      %177 = sbr.rel (%p174) target = $region32
    $region31: #{_lambda_.17} parent=5 // pred_region
      %s178 = ssub.s32 %s9, 1
      %p179 = scmp.lt.s32.totalorder %s18, 1
      %s180 = scalar_select %p179, %s18, 1
      %p181 = scmp.lt.s32.totalorder %s19, 7
      %s182 = scalar_select %p181, %s19, 7
      %s183 = smul.addr %s182, 8
      %s184 = smul.addr %s180, 64
      %s185 = sadd.s32 %s183, %s184
      %s186 = smul.addr %s185, 8
      %s187 = scalar_lea.vmem %s0, %s186
      %p188 = pneg %p49
      %p189 = pneg %p46
      %p190 = scmp.lt.s32.totalorder %s18, 1
      %s191 = scalar_select %p190, %s18, 1
      %s192 = scalar_lea.vmem %s1, %s191
      %p193 = pneg %p75
      %p194 = pneg %p72
      %p195 = scmp.lt.s32.totalorder %s18, 1
      %s196 = scalar_select %p195, %s18, 1
      %s197 = scalar_lea.vmem %s2, %s196
      %p198 = pneg %p101
      %p199 = pneg %p98
      %p200 = pneg %p129
      %p201 = pneg %p126
      %p202 = scmp.lt.s32.totalorder %s18, 1
      %s203 = scalar_select %p202, %s18, 1
      %p204 = scmp.lt.s32.totalorder %s19, 7
      %s205 = scalar_select %p204, %s19, 7
      %s206 = smul.addr %s205, 8
      %s207 = smul.addr %s203, 64
      %s208 = sadd.s32 %s206, %s207
      %s209 = smul.addr %s208, 8
      %s210 = scalar_lea.vmem %s3, %s209
      %p211 = scmp.lt.s32.totalorder %s18, 1
      %s212 = scalar_select %p211, %s18, 1
      %p213 = scmp.lt.s32.totalorder %s19, 7
      %s214 = scalar_select %p213, %s19, 7
      %s215 = smul.addr %s214, 8
      %s216 = smul.addr %s212, 64
      %s217 = sadd.s32 %s215, %s216
      %s218 = smul.addr %s217, 8
      %s219 = scalar_lea.vmem %s0, %s218
      %p220 = scmp.lt.s32.totalorder %s18, 1
      %s221 = scalar_select %p220, %s18, 1
      %s222 = scalar_lea.vmem %s1, %s221
      %p223 = scmp.lt.s32.totalorder %s18, 1
      %s224 = scalar_select %p223, %s18, 1
      %s225 = scalar_lea.vmem %s2, %s224
      %p226 = scmp.lt.s32.totalorder %s18, 1
      %s227 = scalar_select %p226, %s18, 1
      %p228 = scmp.lt.s32.totalorder %s19, 7
      %s229 = scalar_select %p228, %s19, 7
      %s230 = smul.addr %s229, 8
      %s231 = smul.addr %s227, 64
      %s232 = sadd.s32 %s230, %s231
      %s233 = smul.addr %s232, 8
      %s234 = scalar_lea.vmem %s3, %s233
      %v235 = vld [vmem:[%s219] sm:$0xff]
      %v236 = vld [vmem:[%s219 + $0x8] sm:$0xff]
      %v237 = vld [vmem:[%s219 + $0x10] sm:$0xff]
      %v238 = vld [vmem:[%s219 + $0x18] sm:$0xff]
      %v239 = vld [vmem:[%s219 + $0x20] sm:$0xff]
      %v240 = vld [vmem:[%s219 + $0x28] sm:$0xff]
      %v241 = vld [vmem:[%s219 + $0x30] sm:$0xff]
      %v242 = vld [vmem:[%s219 + $0x38] sm:$0xff]
      %v243 = vld [vmem:[%s222] sm:$0x1]
      %v245 = vperm.slane %v243, 0
      %v247 = vmul.f32 %v235, %v245
      %v248 = vmul.f32 %v236, %v245
      %v249 = vmul.f32 %v237, %v245
      %v250 = vmul.f32 %v238, %v245
      %v251 = vmul.f32 %v239, %v245
      %v252 = vmul.f32 %v240, %v245
      %v253 = vmul.f32 %v241, %v245
      %v254 = vmul.f32 %v242, %v245
      %v255 = vld [vmem:[%s225] sm:$0x1]
      %v257 = vperm.slane %v255, 0
      %v259 = vadd.f32 %v247, %v257
      %v260 = vadd.f32 %v248, %v257
      %v261 = vadd.f32 %v249, %v257
      %v262 = vadd.f32 %v250, %v257
      %v263 = vadd.f32 %v251, %v257
      %v264 = vadd.f32 %v252, %v257
      %v265 = vadd.f32 %v253, %v257
      %v266 = vadd.f32 %v254, %v257
      %v267 = vxor.u32 %v259, 2147483648
      %v268 = vxor.u32 %v260, 2147483648
      %v269 = vxor.u32 %v261, 2147483648
      %v270 = vxor.u32 %v262, 2147483648
      %v271 = vxor.u32 %v263, 2147483648
      %v272 = vxor.u32 %v264, 2147483648
      %v273 = vxor.u32 %v265, 2147483648
      %v274 = vxor.u32 %v266, 2147483648
      %v275 = vmul.f32 %v267, 1.442695
      %v276 = vpow.pop %v275
      %v277 = vmul.f32 %v268, 1.442695
      %v278 = vpow.pop %v277
      %v279 = vmul.f32 %v269, 1.442695
      %v280 = vpow.pop %v279
      %v281 = vmul.f32 %v270, 1.442695
      %v282 = vpow.pop %v281
      %v283 = vmul.f32 %v271, 1.442695
      %v284 = vpow.pop %v283
      %v285 = vmul.f32 %v272, 1.442695
      %v286 = vpow.pop %v285
      %v287 = vmul.f32 %v273, 1.442695
      %v288 = vpow.pop %v287
      %v289 = vmul.f32 %v274, 1.442695
      %v290 = vpow.pop %v289
      %v291 = vadd.f32 %v276, 1.0
      %v292 = vadd.f32 %v278, 1.0
      %v293 = vadd.f32 %v280, 1.0
      %v294 = vadd.f32 %v282, 1.0
      %v295 = vadd.f32 %v284, 1.0
      %v296 = vadd.f32 %v286, 1.0
      %v297 = vadd.f32 %v288, 1.0
      %v298 = vadd.f32 %v290, 1.0
      %v299 = vrcp.pop %v291
      %v300 = vmul.f32 %v291, %v299
      %v301 = vsub.f32 1.0, %v300
      %v302 = vmul.f32 %v299, %v301
      %v303 = vadd.f32 %v299, %v302
      %vm304 = vweird.f32 %v291
      %vm305 = vweird.f32 %v299
      %vm306 = vmor %vm304, %vm305
      %v307 = vsel %vm306, %v299, %v303
      %v308 = vand.u32 2147483647, %v291
      %vm309 = vcmp.eq.f32.partialorder %v308, 8.507059e+37
      %v310 = vand.u32 %v291, 2147483648
      %v311 = vor.u32 1.1754944e-38, %v310
      %v312 = vsel %vm309, %v311, %v307
      %v313 = vmul.f32 1.0, %v312
      %v314 = vrcp.pop %v292
      %v315 = vmul.f32 %v292, %v314
      %v316 = vsub.f32 1.0, %v315
      %v317 = vmul.f32 %v314, %v316
      %v318 = vadd.f32 %v314, %v317
      %vm319 = vweird.f32 %v292
      %vm320 = vweird.f32 %v314
      %vm321 = vmor %vm319, %vm320
      %v322 = vsel %vm321, %v314, %v318
      %v323 = vand.u32 2147483647, %v292
      %vm324 = vcmp.eq.f32.partialorder %v323, 8.507059e+37
      %v325 = vand.u32 %v292, 2147483648
      %v326 = vor.u32 1.1754944e-38, %v325
      %v327 = vsel %vm324, %v326, %v322
      %v328 = vmul.f32 1.0, %v327
      %v329 = vrcp.pop %v293
      %v330 = vmul.f32 %v293, %v329
      %v331 = vsub.f32 1.0, %v330
      %v332 = vmul.f32 %v329, %v331
      %v333 = vadd.f32 %v329, %v332
      %vm334 = vweird.f32 %v293
      %vm335 = vweird.f32 %v329
      %vm336 = vmor %vm334, %vm335
      %v337 = vsel %vm336, %v329, %v333
      %v338 = vand.u32 2147483647, %v293
      %vm339 = vcmp.eq.f32.partialorder %v338, 8.507059e+37
      %v340 = vand.u32 %v293, 2147483648
      %v341 = vor.u32 1.1754944e-38, %v340
      %v342 = vsel %vm339, %v341, %v337
      %v343 = vmul.f32 1.0, %v342
      %v344 = vrcp.pop %v294
      %v345 = vmul.f32 %v294, %v344
      %v346 = vsub.f32 1.0, %v345
      %v347 = vmul.f32 %v344, %v346
      %v348 = vadd.f32 %v344, %v347
      %vm349 = vweird.f32 %v294
      %vm350 = vweird.f32 %v344
      %vm351 = vmor %vm349, %vm350
      %v352 = vsel %vm351, %v344, %v348
      %v353 = vand.u32 2147483647, %v294
      %vm354 = vcmp.eq.f32.partialorder %v353, 8.507059e+37
      %v355 = vand.u32 %v294, 2147483648
      %v356 = vor.u32 1.1754944e-38, %v355
      %v357 = vsel %vm354, %v356, %v352
      %v358 = vmul.f32 1.0, %v357
      %v359 = vrcp.pop %v295
      %v360 = vmul.f32 %v295, %v359
      %v361 = vsub.f32 1.0, %v360
      %v362 = vmul.f32 %v359, %v361
      %v363 = vadd.f32 %v359, %v362
      %vm364 = vweird.f32 %v295
      %vm365 = vweird.f32 %v359
      %vm366 = vmor %vm364, %vm365
      %v367 = vsel %vm366, %v359, %v363
      %v368 = vand.u32 2147483647, %v295
      %vm369 = vcmp.eq.f32.partialorder %v368, 8.507059e+37
      %v370 = vand.u32 %v295, 2147483648
      %v371 = vor.u32 1.1754944e-38, %v370
      %v372 = vsel %vm369, %v371, %v367
      %v373 = vmul.f32 1.0, %v372
      %v374 = vrcp.pop %v296
      %v375 = vmul.f32 %v296, %v374
      %v376 = vsub.f32 1.0, %v375
      %v377 = vmul.f32 %v374, %v376
      %v378 = vadd.f32 %v374, %v377
      %vm379 = vweird.f32 %v296
      %vm380 = vweird.f32 %v374
      %vm381 = vmor %vm379, %vm380
      %v382 = vsel %vm381, %v374, %v378
      %v383 = vand.u32 2147483647, %v296
      %vm384 = vcmp.eq.f32.partialorder %v383, 8.507059e+37
      %v385 = vand.u32 %v296, 2147483648
      %v386 = vor.u32 1.1754944e-38, %v385
      %v387 = vsel %vm384, %v386, %v382
      %v388 = vmul.f32 1.0, %v387
      %v389 = vrcp.pop %v297
      %v390 = vmul.f32 %v297, %v389
      %v391 = vsub.f32 1.0, %v390
      %v392 = vmul.f32 %v389, %v391
      %v393 = vadd.f32 %v389, %v392
      %vm394 = vweird.f32 %v297
      %vm395 = vweird.f32 %v389
      %vm396 = vmor %vm394, %vm395
      %v397 = vsel %vm396, %v389, %v393
      %v398 = vand.u32 2147483647, %v297
      %vm399 = vcmp.eq.f32.partialorder %v398, 8.507059e+37
      %v400 = vand.u32 %v297, 2147483648
      %v401 = vor.u32 1.1754944e-38, %v400
      %v402 = vsel %vm399, %v401, %v397
      %v403 = vmul.f32 1.0, %v402
      %v404 = vrcp.pop %v298
      %v405 = vmul.f32 %v298, %v404
      %v406 = vsub.f32 1.0, %v405
      %v407 = vmul.f32 %v404, %v406
      %v408 = vadd.f32 %v404, %v407
      %vm409 = vweird.f32 %v298
      %vm410 = vweird.f32 %v404
      %vm411 = vmor %vm409, %vm410
      %v412 = vsel %vm411, %v404, %v408
      %v413 = vand.u32 2147483647, %v298
      %vm414 = vcmp.eq.f32.partialorder %v413, 8.507059e+37
      %v415 = vand.u32 %v298, 2147483648
      %v416 = vor.u32 1.1754944e-38, %v415
      %v417 = vsel %vm414, %v416, %v412
      %v418 = vmul.f32 1.0, %v417
      %v419 = vmul.f32 %v259, %v313
      %v420 = vmul.f32 %v260, %v328
      %v421 = vmul.f32 %v261, %v343
      %v422 = vmul.f32 %v262, %v358
      %v423 = vmul.f32 %v263, %v373
      %v424 = vmul.f32 %v264, %v388
      %v425 = vmul.f32 %v265, %v403
      %v426 = vmul.f32 %v266, %v418
      %vm427 = vcmask 31744
      %428 = vst.msk [vmem:[%s234] sm:$0xff] %vm427, %v419
      %429 = vst.msk [vmem:[%s234 + $0x8] sm:$0xff] %vm427, %v420
      %430 = vst.msk [vmem:[%s234 + $0x10] sm:$0xff] %vm427, %v421
      %431 = vst.msk [vmem:[%s234 + $0x18] sm:$0xff] %vm427, %v422
      %432 = vst.msk [vmem:[%s234 + $0x20] sm:$0xff] %vm427, %v423
      %433 = vst.msk [vmem:[%s234 + $0x28] sm:$0xff] %vm427, %v424
      %434 = vst.msk [vmem:[%s234 + $0x30] sm:$0xff] %vm427, %v425
      %435 = vst.msk [vmem:[%s234 + $0x38] sm:$0xff] %vm427, %v426
      %p436 = scmp.lt.s32.totalorder %s18, 1
      %s437 = scalar_select %p436, %s18, 1
      %p438 = scmp.lt.s32.totalorder %s19, 7
      %s439 = scalar_select %p438, %s19, 7
      %s440 = smul.addr %s439, 8
      %s441 = smul.addr %s437, 64
      %s442 = sadd.s32 %s440, %s441
      %s443 = smul.addr %s442, 8
      %s444 = scalar_lea.vmem %s3, %s443
      // Predicated region
      $region33: #{_lambda_.17} parent=31 // pred_check
        %p445 = pneg %p126
      $region34: #{_lambda_.17} parent=31 // pred_check_branch
        %447 = sbr.rel (%p445) target = $region36
      $region35: #{_lambda_.17} parent=31 // pred_region
        _
      $region36: #{_lambda_.17} parent=31 // pred_fallthru
        _
    $region32: #{_lambda_.17} parent=5 // pred_fallthru
      _
    %p448 = scmp.le.s32.totalorder 2, %s9
    // Predicated region
    $region37: #{_lambda_.17} parent=5 // pred_check
      %p449 = pneg %p448
    $region38: #{_lambda_.17} parent=5 // pred_check_branch
      %451 = sbr.rel (%p449) target = $region40
    $region39: #{_lambda_.17} parent=5 // pred_region
      %s452 = ssub.s32 %s9, 2
      // Predicated region
      $region41: #{_lambda_.17} parent=39 // pred_check
        %p453 = pneg %p132
      $region42: #{_lambda_.17} parent=39 // pred_check_branch
        %455 = sbr.rel (%p453) target = $region44
      $region43: #{_lambda_.17} parent=39 // pred_region
        %p456 = scmp.lt.s32.totalorder %s20, 1
        %s457 = scalar_select %p456, %s20, 1
        %p458 = scmp.lt.s32.totalorder %s21, 7
        %s459 = scalar_select %p458, %s21, 7
        %s460 = smul.addr %s459, 8
        %s461 = smul.addr %s457, 64
        %s462 = sadd.s32 %s460, %s461
        %s463 = smul.addr %s462, 8
        %s464 = scalar_lea.vmem %s3, %s463
      $region44: #{_lambda_.17} parent=39 // pred_fallthru
        _
    $region40: #{_lambda_.17} parent=5 // pred_fallthru
      _
  $region6: #{_lambda_.17} parent=0 // loop_footer
    %s13 = sadd.s32 1, %s9
  $region7: #{_lambda_.17} parent=0 // loop_footer_branch
    %8 = sbr.rel target = $region3
  $region8: #{_lambda_.17} parent=0 // loop_exit
    _

// kernel: _lambda_.16
$region0: #{_lambda_.16}
  #allocation0 [shape = 'u32[]', space=smem, size = 0x4, offset = 0x4, fixed_abs, tag = 'smem constant byte address 0x4 - core index']
  #allocation1 [shape = 'u32[72,128]{1,0:T(1,128)}', space=vmem, size = 0x9000, scoped, tag = 'internal scratch']
  %s0 = inlined_call_operand.vmem [shape: f32[2,10,10,10,8], index: 0, kind: input, shape index: {}, may-alias: {0,1,2}]
  %s1 = inlined_call_operand.vmem [shape: f32[2,10,10,10,8], index: 1, kind: input, shape index: {}, may-alias: {0,1,2}]
  %s2 = inlined_call_operand.vmem [shape: f32[2,10,10,10,8], index: 2, kind: input, shape index: {}, may-alias: {0,1,2}]
  %s3 = inlined_call_operand.vmem [shape: bf16[27,8,4], index: 3, kind: input, shape index: {}]
  %s4 = inlined_call_operand.vmem [shape: f32[1,4], index: 4, kind: input, shape index: {}]
  %s5 = inlined_call_operand.vmem [shape: f32[2,8,8,8,4], index: 5, kind: output, shape index: {0}]
  %s6 = inlined_call_operand.vmem [shape: f32[2,8,2,128], index: 6, kind: output, shape index: {1}]
  %7 = xla_tuple %s5, %s6
  %s8 = sld [smem:[#allocation0]]
  $region61: #{_lambda_.16} parent=0
    _
  %s10 = ssub.s32 1, %s8
  %s11 = scalar_select 0, %s10, %s8
  loop: start=0, step=1, limit=18
  $region2: #{_lambda_.16} parent=0 // loop_pre_header
    _
  $region3: #{_lambda_.16} parent=0 // loop_header
    %s13 = sphi 0, %s17
    %p14 = scmp.ge.s32.totalorder %s13, 18
    %s20 = sphi 0, %s32
    %s21 = sphi 0, %s28
    %s22 = sphi 0, %s20
    %s23 = sphi 0, %s21
    %s24 = sphi 0, %s22
    %s25 = sphi 0, %s23
    %s37 = sphi 0, %s39
    %s40 = sphi 0, %s37
    %s41 = sphi 0, %s40
    %s57 = sphi 0, %s41
    %s67 = sphi 0, %s69
    %s70 = sphi 0, %s67
    %s71 = sphi 0, %s70
    %s87 = sphi 0, %s71
    %s97 = sphi 0, %s99
    %s100 = sphi 0, %s97
    %s101 = sphi 0, %s100
    %s117 = sphi 0, %s101
    %s121 = sphi 0, %s121
    %s123 = sphi 0, %s121
    %s124 = sphi 0, %s123
    %s138 = sphi 0, %s124
    %s142 = sphi 0, %s142
    %s144 = sphi 0, %s142
    %s145 = sphi 0, %s144
    %s159 = sphi 0, %s145
    %s167 = sphi 0, %s169
    %s170 = sphi 0, %s167
    %s171 = sphi 0, %s170
    %s187 = sphi 0, %s171
    %s195 = sphi 0, %s197
    %s198 = sphi 0, %s195
    %s199 = sphi 0, %s198
    %s215 = sphi 0, %s199
  $region4: #{_lambda_.16} parent=0 // loop_header_branch
    %16 = sbr.rel (%p14) target = $region8
  $region5: #{_lambda_.16} parent=0 // loop_body
    %s18 = ssub.s32 %s13, 1
    %s19 = ssub.s32 %s13, 2
    %s26 = sadd.s32 1, %s21
    %p27 = scmp.ge.s32.totalorder %s26, 8
    %s28 = scalar_select %p27, 0, %s26
    %s29 = sadd.s32 1, %s20
    %s30 = scalar_select %p27, %s29, %s20
    %p31 = scmp.ge.s32.totalorder %s30, 2
    %s32 = scalar_select %p31, 0, %s30
    %s33 = ssub.s32 %s20, %s32
    %s34 = ssub.s32 %s21, %s28
    %s35 = sor.u32 %s33, %s34
    %p36 = scmp.eq.s32.totalorder %s35, 0
    %s38 = sadd.s32 %s37, 1
    %s39 = scalar_select %p36, %s37, %s38
    %p42 = pneg %p36
    %p43 = scmp.eq.s32.totalorder %s13, 15
    %p44 = por %p42, %p43
    %p45 = scmp.ne.s32.totalorder %s37, %s40
    %p46 = scmp.eq.s32.totalorder %s13, 0
    %p47 = por %p45, %p46
    %p48 = scmp.ne.s32.totalorder %s37, %s40
    %p49 = scmp.eq.s32.totalorder %s18, 15
    %p50 = por %p48, %p49
    %p51 = scmp.ne.s32.totalorder %s40, %s41
    %p52 = scmp.eq.s32.totalorder %s18, 0
    %p53 = por %p51, %p52
    %p54 = scmp.ne.s32.totalorder %s40, %s41
    %p55 = scmp.eq.s32.totalorder %s19, 15
    %p56 = por %p54, %p55
    %p58 = scmp.ne.s32.totalorder %s41, %s57
    %p59 = scmp.eq.s32.totalorder %s19, 0
    %p60 = por %p58, %p59
    %s61 = sadd.s32 %s21, 1
    %s62 = sadd.s32 %s28, 1
    %s63 = ssub.s32 %s20, %s32
    %s64 = ssub.s32 %s61, %s62
    %s65 = sor.u32 %s63, %s64
    %p66 = scmp.eq.s32.totalorder %s65, 0
    %s68 = sadd.s32 %s67, 1
    %s69 = scalar_select %p66, %s67, %s68
    %p72 = pneg %p66
    %p73 = scmp.eq.s32.totalorder %s13, 15
    %p74 = por %p72, %p73
    %p75 = scmp.ne.s32.totalorder %s67, %s70
    %p76 = scmp.eq.s32.totalorder %s13, 0
    %p77 = por %p75, %p76
    %p78 = scmp.ne.s32.totalorder %s67, %s70
    %p79 = scmp.eq.s32.totalorder %s18, 15
    %p80 = por %p78, %p79
    %p81 = scmp.ne.s32.totalorder %s70, %s71
    %p82 = scmp.eq.s32.totalorder %s18, 0
    %p83 = por %p81, %p82
    %p84 = scmp.ne.s32.totalorder %s70, %s71
    %p85 = scmp.eq.s32.totalorder %s19, 15
    %p86 = por %p84, %p85
    %p88 = scmp.ne.s32.totalorder %s71, %s87
    %p89 = scmp.eq.s32.totalorder %s19, 0
    %p90 = por %p88, %p89
    %s91 = sadd.s32 %s21, 2
    %s92 = sadd.s32 %s28, 2
    %s93 = ssub.s32 %s20, %s32
    %s94 = ssub.s32 %s91, %s92
    %s95 = sor.u32 %s93, %s94
    %p96 = scmp.eq.s32.totalorder %s95, 0
    %s98 = sadd.s32 %s97, 1
    %s99 = scalar_select %p96, %s97, %s98
    %p102 = pneg %p96
    %p103 = scmp.eq.s32.totalorder %s13, 15
    %p104 = por %p102, %p103
    %p105 = scmp.ne.s32.totalorder %s97, %s100
    %p106 = scmp.eq.s32.totalorder %s13, 0
    %p107 = por %p105, %p106
    %p108 = scmp.ne.s32.totalorder %s97, %s100
    %p109 = scmp.eq.s32.totalorder %s18, 15
    %p110 = por %p108, %p109
    %p111 = scmp.ne.s32.totalorder %s100, %s101
    %p112 = scmp.eq.s32.totalorder %s18, 0
    %p113 = por %p111, %p112
    %p114 = scmp.ne.s32.totalorder %s100, %s101
    %p115 = scmp.eq.s32.totalorder %s19, 15
    %p116 = por %p114, %p115
    %p118 = scmp.ne.s32.totalorder %s101, %s117
    %p119 = scmp.eq.s32.totalorder %s19, 0
    %p120 = por %p118, %p119
    %s122 = sadd.s32 %s121, 1
    %p125 = scmp.eq.s32.totalorder %s13, 15
    %p126 = scmp.ne.s32.totalorder %s121, %s123
    %p127 = scmp.eq.s32.totalorder %s13, 0
    %p128 = por %p126, %p127
    %p129 = scmp.ne.s32.totalorder %s121, %s123
    %p130 = scmp.eq.s32.totalorder %s18, 15
    %p131 = por %p129, %p130
    %p132 = scmp.ne.s32.totalorder %s123, %s124
    %p133 = scmp.eq.s32.totalorder %s18, 0
    %p134 = por %p132, %p133
    %p135 = scmp.ne.s32.totalorder %s123, %s124
    %p136 = scmp.eq.s32.totalorder %s19, 15
    %p137 = por %p135, %p136
    %p139 = scmp.ne.s32.totalorder %s124, %s138
    %p140 = scmp.eq.s32.totalorder %s19, 0
    %p141 = por %p139, %p140
    %s143 = sadd.s32 %s142, 1
    %p146 = scmp.eq.s32.totalorder %s13, 15
    %p147 = scmp.ne.s32.totalorder %s142, %s144
    %p148 = scmp.eq.s32.totalorder %s13, 0
    %p149 = por %p147, %p148
    %p150 = scmp.ne.s32.totalorder %s142, %s144
    %p151 = scmp.eq.s32.totalorder %s18, 15
    %p152 = por %p150, %p151
    %p153 = scmp.ne.s32.totalorder %s144, %s145
    %p154 = scmp.eq.s32.totalorder %s18, 0
    %p155 = por %p153, %p154
    %p156 = scmp.ne.s32.totalorder %s144, %s145
    %p157 = scmp.eq.s32.totalorder %s19, 15
    %p158 = por %p156, %p157
    %p160 = scmp.ne.s32.totalorder %s145, %s159
    %p161 = scmp.eq.s32.totalorder %s19, 0
    %p162 = por %p160, %p161
    %s163 = ssub.s32 %s20, %s32
    %s164 = ssub.s32 %s21, %s28
    %s165 = sor.u32 %s163, %s164
    %p166 = scmp.eq.s32.totalorder %s165, 0
    %s168 = sadd.s32 %s167, 1
    %s169 = scalar_select %p166, %s167, %s168
    %p172 = pneg %p166
    %p173 = scmp.eq.s32.totalorder %s13, 15
    %p174 = por %p172, %p173
    %p175 = scmp.ne.s32.totalorder %s167, %s170
    %p176 = scmp.eq.s32.totalorder %s13, 0
    %p177 = por %p175, %p176
    %p178 = scmp.ne.s32.totalorder %s167, %s170
    %p179 = scmp.eq.s32.totalorder %s18, 15
    %p180 = por %p178, %p179
    %p181 = scmp.ne.s32.totalorder %s170, %s171
    %p182 = scmp.eq.s32.totalorder %s18, 0
    %p183 = por %p181, %p182
    %p184 = scmp.ne.s32.totalorder %s170, %s171
    %p185 = scmp.eq.s32.totalorder %s19, 15
    %p186 = por %p184, %p185
    %p188 = scmp.ne.s32.totalorder %s171, %s187
    %p189 = scmp.eq.s32.totalorder %s19, 0
    %p190 = por %p188, %p189
    %s191 = ssub.s32 %s20, %s32
    %s192 = ssub.s32 %s21, %s28
    %s193 = sor.u32 %s191, %s192
    %p194 = scmp.eq.s32.totalorder %s193, 0
    %s196 = sadd.s32 %s195, 1
    %s197 = scalar_select %p194, %s195, %s196
    %p200 = pneg %p194
    %p201 = scmp.eq.s32.totalorder %s13, 15
    %p202 = por %p200, %p201
    %p203 = scmp.ne.s32.totalorder %s195, %s198
    %p204 = scmp.eq.s32.totalorder %s13, 0
    %p205 = por %p203, %p204
    %p206 = scmp.ne.s32.totalorder %s195, %s198
    %p207 = scmp.eq.s32.totalorder %s18, 15
    %p208 = por %p206, %p207
    %p209 = scmp.ne.s32.totalorder %s198, %s199
    %p210 = scmp.eq.s32.totalorder %s18, 0
    %p211 = por %p209, %p210
    %p212 = scmp.ne.s32.totalorder %s198, %s199
    %p213 = scmp.eq.s32.totalorder %s19, 15
    %p214 = por %p212, %p213
    %p216 = scmp.ne.s32.totalorder %s199, %s215
    %p217 = scmp.eq.s32.totalorder %s19, 0
    %p218 = por %p216, %p217
    %p219 = scmp.le.s32.totalorder 1, %s13
    %p220 = scmp.lt.s32.totalorder %s13, 17
    %p221 = pnand %p219, %p220
    %p222 = pneg %p221
    // Predicated region
    $region9: #{_lambda_.16} parent=5 // pred_check
      _
    $region10: #{_lambda_.16} parent=5 // pred_check_branch
      %224 = sbr.rel (%p221) target = $region12
    $region11: #{_lambda_.16} parent=5 // pred_region
      %s225 = ssub.s32 %s13, 1
      // Predicated region
      $region13: #{_lambda_.16} parent=11 // pred_check
        %p226 = pneg %p134
      $region14: #{_lambda_.16} parent=11 // pred_check_branch
        %228 = sbr.rel (%p226) target = $region16
      $region15: #{_lambda_.16} parent=11 // pred_region
        _
      $region16: #{_lambda_.16} parent=11 // pred_fallthru
        _
      // Predicated region
      $region17: #{_lambda_.16} parent=11 // pred_check
        %p229 = pneg %p155
      $region18: #{_lambda_.16} parent=11 // pred_check_branch
        %231 = sbr.rel (%p229) target = $region20
      $region19: #{_lambda_.16} parent=11 // pred_region
        _
      $region20: #{_lambda_.16} parent=11 // pred_fallthru
        _
    $region12: #{_lambda_.16} parent=5 // pred_fallthru
      _
    %p232 = scmp.lt.s32.totalorder %s13, 16
    // Predicated region
    $region21: #{_lambda_.16} parent=5 // pred_check
      %p233 = pneg %p232
    $region22: #{_lambda_.16} parent=5 // pred_check_branch
      %235 = sbr.rel (%p233) target = $region24
    $region23: #{_lambda_.16} parent=5 // pred_region
      // Predicated region
      $region25: #{_lambda_.16} parent=23 // pred_check
        %p236 = pneg %p47
      $region26: #{_lambda_.16} parent=23 // pred_check_branch
        %238 = sbr.rel (%p236) target = $region28
      $region27: #{_lambda_.16} parent=23 // pred_region
        %p239 = scmp.lt.s32.totalorder %s20, 1
        %s240 = scalar_select %p239, %s20, 1
        %p241 = scmp.lt.s32.totalorder %s21, 9
        %s242 = scalar_select %p241, %s21, 9
        %s243 = smul.addr %s242, 20
        %s244 = smul.addr %s240, 200
        %s245 = sadd.s32 %s243, %s244
        %s246 = smul.addr %s245, 8
        %s247 = scalar_lea.vmem %s0, %s246
      $region28: #{_lambda_.16} parent=23 // pred_fallthru
        _
      // Predicated region
      $region29: #{_lambda_.16} parent=23 // pred_check
        %p248 = pneg %p77
      $region30: #{_lambda_.16} parent=23 // pred_check_branch
        %250 = sbr.rel (%p248) target = $region32
      $region31: #{_lambda_.16} parent=23 // pred_region
        %s251 = sadd.s32 %s21, 1
        %p252 = scmp.lt.s32.totalorder %s20, 1
        %s253 = scalar_select %p252, %s20, 1
        %p254 = scmp.lt.s32.totalorder %s251, 9
        %s255 = scalar_select %p254, %s251, 9
        %s256 = smul.addr %s255, 20
        %s257 = smul.addr %s253, 200
        %s258 = sadd.s32 %s256, %s257
        %s259 = smul.addr %s258, 8
        %s260 = scalar_lea.vmem %s1, %s259
        %s261 = sadd.s32 %s21, 1
      $region32: #{_lambda_.16} parent=23 // pred_fallthru
        _
      // Predicated region
      $region33: #{_lambda_.16} parent=23 // pred_check
        %p262 = pneg %p107
      $region34: #{_lambda_.16} parent=23 // pred_check_branch
        %264 = sbr.rel (%p262) target = $region36
      $region35: #{_lambda_.16} parent=23 // pred_region
        %s265 = sadd.s32 %s21, 2
        %p266 = scmp.lt.s32.totalorder %s20, 1
        %s267 = scalar_select %p266, %s20, 1
        %p268 = scmp.lt.s32.totalorder %s265, 9
        %s269 = scalar_select %p268, %s265, 9
        %s270 = smul.addr %s269, 20
        %s271 = smul.addr %s267, 200
        %s272 = sadd.s32 %s270, %s271
        %s273 = smul.addr %s272, 8
        %s274 = scalar_lea.vmem %s2, %s273
        %s275 = sadd.s32 %s21, 2
      $region36: #{_lambda_.16} parent=23 // pred_fallthru
        _
    $region24: #{_lambda_.16} parent=5 // pred_fallthru
      _
    %p276 = scmp.le.s32.totalorder 1, %s13
    %p277 = scmp.lt.s32.totalorder %s13, 17
    %p278 = pnand %p276, %p277
    %p279 = pneg %p278
    // Predicated region
    $region37: #{_lambda_.16} parent=5 // pred_check
      _
    $region38: #{_lambda_.16} parent=5 // pred_check_branch
      %281 = sbr.rel (%p278) target = $region40
    $region39: #{_lambda_.16} parent=5 // pred_region
      %s282 = ssub.s32 %s13, 1
      %p283 = scmp.lt.s32.totalorder %s22, 1
      %s284 = scalar_select %p283, %s22, 1
      %p285 = scmp.lt.s32.totalorder %s23, 9
      %s286 = scalar_select %p285, %s23, 9
      %s287 = smul.addr %s286, 20
      %s288 = smul.addr %s284, 200
      %s289 = sadd.s32 %s287, %s288
      %s290 = smul.addr %s289, 8
      %s291 = scalar_lea.vmem %s0, %s290
      %p292 = pneg %p53
      %p293 = pneg %p50
      %s294 = sadd.s32 %s23, 1
      %p295 = scmp.lt.s32.totalorder %s22, 1
      %s296 = scalar_select %p295, %s22, 1
      %p297 = scmp.lt.s32.totalorder %s294, 9
      %s298 = scalar_select %p297, %s294, 9
      %s299 = smul.addr %s298, 20
      %s300 = smul.addr %s296, 200
      %s301 = sadd.s32 %s299, %s300
      %s302 = smul.addr %s301, 8
      %s303 = scalar_lea.vmem %s1, %s302
      %p304 = pneg %p83
      %p305 = pneg %p80
      %s306 = sadd.s32 %s23, 2
      %p307 = scmp.lt.s32.totalorder %s22, 1
      %s308 = scalar_select %p307, %s22, 1
      %p309 = scmp.lt.s32.totalorder %s306, 9
      %s310 = scalar_select %p309, %s306, 9
      %s311 = smul.addr %s310, 20
      %s312 = smul.addr %s308, 200
      %s313 = sadd.s32 %s311, %s312
      %s314 = smul.addr %s313, 8
      %s315 = scalar_lea.vmem %s2, %s314
      %p316 = pneg %p113
      %p317 = pneg %p110
      %p318 = pneg %p134
      %p319 = pneg %p131
      %p320 = pneg %p155
      %p321 = pneg %p152
      %p322 = pneg %p183
      %p323 = pneg %p180
      %p324 = scmp.lt.s32.totalorder %s22, 1
      %s325 = scalar_select %p324, %s22, 1
      %p326 = scmp.lt.s32.totalorder %s23, 7
      %s327 = scalar_select %p326, %s23, 7
      %s328 = smul.addr %s327, 8
      %s329 = smul.addr %s325, 64
      %s330 = sadd.s32 %s328, %s329
      %s331 = smul.addr %s330, 8
      %s332 = scalar_lea.vmem %s5, %s331
      %p333 = pneg %p211
      %p334 = pneg %p208
      %p335 = scmp.lt.s32.totalorder %s22, 1
      %s336 = scalar_select %p335, %s22, 1
      %p337 = scmp.lt.s32.totalorder %s23, 7
      %s338 = scalar_select %p337, %s23, 7
      %s339 = smul.addr %s336, 8
      %s340 = sadd.s32 %s338, %s339
      %s341 = smul.addr %s340, 2
      %s342 = scalar_lea.vmem %s6, %s341
      %p343 = scmp.lt.s32.totalorder %s22, 1
      %s344 = scalar_select %p343, %s22, 1
      %p345 = scmp.lt.s32.totalorder %s23, 9
      %s346 = scalar_select %p345, %s23, 9
      %s347 = smul.addr %s346, 20
      %s348 = smul.addr %s344, 200
      %s349 = sadd.s32 %s347, %s348
      %s350 = smul.addr %s349, 8
      %s351 = scalar_lea.vmem %s0, %s350
      %s352 = sadd.s32 %s23, 1
      %p353 = scmp.lt.s32.totalorder %s22, 1
      %s354 = scalar_select %p353, %s22, 1
      %p355 = scmp.lt.s32.totalorder %s352, 9
      %s356 = scalar_select %p355, %s352, 9
      %s357 = smul.addr %s356, 20
      %s358 = smul.addr %s354, 200
      %s359 = sadd.s32 %s357, %s358
      %s360 = smul.addr %s359, 8
      %s361 = scalar_lea.vmem %s1, %s360
      %s362 = sadd.s32 %s23, 1
      %s363 = sadd.s32 %s23, 2
      %p364 = scmp.lt.s32.totalorder %s22, 1
      %s365 = scalar_select %p364, %s22, 1
      %p366 = scmp.lt.s32.totalorder %s363, 9
      %s367 = scalar_select %p366, %s363, 9
      %s368 = smul.addr %s367, 20
      %s369 = smul.addr %s365, 200
      %s370 = sadd.s32 %s368, %s369
      %s371 = smul.addr %s370, 8
      %s372 = scalar_lea.vmem %s2, %s371
      %s373 = sadd.s32 %s23, 2
      %p374 = scmp.lt.s32.totalorder %s22, 1
      %s375 = scalar_select %p374, %s22, 1
      %p376 = scmp.lt.s32.totalorder %s23, 7
      %s377 = scalar_select %p376, %s23, 7
      %s378 = smul.addr %s377, 8
      %s379 = smul.addr %s375, 64
      %s380 = sadd.s32 %s378, %s379
      %s381 = smul.addr %s380, 8
      %s382 = scalar_lea.vmem %s5, %s381
      %p383 = scmp.lt.s32.totalorder %s22, 1
      %s384 = scalar_select %p383, %s22, 1
      %p385 = scmp.lt.s32.totalorder %s23, 7
      %s386 = scalar_select %p385, %s23, 7
      %s387 = smul.addr %s384, 8
      %s388 = sadd.s32 %s386, %s387
      %s389 = smul.addr %s388, 2
      %s390 = scalar_lea.vmem %s6, %s389
      %v392 = vld [vmem:[%s351] sm:$0xff]
      %v393 = vld [vmem:[%s351 + $0x10] sm:$0xff]
      %v394 = vld [vmem:[%s351 + $0x20] sm:$0xff]
      %v395 = vld [vmem:[%s351 + $0x30] sm:$0xff]
      %v396 = vld [vmem:[%s351 + $0x40] sm:$0xff]
      %v397 = vld [vmem:[%s351 + $0x50] sm:$0xff]
      %v398 = vld [vmem:[%s351 + $0x60] sm:$0xff]
      %v399 = vld [vmem:[%s351 + $0x70] sm:$0xff]
      %v400 = vpack.c.bf16 %v393, %v392
      %v401 = vpack.c.bf16 %v395, %v394
      %v402 = vpack.c.bf16 %v397, %v396
      %v403 = vpack.c.bf16 %v399, %v398
      %v404 = vld [vmem:[%s3] sm:$0xf]
      %v405 = vld [vmem:[%s351 + $0x1] sm:$0xff]
      %v406 = vld [vmem:[%s351 + $0x11] sm:$0xff]
      %v407 = vld [vmem:[%s351 + $0x21] sm:$0xff]
      %v408 = vld [vmem:[%s351 + $0x31] sm:$0xff]
      %v409 = vld [vmem:[%s351 + $0x41] sm:$0xff]
      %v410 = vld [vmem:[%s351 + $0x51] sm:$0xff]
      %v411 = vld [vmem:[%s351 + $0x61] sm:$0xff]
      %v412 = vld [vmem:[%s351 + $0x71] sm:$0xff]
      %v413 = vpack.c.bf16 %v406, %v405
      %v414 = vpack.c.bf16 %v408, %v407
      %v415 = vpack.c.bf16 %v410, %v409
      %v416 = vpack.c.bf16 %v412, %v411
      %s417 = scalar_lea.vmem %s3, 4
      %v418 = vld [vmem:[%s417] sm:$0xf]
      %vm419 = vcmask 64512
      %v421 = vsel %vm419, %v413, 0
      %v424 = vsel %vm419, %v414, 0
      %v427 = vsel %vm419, %v415, 0
      %v430 = vsel %vm419, %v416, 0
      %vm432 = vcmask 1043456
      %v434 = vsel %vm432, %v418, 0
      %436 = vmatpush.bf16.msra.mxu0 0
      %437 = vmatpush.bf16.msra.mxu0 0
      %438 = vmatpush.bf16.msra.mxu0 0
      %439 = vmatpush.bf16.msra.mxu0 0
      %440 = vmatpush.bf16.msra.mxu0 0
      %441 = vmatpush.bf16.msra.mxu0 0
      %442 = vmatpush.bf16.msra.mxu0 0
      %443 = vmatpush.bf16.msra.mxu0 %v434
      %444 = vmatmul.bf16.gmra.mxu0 %v421
      %v445 = vpop.f32.mrf.mxu0
      %v446 = vadd.f32 0.0, %v445
      %v447 = vpop.f32.mrf.mxu0
      %v448 = vadd.f32 0.0, %v447
      %449 = vmatmul.bf16.gmra.mxu0 %v424
      %v450 = vpop.f32.mrf.mxu0
      %v451 = vadd.f32 0.0, %v450
      %v452 = vpop.f32.mrf.mxu0
      %v453 = vadd.f32 0.0, %v452
      %454 = vmatmul.bf16.gmra.mxu0 %v427
      %v455 = vpop.f32.mrf.mxu0
      %v456 = vadd.f32 0.0, %v455
      %v457 = vpop.f32.mrf.mxu0
      %v458 = vadd.f32 0.0, %v457
      %459 = vmatmul.bf16.gmra.mxu0 %v430
      %v460 = vpop.f32.mrf.mxu0
      %v461 = vadd.f32 0.0, %v460
      %v462 = vpop.f32.mrf.mxu0
      %v463 = vadd.f32 0.0, %v462
      %464 = vdwg.mxu0
      %v466 = vsel %vm419, %v400, 0
      %v469 = vsel %vm419, %v401, 0
      %v472 = vsel %vm419, %v402, 0
      %v475 = vsel %vm419, %v403, 0
      %v478 = vsel %vm432, %v404, 0
      %480 = vmatpush.bf16.msra.mxu0 0
      %481 = vmatpush.bf16.msra.mxu0 0
      %482 = vmatpush.bf16.msra.mxu0 0
      %483 = vmatpush.bf16.msra.mxu0 0
      %484 = vmatpush.bf16.msra.mxu0 0
      %485 = vmatpush.bf16.msra.mxu0 0
      %486 = vmatpush.bf16.msra.mxu0 0
      %487 = vmatpush.bf16.msra.mxu0 %v478
      %488 = vmatmul.bf16.gmra.mxu0 %v466
      %v489 = vpop.f32.mrf.mxu0
      %v490 = vadd.f32 %v446, %v489
      %v491 = vpop.f32.mrf.mxu0
      %v492 = vadd.f32 %v448, %v491
      %493 = vmatmul.bf16.gmra.mxu0 %v469
      %v494 = vpop.f32.mrf.mxu0
      %v495 = vadd.f32 %v451, %v494
      %v496 = vpop.f32.mrf.mxu0
      %v497 = vadd.f32 %v453, %v496
      %498 = vmatmul.bf16.gmra.mxu0 %v472
      %v499 = vpop.f32.mrf.mxu0
      %v500 = vadd.f32 %v456, %v499
      %v501 = vpop.f32.mrf.mxu0
      %v502 = vadd.f32 %v458, %v501
      %503 = vmatmul.bf16.gmra.mxu0 %v475
      %v504 = vpop.f32.mrf.mxu0
      %v505 = vadd.f32 %v461, %v504
      %v506 = vpop.f32.mrf.mxu0
      %v507 = vadd.f32 %v463, %v506
      %508 = vdwg.mxu0
      %v509 = vld [vmem:[%s351 + $0x2] sm:$0xff]
      %v510 = vld [vmem:[%s351 + $0x12] sm:$0xff]
      %v511 = vld [vmem:[%s351 + $0x22] sm:$0xff]
      %v512 = vld [vmem:[%s351 + $0x32] sm:$0xff]
      %v513 = vld [vmem:[%s351 + $0x42] sm:$0xff]
      %v514 = vld [vmem:[%s351 + $0x52] sm:$0xff]
      %v515 = vld [vmem:[%s351 + $0x62] sm:$0xff]
      %v516 = vld [vmem:[%s351 + $0x72] sm:$0xff]
      %v517 = vpack.c.bf16 %v510, %v509
      %v518 = vpack.c.bf16 %v512, %v511
      %v519 = vpack.c.bf16 %v514, %v513
      %v520 = vpack.c.bf16 %v516, %v515
      %s521 = scalar_lea.vmem %s3, 8
      %v522 = vld [vmem:[%s521] sm:$0xf]
      %v524 = vsel %vm419, %v517, 0
      %v527 = vsel %vm419, %v518, 0
      %v530 = vsel %vm419, %v519, 0
      %v533 = vsel %vm419, %v520, 0
      %v536 = vsel %vm432, %v522, 0
      %538 = vmatpush.bf16.msra.mxu0 0
      %539 = vmatpush.bf16.msra.mxu0 0
      %540 = vmatpush.bf16.msra.mxu0 0
      %541 = vmatpush.bf16.msra.mxu0 0
      %542 = vmatpush.bf16.msra.mxu0 0
      %543 = vmatpush.bf16.msra.mxu0 0
      %544 = vmatpush.bf16.msra.mxu0 0
      %545 = vmatpush.bf16.msra.mxu0 %v536
      %546 = vmatmul.bf16.gmra.mxu0 %v524
      %v547 = vpop.f32.mrf.mxu0
      %v548 = vadd.f32 0.0, %v547
      %v549 = vpop.f32.mrf.mxu0
      %v550 = vadd.f32 0.0, %v549
      %551 = vmatmul.bf16.gmra.mxu0 %v527
      %v552 = vpop.f32.mrf.mxu0
      %v553 = vadd.f32 0.0, %v552
      %v554 = vpop.f32.mrf.mxu0
      %v555 = vadd.f32 0.0, %v554
      %556 = vmatmul.bf16.gmra.mxu0 %v530
      %v557 = vpop.f32.mrf.mxu0
      %v558 = vadd.f32 0.0, %v557
      %v559 = vpop.f32.mrf.mxu0
      %v560 = vadd.f32 0.0, %v559
      %561 = vmatmul.bf16.gmra.mxu0 %v533
      %v562 = vpop.f32.mrf.mxu0
      %v563 = vadd.f32 0.0, %v562
      %v564 = vpop.f32.mrf.mxu0
      %v565 = vadd.f32 0.0, %v564
      %566 = vdwg.mxu0
      %v567 = vadd.f32 %v490, %v548
      %v568 = vadd.f32 %v492, %v550
      %v569 = vadd.f32 %v495, %v553
      %v570 = vadd.f32 %v497, %v555
      %v571 = vadd.f32 %v500, %v558
      %v572 = vadd.f32 %v502, %v560
      %v573 = vadd.f32 %v505, %v563
      %v574 = vadd.f32 %v507, %v565
      %s575 = scalar_lea.vmem %s351, 16
      %v576 = vld [vmem:[%s575] sm:$0xff]
      %v577 = vld [vmem:[%s575 + $0x10] sm:$0xff]
      %v578 = vld [vmem:[%s575 + $0x20] sm:$0xff]
      %v579 = vld [vmem:[%s575 + $0x30] sm:$0xff]
      %v580 = vld [vmem:[%s575 + $0x40] sm:$0xff]
      %v581 = vld [vmem:[%s575 + $0x50] sm:$0xff]
      %v582 = vld [vmem:[%s575 + $0x60] sm:$0xff]
      %v583 = vld [vmem:[%s575 + $0x70] sm:$0xff]
      %v584 = vpack.c.bf16 %v577, %v576
      %v585 = vpack.c.bf16 %v579, %v578
      %v586 = vpack.c.bf16 %v581, %v580
      %v587 = vpack.c.bf16 %v583, %v582
      %s588 = scalar_lea.vmem %s3, 12
      %v589 = vld [vmem:[%s588] sm:$0xf]
      %v591 = vsel %vm419, %v584, 0
      %v594 = vsel %vm419, %v585, 0
      %v597 = vsel %vm419, %v586, 0
      %v600 = vsel %vm419, %v587, 0
      %v603 = vsel %vm432, %v589, 0
      %605 = vmatpush.bf16.msra.mxu0 0
      %606 = vmatpush.bf16.msra.mxu0 0
      %607 = vmatpush.bf16.msra.mxu0 0
      %608 = vmatpush.bf16.msra.mxu0 0
      %609 = vmatpush.bf16.msra.mxu0 0
      %610 = vmatpush.bf16.msra.mxu0 0
      %611 = vmatpush.bf16.msra.mxu0 0
      %612 = vmatpush.bf16.msra.mxu0 %v603
      %613 = vmatmul.bf16.gmra.mxu0 %v591
      %v614 = vpop.f32.mrf.mxu0
      %v615 = vadd.f32 0.0, %v614
      %v616 = vpop.f32.mrf.mxu0
      %v617 = vadd.f32 0.0, %v616
      %618 = vmatmul.bf16.gmra.mxu0 %v594
      %v619 = vpop.f32.mrf.mxu0
      %v620 = vadd.f32 0.0, %v619
      %v621 = vpop.f32.mrf.mxu0
      %v622 = vadd.f32 0.0, %v621
      %623 = vmatmul.bf16.gmra.mxu0 %v597
      %v624 = vpop.f32.mrf.mxu0
      %v625 = vadd.f32 0.0, %v624
      %v626 = vpop.f32.mrf.mxu0
      %v627 = vadd.f32 0.0, %v626
      %628 = vmatmul.bf16.gmra.mxu0 %v600
      %v629 = vpop.f32.mrf.mxu0
      %v630 = vadd.f32 0.0, %v629
      %v631 = vpop.f32.mrf.mxu0
      %v632 = vadd.f32 0.0, %v631
      %633 = vdwg.mxu0
      %v634 = vadd.f32 %v567, %v615
      %v635 = vadd.f32 %v568, %v617
      %v636 = vadd.f32 %v569, %v620
      %v637 = vadd.f32 %v570, %v622
      %v638 = vadd.f32 %v571, %v625
      %v639 = vadd.f32 %v572, %v627
      %v640 = vadd.f32 %v573, %v630
      %v641 = vadd.f32 %v574, %v632
      %v642 = vld [vmem:[%s575 + $0x1] sm:$0xff]
      %v643 = vld [vmem:[%s575 + $0x11] sm:$0xff]
      %v644 = vld [vmem:[%s575 + $0x21] sm:$0xff]
      %v645 = vld [vmem:[%s575 + $0x31] sm:$0xff]
      %v646 = vld [vmem:[%s575 + $0x41] sm:$0xff]
      %v647 = vld [vmem:[%s575 + $0x51] sm:$0xff]
      %v648 = vld [vmem:[%s575 + $0x61] sm:$0xff]
      %v649 = vld [vmem:[%s575 + $0x71] sm:$0xff]
      %v650 = vpack.c.bf16 %v643, %v642
      %v651 = vpack.c.bf16 %v645, %v644
      %v652 = vpack.c.bf16 %v647, %v646
      %v653 = vpack.c.bf16 %v649, %v648
      %s654 = scalar_lea.vmem %s3, 16
      %v655 = vld [vmem:[%s654] sm:$0xf]
      %v657 = vsel %vm419, %v650, 0
      %v660 = vsel %vm419, %v651, 0
      %v663 = vsel %vm419, %v652, 0
      %v666 = vsel %vm419, %v653, 0
      %v669 = vsel %vm432, %v655, 0
      %671 = vmatpush.bf16.msra.mxu0 0
      %672 = vmatpush.bf16.msra.mxu0 0
      %673 = vmatpush.bf16.msra.mxu0 0
      %674 = vmatpush.bf16.msra.mxu0 0
      %675 = vmatpush.bf16.msra.mxu0 0
      %676 = vmatpush.bf16.msra.mxu0 0
      %677 = vmatpush.bf16.msra.mxu0 0
      %678 = vmatpush.bf16.msra.mxu0 %v669
      %679 = vmatmul.bf16.gmra.mxu0 %v657
      %v680 = vpop.f32.mrf.mxu0
      %v681 = vadd.f32 0.0, %v680
      %v682 = vpop.f32.mrf.mxu0
      %v683 = vadd.f32 0.0, %v682
      %684 = vmatmul.bf16.gmra.mxu0 %v660
      %v685 = vpop.f32.mrf.mxu0
      %v686 = vadd.f32 0.0, %v685
      %v687 = vpop.f32.mrf.mxu0
      %v688 = vadd.f32 0.0, %v687
      %689 = vmatmul.bf16.gmra.mxu0 %v663
      %v690 = vpop.f32.mrf.mxu0
      %v691 = vadd.f32 0.0, %v690
      %v692 = vpop.f32.mrf.mxu0
      %v693 = vadd.f32 0.0, %v692
      %694 = vmatmul.bf16.gmra.mxu0 %v666
      %v695 = vpop.f32.mrf.mxu0
      %v696 = vadd.f32 0.0, %v695
      %v697 = vpop.f32.mrf.mxu0
      %v698 = vadd.f32 0.0, %v697
      %699 = vdwg.mxu0
      %v700 = vadd.f32 %v634, %v681
      %v701 = vadd.f32 %v635, %v683
      %v702 = vadd.f32 %v636, %v686
      %v703 = vadd.f32 %v637, %v688
      %v704 = vadd.f32 %v638, %v691
      %v705 = vadd.f32 %v639, %v693
      %v706 = vadd.f32 %v640, %v696
      %v707 = vadd.f32 %v641, %v698
      %v708 = vld [vmem:[%s575 + $0x2] sm:$0xff]
      %v709 = vld [vmem:[%s575 + $0x12] sm:$0xff]
      %v710 = vld [vmem:[%s575 + $0x22] sm:$0xff]
      %v711 = vld [vmem:[%s575 + $0x32] sm:$0xff]
      %v712 = vld [vmem:[%s575 + $0x42] sm:$0xff]
      %v713 = vld [vmem:[%s575 + $0x52] sm:$0xff]
      %v714 = vld [vmem:[%s575 + $0x62] sm:$0xff]
      %v715 = vld [vmem:[%s575 + $0x72] sm:$0xff]
      %v716 = vpack.c.bf16 %v709, %v708
      %v717 = vpack.c.bf16 %v711, %v710
      %v718 = vpack.c.bf16 %v713, %v712
      %v719 = vpack.c.bf16 %v715, %v714
      %s720 = scalar_lea.vmem %s3, 20
      %v721 = vld [vmem:[%s720] sm:$0xf]
      %v723 = vsel %vm419, %v716, 0
      %v726 = vsel %vm419, %v717, 0
      %v729 = vsel %vm419, %v718, 0
      %v732 = vsel %vm419, %v719, 0
      %v735 = vsel %vm432, %v721, 0
      %737 = vmatpush.bf16.msra.mxu0 0
      %738 = vmatpush.bf16.msra.mxu0 0
      %739 = vmatpush.bf16.msra.mxu0 0
      %740 = vmatpush.bf16.msra.mxu0 0
      %741 = vmatpush.bf16.msra.mxu0 0
      %742 = vmatpush.bf16.msra.mxu0 0
      %743 = vmatpush.bf16.msra.mxu0 0
      %744 = vmatpush.bf16.msra.mxu0 %v735
      %745 = vmatmul.bf16.gmra.mxu0 %v723
      %v746 = vpop.f32.mrf.mxu0
      %v747 = vadd.f32 0.0, %v746
      %v748 = vpop.f32.mrf.mxu0
      %v749 = vadd.f32 0.0, %v748
      %750 = vmatmul.bf16.gmra.mxu0 %v726
      %v751 = vpop.f32.mrf.mxu0
      %v752 = vadd.f32 0.0, %v751
      %v753 = vpop.f32.mrf.mxu0
      %v754 = vadd.f32 0.0, %v753
      %755 = vmatmul.bf16.gmra.mxu0 %v729
      %v756 = vpop.f32.mrf.mxu0
      %v757 = vadd.f32 0.0, %v756
      %v758 = vpop.f32.mrf.mxu0
      %v759 = vadd.f32 0.0, %v758
      %760 = vmatmul.bf16.gmra.mxu0 %v732
      %v761 = vpop.f32.mrf.mxu0
      %v762 = vadd.f32 0.0, %v761
      %v763 = vpop.f32.mrf.mxu0
      %v764 = vadd.f32 0.0, %v763
      %765 = vdwg.mxu0
      %v766 = vadd.f32 %v700, %v747
      %v767 = vadd.f32 %v701, %v749
      %v768 = vadd.f32 %v702, %v752
      %v769 = vadd.f32 %v703, %v754
      %v770 = vadd.f32 %v704, %v757
      %v771 = vadd.f32 %v705, %v759
      %v772 = vadd.f32 %v706, %v762
      %v773 = vadd.f32 %v707, %v764
      %s774 = scalar_lea.vmem %s351, 32
      %v775 = vld [vmem:[%s774] sm:$0xff]
      %v776 = vld [vmem:[%s774 + $0x10] sm:$0xff]
      %v777 = vld [vmem:[%s774 + $0x20] sm:$0xff]
      %v778 = vld [vmem:[%s774 + $0x30] sm:$0xff]
      %v779 = vld [vmem:[%s774 + $0x40] sm:$0xff]
      %v780 = vld [vmem:[%s774 + $0x50] sm:$0xff]
      %v781 = vld [vmem:[%s774 + $0x60] sm:$0xff]
      %v782 = vld [vmem:[%s774 + $0x70] sm:$0xff]
      %v783 = vpack.c.bf16 %v776, %v775
      %v784 = vpack.c.bf16 %v778, %v777
      %v785 = vpack.c.bf16 %v780, %v779
      %v786 = vpack.c.bf16 %v782, %v781
      %s787 = scalar_lea.vmem %s3, 24
      %v788 = vld [vmem:[%s787] sm:$0xf]
      %v790 = vsel %vm419, %v783, 0
      %v793 = vsel %vm419, %v784, 0
      %v796 = vsel %vm419, %v785, 0
      %v799 = vsel %vm419, %v786, 0
      %v802 = vsel %vm432, %v788, 0
      %804 = vmatpush.bf16.msra.mxu0 0
      %805 = vmatpush.bf16.msra.mxu0 0
      %806 = vmatpush.bf16.msra.mxu0 0
      %807 = vmatpush.bf16.msra.mxu0 0
      %808 = vmatpush.bf16.msra.mxu0 0
      %809 = vmatpush.bf16.msra.mxu0 0
      %810 = vmatpush.bf16.msra.mxu0 0
      %811 = vmatpush.bf16.msra.mxu0 %v802
      %812 = vmatmul.bf16.gmra.mxu0 %v790
      %v813 = vpop.f32.mrf.mxu0
      %v814 = vadd.f32 0.0, %v813
      %v815 = vpop.f32.mrf.mxu0
      %v816 = vadd.f32 0.0, %v815
      %817 = vmatmul.bf16.gmra.mxu0 %v793
      %v818 = vpop.f32.mrf.mxu0
      %v819 = vadd.f32 0.0, %v818
      %v820 = vpop.f32.mrf.mxu0
      %v821 = vadd.f32 0.0, %v820
      %822 = vmatmul.bf16.gmra.mxu0 %v796
      %v823 = vpop.f32.mrf.mxu0
      %v824 = vadd.f32 0.0, %v823
      %v825 = vpop.f32.mrf.mxu0
      %v826 = vadd.f32 0.0, %v825
      %827 = vmatmul.bf16.gmra.mxu0 %v799
      %v828 = vpop.f32.mrf.mxu0
      %v829 = vadd.f32 0.0, %v828
      %v830 = vpop.f32.mrf.mxu0
      %v831 = vadd.f32 0.0, %v830
      %832 = vdwg.mxu0
      %v833 = vadd.f32 %v766, %v814
      %v834 = vadd.f32 %v767, %v816
      %v835 = vadd.f32 %v768, %v819
      %v836 = vadd.f32 %v769, %v821
      %v837 = vadd.f32 %v770, %v824
      %v838 = vadd.f32 %v771, %v826
      %v839 = vadd.f32 %v772, %v829
      %v840 = vadd.f32 %v773, %v831
      %v841 = vld [vmem:[%s774 + $0x1] sm:$0xff]
      %v842 = vld [vmem:[%s774 + $0x11] sm:$0xff]
      %v843 = vld [vmem:[%s774 + $0x21] sm:$0xff]
      %v844 = vld [vmem:[%s774 + $0x31] sm:$0xff]
      %v845 = vld [vmem:[%s774 + $0x41] sm:$0xff]
      %v846 = vld [vmem:[%s774 + $0x51] sm:$0xff]
      %v847 = vld [vmem:[%s774 + $0x61] sm:$0xff]
      %v848 = vld [vmem:[%s774 + $0x71] sm:$0xff]
      %v849 = vpack.c.bf16 %v842, %v841
      %v850 = vpack.c.bf16 %v844, %v843
      %v851 = vpack.c.bf16 %v846, %v845
      %v852 = vpack.c.bf16 %v848, %v847
      %s853 = scalar_lea.vmem %s3, 28
      %v854 = vld [vmem:[%s853] sm:$0xf]
      %v856 = vsel %vm419, %v849, 0
      %v859 = vsel %vm419, %v850, 0
      %v862 = vsel %vm419, %v851, 0
      %v865 = vsel %vm419, %v852, 0
      %v868 = vsel %vm432, %v854, 0
      %870 = vmatpush.bf16.msra.mxu0 0
      %871 = vmatpush.bf16.msra.mxu0 0
      %872 = vmatpush.bf16.msra.mxu0 0
      %873 = vmatpush.bf16.msra.mxu0 0
      %874 = vmatpush.bf16.msra.mxu0 0
      %875 = vmatpush.bf16.msra.mxu0 0
      %876 = vmatpush.bf16.msra.mxu0 0
      %877 = vmatpush.bf16.msra.mxu0 %v868
      %878 = vmatmul.bf16.gmra.mxu0 %v856
      %v879 = vpop.f32.mrf.mxu0
      %v880 = vadd.f32 0.0, %v879
      %v881 = vpop.f32.mrf.mxu0
      %v882 = vadd.f32 0.0, %v881
      %883 = vmatmul.bf16.gmra.mxu0 %v859
      %v884 = vpop.f32.mrf.mxu0
      %v885 = vadd.f32 0.0, %v884
      %v886 = vpop.f32.mrf.mxu0
      %v887 = vadd.f32 0.0, %v886
      %888 = vmatmul.bf16.gmra.mxu0 %v862
      %v889 = vpop.f32.mrf.mxu0
      %v890 = vadd.f32 0.0, %v889
      %v891 = vpop.f32.mrf.mxu0
      %v892 = vadd.f32 0.0, %v891
      %893 = vmatmul.bf16.gmra.mxu0 %v865
      %v894 = vpop.f32.mrf.mxu0
      %v895 = vadd.f32 0.0, %v894
      %v896 = vpop.f32.mrf.mxu0
      %v897 = vadd.f32 0.0, %v896
      %898 = vdwg.mxu0
      %v899 = vadd.f32 %v833, %v880
      %v900 = vadd.f32 %v834, %v882
      %v901 = vadd.f32 %v835, %v885
      %v902 = vadd.f32 %v836, %v887
      %v903 = vadd.f32 %v837, %v890
      %v904 = vadd.f32 %v838, %v892
      %v905 = vadd.f32 %v839, %v895
      %v906 = vadd.f32 %v840, %v897
      %v907 = vld [vmem:[%s774 + $0x2] sm:$0xff]
      %v908 = vld [vmem:[%s774 + $0x12] sm:$0xff]
      %v909 = vld [vmem:[%s774 + $0x22] sm:$0xff]
      %v910 = vld [vmem:[%s774 + $0x32] sm:$0xff]
      %v911 = vld [vmem:[%s774 + $0x42] sm:$0xff]
      %v912 = vld [vmem:[%s774 + $0x52] sm:$0xff]
      %v913 = vld [vmem:[%s774 + $0x62] sm:$0xff]
      %v914 = vld [vmem:[%s774 + $0x72] sm:$0xff]
      %v915 = vpack.c.bf16 %v908, %v907
      %v916 = vpack.c.bf16 %v910, %v909
      %v917 = vpack.c.bf16 %v912, %v911
      %v918 = vpack.c.bf16 %v914, %v913
      %s919 = scalar_lea.vmem %s3, 32
      %v920 = vld [vmem:[%s919] sm:$0xf]
      %v922 = vsel %vm419, %v915, 0
      %v925 = vsel %vm419, %v916, 0
      %v928 = vsel %vm419, %v917, 0
      %v931 = vsel %vm419, %v918, 0
      %v934 = vsel %vm432, %v920, 0
      %936 = vmatpush.bf16.msra.mxu0 0
      %937 = vmatpush.bf16.msra.mxu0 0
      %938 = vmatpush.bf16.msra.mxu0 0
      %939 = vmatpush.bf16.msra.mxu0 0
      %940 = vmatpush.bf16.msra.mxu0 0
      %941 = vmatpush.bf16.msra.mxu0 0
      %942 = vmatpush.bf16.msra.mxu0 0
      %943 = vmatpush.bf16.msra.mxu0 %v934
      %944 = vmatmul.bf16.gmra.mxu0 %v922
      %v945 = vpop.f32.mrf.mxu0
      %v946 = vadd.f32 0.0, %v945
      %v947 = vpop.f32.mrf.mxu0
      %v948 = vadd.f32 0.0, %v947
      %949 = vmatmul.bf16.gmra.mxu0 %v925
      %v950 = vpop.f32.mrf.mxu0
      %v951 = vadd.f32 0.0, %v950
      %v952 = vpop.f32.mrf.mxu0
      %v953 = vadd.f32 0.0, %v952
      %954 = vmatmul.bf16.gmra.mxu0 %v928
      %v955 = vpop.f32.mrf.mxu0
      %v956 = vadd.f32 0.0, %v955
      %v957 = vpop.f32.mrf.mxu0
      %v958 = vadd.f32 0.0, %v957
      %959 = vmatmul.bf16.gmra.mxu0 %v931
      %v960 = vpop.f32.mrf.mxu0
      %v961 = vadd.f32 0.0, %v960
      %v962 = vpop.f32.mrf.mxu0
      %v963 = vadd.f32 0.0, %v962
      %964 = vdwg.mxu0
      %v965 = vadd.f32 %v899, %v946
      %v966 = vadd.f32 %v900, %v948
      %v967 = vadd.f32 %v901, %v951
      %v968 = vadd.f32 %v902, %v953
      %v969 = vadd.f32 %v903, %v956
      %v970 = vadd.f32 %v904, %v958
      %v971 = vadd.f32 %v905, %v961
      %v972 = vadd.f32 %v906, %v963
      %v973 = vld [vmem:[%s361] sm:$0xff]
      %v974 = vld [vmem:[%s361 + $0x10] sm:$0xff]
      %v975 = vld [vmem:[%s361 + $0x20] sm:$0xff]
      %v976 = vld [vmem:[%s361 + $0x30] sm:$0xff]
      %v977 = vld [vmem:[%s361 + $0x40] sm:$0xff]
      %v978 = vld [vmem:[%s361 + $0x50] sm:$0xff]
      %v979 = vld [vmem:[%s361 + $0x60] sm:$0xff]
      %v980 = vld [vmem:[%s361 + $0x70] sm:$0xff]
      %v981 = vpack.c.bf16 %v974, %v973
      %v982 = vpack.c.bf16 %v976, %v975
      %v983 = vpack.c.bf16 %v978, %v977
      %v984 = vpack.c.bf16 %v980, %v979
      %s985 = scalar_lea.vmem %s3, 36
      %v986 = vld [vmem:[%s985] sm:$0xf]
      %v988 = vsel %vm419, %v981, 0
      %v991 = vsel %vm419, %v982, 0
      %v994 = vsel %vm419, %v983, 0
      %v997 = vsel %vm419, %v984, 0
      %v1000 = vsel %vm432, %v986, 0
      %1002 = vmatpush.bf16.msra.mxu0 0
      %1003 = vmatpush.bf16.msra.mxu0 0
      %1004 = vmatpush.bf16.msra.mxu0 0
      %1005 = vmatpush.bf16.msra.mxu0 0
      %1006 = vmatpush.bf16.msra.mxu0 0
      %1007 = vmatpush.bf16.msra.mxu0 0
      %1008 = vmatpush.bf16.msra.mxu0 0
      %1009 = vmatpush.bf16.msra.mxu0 %v1000
      %1010 = vmatmul.bf16.gmra.mxu0 %v988
      %v1011 = vpop.f32.mrf.mxu0
      %v1012 = vadd.f32 0.0, %v1011
      %v1013 = vpop.f32.mrf.mxu0
      %v1014 = vadd.f32 0.0, %v1013
      %1015 = vmatmul.bf16.gmra.mxu0 %v991
      %v1016 = vpop.f32.mrf.mxu0
      %v1017 = vadd.f32 0.0, %v1016
      %v1018 = vpop.f32.mrf.mxu0
      %v1019 = vadd.f32 0.0, %v1018
      %1020 = vmatmul.bf16.gmra.mxu0 %v994
      %v1021 = vpop.f32.mrf.mxu0
      %v1022 = vadd.f32 0.0, %v1021
      %v1023 = vpop.f32.mrf.mxu0
      %v1024 = vadd.f32 0.0, %v1023
      %1025 = vmatmul.bf16.gmra.mxu0 %v997
      %v1026 = vpop.f32.mrf.mxu0
      %v1027 = vadd.f32 0.0, %v1026
      %v1028 = vpop.f32.mrf.mxu0
      %v1029 = vadd.f32 0.0, %v1028
      %1030 = vdwg.mxu0
      %v1031 = vadd.f32 %v965, %v1012
      %v1032 = vadd.f32 %v966, %v1014
      %v1033 = vadd.f32 %v967, %v1017
      %v1034 = vadd.f32 %v968, %v1019
      %v1035 = vadd.f32 %v969, %v1022
      %v1036 = vadd.f32 %v970, %v1024
      %v1037 = vadd.f32 %v971, %v1027
      %v1038 = vadd.f32 %v972, %v1029
      %v1039 = vld [vmem:[%s361 + $0x1] sm:$0xff]
      %v1040 = vld [vmem:[%s361 + $0x11] sm:$0xff]
      %v1041 = vld [vmem:[%s361 + $0x21] sm:$0xff]
      %v1042 = vld [vmem:[%s361 + $0x31] sm:$0xff]
      %v1043 = vld [vmem:[%s361 + $0x41] sm:$0xff]
      %v1044 = vld [vmem:[%s361 + $0x51] sm:$0xff]
      %v1045 = vld [vmem:[%s361 + $0x61] sm:$0xff]
      %v1046 = vld [vmem:[%s361 + $0x71] sm:$0xff]
      %v1047 = vpack.c.bf16 %v1040, %v1039
      %v1048 = vpack.c.bf16 %v1042, %v1041
      %v1049 = vpack.c.bf16 %v1044, %v1043
      %v1050 = vpack.c.bf16 %v1046, %v1045
      %s1051 = scalar_lea.vmem %s3, 40
      %v1052 = vld [vmem:[%s1051] sm:$0xf]
      %v1054 = vsel %vm419, %v1047, 0
      %v1057 = vsel %vm419, %v1048, 0
      %v1060 = vsel %vm419, %v1049, 0
      %v1063 = vsel %vm419, %v1050, 0
      %v1066 = vsel %vm432, %v1052, 0
      %1068 = vmatpush.bf16.msra.mxu0 0
      %1069 = vmatpush.bf16.msra.mxu0 0
      %1070 = vmatpush.bf16.msra.mxu0 0
      %1071 = vmatpush.bf16.msra.mxu0 0
      %1072 = vmatpush.bf16.msra.mxu0 0
      %1073 = vmatpush.bf16.msra.mxu0 0
      %1074 = vmatpush.bf16.msra.mxu0 0
      %1075 = vmatpush.bf16.msra.mxu0 %v1066
      %1076 = vmatmul.bf16.gmra.mxu0 %v1054
      %v1077 = vpop.f32.mrf.mxu0
      %v1078 = vadd.f32 0.0, %v1077
      %v1079 = vpop.f32.mrf.mxu0
      %v1080 = vadd.f32 0.0, %v1079
      %1081 = vmatmul.bf16.gmra.mxu0 %v1057
      %v1082 = vpop.f32.mrf.mxu0
      %v1083 = vadd.f32 0.0, %v1082
      %v1084 = vpop.f32.mrf.mxu0
      %v1085 = vadd.f32 0.0, %v1084
      %1086 = vmatmul.bf16.gmra.mxu0 %v1060
      %v1087 = vpop.f32.mrf.mxu0
      %v1088 = vadd.f32 0.0, %v1087
      %v1089 = vpop.f32.mrf.mxu0
      %v1090 = vadd.f32 0.0, %v1089
      %1091 = vmatmul.bf16.gmra.mxu0 %v1063
      %v1092 = vpop.f32.mrf.mxu0
      %v1093 = vadd.f32 0.0, %v1092
      %v1094 = vpop.f32.mrf.mxu0
      %v1095 = vadd.f32 0.0, %v1094
      %1096 = vdwg.mxu0
      %v1097 = vadd.f32 %v1031, %v1078
      %v1098 = vadd.f32 %v1032, %v1080
      %v1099 = vadd.f32 %v1033, %v1083
      %v1100 = vadd.f32 %v1034, %v1085
      %v1101 = vadd.f32 %v1035, %v1088
      %v1102 = vadd.f32 %v1036, %v1090
      %v1103 = vadd.f32 %v1037, %v1093
      %v1104 = vadd.f32 %v1038, %v1095
      %v1105 = vld [vmem:[%s361 + $0x2] sm:$0xff]
      %v1106 = vld [vmem:[%s361 + $0x12] sm:$0xff]
      %v1107 = vld [vmem:[%s361 + $0x22] sm:$0xff]
      %v1108 = vld [vmem:[%s361 + $0x32] sm:$0xff]
      %v1109 = vld [vmem:[%s361 + $0x42] sm:$0xff]
      %v1110 = vld [vmem:[%s361 + $0x52] sm:$0xff]
      %v1111 = vld [vmem:[%s361 + $0x62] sm:$0xff]
      %v1112 = vld [vmem:[%s361 + $0x72] sm:$0xff]
      %v1113 = vpack.c.bf16 %v1106, %v1105
      %v1114 = vpack.c.bf16 %v1108, %v1107
      %v1115 = vpack.c.bf16 %v1110, %v1109
      %v1116 = vpack.c.bf16 %v1112, %v1111
      %s1117 = scalar_lea.vmem %s3, 44
      %v1118 = vld [vmem:[%s1117] sm:$0xf]
      %v1120 = vsel %vm419, %v1113, 0
      %v1123 = vsel %vm419, %v1114, 0
      %v1126 = vsel %vm419, %v1115, 0
      %v1129 = vsel %vm419, %v1116, 0
      %v1132 = vsel %vm432, %v1118, 0
      %1134 = vmatpush.bf16.msra.mxu0 0
      %1135 = vmatpush.bf16.msra.mxu0 0
      %1136 = vmatpush.bf16.msra.mxu0 0
      %1137 = vmatpush.bf16.msra.mxu0 0
      %1138 = vmatpush.bf16.msra.mxu0 0
      %1139 = vmatpush.bf16.msra.mxu0 0
      %1140 = vmatpush.bf16.msra.mxu0 0
      %1141 = vmatpush.bf16.msra.mxu0 %v1132
      %1142 = vmatmul.bf16.gmra.mxu0 %v1120
      %v1143 = vpop.f32.mrf.mxu0
      %v1144 = vadd.f32 0.0, %v1143
      %v1145 = vpop.f32.mrf.mxu0
      %v1146 = vadd.f32 0.0, %v1145
      %1147 = vmatmul.bf16.gmra.mxu0 %v1123
      %v1148 = vpop.f32.mrf.mxu0
      %v1149 = vadd.f32 0.0, %v1148
      %v1150 = vpop.f32.mrf.mxu0
      %v1151 = vadd.f32 0.0, %v1150
      %1152 = vmatmul.bf16.gmra.mxu0 %v1126
      %v1153 = vpop.f32.mrf.mxu0
      %v1154 = vadd.f32 0.0, %v1153
      %v1155 = vpop.f32.mrf.mxu0
      %v1156 = vadd.f32 0.0, %v1155
      %1157 = vmatmul.bf16.gmra.mxu0 %v1129
      %v1158 = vpop.f32.mrf.mxu0
      %v1159 = vadd.f32 0.0, %v1158
      %v1160 = vpop.f32.mrf.mxu0
      %v1161 = vadd.f32 0.0, %v1160
      %1162 = vdwg.mxu0
      %v1163 = vadd.f32 %v1097, %v1144
      %v1164 = vadd.f32 %v1098, %v1146
      %v1165 = vadd.f32 %v1099, %v1149
      %v1166 = vadd.f32 %v1100, %v1151
      %v1167 = vadd.f32 %v1101, %v1154
      %v1168 = vadd.f32 %v1102, %v1156
      %v1169 = vadd.f32 %v1103, %v1159
      %v1170 = vadd.f32 %v1104, %v1161
      %s1171 = scalar_lea.vmem %s361, 16
      %v1172 = vld [vmem:[%s1171] sm:$0xff]
      %v1173 = vld [vmem:[%s1171 + $0x10] sm:$0xff]
      %v1174 = vld [vmem:[%s1171 + $0x20] sm:$0xff]
      %v1175 = vld [vmem:[%s1171 + $0x30] sm:$0xff]
      %v1176 = vld [vmem:[%s1171 + $0x40] sm:$0xff]
      %v1177 = vld [vmem:[%s1171 + $0x50] sm:$0xff]
      %v1178 = vld [vmem:[%s1171 + $0x60] sm:$0xff]
      %v1179 = vld [vmem:[%s1171 + $0x70] sm:$0xff]
      %v1180 = vpack.c.bf16 %v1173, %v1172
      %v1181 = vpack.c.bf16 %v1175, %v1174
      %v1182 = vpack.c.bf16 %v1177, %v1176
      %v1183 = vpack.c.bf16 %v1179, %v1178
      %s1184 = scalar_lea.vmem %s3, 48
      %v1185 = vld [vmem:[%s1184] sm:$0xf]
      %v1187 = vsel %vm419, %v1180, 0
      %v1190 = vsel %vm419, %v1181, 0
      %v1193 = vsel %vm419, %v1182, 0
      %v1196 = vsel %vm419, %v1183, 0
      %v1199 = vsel %vm432, %v1185, 0
      %1201 = vmatpush.bf16.msra.mxu0 0
      %1202 = vmatpush.bf16.msra.mxu0 0
      %1203 = vmatpush.bf16.msra.mxu0 0
      %1204 = vmatpush.bf16.msra.mxu0 0
      %1205 = vmatpush.bf16.msra.mxu0 0
      %1206 = vmatpush.bf16.msra.mxu0 0
      %1207 = vmatpush.bf16.msra.mxu0 0
      %1208 = vmatpush.bf16.msra.mxu0 %v1199
      %1209 = vmatmul.bf16.gmra.mxu0 %v1187
      %v1210 = vpop.f32.mrf.mxu0
      %v1211 = vadd.f32 0.0, %v1210
      %v1212 = vpop.f32.mrf.mxu0
      %v1213 = vadd.f32 0.0, %v1212
      %1214 = vmatmul.bf16.gmra.mxu0 %v1190
      %v1215 = vpop.f32.mrf.mxu0
      %v1216 = vadd.f32 0.0, %v1215
      %v1217 = vpop.f32.mrf.mxu0
      %v1218 = vadd.f32 0.0, %v1217
      %1219 = vmatmul.bf16.gmra.mxu0 %v1193
      %v1220 = vpop.f32.mrf.mxu0
      %v1221 = vadd.f32 0.0, %v1220
      %v1222 = vpop.f32.mrf.mxu0
      %v1223 = vadd.f32 0.0, %v1222
      %1224 = vmatmul.bf16.gmra.mxu0 %v1196
      %v1225 = vpop.f32.mrf.mxu0
      %v1226 = vadd.f32 0.0, %v1225
      %v1227 = vpop.f32.mrf.mxu0
      %v1228 = vadd.f32 0.0, %v1227
      %1229 = vdwg.mxu0
      %v1230 = vadd.f32 %v1163, %v1211
      %v1231 = vadd.f32 %v1164, %v1213
      %v1232 = vadd.f32 %v1165, %v1216
      %v1233 = vadd.f32 %v1166, %v1218
      %v1234 = vadd.f32 %v1167, %v1221
      %v1235 = vadd.f32 %v1168, %v1223
      %v1236 = vadd.f32 %v1169, %v1226
      %v1237 = vadd.f32 %v1170, %v1228
      %v1238 = vld [vmem:[%s1171 + $0x1] sm:$0xff]
      %v1239 = vld [vmem:[%s1171 + $0x11] sm:$0xff]
      %v1240 = vld [vmem:[%s1171 + $0x21] sm:$0xff]
      %v1241 = vld [vmem:[%s1171 + $0x31] sm:$0xff]
      %v1242 = vld [vmem:[%s1171 + $0x41] sm:$0xff]
      %v1243 = vld [vmem:[%s1171 + $0x51] sm:$0xff]
      %v1244 = vld [vmem:[%s1171 + $0x61] sm:$0xff]
      %v1245 = vld [vmem:[%s1171 + $0x71] sm:$0xff]
      %v1246 = vpack.c.bf16 %v1239, %v1238
      %v1247 = vpack.c.bf16 %v1241, %v1240
      %v1248 = vpack.c.bf16 %v1243, %v1242
      %v1249 = vpack.c.bf16 %v1245, %v1244
      %s1250 = scalar_lea.vmem %s3, 52
      %v1251 = vld [vmem:[%s1250] sm:$0xf]
      %v1253 = vsel %vm419, %v1246, 0
      %v1256 = vsel %vm419, %v1247, 0
      %v1259 = vsel %vm419, %v1248, 0
      %v1262 = vsel %vm419, %v1249, 0
      %v1265 = vsel %vm432, %v1251, 0
      %1267 = vmatpush.bf16.msra.mxu0 0
      %1268 = vmatpush.bf16.msra.mxu0 0
      %1269 = vmatpush.bf16.msra.mxu0 0
      %1270 = vmatpush.bf16.msra.mxu0 0
      %1271 = vmatpush.bf16.msra.mxu0 0
      %1272 = vmatpush.bf16.msra.mxu0 0
      %1273 = vmatpush.bf16.msra.mxu0 0
      %1274 = vmatpush.bf16.msra.mxu0 %v1265
      %1275 = vmatmul.bf16.gmra.mxu0 %v1253
      %v1276 = vpop.f32.mrf.mxu0
      %v1277 = vadd.f32 0.0, %v1276
      %v1278 = vpop.f32.mrf.mxu0
      %v1279 = vadd.f32 0.0, %v1278
      %1280 = vmatmul.bf16.gmra.mxu0 %v1256
      %v1281 = vpop.f32.mrf.mxu0
      %v1282 = vadd.f32 0.0, %v1281
      %v1283 = vpop.f32.mrf.mxu0
      %v1284 = vadd.f32 0.0, %v1283
      %1285 = vmatmul.bf16.gmra.mxu0 %v1259
      %v1286 = vpop.f32.mrf.mxu0
      %v1287 = vadd.f32 0.0, %v1286
      %v1288 = vpop.f32.mrf.mxu0
      %v1289 = vadd.f32 0.0, %v1288
      %1290 = vmatmul.bf16.gmra.mxu0 %v1262
      %v1291 = vpop.f32.mrf.mxu0
      %v1292 = vadd.f32 0.0, %v1291
      %v1293 = vpop.f32.mrf.mxu0
      %v1294 = vadd.f32 0.0, %v1293
      %1295 = vdwg.mxu0
      %v1296 = vadd.f32 %v1230, %v1277
      %v1297 = vadd.f32 %v1231, %v1279
      %v1298 = vadd.f32 %v1232, %v1282
      %v1299 = vadd.f32 %v1233, %v1284
      %v1300 = vadd.f32 %v1234, %v1287
      %v1301 = vadd.f32 %v1235, %v1289
      %v1302 = vadd.f32 %v1236, %v1292
      %v1303 = vadd.f32 %v1237, %v1294
      %v1304 = vld [vmem:[%s1171 + $0x2] sm:$0xff]
      %v1305 = vld [vmem:[%s1171 + $0x12] sm:$0xff]
      %v1306 = vld [vmem:[%s1171 + $0x22] sm:$0xff]
      %v1307 = vld [vmem:[%s1171 + $0x32] sm:$0xff]
      %v1308 = vld [vmem:[%s1171 + $0x42] sm:$0xff]
      %v1309 = vld [vmem:[%s1171 + $0x52] sm:$0xff]
      %v1310 = vld [vmem:[%s1171 + $0x62] sm:$0xff]
      %v1311 = vld [vmem:[%s1171 + $0x72] sm:$0xff]
      %v1312 = vpack.c.bf16 %v1305, %v1304
      %v1313 = vpack.c.bf16 %v1307, %v1306
      %v1314 = vpack.c.bf16 %v1309, %v1308
      %v1315 = vpack.c.bf16 %v1311, %v1310
      %s1316 = scalar_lea.vmem %s3, 56
      %v1317 = vld [vmem:[%s1316] sm:$0xf]
      %v1319 = vsel %vm419, %v1312, 0
      %v1322 = vsel %vm419, %v1313, 0
      %v1325 = vsel %vm419, %v1314, 0
      %v1328 = vsel %vm419, %v1315, 0
      %v1331 = vsel %vm432, %v1317, 0
      %1333 = vmatpush.bf16.msra.mxu0 0
      %1334 = vmatpush.bf16.msra.mxu0 0
      %1335 = vmatpush.bf16.msra.mxu0 0
      %1336 = vmatpush.bf16.msra.mxu0 0
      %1337 = vmatpush.bf16.msra.mxu0 0
      %1338 = vmatpush.bf16.msra.mxu0 0
      %1339 = vmatpush.bf16.msra.mxu0 0
      %1340 = vmatpush.bf16.msra.mxu0 %v1331
      %1341 = vmatmul.bf16.gmra.mxu0 %v1319
      %v1342 = vpop.f32.mrf.mxu0
      %v1343 = vadd.f32 0.0, %v1342
      %v1344 = vpop.f32.mrf.mxu0
      %v1345 = vadd.f32 0.0, %v1344
      %1346 = vmatmul.bf16.gmra.mxu0 %v1322
      %v1347 = vpop.f32.mrf.mxu0
      %v1348 = vadd.f32 0.0, %v1347
      %v1349 = vpop.f32.mrf.mxu0
      %v1350 = vadd.f32 0.0, %v1349
      %1351 = vmatmul.bf16.gmra.mxu0 %v1325
      %v1352 = vpop.f32.mrf.mxu0
      %v1353 = vadd.f32 0.0, %v1352
      %v1354 = vpop.f32.mrf.mxu0
      %v1355 = vadd.f32 0.0, %v1354
      %1356 = vmatmul.bf16.gmra.mxu0 %v1328
      %v1357 = vpop.f32.mrf.mxu0
      %v1358 = vadd.f32 0.0, %v1357
      %v1359 = vpop.f32.mrf.mxu0
      %v1360 = vadd.f32 0.0, %v1359
      %1361 = vdwg.mxu0
      %v1362 = vadd.f32 %v1296, %v1343
      %v1363 = vadd.f32 %v1297, %v1345
      %v1364 = vadd.f32 %v1298, %v1348
      %v1365 = vadd.f32 %v1299, %v1350
      %v1366 = vadd.f32 %v1300, %v1353
      %v1367 = vadd.f32 %v1301, %v1355
      %v1368 = vadd.f32 %v1302, %v1358
      %v1369 = vadd.f32 %v1303, %v1360
      %s1370 = scalar_lea.vmem %s361, 32
      %v1371 = vld [vmem:[%s1370] sm:$0xff]
      %v1372 = vld [vmem:[%s1370 + $0x10] sm:$0xff]
      %v1373 = vld [vmem:[%s1370 + $0x20] sm:$0xff]
      %v1374 = vld [vmem:[%s1370 + $0x30] sm:$0xff]
      %v1375 = vld [vmem:[%s1370 + $0x40] sm:$0xff]
      %v1376 = vld [vmem:[%s1370 + $0x50] sm:$0xff]
      %v1377 = vld [vmem:[%s1370 + $0x60] sm:$0xff]
      %v1378 = vld [vmem:[%s1370 + $0x70] sm:$0xff]
      %v1379 = vpack.c.bf16 %v1372, %v1371
      %v1380 = vpack.c.bf16 %v1374, %v1373
      %v1381 = vpack.c.bf16 %v1376, %v1375
      %v1382 = vpack.c.bf16 %v1378, %v1377
      %s1383 = scalar_lea.vmem %s3, 60
      %v1384 = vld [vmem:[%s1383] sm:$0xf]
      %v1386 = vsel %vm419, %v1379, 0
      %v1389 = vsel %vm419, %v1380, 0
      %v1392 = vsel %vm419, %v1381, 0
      %v1395 = vsel %vm419, %v1382, 0
      %v1398 = vsel %vm432, %v1384, 0
      %1400 = vmatpush.bf16.msra.mxu0 0
      %1401 = vmatpush.bf16.msra.mxu0 0
      %1402 = vmatpush.bf16.msra.mxu0 0
      %1403 = vmatpush.bf16.msra.mxu0 0
      %1404 = vmatpush.bf16.msra.mxu0 0
      %1405 = vmatpush.bf16.msra.mxu0 0
      %1406 = vmatpush.bf16.msra.mxu0 0
      %1407 = vmatpush.bf16.msra.mxu0 %v1398
      %1408 = vmatmul.bf16.gmra.mxu0 %v1386
      %v1409 = vpop.f32.mrf.mxu0
      %v1410 = vadd.f32 0.0, %v1409
      %v1411 = vpop.f32.mrf.mxu0
      %v1412 = vadd.f32 0.0, %v1411
      %1413 = vmatmul.bf16.gmra.mxu0 %v1389
      %v1414 = vpop.f32.mrf.mxu0
      %v1415 = vadd.f32 0.0, %v1414
      %v1416 = vpop.f32.mrf.mxu0
      %v1417 = vadd.f32 0.0, %v1416
      %1418 = vmatmul.bf16.gmra.mxu0 %v1392
      %v1419 = vpop.f32.mrf.mxu0
      %v1420 = vadd.f32 0.0, %v1419
      %v1421 = vpop.f32.mrf.mxu0
      %v1422 = vadd.f32 0.0, %v1421
      %1423 = vmatmul.bf16.gmra.mxu0 %v1395
      %v1424 = vpop.f32.mrf.mxu0
      %v1425 = vadd.f32 0.0, %v1424
      %v1426 = vpop.f32.mrf.mxu0
      %v1427 = vadd.f32 0.0, %v1426
      %1428 = vdwg.mxu0
      %v1429 = vadd.f32 %v1362, %v1410
      %v1430 = vadd.f32 %v1363, %v1412
      %v1431 = vadd.f32 %v1364, %v1415
      %v1432 = vadd.f32 %v1365, %v1417
      %v1433 = vadd.f32 %v1366, %v1420
      %v1434 = vadd.f32 %v1367, %v1422
      %v1435 = vadd.f32 %v1368, %v1425
      %v1436 = vadd.f32 %v1369, %v1427
      %v1437 = vld [vmem:[%s1370 + $0x1] sm:$0xff]
      %v1438 = vld [vmem:[%s1370 + $0x11] sm:$0xff]
      %v1439 = vld [vmem:[%s1370 + $0x21] sm:$0xff]
      %v1440 = vld [vmem:[%s1370 + $0x31] sm:$0xff]
      %v1441 = vld [vmem:[%s1370 + $0x41] sm:$0xff]
      %v1442 = vld [vmem:[%s1370 + $0x51] sm:$0xff]
      %v1443 = vld [vmem:[%s1370 + $0x61] sm:$0xff]
      %v1444 = vld [vmem:[%s1370 + $0x71] sm:$0xff]
      %v1445 = vpack.c.bf16 %v1438, %v1437
      %v1446 = vpack.c.bf16 %v1440, %v1439
      %v1447 = vpack.c.bf16 %v1442, %v1441
      %v1448 = vpack.c.bf16 %v1444, %v1443
      %s1449 = scalar_lea.vmem %s3, 64
      %v1450 = vld [vmem:[%s1449] sm:$0xf]
      %v1452 = vsel %vm419, %v1445, 0
      %v1455 = vsel %vm419, %v1446, 0
      %v1458 = vsel %vm419, %v1447, 0
      %v1461 = vsel %vm419, %v1448, 0
      %v1464 = vsel %vm432, %v1450, 0
      %1466 = vmatpush.bf16.msra.mxu0 0
      %1467 = vmatpush.bf16.msra.mxu0 0
      %1468 = vmatpush.bf16.msra.mxu0 0
      %1469 = vmatpush.bf16.msra.mxu0 0
      %1470 = vmatpush.bf16.msra.mxu0 0
      %1471 = vmatpush.bf16.msra.mxu0 0
      %1472 = vmatpush.bf16.msra.mxu0 0
      %1473 = vmatpush.bf16.msra.mxu0 %v1464
      %1474 = vmatmul.bf16.gmra.mxu0 %v1452
      %v1475 = vpop.f32.mrf.mxu0
      %v1476 = vadd.f32 0.0, %v1475
      %v1477 = vpop.f32.mrf.mxu0
      %v1478 = vadd.f32 0.0, %v1477
      %1479 = vmatmul.bf16.gmra.mxu0 %v1455
      %v1480 = vpop.f32.mrf.mxu0
      %v1481 = vadd.f32 0.0, %v1480
      %v1482 = vpop.f32.mrf.mxu0
      %v1483 = vadd.f32 0.0, %v1482
      %1484 = vmatmul.bf16.gmra.mxu0 %v1458
      %v1485 = vpop.f32.mrf.mxu0
      %v1486 = vadd.f32 0.0, %v1485
      %v1487 = vpop.f32.mrf.mxu0
      %v1488 = vadd.f32 0.0, %v1487
      %1489 = vmatmul.bf16.gmra.mxu0 %v1461
      %v1490 = vpop.f32.mrf.mxu0
      %v1491 = vadd.f32 0.0, %v1490
      %v1492 = vpop.f32.mrf.mxu0
      %v1493 = vadd.f32 0.0, %v1492
      %1494 = vdwg.mxu0
      %v1495 = vadd.f32 %v1429, %v1476
      %v1496 = vadd.f32 %v1430, %v1478
      %v1497 = vadd.f32 %v1431, %v1481
      %v1498 = vadd.f32 %v1432, %v1483
      %v1499 = vadd.f32 %v1433, %v1486
      %v1500 = vadd.f32 %v1434, %v1488
      %v1501 = vadd.f32 %v1435, %v1491
      %v1502 = vadd.f32 %v1436, %v1493
      %v1503 = vld [vmem:[%s1370 + $0x2] sm:$0xff]
      %v1504 = vld [vmem:[%s1370 + $0x12] sm:$0xff]
      %v1505 = vld [vmem:[%s1370 + $0x22] sm:$0xff]
      %v1506 = vld [vmem:[%s1370 + $0x32] sm:$0xff]
      %v1507 = vld [vmem:[%s1370 + $0x42] sm:$0xff]
      %v1508 = vld [vmem:[%s1370 + $0x52] sm:$0xff]
      %v1509 = vld [vmem:[%s1370 + $0x62] sm:$0xff]
      %v1510 = vld [vmem:[%s1370 + $0x72] sm:$0xff]
      %v1511 = vpack.c.bf16 %v1504, %v1503
      %v1512 = vpack.c.bf16 %v1506, %v1505
      %v1513 = vpack.c.bf16 %v1508, %v1507
      %v1514 = vpack.c.bf16 %v1510, %v1509
      %s1515 = scalar_lea.vmem %s3, 68
      %v1516 = vld [vmem:[%s1515] sm:$0xf]
      %v1518 = vsel %vm419, %v1511, 0
      %v1521 = vsel %vm419, %v1512, 0
      %v1524 = vsel %vm419, %v1513, 0
      %v1527 = vsel %vm419, %v1514, 0
      %v1530 = vsel %vm432, %v1516, 0
      %1532 = vmatpush.bf16.msra.mxu0 0
      %1533 = vmatpush.bf16.msra.mxu0 0
      %1534 = vmatpush.bf16.msra.mxu0 0
      %1535 = vmatpush.bf16.msra.mxu0 0
      %1536 = vmatpush.bf16.msra.mxu0 0
      %1537 = vmatpush.bf16.msra.mxu0 0
      %1538 = vmatpush.bf16.msra.mxu0 0
      %1539 = vmatpush.bf16.msra.mxu0 %v1530
      %1540 = vmatmul.bf16.gmra.mxu0 %v1518
      %v1541 = vpop.f32.mrf.mxu0
      %v1542 = vadd.f32 0.0, %v1541
      %v1543 = vpop.f32.mrf.mxu0
      %v1544 = vadd.f32 0.0, %v1543
      %1545 = vmatmul.bf16.gmra.mxu0 %v1521
      %v1546 = vpop.f32.mrf.mxu0
      %v1547 = vadd.f32 0.0, %v1546
      %v1548 = vpop.f32.mrf.mxu0
      %v1549 = vadd.f32 0.0, %v1548
      %1550 = vmatmul.bf16.gmra.mxu0 %v1524
      %v1551 = vpop.f32.mrf.mxu0
      %v1552 = vadd.f32 0.0, %v1551
      %v1553 = vpop.f32.mrf.mxu0
      %v1554 = vadd.f32 0.0, %v1553
      %1555 = vmatmul.bf16.gmra.mxu0 %v1527
      %v1556 = vpop.f32.mrf.mxu0
      %v1557 = vadd.f32 0.0, %v1556
      %v1558 = vpop.f32.mrf.mxu0
      %v1559 = vadd.f32 0.0, %v1558
      %1560 = vdwg.mxu0
      %v1561 = vadd.f32 %v1495, %v1542
      %v1562 = vadd.f32 %v1496, %v1544
      %v1563 = vadd.f32 %v1497, %v1547
      %v1564 = vadd.f32 %v1498, %v1549
      %v1565 = vadd.f32 %v1499, %v1552
      %v1566 = vadd.f32 %v1500, %v1554
      %v1567 = vadd.f32 %v1501, %v1557
      %v1568 = vadd.f32 %v1502, %v1559
      %v1569 = vld [vmem:[%s372] sm:$0xff]
      %v1570 = vld [vmem:[%s372 + $0x10] sm:$0xff]
      %v1571 = vld [vmem:[%s372 + $0x20] sm:$0xff]
      %v1572 = vld [vmem:[%s372 + $0x30] sm:$0xff]
      %v1573 = vld [vmem:[%s372 + $0x40] sm:$0xff]
      %v1574 = vld [vmem:[%s372 + $0x50] sm:$0xff]
      %v1575 = vld [vmem:[%s372 + $0x60] sm:$0xff]
      %v1576 = vld [vmem:[%s372 + $0x70] sm:$0xff]
      %v1577 = vpack.c.bf16 %v1570, %v1569
      %v1578 = vpack.c.bf16 %v1572, %v1571
      %v1579 = vpack.c.bf16 %v1574, %v1573
      %v1580 = vpack.c.bf16 %v1576, %v1575
      %s1581 = scalar_lea.vmem %s3, 72
      %v1582 = vld [vmem:[%s1581] sm:$0xf]
      %v1584 = vsel %vm419, %v1577, 0
      %v1587 = vsel %vm419, %v1578, 0
      %v1590 = vsel %vm419, %v1579, 0
      %v1593 = vsel %vm419, %v1580, 0
      %v1596 = vsel %vm432, %v1582, 0
      %1598 = vmatpush.bf16.msra.mxu0 0
      %1599 = vmatpush.bf16.msra.mxu0 0
      %1600 = vmatpush.bf16.msra.mxu0 0
      %1601 = vmatpush.bf16.msra.mxu0 0
      %1602 = vmatpush.bf16.msra.mxu0 0
      %1603 = vmatpush.bf16.msra.mxu0 0
      %1604 = vmatpush.bf16.msra.mxu0 0
      %1605 = vmatpush.bf16.msra.mxu0 %v1596
      %1606 = vmatmul.bf16.gmra.mxu0 %v1584
      %v1607 = vpop.f32.mrf.mxu0
      %v1608 = vadd.f32 0.0, %v1607
      %v1609 = vpop.f32.mrf.mxu0
      %v1610 = vadd.f32 0.0, %v1609
      %1611 = vmatmul.bf16.gmra.mxu0 %v1587
      %v1612 = vpop.f32.mrf.mxu0
      %v1613 = vadd.f32 0.0, %v1612
      %v1614 = vpop.f32.mrf.mxu0
      %v1615 = vadd.f32 0.0, %v1614
      %1616 = vmatmul.bf16.gmra.mxu0 %v1590
      %v1617 = vpop.f32.mrf.mxu0
      %v1618 = vadd.f32 0.0, %v1617
      %v1619 = vpop.f32.mrf.mxu0
      %v1620 = vadd.f32 0.0, %v1619
      %1621 = vmatmul.bf16.gmra.mxu0 %v1593
      %v1622 = vpop.f32.mrf.mxu0
      %v1623 = vadd.f32 0.0, %v1622
      %v1624 = vpop.f32.mrf.mxu0
      %v1625 = vadd.f32 0.0, %v1624
      %1626 = vdwg.mxu0
      %v1627 = vadd.f32 %v1561, %v1608
      %v1628 = vadd.f32 %v1562, %v1610
      %v1629 = vadd.f32 %v1563, %v1613
      %v1630 = vadd.f32 %v1564, %v1615
      %v1631 = vadd.f32 %v1565, %v1618
      %v1632 = vadd.f32 %v1566, %v1620
      %v1633 = vadd.f32 %v1567, %v1623
      %v1634 = vadd.f32 %v1568, %v1625
      %v1635 = vld [vmem:[%s372 + $0x1] sm:$0xff]
      %v1636 = vld [vmem:[%s372 + $0x11] sm:$0xff]
      %v1637 = vld [vmem:[%s372 + $0x21] sm:$0xff]
      %v1638 = vld [vmem:[%s372 + $0x31] sm:$0xff]
      %v1639 = vld [vmem:[%s372 + $0x41] sm:$0xff]
      %v1640 = vld [vmem:[%s372 + $0x51] sm:$0xff]
      %v1641 = vld [vmem:[%s372 + $0x61] sm:$0xff]
      %v1642 = vld [vmem:[%s372 + $0x71] sm:$0xff]
      %v1643 = vpack.c.bf16 %v1636, %v1635
      %v1644 = vpack.c.bf16 %v1638, %v1637
      %v1645 = vpack.c.bf16 %v1640, %v1639
      %v1646 = vpack.c.bf16 %v1642, %v1641
      %s1647 = scalar_lea.vmem %s3, 76
      %v1648 = vld [vmem:[%s1647] sm:$0xf]
      %v1650 = vsel %vm419, %v1643, 0
      %v1653 = vsel %vm419, %v1644, 0
      %v1656 = vsel %vm419, %v1645, 0
      %v1659 = vsel %vm419, %v1646, 0
      %v1662 = vsel %vm432, %v1648, 0
      %1664 = vmatpush.bf16.msra.mxu0 0
      %1665 = vmatpush.bf16.msra.mxu0 0
      %1666 = vmatpush.bf16.msra.mxu0 0
      %1667 = vmatpush.bf16.msra.mxu0 0
      %1668 = vmatpush.bf16.msra.mxu0 0
      %1669 = vmatpush.bf16.msra.mxu0 0
      %1670 = vmatpush.bf16.msra.mxu0 0
      %1671 = vmatpush.bf16.msra.mxu0 %v1662
      %1672 = vmatmul.bf16.gmra.mxu0 %v1650
      %v1673 = vpop.f32.mrf.mxu0
      %v1674 = vadd.f32 0.0, %v1673
      %v1675 = vpop.f32.mrf.mxu0
      %v1676 = vadd.f32 0.0, %v1675
      %1677 = vmatmul.bf16.gmra.mxu0 %v1653
      %v1678 = vpop.f32.mrf.mxu0
      %v1679 = vadd.f32 0.0, %v1678
      %v1680 = vpop.f32.mrf.mxu0
      %v1681 = vadd.f32 0.0, %v1680
      %1682 = vmatmul.bf16.gmra.mxu0 %v1656
      %v1683 = vpop.f32.mrf.mxu0
      %v1684 = vadd.f32 0.0, %v1683
      %v1685 = vpop.f32.mrf.mxu0
      %v1686 = vadd.f32 0.0, %v1685
      %1687 = vmatmul.bf16.gmra.mxu0 %v1659
      %v1688 = vpop.f32.mrf.mxu0
      %v1689 = vadd.f32 0.0, %v1688
      %v1690 = vpop.f32.mrf.mxu0
      %v1691 = vadd.f32 0.0, %v1690
      %1692 = vdwg.mxu0
      %v1693 = vadd.f32 %v1627, %v1674
      %v1694 = vadd.f32 %v1628, %v1676
      %v1695 = vadd.f32 %v1629, %v1679
      %v1696 = vadd.f32 %v1630, %v1681
      %v1697 = vadd.f32 %v1631, %v1684
      %v1698 = vadd.f32 %v1632, %v1686
      %v1699 = vadd.f32 %v1633, %v1689
      %v1700 = vadd.f32 %v1634, %v1691
      %v1701 = vld [vmem:[%s372 + $0x2] sm:$0xff]
      %v1702 = vld [vmem:[%s372 + $0x12] sm:$0xff]
      %v1703 = vld [vmem:[%s372 + $0x22] sm:$0xff]
      %v1704 = vld [vmem:[%s372 + $0x32] sm:$0xff]
      %v1705 = vld [vmem:[%s372 + $0x42] sm:$0xff]
      %v1706 = vld [vmem:[%s372 + $0x52] sm:$0xff]
      %v1707 = vld [vmem:[%s372 + $0x62] sm:$0xff]
      %v1708 = vld [vmem:[%s372 + $0x72] sm:$0xff]
      %v1709 = vpack.c.bf16 %v1702, %v1701
      %v1710 = vpack.c.bf16 %v1704, %v1703
      %v1711 = vpack.c.bf16 %v1706, %v1705
      %v1712 = vpack.c.bf16 %v1708, %v1707
      %s1713 = scalar_lea.vmem %s3, 80
      %v1714 = vld [vmem:[%s1713] sm:$0xf]
      %v1716 = vsel %vm419, %v1709, 0
      %v1719 = vsel %vm419, %v1710, 0
      %v1722 = vsel %vm419, %v1711, 0
      %v1725 = vsel %vm419, %v1712, 0
      %v1728 = vsel %vm432, %v1714, 0
      %1730 = vmatpush.bf16.msra.mxu0 0
      %1731 = vmatpush.bf16.msra.mxu0 0
      %1732 = vmatpush.bf16.msra.mxu0 0
      %1733 = vmatpush.bf16.msra.mxu0 0
      %1734 = vmatpush.bf16.msra.mxu0 0
      %1735 = vmatpush.bf16.msra.mxu0 0
      %1736 = vmatpush.bf16.msra.mxu0 0
      %1737 = vmatpush.bf16.msra.mxu0 %v1728
      %1738 = vmatmul.bf16.gmra.mxu0 %v1716
      %v1739 = vpop.f32.mrf.mxu0
      %v1740 = vadd.f32 0.0, %v1739
      %v1741 = vpop.f32.mrf.mxu0
      %v1742 = vadd.f32 0.0, %v1741
      %1743 = vmatmul.bf16.gmra.mxu0 %v1719
      %v1744 = vpop.f32.mrf.mxu0
      %v1745 = vadd.f32 0.0, %v1744
      %v1746 = vpop.f32.mrf.mxu0
      %v1747 = vadd.f32 0.0, %v1746
      %1748 = vmatmul.bf16.gmra.mxu0 %v1722
      %v1749 = vpop.f32.mrf.mxu0
      %v1750 = vadd.f32 0.0, %v1749
      %v1751 = vpop.f32.mrf.mxu0
      %v1752 = vadd.f32 0.0, %v1751
      %1753 = vmatmul.bf16.gmra.mxu0 %v1725
      %v1754 = vpop.f32.mrf.mxu0
      %v1755 = vadd.f32 0.0, %v1754
      %v1756 = vpop.f32.mrf.mxu0
      %v1757 = vadd.f32 0.0, %v1756
      %1758 = vdwg.mxu0
      %v1759 = vadd.f32 %v1693, %v1740
      %v1760 = vadd.f32 %v1694, %v1742
      %v1761 = vadd.f32 %v1695, %v1745
      %v1762 = vadd.f32 %v1696, %v1747
      %v1763 = vadd.f32 %v1697, %v1750
      %v1764 = vadd.f32 %v1698, %v1752
      %v1765 = vadd.f32 %v1699, %v1755
      %v1766 = vadd.f32 %v1700, %v1757
      %s1767 = scalar_lea.vmem %s372, 16
      %v1768 = vld [vmem:[%s1767] sm:$0xff]
      %v1769 = vld [vmem:[%s1767 + $0x10] sm:$0xff]
      %v1770 = vld [vmem:[%s1767 + $0x20] sm:$0xff]
      %v1771 = vld [vmem:[%s1767 + $0x30] sm:$0xff]
      %v1772 = vld [vmem:[%s1767 + $0x40] sm:$0xff]
      %v1773 = vld [vmem:[%s1767 + $0x50] sm:$0xff]
      %v1774 = vld [vmem:[%s1767 + $0x60] sm:$0xff]
      %v1775 = vld [vmem:[%s1767 + $0x70] sm:$0xff]
      %v1776 = vpack.c.bf16 %v1769, %v1768
      %v1777 = vpack.c.bf16 %v1771, %v1770
      %v1778 = vpack.c.bf16 %v1773, %v1772
      %v1779 = vpack.c.bf16 %v1775, %v1774
      %s1780 = scalar_lea.vmem %s3, 84
      %v1781 = vld [vmem:[%s1780] sm:$0xf]
      %v1783 = vsel %vm419, %v1776, 0
      %v1786 = vsel %vm419, %v1777, 0
      %v1789 = vsel %vm419, %v1778, 0
      %v1792 = vsel %vm419, %v1779, 0
      %v1795 = vsel %vm432, %v1781, 0
      %1797 = vmatpush.bf16.msra.mxu0 0
      %1798 = vmatpush.bf16.msra.mxu0 0
      %1799 = vmatpush.bf16.msra.mxu0 0
      %1800 = vmatpush.bf16.msra.mxu0 0
      %1801 = vmatpush.bf16.msra.mxu0 0
      %1802 = vmatpush.bf16.msra.mxu0 0
      %1803 = vmatpush.bf16.msra.mxu0 0
      %1804 = vmatpush.bf16.msra.mxu0 %v1795
      %1805 = vmatmul.bf16.gmra.mxu0 %v1783
      %v1806 = vpop.f32.mrf.mxu0
      %v1807 = vadd.f32 0.0, %v1806
      %v1808 = vpop.f32.mrf.mxu0
      %v1809 = vadd.f32 0.0, %v1808
      %1810 = vmatmul.bf16.gmra.mxu0 %v1786
      %v1811 = vpop.f32.mrf.mxu0
      %v1812 = vadd.f32 0.0, %v1811
      %v1813 = vpop.f32.mrf.mxu0
      %v1814 = vadd.f32 0.0, %v1813
      %1815 = vmatmul.bf16.gmra.mxu0 %v1789
      %v1816 = vpop.f32.mrf.mxu0
      %v1817 = vadd.f32 0.0, %v1816
      %v1818 = vpop.f32.mrf.mxu0
      %v1819 = vadd.f32 0.0, %v1818
      %1820 = vmatmul.bf16.gmra.mxu0 %v1792
      %v1821 = vpop.f32.mrf.mxu0
      %v1822 = vadd.f32 0.0, %v1821
      %v1823 = vpop.f32.mrf.mxu0
      %v1824 = vadd.f32 0.0, %v1823
      %1825 = vdwg.mxu0
      %v1826 = vadd.f32 %v1759, %v1807
      %v1827 = vadd.f32 %v1760, %v1809
      %v1828 = vadd.f32 %v1761, %v1812
      %v1829 = vadd.f32 %v1762, %v1814
      %v1830 = vadd.f32 %v1763, %v1817
      %v1831 = vadd.f32 %v1764, %v1819
      %v1832 = vadd.f32 %v1765, %v1822
      %v1833 = vadd.f32 %v1766, %v1824
      %v1834 = vld [vmem:[%s1767 + $0x1] sm:$0xff]
      %v1835 = vld [vmem:[%s1767 + $0x11] sm:$0xff]
      %v1836 = vld [vmem:[%s1767 + $0x21] sm:$0xff]
      %v1837 = vld [vmem:[%s1767 + $0x31] sm:$0xff]
      %v1838 = vld [vmem:[%s1767 + $0x41] sm:$0xff]
      %v1839 = vld [vmem:[%s1767 + $0x51] sm:$0xff]
      %v1840 = vld [vmem:[%s1767 + $0x61] sm:$0xff]
      %v1841 = vld [vmem:[%s1767 + $0x71] sm:$0xff]
      %v1842 = vpack.c.bf16 %v1835, %v1834
      %v1843 = vpack.c.bf16 %v1837, %v1836
      %v1844 = vpack.c.bf16 %v1839, %v1838
      %v1845 = vpack.c.bf16 %v1841, %v1840
      %s1846 = scalar_lea.vmem %s3, 88
      %v1847 = vld [vmem:[%s1846] sm:$0xf]
      %v1849 = vsel %vm419, %v1842, 0
      %v1852 = vsel %vm419, %v1843, 0
      %v1855 = vsel %vm419, %v1844, 0
      %v1858 = vsel %vm419, %v1845, 0
      %v1861 = vsel %vm432, %v1847, 0
      %1863 = vmatpush.bf16.msra.mxu0 0
      %1864 = vmatpush.bf16.msra.mxu0 0
      %1865 = vmatpush.bf16.msra.mxu0 0
      %1866 = vmatpush.bf16.msra.mxu0 0
      %1867 = vmatpush.bf16.msra.mxu0 0
      %1868 = vmatpush.bf16.msra.mxu0 0
      %1869 = vmatpush.bf16.msra.mxu0 0
      %1870 = vmatpush.bf16.msra.mxu0 %v1861
      %1871 = vmatmul.bf16.gmra.mxu0 %v1849
      %v1872 = vpop.f32.mrf.mxu0
      %v1873 = vadd.f32 0.0, %v1872
      %v1874 = vpop.f32.mrf.mxu0
      %v1875 = vadd.f32 0.0, %v1874
      %1876 = vmatmul.bf16.gmra.mxu0 %v1852
      %v1877 = vpop.f32.mrf.mxu0
      %v1878 = vadd.f32 0.0, %v1877
      %v1879 = vpop.f32.mrf.mxu0
      %v1880 = vadd.f32 0.0, %v1879
      %1881 = vmatmul.bf16.gmra.mxu0 %v1855
      %v1882 = vpop.f32.mrf.mxu0
      %v1883 = vadd.f32 0.0, %v1882
      %v1884 = vpop.f32.mrf.mxu0
      %v1885 = vadd.f32 0.0, %v1884
      %1886 = vmatmul.bf16.gmra.mxu0 %v1858
      %v1887 = vpop.f32.mrf.mxu0
      %v1888 = vadd.f32 0.0, %v1887
      %v1889 = vpop.f32.mrf.mxu0
      %v1890 = vadd.f32 0.0, %v1889
      %1891 = vdwg.mxu0
      %v1892 = vadd.f32 %v1826, %v1873
      %v1893 = vadd.f32 %v1827, %v1875
      %v1894 = vadd.f32 %v1828, %v1878
      %v1895 = vadd.f32 %v1829, %v1880
      %v1896 = vadd.f32 %v1830, %v1883
      %v1897 = vadd.f32 %v1831, %v1885
      %v1898 = vadd.f32 %v1832, %v1888
      %v1899 = vadd.f32 %v1833, %v1890
      %v1900 = vld [vmem:[%s1767 + $0x2] sm:$0xff]
      %v1901 = vld [vmem:[%s1767 + $0x12] sm:$0xff]
      %v1902 = vld [vmem:[%s1767 + $0x22] sm:$0xff]
      %v1903 = vld [vmem:[%s1767 + $0x32] sm:$0xff]
      %v1904 = vld [vmem:[%s1767 + $0x42] sm:$0xff]
      %v1905 = vld [vmem:[%s1767 + $0x52] sm:$0xff]
      %v1906 = vld [vmem:[%s1767 + $0x62] sm:$0xff]
      %v1907 = vld [vmem:[%s1767 + $0x72] sm:$0xff]
      %v1908 = vpack.c.bf16 %v1901, %v1900
      %v1909 = vpack.c.bf16 %v1903, %v1902
      %v1910 = vpack.c.bf16 %v1905, %v1904
      %v1911 = vpack.c.bf16 %v1907, %v1906
      %s1912 = scalar_lea.vmem %s3, 92
      %v1913 = vld [vmem:[%s1912] sm:$0xf]
      %v1915 = vsel %vm419, %v1908, 0
      %v1918 = vsel %vm419, %v1909, 0
      %v1921 = vsel %vm419, %v1910, 0
      %v1924 = vsel %vm419, %v1911, 0
      %v1927 = vsel %vm432, %v1913, 0
      %1929 = vmatpush.bf16.msra.mxu0 0
      %1930 = vmatpush.bf16.msra.mxu0 0
      %1931 = vmatpush.bf16.msra.mxu0 0
      %1932 = vmatpush.bf16.msra.mxu0 0
      %1933 = vmatpush.bf16.msra.mxu0 0
      %1934 = vmatpush.bf16.msra.mxu0 0
      %1935 = vmatpush.bf16.msra.mxu0 0
      %1936 = vmatpush.bf16.msra.mxu0 %v1927
      %1937 = vmatmul.bf16.gmra.mxu0 %v1915
      %v1938 = vpop.f32.mrf.mxu0
      %v1939 = vadd.f32 0.0, %v1938
      %v1940 = vpop.f32.mrf.mxu0
      %v1941 = vadd.f32 0.0, %v1940
      %1942 = vmatmul.bf16.gmra.mxu0 %v1918
      %v1943 = vpop.f32.mrf.mxu0
      %v1944 = vadd.f32 0.0, %v1943
      %v1945 = vpop.f32.mrf.mxu0
      %v1946 = vadd.f32 0.0, %v1945
      %1947 = vmatmul.bf16.gmra.mxu0 %v1921
      %v1948 = vpop.f32.mrf.mxu0
      %v1949 = vadd.f32 0.0, %v1948
      %v1950 = vpop.f32.mrf.mxu0
      %v1951 = vadd.f32 0.0, %v1950
      %1952 = vmatmul.bf16.gmra.mxu0 %v1924
      %v1953 = vpop.f32.mrf.mxu0
      %v1954 = vadd.f32 0.0, %v1953
      %v1955 = vpop.f32.mrf.mxu0
      %v1956 = vadd.f32 0.0, %v1955
      %1957 = vdwg.mxu0
      %v1958 = vadd.f32 %v1892, %v1939
      %v1959 = vadd.f32 %v1893, %v1941
      %v1960 = vadd.f32 %v1894, %v1944
      %v1961 = vadd.f32 %v1895, %v1946
      %v1962 = vadd.f32 %v1896, %v1949
      %v1963 = vadd.f32 %v1897, %v1951
      %v1964 = vadd.f32 %v1898, %v1954
      %v1965 = vadd.f32 %v1899, %v1956
      %s1966 = scalar_lea.vmem %s372, 32
      %v1967 = vld [vmem:[%s1966] sm:$0xff]
      %v1968 = vld [vmem:[%s1966 + $0x10] sm:$0xff]
      %v1969 = vld [vmem:[%s1966 + $0x20] sm:$0xff]
      %v1970 = vld [vmem:[%s1966 + $0x30] sm:$0xff]
      %v1971 = vld [vmem:[%s1966 + $0x40] sm:$0xff]
      %v1972 = vld [vmem:[%s1966 + $0x50] sm:$0xff]
      %v1973 = vld [vmem:[%s1966 + $0x60] sm:$0xff]
      %v1974 = vld [vmem:[%s1966 + $0x70] sm:$0xff]
      %v1975 = vpack.c.bf16 %v1968, %v1967
      %v1976 = vpack.c.bf16 %v1970, %v1969
      %v1977 = vpack.c.bf16 %v1972, %v1971
      %v1978 = vpack.c.bf16 %v1974, %v1973
      %s1979 = scalar_lea.vmem %s3, 96
      %v1980 = vld [vmem:[%s1979] sm:$0xf]
      %v1982 = vsel %vm419, %v1975, 0
      %v1985 = vsel %vm419, %v1976, 0
      %v1988 = vsel %vm419, %v1977, 0
      %v1991 = vsel %vm419, %v1978, 0
      %v1994 = vsel %vm432, %v1980, 0
      %1996 = vmatpush.bf16.msra.mxu0 0
      %1997 = vmatpush.bf16.msra.mxu0 0
      %1998 = vmatpush.bf16.msra.mxu0 0
      %1999 = vmatpush.bf16.msra.mxu0 0
      %2000 = vmatpush.bf16.msra.mxu0 0
      %2001 = vmatpush.bf16.msra.mxu0 0
      %2002 = vmatpush.bf16.msra.mxu0 0
      %2003 = vmatpush.bf16.msra.mxu0 %v1994
      %2004 = vmatmul.bf16.gmra.mxu0 %v1982
      %v2005 = vpop.f32.mrf.mxu0
      %v2006 = vadd.f32 0.0, %v2005
      %v2007 = vpop.f32.mrf.mxu0
      %v2008 = vadd.f32 0.0, %v2007
      %2009 = vmatmul.bf16.gmra.mxu0 %v1985
      %v2010 = vpop.f32.mrf.mxu0
      %v2011 = vadd.f32 0.0, %v2010
      %v2012 = vpop.f32.mrf.mxu0
      %v2013 = vadd.f32 0.0, %v2012
      %2014 = vmatmul.bf16.gmra.mxu0 %v1988
      %v2015 = vpop.f32.mrf.mxu0
      %v2016 = vadd.f32 0.0, %v2015
      %v2017 = vpop.f32.mrf.mxu0
      %v2018 = vadd.f32 0.0, %v2017
      %2019 = vmatmul.bf16.gmra.mxu0 %v1991
      %v2020 = vpop.f32.mrf.mxu0
      %v2021 = vadd.f32 0.0, %v2020
      %v2022 = vpop.f32.mrf.mxu0
      %v2023 = vadd.f32 0.0, %v2022
      %2024 = vdwg.mxu0
      %v2025 = vadd.f32 %v1958, %v2006
      %v2026 = vadd.f32 %v1959, %v2008
      %v2027 = vadd.f32 %v1960, %v2011
      %v2028 = vadd.f32 %v1961, %v2013
      %v2029 = vadd.f32 %v1962, %v2016
      %v2030 = vadd.f32 %v1963, %v2018
      %v2031 = vadd.f32 %v1964, %v2021
      %v2032 = vadd.f32 %v1965, %v2023
      %v2033 = vld [vmem:[%s1966 + $0x1] sm:$0xff]
      %v2034 = vld [vmem:[%s1966 + $0x11] sm:$0xff]
      %v2035 = vld [vmem:[%s1966 + $0x21] sm:$0xff]
      %v2036 = vld [vmem:[%s1966 + $0x31] sm:$0xff]
      %v2037 = vld [vmem:[%s1966 + $0x41] sm:$0xff]
      %v2038 = vld [vmem:[%s1966 + $0x51] sm:$0xff]
      %v2039 = vld [vmem:[%s1966 + $0x61] sm:$0xff]
      %v2040 = vld [vmem:[%s1966 + $0x71] sm:$0xff]
      %v2041 = vpack.c.bf16 %v2034, %v2033
      %v2042 = vpack.c.bf16 %v2036, %v2035
      %v2043 = vpack.c.bf16 %v2038, %v2037
      %v2044 = vpack.c.bf16 %v2040, %v2039
      %s2045 = scalar_lea.vmem %s3, 100
      %v2046 = vld [vmem:[%s2045] sm:$0xf]
      %v2048 = vsel %vm419, %v2041, 0
      %v2051 = vsel %vm419, %v2042, 0
      %v2054 = vsel %vm419, %v2043, 0
      %v2057 = vsel %vm419, %v2044, 0
      %v2060 = vsel %vm432, %v2046, 0
      %2062 = vmatpush.bf16.msra.mxu0 0
      %2063 = vmatpush.bf16.msra.mxu0 0
      %2064 = vmatpush.bf16.msra.mxu0 0
      %2065 = vmatpush.bf16.msra.mxu0 0
      %2066 = vmatpush.bf16.msra.mxu0 0
      %2067 = vmatpush.bf16.msra.mxu0 0
      %2068 = vmatpush.bf16.msra.mxu0 0
      %2069 = vmatpush.bf16.msra.mxu0 %v2060
      %2070 = vmatmul.bf16.gmra.mxu0 %v2048
      %v2071 = vpop.f32.mrf.mxu0
      %v2072 = vadd.f32 0.0, %v2071
      %v2073 = vpop.f32.mrf.mxu0
      %v2074 = vadd.f32 0.0, %v2073
      %2075 = vmatmul.bf16.gmra.mxu0 %v2051
      %v2076 = vpop.f32.mrf.mxu0
      %v2077 = vadd.f32 0.0, %v2076
      %v2078 = vpop.f32.mrf.mxu0
      %v2079 = vadd.f32 0.0, %v2078
      %2080 = vmatmul.bf16.gmra.mxu0 %v2054
      %v2081 = vpop.f32.mrf.mxu0
      %v2082 = vadd.f32 0.0, %v2081
      %v2083 = vpop.f32.mrf.mxu0
      %v2084 = vadd.f32 0.0, %v2083
      %2085 = vmatmul.bf16.gmra.mxu0 %v2057
      %v2086 = vpop.f32.mrf.mxu0
      %v2087 = vadd.f32 0.0, %v2086
      %v2088 = vpop.f32.mrf.mxu0
      %v2089 = vadd.f32 0.0, %v2088
      %2090 = vdwg.mxu0
      %v2091 = vadd.f32 %v2025, %v2072
      %v2092 = vadd.f32 %v2026, %v2074
      %v2093 = vadd.f32 %v2027, %v2077
      %v2094 = vadd.f32 %v2028, %v2079
      %v2095 = vadd.f32 %v2029, %v2082
      %v2096 = vadd.f32 %v2030, %v2084
      %v2097 = vadd.f32 %v2031, %v2087
      %v2098 = vadd.f32 %v2032, %v2089
      %v2099 = vld [vmem:[%s1966 + $0x2] sm:$0xff]
      %v2100 = vld [vmem:[%s1966 + $0x12] sm:$0xff]
      %v2101 = vld [vmem:[%s1966 + $0x22] sm:$0xff]
      %v2102 = vld [vmem:[%s1966 + $0x32] sm:$0xff]
      %v2103 = vld [vmem:[%s1966 + $0x42] sm:$0xff]
      %v2104 = vld [vmem:[%s1966 + $0x52] sm:$0xff]
      %v2105 = vld [vmem:[%s1966 + $0x62] sm:$0xff]
      %v2106 = vld [vmem:[%s1966 + $0x72] sm:$0xff]
      %v2107 = vpack.c.bf16 %v2100, %v2099
      %v2108 = vpack.c.bf16 %v2102, %v2101
      %v2109 = vpack.c.bf16 %v2104, %v2103
      %v2110 = vpack.c.bf16 %v2106, %v2105
      %s2111 = scalar_lea.vmem %s3, 104
      %v2112 = vld [vmem:[%s2111] sm:$0xf]
      %v2114 = vsel %vm419, %v2107, 0
      %v2117 = vsel %vm419, %v2108, 0
      %v2120 = vsel %vm419, %v2109, 0
      %v2123 = vsel %vm419, %v2110, 0
      %v2126 = vsel %vm432, %v2112, 0
      %2128 = vmatpush.bf16.msra.mxu0 0
      %2129 = vmatpush.bf16.msra.mxu0 0
      %2130 = vmatpush.bf16.msra.mxu0 0
      %2131 = vmatpush.bf16.msra.mxu0 0
      %2132 = vmatpush.bf16.msra.mxu0 0
      %2133 = vmatpush.bf16.msra.mxu0 0
      %2134 = vmatpush.bf16.msra.mxu0 0
      %2135 = vmatpush.bf16.msra.mxu0 %v2126
      %2136 = vmatmul.bf16.gmra.mxu0 %v2114
      %v2137 = vpop.f32.mrf.mxu0
      %v2138 = vadd.f32 0.0, %v2137
      %v2139 = vpop.f32.mrf.mxu0
      %v2140 = vadd.f32 0.0, %v2139
      %2141 = vmatmul.bf16.gmra.mxu0 %v2117
      %v2142 = vpop.f32.mrf.mxu0
      %v2143 = vadd.f32 0.0, %v2142
      %v2144 = vpop.f32.mrf.mxu0
      %v2145 = vadd.f32 0.0, %v2144
      %2146 = vmatmul.bf16.gmra.mxu0 %v2120
      %v2147 = vpop.f32.mrf.mxu0
      %v2148 = vadd.f32 0.0, %v2147
      %v2149 = vpop.f32.mrf.mxu0
      %v2150 = vadd.f32 0.0, %v2149
      %2151 = vmatmul.bf16.gmra.mxu0 %v2123
      %v2152 = vpop.f32.mrf.mxu0
      %v2153 = vadd.f32 0.0, %v2152
      %v2154 = vpop.f32.mrf.mxu0
      %v2155 = vadd.f32 0.0, %v2154
      %2156 = vdwg.mxu0
      %v2157 = vadd.f32 %v2091, %v2138
      %v2158 = vadd.f32 %v2092, %v2140
      %v2159 = vadd.f32 %v2093, %v2143
      %v2160 = vadd.f32 %v2094, %v2145
      %v2161 = vadd.f32 %v2095, %v2148
      %v2162 = vadd.f32 %v2096, %v2150
      %v2163 = vadd.f32 %v2097, %v2153
      %v2164 = vadd.f32 %v2098, %v2155
      %v2165 = vld [vmem:[%s4] sm:$0x1]
      %v2167 = vperm.slane %v2165, 0
      %v2169 = vadd.f32 %v2157, %v2167
      %v2170 = vadd.f32 %v2158, %v2167
      %v2171 = vadd.f32 %v2159, %v2167
      %v2172 = vadd.f32 %v2160, %v2167
      %v2173 = vadd.f32 %v2161, %v2167
      %v2174 = vadd.f32 %v2162, %v2167
      %v2175 = vadd.f32 %v2163, %v2167
      %v2176 = vadd.f32 %v2164, %v2167
      %vm2177 = vcmask 31744
      %v2178 = vsel %vm2177, %v2169, 0.0
      %v2179 = vsel %vm2177, %v2170, 0.0
      %v2180 = vadd.f32 %v2178, %v2179
      %v2181 = vsel %vm2177, %v2171, 0.0
      %v2182 = vadd.f32 %v2180, %v2181
      %v2183 = vsel %vm2177, %v2172, 0.0
      %v2184 = vadd.f32 %v2182, %v2183
      %v2185 = vsel %vm2177, %v2173, 0.0
      %v2186 = vadd.f32 %v2184, %v2185
      %v2187 = vsel %vm2177, %v2174, 0.0
      %v2188 = vadd.f32 %v2186, %v2187
      %v2189 = vsel %vm2177, %v2175, 0.0
      %v2190 = vadd.f32 %v2188, %v2189
      %v2191 = vsel %vm2177, %v2176, 0.0
      %v2192 = vadd.f32 %v2190, %v2191
      %2193 = vadd.xlane.f32.xlu0 %v2192
      %v2194 = vpop.xlane.xlu0 %2193
      %v2195 = vrot.slane %v2194, 4
      %v2196 = vadd.f32 %v2194, %v2195
      %v2197 = vrot.slane %v2196, 2
      %v2198 = vadd.f32 %v2196, %v2197
      %v2199 = vrot.slane %v2198, 1
      %v2200 = vadd.f32 %v2198, %v2199
      %s2201 = vtos %v2200
      %v2202 = vmul.f32 %v2169, %v2169
      %v2203 = vmul.f32 %v2170, %v2170
      %v2204 = vmul.f32 %v2171, %v2171
      %v2205 = vmul.f32 %v2172, %v2172
      %v2206 = vmul.f32 %v2173, %v2173
      %v2207 = vmul.f32 %v2174, %v2174
      %v2208 = vmul.f32 %v2175, %v2175
      %v2209 = vmul.f32 %v2176, %v2176
      %v2210 = vsel %vm2177, %v2202, 0.0
      %v2211 = vsel %vm2177, %v2203, 0.0
      %v2212 = vadd.f32 %v2210, %v2211
      %v2213 = vsel %vm2177, %v2204, 0.0
      %v2214 = vadd.f32 %v2212, %v2213
      %v2215 = vsel %vm2177, %v2205, 0.0
      %v2216 = vadd.f32 %v2214, %v2215
      %v2217 = vsel %vm2177, %v2206, 0.0
      %v2218 = vadd.f32 %v2216, %v2217
      %v2219 = vsel %vm2177, %v2207, 0.0
      %v2220 = vadd.f32 %v2218, %v2219
      %v2221 = vsel %vm2177, %v2208, 0.0
      %v2222 = vadd.f32 %v2220, %v2221
      %v2223 = vsel %vm2177, %v2209, 0.0
      %v2224 = vadd.f32 %v2222, %v2223
      %2225 = vadd.xlane.f32.xlu0 %v2224
      %v2226 = vpop.xlane.xlu0 %2225
      %v2227 = vrot.slane %v2226, 4
      %v2228 = vadd.f32 %v2226, %v2227
      %v2229 = vrot.slane %v2228, 2
      %v2230 = vadd.f32 %v2228, %v2229
      %v2231 = vrot.slane %v2230, 1
      %v2232 = vadd.f32 %v2230, %v2231
      %s2233 = vtos %v2232
      %2234 = vst.msk [vmem:[%s382] sm:$0xff] %vm2177, %v2169
      %2235 = vst.msk [vmem:[%s382 + $0x8] sm:$0xff] %vm2177, %v2170
      %2236 = vst.msk [vmem:[%s382 + $0x10] sm:$0xff] %vm2177, %v2171
      %2237 = vst.msk [vmem:[%s382 + $0x18] sm:$0xff] %vm2177, %v2172
      %2238 = vst.msk [vmem:[%s382 + $0x20] sm:$0xff] %vm2177, %v2173
      %2239 = vst.msk [vmem:[%s382 + $0x28] sm:$0xff] %vm2177, %v2174
      %2240 = vst.msk [vmem:[%s382 + $0x30] sm:$0xff] %vm2177, %v2175
      %2241 = vst.msk [vmem:[%s382 + $0x38] sm:$0xff] %vm2177, %v2176
      %v2242 = vstv %s2201
      %v2243 = vstv %s2233
      %vm2244 = vcmask 1040384
      %v2245 = vsel %vm2244, %v2242, %v2243
      %2246 = vst [vmem:[%s390] sm:$0x3] %v2245
      %p2247 = scmp.lt.s32.totalorder %s22, 1
      %s2248 = scalar_select %p2247, %s22, 1
      %p2249 = scmp.lt.s32.totalorder %s23, 7
      %s2250 = scalar_select %p2249, %s23, 7
      %s2251 = smul.addr %s2250, 8
      %s2252 = smul.addr %s2248, 64
      %s2253 = sadd.s32 %s2251, %s2252
      %s2254 = smul.addr %s2253, 8
      %s2255 = scalar_lea.vmem %s5, %s2254
      %p2256 = scmp.lt.s32.totalorder %s22, 1
      %s2257 = scalar_select %p2256, %s22, 1
      %p2258 = scmp.lt.s32.totalorder %s23, 7
      %s2259 = scalar_select %p2258, %s23, 7
      %s2260 = smul.addr %s2257, 8
      %s2261 = sadd.s32 %s2259, %s2260
      %s2262 = smul.addr %s2261, 2
      %s2263 = scalar_lea.vmem %s6, %s2262
      // Predicated region
      $region41: #{_lambda_.16} parent=39 // pred_check
        %p2264 = pneg %p180
      $region42: #{_lambda_.16} parent=39 // pred_check_branch
        %2266 = sbr.rel (%p2264) target = $region44
      $region43: #{_lambda_.16} parent=39 // pred_region
        _
      $region44: #{_lambda_.16} parent=39 // pred_fallthru
        _
      // Predicated region
      $region45: #{_lambda_.16} parent=39 // pred_check
        %p2267 = pneg %p208
      $region46: #{_lambda_.16} parent=39 // pred_check_branch
        %2269 = sbr.rel (%p2267) target = $region48
      $region47: #{_lambda_.16} parent=39 // pred_region
        _
      $region48: #{_lambda_.16} parent=39 // pred_fallthru
        _
    $region40: #{_lambda_.16} parent=5 // pred_fallthru
      _
    %p2270 = scmp.le.s32.totalorder 2, %s13
    // Predicated region
    $region49: #{_lambda_.16} parent=5 // pred_check
      %p2271 = pneg %p2270
    $region50: #{_lambda_.16} parent=5 // pred_check_branch
      %2273 = sbr.rel (%p2271) target = $region52
    $region51: #{_lambda_.16} parent=5 // pred_region
      %s2274 = ssub.s32 %s13, 2
      // Predicated region
      $region53: #{_lambda_.16} parent=51 // pred_check
        %p2275 = pneg %p186
      $region54: #{_lambda_.16} parent=51 // pred_check_branch
        %2277 = sbr.rel (%p2275) target = $region56
      $region55: #{_lambda_.16} parent=51 // pred_region
        %p2278 = scmp.lt.s32.totalorder %s24, 1
        %s2279 = scalar_select %p2278, %s24, 1
        %p2280 = scmp.lt.s32.totalorder %s25, 7
        %s2281 = scalar_select %p2280, %s25, 7
        %s2282 = smul.addr %s2281, 8
        %s2283 = smul.addr %s2279, 64
        %s2284 = sadd.s32 %s2282, %s2283
        %s2285 = smul.addr %s2284, 8
        %s2286 = scalar_lea.vmem %s5, %s2285
      $region56: #{_lambda_.16} parent=51 // pred_fallthru
        _
      // Predicated region
      $region57: #{_lambda_.16} parent=51 // pred_check
        %p2287 = pneg %p214
      $region58: #{_lambda_.16} parent=51 // pred_check_branch
        %2289 = sbr.rel (%p2287) target = $region60
      $region59: #{_lambda_.16} parent=51 // pred_region
        %p2290 = scmp.lt.s32.totalorder %s24, 1
        %s2291 = scalar_select %p2290, %s24, 1
        %p2292 = scmp.lt.s32.totalorder %s25, 7
        %s2293 = scalar_select %p2292, %s25, 7
        %s2294 = smul.addr %s2291, 8
        %s2295 = sadd.s32 %s2293, %s2294
        %s2296 = smul.addr %s2295, 2
        %s2297 = scalar_lea.vmem %s6, %s2296
      $region60: #{_lambda_.16} parent=51 // pred_fallthru
        _
    $region52: #{_lambda_.16} parent=5 // pred_fallthru
      _
  $region6: #{_lambda_.16} parent=0 // loop_footer
    %s17 = sadd.s32 1, %s13
  $region7: #{_lambda_.16} parent=0 // loop_footer_branch
    %12 = sbr.rel target = $region3
  $region8: #{_lambda_.16} parent=0 // loop_exit
    _

// kernel: _lambda_.19
$region0: #{_lambda_.19}
  #allocation0 [shape = 'u32[]', space=smem, size = 0x4, offset = 0x4, fixed_abs, tag = 'smem constant byte address 0x4 - core index']
  #allocation1 [shape = 'u32[72,128]{1,0:T(1,128)}', space=vmem, size = 0x9000, scoped, tag = 'internal scratch']
  %s0 = inlined_call_operand.vmem [shape: f32[2,8,8,8,2], index: 0, kind: input, shape index: {}]
  %s1 = inlined_call_operand.vmem [shape: f32[2,1,2], index: 1, kind: input, shape index: {}]
  %s2 = inlined_call_operand.vmem [shape: f32[2,1,2], index: 2, kind: input, shape index: {}]
  %s3 = inlined_call_operand.vmem [shape: f32[2,8,8,8,2], index: 3, kind: output, shape index: {}]
  %s4 = sld [smem:[#allocation0]]
  $region45: #{_lambda_.19} parent=0
    _
  %s6 = ssub.s32 1, %s4
  %s7 = scalar_select 0, %s6, %s4
  loop: start=0, step=1, limit=18
  $region2: #{_lambda_.19} parent=0 // loop_pre_header
    _
  $region3: #{_lambda_.19} parent=0 // loop_header
    %s9 = sphi 0, %s13
    %p10 = scmp.ge.s32.totalorder %s9, 18
    %s16 = sphi 0, %s28
    %s17 = sphi 0, %s24
    %s18 = sphi 0, %s16
    %s19 = sphi 0, %s17
    %s20 = sphi 0, %s18
    %s21 = sphi 0, %s19
    %s33 = sphi 0, %s35
    %s36 = sphi 0, %s33
    %s37 = sphi 0, %s36
    %s53 = sphi 0, %s37
    %s59 = sphi 0, %s61
    %s62 = sphi 0, %s59
    %s63 = sphi 0, %s62
    %s79 = sphi 0, %s63
    %s85 = sphi 0, %s87
    %s88 = sphi 0, %s85
    %s89 = sphi 0, %s88
    %s105 = sphi 0, %s89
    %s113 = sphi 0, %s115
    %s116 = sphi 0, %s113
    %s117 = sphi 0, %s116
    %s133 = sphi 0, %s117
  $region4: #{_lambda_.19} parent=0 // loop_header_branch
    %12 = sbr.rel (%p10) target = $region8
  $region5: #{_lambda_.19} parent=0 // loop_body
    %s14 = ssub.s32 %s9, 1
    %s15 = ssub.s32 %s9, 2
    %s22 = sadd.s32 1, %s17
    %p23 = scmp.ge.s32.totalorder %s22, 8
    %s24 = scalar_select %p23, 0, %s22
    %s25 = sadd.s32 1, %s16
    %s26 = scalar_select %p23, %s25, %s16
    %p27 = scmp.ge.s32.totalorder %s26, 2
    %s28 = scalar_select %p27, 0, %s26
    %s29 = ssub.s32 %s16, %s28
    %s30 = ssub.s32 %s17, %s24
    %s31 = sor.u32 %s29, %s30
    %p32 = scmp.eq.s32.totalorder %s31, 0
    %s34 = sadd.s32 %s33, 1
    %s35 = scalar_select %p32, %s33, %s34
    %p38 = pneg %p32
    %p39 = scmp.eq.s32.totalorder %s9, 15
    %p40 = por %p38, %p39
    %p41 = scmp.ne.s32.totalorder %s33, %s36
    %p42 = scmp.eq.s32.totalorder %s9, 0
    %p43 = por %p41, %p42
    %p44 = scmp.ne.s32.totalorder %s33, %s36
    %p45 = scmp.eq.s32.totalorder %s14, 15
    %p46 = por %p44, %p45
    %p47 = scmp.ne.s32.totalorder %s36, %s37
    %p48 = scmp.eq.s32.totalorder %s14, 0
    %p49 = por %p47, %p48
    %p50 = scmp.ne.s32.totalorder %s36, %s37
    %p51 = scmp.eq.s32.totalorder %s15, 15
    %p52 = por %p50, %p51
    %p54 = scmp.ne.s32.totalorder %s37, %s53
    %p55 = scmp.eq.s32.totalorder %s15, 0
    %p56 = por %p54, %p55
    %s57 = ssub.s32 %s16, %s28
    %p58 = scmp.eq.s32.totalorder %s57, 0
    %s60 = sadd.s32 %s59, 1
    %s61 = scalar_select %p58, %s59, %s60
    %p64 = pneg %p58
    %p65 = scmp.eq.s32.totalorder %s9, 15
    %p66 = por %p64, %p65
    %p67 = scmp.ne.s32.totalorder %s59, %s62
    %p68 = scmp.eq.s32.totalorder %s9, 0
    %p69 = por %p67, %p68
    %p70 = scmp.ne.s32.totalorder %s59, %s62
    %p71 = scmp.eq.s32.totalorder %s14, 15
    %p72 = por %p70, %p71
    %p73 = scmp.ne.s32.totalorder %s62, %s63
    %p74 = scmp.eq.s32.totalorder %s14, 0
    %p75 = por %p73, %p74
    %p76 = scmp.ne.s32.totalorder %s62, %s63
    %p77 = scmp.eq.s32.totalorder %s15, 15
    %p78 = por %p76, %p77
    %p80 = scmp.ne.s32.totalorder %s63, %s79
    %p81 = scmp.eq.s32.totalorder %s15, 0
    %p82 = por %p80, %p81
    %s83 = ssub.s32 %s16, %s28
    %p84 = scmp.eq.s32.totalorder %s83, 0
    %s86 = sadd.s32 %s85, 1
    %s87 = scalar_select %p84, %s85, %s86
    %p90 = pneg %p84
    %p91 = scmp.eq.s32.totalorder %s9, 15
    %p92 = por %p90, %p91
    %p93 = scmp.ne.s32.totalorder %s85, %s88
    %p94 = scmp.eq.s32.totalorder %s9, 0
    %p95 = por %p93, %p94
    %p96 = scmp.ne.s32.totalorder %s85, %s88
    %p97 = scmp.eq.s32.totalorder %s14, 15
    %p98 = por %p96, %p97
    %p99 = scmp.ne.s32.totalorder %s88, %s89
    %p100 = scmp.eq.s32.totalorder %s14, 0
    %p101 = por %p99, %p100
    %p102 = scmp.ne.s32.totalorder %s88, %s89
    %p103 = scmp.eq.s32.totalorder %s15, 15
    %p104 = por %p102, %p103
    %p106 = scmp.ne.s32.totalorder %s89, %s105
    %p107 = scmp.eq.s32.totalorder %s15, 0
    %p108 = por %p106, %p107
    %s109 = ssub.s32 %s16, %s28
    %s110 = ssub.s32 %s17, %s24
    %s111 = sor.u32 %s109, %s110
    %p112 = scmp.eq.s32.totalorder %s111, 0
    %s114 = sadd.s32 %s113, 1
    %s115 = scalar_select %p112, %s113, %s114
    %p118 = pneg %p112
    %p119 = scmp.eq.s32.totalorder %s9, 15
    %p120 = por %p118, %p119
    %p121 = scmp.ne.s32.totalorder %s113, %s116
    %p122 = scmp.eq.s32.totalorder %s9, 0
    %p123 = por %p121, %p122
    %p124 = scmp.ne.s32.totalorder %s113, %s116
    %p125 = scmp.eq.s32.totalorder %s14, 15
    %p126 = por %p124, %p125
    %p127 = scmp.ne.s32.totalorder %s116, %s117
    %p128 = scmp.eq.s32.totalorder %s14, 0
    %p129 = por %p127, %p128
    %p130 = scmp.ne.s32.totalorder %s116, %s117
    %p131 = scmp.eq.s32.totalorder %s15, 15
    %p132 = por %p130, %p131
    %p134 = scmp.ne.s32.totalorder %s117, %s133
    %p135 = scmp.eq.s32.totalorder %s15, 0
    %p136 = por %p134, %p135
    %p137 = scmp.le.s32.totalorder 1, %s9
    %p138 = scmp.lt.s32.totalorder %s9, 17
    %p139 = pnand %p137, %p138
    %p140 = pneg %p139
    // Predicated region
    $region9: #{_lambda_.19} parent=5 // pred_check
      _
    $region10: #{_lambda_.19} parent=5 // pred_check_branch
      %142 = sbr.rel (%p139) target = $region12
    $region11: #{_lambda_.19} parent=5 // pred_region
      %s143 = ssub.s32 %s9, 1
    $region12: #{_lambda_.19} parent=5 // pred_fallthru
      _
    %p144 = scmp.lt.s32.totalorder %s9, 16
    // Predicated region
    $region13: #{_lambda_.19} parent=5 // pred_check
      %p145 = pneg %p144
    $region14: #{_lambda_.19} parent=5 // pred_check_branch
      %147 = sbr.rel (%p145) target = $region16
    $region15: #{_lambda_.19} parent=5 // pred_region
      // Predicated region
      $region17: #{_lambda_.19} parent=15 // pred_check
        %p148 = pneg %p43
      $region18: #{_lambda_.19} parent=15 // pred_check_branch
        %150 = sbr.rel (%p148) target = $region20
      $region19: #{_lambda_.19} parent=15 // pred_region
        %p151 = scmp.lt.s32.totalorder %s16, 1
        %s152 = scalar_select %p151, %s16, 1
        %p153 = scmp.lt.s32.totalorder %s17, 7
        %s154 = scalar_select %p153, %s17, 7
        %s155 = smul.addr %s154, 8
        %s156 = smul.addr %s152, 64
        %s157 = sadd.s32 %s155, %s156
        %s158 = smul.addr %s157, 8
        %s159 = scalar_lea.vmem %s0, %s158
      $region20: #{_lambda_.19} parent=15 // pred_fallthru
        _
      // Predicated region
      $region21: #{_lambda_.19} parent=15 // pred_check
        %p160 = pneg %p69
      $region22: #{_lambda_.19} parent=15 // pred_check_branch
        %162 = sbr.rel (%p160) target = $region24
      $region23: #{_lambda_.19} parent=15 // pred_region
        %p163 = scmp.lt.s32.totalorder %s16, 1
        %s164 = scalar_select %p163, %s16, 1
        %s165 = scalar_lea.vmem %s1, %s164
      $region24: #{_lambda_.19} parent=15 // pred_fallthru
        _
      // Predicated region
      $region25: #{_lambda_.19} parent=15 // pred_check
        %p166 = pneg %p95
      $region26: #{_lambda_.19} parent=15 // pred_check_branch
        %168 = sbr.rel (%p166) target = $region28
      $region27: #{_lambda_.19} parent=15 // pred_region
        %p169 = scmp.lt.s32.totalorder %s16, 1
        %s170 = scalar_select %p169, %s16, 1
        %s171 = scalar_lea.vmem %s2, %s170
      $region28: #{_lambda_.19} parent=15 // pred_fallthru
        _
    $region16: #{_lambda_.19} parent=5 // pred_fallthru
      _
    %p172 = scmp.le.s32.totalorder 1, %s9
    %p173 = scmp.lt.s32.totalorder %s9, 17
    %p174 = pnand %p172, %p173
    %p175 = pneg %p174
    // Predicated region
    $region29: #{_lambda_.19} parent=5 // pred_check
      _
    $region30: #{_lambda_.19} parent=5 // pred_check_branch
      %177 = sbr.rel (%p174) target = $region32
    $region31: #{_lambda_.19} parent=5 // pred_region
      %s178 = ssub.s32 %s9, 1
      %p179 = scmp.lt.s32.totalorder %s18, 1
      %s180 = scalar_select %p179, %s18, 1
      %p181 = scmp.lt.s32.totalorder %s19, 7
      %s182 = scalar_select %p181, %s19, 7
      %s183 = smul.addr %s182, 8
      %s184 = smul.addr %s180, 64
      %s185 = sadd.s32 %s183, %s184
      %s186 = smul.addr %s185, 8
      %s187 = scalar_lea.vmem %s0, %s186
      %p188 = pneg %p49
      %p189 = pneg %p46
      %p190 = scmp.lt.s32.totalorder %s18, 1
      %s191 = scalar_select %p190, %s18, 1
      %s192 = scalar_lea.vmem %s1, %s191
      %p193 = pneg %p75
      %p194 = pneg %p72
      %p195 = scmp.lt.s32.totalorder %s18, 1
      %s196 = scalar_select %p195, %s18, 1
      %s197 = scalar_lea.vmem %s2, %s196
      %p198 = pneg %p101
      %p199 = pneg %p98
      %p200 = pneg %p129
      %p201 = pneg %p126
      %p202 = scmp.lt.s32.totalorder %s18, 1
      %s203 = scalar_select %p202, %s18, 1
      %p204 = scmp.lt.s32.totalorder %s19, 7
      %s205 = scalar_select %p204, %s19, 7
      %s206 = smul.addr %s205, 8
      %s207 = smul.addr %s203, 64
      %s208 = sadd.s32 %s206, %s207
      %s209 = smul.addr %s208, 8
      %s210 = scalar_lea.vmem %s3, %s209
      %p211 = scmp.lt.s32.totalorder %s18, 1
      %s212 = scalar_select %p211, %s18, 1
      %p213 = scmp.lt.s32.totalorder %s19, 7
      %s214 = scalar_select %p213, %s19, 7
      %s215 = smul.addr %s214, 8
      %s216 = smul.addr %s212, 64
      %s217 = sadd.s32 %s215, %s216
      %s218 = smul.addr %s217, 8
      %s219 = scalar_lea.vmem %s0, %s218
      %p220 = scmp.lt.s32.totalorder %s18, 1
      %s221 = scalar_select %p220, %s18, 1
      %s222 = scalar_lea.vmem %s1, %s221
      %p223 = scmp.lt.s32.totalorder %s18, 1
      %s224 = scalar_select %p223, %s18, 1
      %s225 = scalar_lea.vmem %s2, %s224
      %p226 = scmp.lt.s32.totalorder %s18, 1
      %s227 = scalar_select %p226, %s18, 1
      %p228 = scmp.lt.s32.totalorder %s19, 7
      %s229 = scalar_select %p228, %s19, 7
      %s230 = smul.addr %s229, 8
      %s231 = smul.addr %s227, 64
      %s232 = sadd.s32 %s230, %s231
      %s233 = smul.addr %s232, 8
      %s234 = scalar_lea.vmem %s3, %s233
      %v235 = vld [vmem:[%s219] sm:$0xff]
      %v236 = vld [vmem:[%s219 + $0x8] sm:$0xff]
      %v237 = vld [vmem:[%s219 + $0x10] sm:$0xff]
      %v238 = vld [vmem:[%s219 + $0x18] sm:$0xff]
      %v239 = vld [vmem:[%s219 + $0x20] sm:$0xff]
      %v240 = vld [vmem:[%s219 + $0x28] sm:$0xff]
      %v241 = vld [vmem:[%s219 + $0x30] sm:$0xff]
      %v242 = vld [vmem:[%s219 + $0x38] sm:$0xff]
      %v243 = vld [vmem:[%s222] sm:$0x1]
      %v245 = vperm.slane %v243, 0
      %v247 = vmul.f32 %v235, %v245
      %v248 = vmul.f32 %v236, %v245
      %v249 = vmul.f32 %v237, %v245
      %v250 = vmul.f32 %v238, %v245
      %v251 = vmul.f32 %v239, %v245
      %v252 = vmul.f32 %v240, %v245
      %v253 = vmul.f32 %v241, %v245
      %v254 = vmul.f32 %v242, %v245
      %v255 = vld [vmem:[%s225] sm:$0x1]
      %v257 = vperm.slane %v255, 0
      %v259 = vadd.f32 %v247, %v257
      %v260 = vadd.f32 %v248, %v257
      %v261 = vadd.f32 %v249, %v257
      %v262 = vadd.f32 %v250, %v257
      %v263 = vadd.f32 %v251, %v257
      %v264 = vadd.f32 %v252, %v257
      %v265 = vadd.f32 %v253, %v257
      %v266 = vadd.f32 %v254, %v257
      %v267 = vxor.u32 %v259, 2147483648
      %v268 = vxor.u32 %v260, 2147483648
      %v269 = vxor.u32 %v261, 2147483648
      %v270 = vxor.u32 %v262, 2147483648
      %v271 = vxor.u32 %v263, 2147483648
      %v272 = vxor.u32 %v264, 2147483648
      %v273 = vxor.u32 %v265, 2147483648
      %v274 = vxor.u32 %v266, 2147483648
      %v275 = vmul.f32 %v267, 1.442695
      %v276 = vpow.pop %v275
      %v277 = vmul.f32 %v268, 1.442695
      %v278 = vpow.pop %v277
      %v279 = vmul.f32 %v269, 1.442695
      %v280 = vpow.pop %v279
      %v281 = vmul.f32 %v270, 1.442695
      %v282 = vpow.pop %v281
      %v283 = vmul.f32 %v271, 1.442695
      %v284 = vpow.pop %v283
      %v285 = vmul.f32 %v272, 1.442695
      %v286 = vpow.pop %v285
      %v287 = vmul.f32 %v273, 1.442695
      %v288 = vpow.pop %v287
      %v289 = vmul.f32 %v274, 1.442695
      %v290 = vpow.pop %v289
      %v291 = vadd.f32 %v276, 1.0
      %v292 = vadd.f32 %v278, 1.0
      %v293 = vadd.f32 %v280, 1.0
      %v294 = vadd.f32 %v282, 1.0
      %v295 = vadd.f32 %v284, 1.0
      %v296 = vadd.f32 %v286, 1.0
      %v297 = vadd.f32 %v288, 1.0
      %v298 = vadd.f32 %v290, 1.0
      %v299 = vrcp.pop %v291
      %v300 = vmul.f32 %v291, %v299
      %v301 = vsub.f32 1.0, %v300
      %v302 = vmul.f32 %v299, %v301
      %v303 = vadd.f32 %v299, %v302
      %vm304 = vweird.f32 %v291
      %vm305 = vweird.f32 %v299
      %vm306 = vmor %vm304, %vm305
      %v307 = vsel %vm306, %v299, %v303
      %v308 = vand.u32 2147483647, %v291
      %vm309 = vcmp.eq.f32.partialorder %v308, 8.507059e+37
      %v310 = vand.u32 %v291, 2147483648
      %v311 = vor.u32 1.1754944e-38, %v310
      %v312 = vsel %vm309, %v311, %v307
      %v313 = vmul.f32 1.0, %v312
      %v314 = vrcp.pop %v292
      %v315 = vmul.f32 %v292, %v314
      %v316 = vsub.f32 1.0, %v315
      %v317 = vmul.f32 %v314, %v316
      %v318 = vadd.f32 %v314, %v317
      %vm319 = vweird.f32 %v292
      %vm320 = vweird.f32 %v314
      %vm321 = vmor %vm319, %vm320
      %v322 = vsel %vm321, %v314, %v318
      %v323 = vand.u32 2147483647, %v292
      %vm324 = vcmp.eq.f32.partialorder %v323, 8.507059e+37
      %v325 = vand.u32 %v292, 2147483648
      %v326 = vor.u32 1.1754944e-38, %v325
      %v327 = vsel %vm324, %v326, %v322
      %v328 = vmul.f32 1.0, %v327
      %v329 = vrcp.pop %v293
      %v330 = vmul.f32 %v293, %v329
      %v331 = vsub.f32 1.0, %v330
      %v332 = vmul.f32 %v329, %v331
      %v333 = vadd.f32 %v329, %v332
      %vm334 = vweird.f32 %v293
      %vm335 = vweird.f32 %v329
      %vm336 = vmor %vm334, %vm335
      %v337 = vsel %vm336, %v329, %v333
      %v338 = vand.u32 2147483647, %v293
      %vm339 = vcmp.eq.f32.partialorder %v338, 8.507059e+37
      %v340 = vand.u32 %v293, 2147483648
      %v341 = vor.u32 1.1754944e-38, %v340
      %v342 = vsel %vm339, %v341, %v337
      %v343 = vmul.f32 1.0, %v342
      %v344 = vrcp.pop %v294
      %v345 = vmul.f32 %v294, %v344
      %v346 = vsub.f32 1.0, %v345
      %v347 = vmul.f32 %v344, %v346
      %v348 = vadd.f32 %v344, %v347
      %vm349 = vweird.f32 %v294
      %vm350 = vweird.f32 %v344
      %vm351 = vmor %vm349, %vm350
      %v352 = vsel %vm351, %v344, %v348
      %v353 = vand.u32 2147483647, %v294
      %vm354 = vcmp.eq.f32.partialorder %v353, 8.507059e+37
      %v355 = vand.u32 %v294, 2147483648
      %v356 = vor.u32 1.1754944e-38, %v355
      %v357 = vsel %vm354, %v356, %v352
      %v358 = vmul.f32 1.0, %v357
      %v359 = vrcp.pop %v295
      %v360 = vmul.f32 %v295, %v359
      %v361 = vsub.f32 1.0, %v360
      %v362 = vmul.f32 %v359, %v361
      %v363 = vadd.f32 %v359, %v362
      %vm364 = vweird.f32 %v295
      %vm365 = vweird.f32 %v359
      %vm366 = vmor %vm364, %vm365
      %v367 = vsel %vm366, %v359, %v363
      %v368 = vand.u32 2147483647, %v295
      %vm369 = vcmp.eq.f32.partialorder %v368, 8.507059e+37
      %v370 = vand.u32 %v295, 2147483648
      %v371 = vor.u32 1.1754944e-38, %v370
      %v372 = vsel %vm369, %v371, %v367
      %v373 = vmul.f32 1.0, %v372
      %v374 = vrcp.pop %v296
      %v375 = vmul.f32 %v296, %v374
      %v376 = vsub.f32 1.0, %v375
      %v377 = vmul.f32 %v374, %v376
      %v378 = vadd.f32 %v374, %v377
      %vm379 = vweird.f32 %v296
      %vm380 = vweird.f32 %v374
      %vm381 = vmor %vm379, %vm380
      %v382 = vsel %vm381, %v374, %v378
      %v383 = vand.u32 2147483647, %v296
      %vm384 = vcmp.eq.f32.partialorder %v383, 8.507059e+37
      %v385 = vand.u32 %v296, 2147483648
      %v386 = vor.u32 1.1754944e-38, %v385
      %v387 = vsel %vm384, %v386, %v382
      %v388 = vmul.f32 1.0, %v387
      %v389 = vrcp.pop %v297
      %v390 = vmul.f32 %v297, %v389
      %v391 = vsub.f32 1.0, %v390
      %v392 = vmul.f32 %v389, %v391
      %v393 = vadd.f32 %v389, %v392
      %vm394 = vweird.f32 %v297
      %vm395 = vweird.f32 %v389
      %vm396 = vmor %vm394, %vm395
      %v397 = vsel %vm396, %v389, %v393
      %v398 = vand.u32 2147483647, %v297
      %vm399 = vcmp.eq.f32.partialorder %v398, 8.507059e+37
      %v400 = vand.u32 %v297, 2147483648
      %v401 = vor.u32 1.1754944e-38, %v400
      %v402 = vsel %vm399, %v401, %v397
      %v403 = vmul.f32 1.0, %v402
      %v404 = vrcp.pop %v298
      %v405 = vmul.f32 %v298, %v404
      %v406 = vsub.f32 1.0, %v405
      %v407 = vmul.f32 %v404, %v406
      %v408 = vadd.f32 %v404, %v407
      %vm409 = vweird.f32 %v298
      %vm410 = vweird.f32 %v404
      %vm411 = vmor %vm409, %vm410
      %v412 = vsel %vm411, %v404, %v408
      %v413 = vand.u32 2147483647, %v298
      %vm414 = vcmp.eq.f32.partialorder %v413, 8.507059e+37
      %v415 = vand.u32 %v298, 2147483648
      %v416 = vor.u32 1.1754944e-38, %v415
      %v417 = vsel %vm414, %v416, %v412
      %v418 = vmul.f32 1.0, %v417
      %v419 = vmul.f32 %v259, %v313
      %v420 = vmul.f32 %v260, %v328
      %v421 = vmul.f32 %v261, %v343
      %v422 = vmul.f32 %v262, %v358
      %v423 = vmul.f32 %v263, %v373
      %v424 = vmul.f32 %v264, %v388
      %v425 = vmul.f32 %v265, %v403
      %v426 = vmul.f32 %v266, %v418
      %vm427 = vcmask 15360
      %428 = vst.msk [vmem:[%s234] sm:$0xff] %vm427, %v419
      %429 = vst.msk [vmem:[%s234 + $0x8] sm:$0xff] %vm427, %v420
      %430 = vst.msk [vmem:[%s234 + $0x10] sm:$0xff] %vm427, %v421
      %431 = vst.msk [vmem:[%s234 + $0x18] sm:$0xff] %vm427, %v422
      %432 = vst.msk [vmem:[%s234 + $0x20] sm:$0xff] %vm427, %v423
      %433 = vst.msk [vmem:[%s234 + $0x28] sm:$0xff] %vm427, %v424
      %434 = vst.msk [vmem:[%s234 + $0x30] sm:$0xff] %vm427, %v425
      %435 = vst.msk [vmem:[%s234 + $0x38] sm:$0xff] %vm427, %v426
      %p436 = scmp.lt.s32.totalorder %s18, 1
      %s437 = scalar_select %p436, %s18, 1
      %p438 = scmp.lt.s32.totalorder %s19, 7
      %s439 = scalar_select %p438, %s19, 7
      %s440 = smul.addr %s439, 8
      %s441 = smul.addr %s437, 64
      %s442 = sadd.s32 %s440, %s441
      %s443 = smul.addr %s442, 8
      %s444 = scalar_lea.vmem %s3, %s443
      // Predicated region
      $region33: #{_lambda_.19} parent=31 // pred_check
        %p445 = pneg %p126
      $region34: #{_lambda_.19} parent=31 // pred_check_branch
        %447 = sbr.rel (%p445) target = $region36
      $region35: #{_lambda_.19} parent=31 // pred_region
        _
      $region36: #{_lambda_.19} parent=31 // pred_fallthru
        _
    $region32: #{_lambda_.19} parent=5 // pred_fallthru
      _
    %p448 = scmp.le.s32.totalorder 2, %s9
    // Predicated region
    $region37: #{_lambda_.19} parent=5 // pred_check
      %p449 = pneg %p448
    $region38: #{_lambda_.19} parent=5 // pred_check_branch
      %451 = sbr.rel (%p449) target = $region40
    $region39: #{_lambda_.19} parent=5 // pred_region
      %s452 = ssub.s32 %s9, 2
      // Predicated region
      $region41: #{_lambda_.19} parent=39 // pred_check
        %p453 = pneg %p132
      $region42: #{_lambda_.19} parent=39 // pred_check_branch
        %455 = sbr.rel (%p453) target = $region44
      $region43: #{_lambda_.19} parent=39 // pred_region
        %p456 = scmp.lt.s32.totalorder %s20, 1
        %s457 = scalar_select %p456, %s20, 1
        %p458 = scmp.lt.s32.totalorder %s21, 7
        %s459 = scalar_select %p458, %s21, 7
        %s460 = smul.addr %s459, 8
        %s461 = smul.addr %s457, 64
        %s462 = sadd.s32 %s460, %s461
        %s463 = smul.addr %s462, 8
        %s464 = scalar_lea.vmem %s3, %s463
      $region44: #{_lambda_.19} parent=39 // pred_fallthru
        _
    $region40: #{_lambda_.19} parent=5 // pred_fallthru
      _
  $region6: #{_lambda_.19} parent=0 // loop_footer
    %s13 = sadd.s32 1, %s9
  $region7: #{_lambda_.19} parent=0 // loop_footer_branch
    %8 = sbr.rel target = $region3
  $region8: #{_lambda_.19} parent=0 // loop_exit
    _

// kernel: _lambda_.22
$region0: #{_lambda_.22}
  #allocation0 [shape = 'u32[]', space=smem, size = 0x4, offset = 0x4, fixed_abs, tag = 'smem constant byte address 0x4 - core index']
  #allocation1 [shape = 'u32[72,128]{1,0:T(1,128)}', space=vmem, size = 0x9000, scoped, tag = 'internal scratch']
  %s0 = inlined_call_operand.vmem [shape: f32[2,8,8,8,8], index: 0, kind: input, shape index: {}]
  %s1 = inlined_call_operand.vmem [shape: f32[2,8,8,8,4], index: 1, kind: input, shape index: {}]
  %s2 = inlined_call_operand.vmem [shape: f32[2,8,8,8,2], index: 2, kind: input, shape index: {}]
  %s3 = inlined_call_operand.vmem [shape: f32[2,8,8,8,2], index: 3, kind: input, shape index: {}]
  %s4 = inlined_call_operand.vmem [shape: bf16[8,8], index: 4, kind: input, shape index: {}]
  %s5 = inlined_call_operand.vmem [shape: f32[1,8], index: 5, kind: input, shape index: {}]
  %s6 = inlined_call_operand.vmem [shape: f32[2,8,8,8,8], index: 6, kind: output, shape index: {0}]
  %s7 = inlined_call_operand.vmem [shape: f32[2,8,2,128], index: 7, kind: output, shape index: {1}]
  %8 = xla_tuple %s6, %s7
  %s9 = sld [smem:[#allocation0]]
  $region65: #{_lambda_.22} parent=0
    _
  %s11 = ssub.s32 1, %s9
  %s12 = scalar_select 0, %s11, %s9
  loop: start=0, step=1, limit=18
  $region2: #{_lambda_.22} parent=0 // loop_pre_header
    _
  $region3: #{_lambda_.22} parent=0 // loop_header
    %s14 = sphi 0, %s18
    %p15 = scmp.ge.s32.totalorder %s14, 18
    %s21 = sphi 0, %s33
    %s22 = sphi 0, %s29
    %s23 = sphi 0, %s21
    %s24 = sphi 0, %s22
    %s25 = sphi 0, %s23
    %s26 = sphi 0, %s24
    %s38 = sphi 0, %s40
    %s41 = sphi 0, %s38
    %s42 = sphi 0, %s41
    %s58 = sphi 0, %s42
    %s66 = sphi 0, %s68
    %s69 = sphi 0, %s66
    %s70 = sphi 0, %s69
    %s86 = sphi 0, %s70
    %s94 = sphi 0, %s96
    %s97 = sphi 0, %s94
    %s98 = sphi 0, %s97
    %s114 = sphi 0, %s98
    %s122 = sphi 0, %s124
    %s125 = sphi 0, %s122
    %s126 = sphi 0, %s125
    %s142 = sphi 0, %s126
    %s146 = sphi 0, %s146
    %s148 = sphi 0, %s146
    %s149 = sphi 0, %s148
    %s163 = sphi 0, %s149
    %s167 = sphi 0, %s167
    %s169 = sphi 0, %s167
    %s170 = sphi 0, %s169
    %s184 = sphi 0, %s170
    %s192 = sphi 0, %s194
    %s195 = sphi 0, %s192
    %s196 = sphi 0, %s195
    %s212 = sphi 0, %s196
    %s220 = sphi 0, %s222
    %s223 = sphi 0, %s220
    %s224 = sphi 0, %s223
    %s240 = sphi 0, %s224
  $region4: #{_lambda_.22} parent=0 // loop_header_branch
    %17 = sbr.rel (%p15) target = $region8
  $region5: #{_lambda_.22} parent=0 // loop_body
    %s19 = ssub.s32 %s14, 1
    %s20 = ssub.s32 %s14, 2
    %s27 = sadd.s32 1, %s22
    %p28 = scmp.ge.s32.totalorder %s27, 8
    %s29 = scalar_select %p28, 0, %s27
    %s30 = sadd.s32 1, %s21
    %s31 = scalar_select %p28, %s30, %s21
    %p32 = scmp.ge.s32.totalorder %s31, 2
    %s33 = scalar_select %p32, 0, %s31
    %s34 = ssub.s32 %s21, %s33
    %s35 = ssub.s32 %s22, %s29
    %s36 = sor.u32 %s34, %s35
    %p37 = scmp.eq.s32.totalorder %s36, 0
    %s39 = sadd.s32 %s38, 1
    %s40 = scalar_select %p37, %s38, %s39
    %p43 = pneg %p37
    %p44 = scmp.eq.s32.totalorder %s14, 15
    %p45 = por %p43, %p44
    %p46 = scmp.ne.s32.totalorder %s38, %s41
    %p47 = scmp.eq.s32.totalorder %s14, 0
    %p48 = por %p46, %p47
    %p49 = scmp.ne.s32.totalorder %s38, %s41
    %p50 = scmp.eq.s32.totalorder %s19, 15
    %p51 = por %p49, %p50
    %p52 = scmp.ne.s32.totalorder %s41, %s42
    %p53 = scmp.eq.s32.totalorder %s19, 0
    %p54 = por %p52, %p53
    %p55 = scmp.ne.s32.totalorder %s41, %s42
    %p56 = scmp.eq.s32.totalorder %s20, 15
    %p57 = por %p55, %p56
    %p59 = scmp.ne.s32.totalorder %s42, %s58
    %p60 = scmp.eq.s32.totalorder %s20, 0
    %p61 = por %p59, %p60
    %s62 = ssub.s32 %s21, %s33
    %s63 = ssub.s32 %s22, %s29
    %s64 = sor.u32 %s62, %s63
    %p65 = scmp.eq.s32.totalorder %s64, 0
    %s67 = sadd.s32 %s66, 1
    %s68 = scalar_select %p65, %s66, %s67
    %p71 = pneg %p65
    %p72 = scmp.eq.s32.totalorder %s14, 15
    %p73 = por %p71, %p72
    %p74 = scmp.ne.s32.totalorder %s66, %s69
    %p75 = scmp.eq.s32.totalorder %s14, 0
    %p76 = por %p74, %p75
    %p77 = scmp.ne.s32.totalorder %s66, %s69
    %p78 = scmp.eq.s32.totalorder %s19, 15
    %p79 = por %p77, %p78
    %p80 = scmp.ne.s32.totalorder %s69, %s70
    %p81 = scmp.eq.s32.totalorder %s19, 0
    %p82 = por %p80, %p81
    %p83 = scmp.ne.s32.totalorder %s69, %s70
    %p84 = scmp.eq.s32.totalorder %s20, 15
    %p85 = por %p83, %p84
    %p87 = scmp.ne.s32.totalorder %s70, %s86
    %p88 = scmp.eq.s32.totalorder %s20, 0
    %p89 = por %p87, %p88
    %s90 = ssub.s32 %s21, %s33
    %s91 = ssub.s32 %s22, %s29
    %s92 = sor.u32 %s90, %s91
    %p93 = scmp.eq.s32.totalorder %s92, 0
    %s95 = sadd.s32 %s94, 1
    %s96 = scalar_select %p93, %s94, %s95
    %p99 = pneg %p93
    %p100 = scmp.eq.s32.totalorder %s14, 15
    %p101 = por %p99, %p100
    %p102 = scmp.ne.s32.totalorder %s94, %s97
    %p103 = scmp.eq.s32.totalorder %s14, 0
    %p104 = por %p102, %p103
    %p105 = scmp.ne.s32.totalorder %s94, %s97
    %p106 = scmp.eq.s32.totalorder %s19, 15
    %p107 = por %p105, %p106
    %p108 = scmp.ne.s32.totalorder %s97, %s98
    %p109 = scmp.eq.s32.totalorder %s19, 0
    %p110 = por %p108, %p109
    %p111 = scmp.ne.s32.totalorder %s97, %s98
    %p112 = scmp.eq.s32.totalorder %s20, 15
    %p113 = por %p111, %p112
    %p115 = scmp.ne.s32.totalorder %s98, %s114
    %p116 = scmp.eq.s32.totalorder %s20, 0
    %p117 = por %p115, %p116
    %s118 = ssub.s32 %s21, %s33
    %s119 = ssub.s32 %s22, %s29
    %s120 = sor.u32 %s118, %s119
    %p121 = scmp.eq.s32.totalorder %s120, 0
    %s123 = sadd.s32 %s122, 1
    %s124 = scalar_select %p121, %s122, %s123
    %p127 = pneg %p121
    %p128 = scmp.eq.s32.totalorder %s14, 15
    %p129 = por %p127, %p128
    %p130 = scmp.ne.s32.totalorder %s122, %s125
    %p131 = scmp.eq.s32.totalorder %s14, 0
    %p132 = por %p130, %p131
    %p133 = scmp.ne.s32.totalorder %s122, %s125
    %p134 = scmp.eq.s32.totalorder %s19, 15
    %p135 = por %p133, %p134
    %p136 = scmp.ne.s32.totalorder %s125, %s126
    %p137 = scmp.eq.s32.totalorder %s19, 0
    %p138 = por %p136, %p137
    %p139 = scmp.ne.s32.totalorder %s125, %s126
    %p140 = scmp.eq.s32.totalorder %s20, 15
    %p141 = por %p139, %p140
    %p143 = scmp.ne.s32.totalorder %s126, %s142
    %p144 = scmp.eq.s32.totalorder %s20, 0
    %p145 = por %p143, %p144
    %s147 = sadd.s32 %s146, 1
    %p150 = scmp.eq.s32.totalorder %s14, 15
    %p151 = scmp.ne.s32.totalorder %s146, %s148
    %p152 = scmp.eq.s32.totalorder %s14, 0
    %p153 = por %p151, %p152
    %p154 = scmp.ne.s32.totalorder %s146, %s148
    %p155 = scmp.eq.s32.totalorder %s19, 15
    %p156 = por %p154, %p155
    %p157 = scmp.ne.s32.totalorder %s148, %s149
    %p158 = scmp.eq.s32.totalorder %s19, 0
    %p159 = por %p157, %p158
    %p160 = scmp.ne.s32.totalorder %s148, %s149
    %p161 = scmp.eq.s32.totalorder %s20, 15
    %p162 = por %p160, %p161
    %p164 = scmp.ne.s32.totalorder %s149, %s163
    %p165 = scmp.eq.s32.totalorder %s20, 0
    %p166 = por %p164, %p165
    %s168 = sadd.s32 %s167, 1
    %p171 = scmp.eq.s32.totalorder %s14, 15
    %p172 = scmp.ne.s32.totalorder %s167, %s169
    %p173 = scmp.eq.s32.totalorder %s14, 0
    %p174 = por %p172, %p173
    %p175 = scmp.ne.s32.totalorder %s167, %s169
    %p176 = scmp.eq.s32.totalorder %s19, 15
    %p177 = por %p175, %p176
    %p178 = scmp.ne.s32.totalorder %s169, %s170
    %p179 = scmp.eq.s32.totalorder %s19, 0
    %p180 = por %p178, %p179
    %p181 = scmp.ne.s32.totalorder %s169, %s170
    %p182 = scmp.eq.s32.totalorder %s20, 15
    %p183 = por %p181, %p182
    %p185 = scmp.ne.s32.totalorder %s170, %s184
    %p186 = scmp.eq.s32.totalorder %s20, 0
    %p187 = por %p185, %p186
    %s188 = ssub.s32 %s21, %s33
    %s189 = ssub.s32 %s22, %s29
    %s190 = sor.u32 %s188, %s189
    %p191 = scmp.eq.s32.totalorder %s190, 0
    %s193 = sadd.s32 %s192, 1
    %s194 = scalar_select %p191, %s192, %s193
    %p197 = pneg %p191
    %p198 = scmp.eq.s32.totalorder %s14, 15
    %p199 = por %p197, %p198
    %p200 = scmp.ne.s32.totalorder %s192, %s195
    %p201 = scmp.eq.s32.totalorder %s14, 0
    %p202 = por %p200, %p201
    %p203 = scmp.ne.s32.totalorder %s192, %s195
    %p204 = scmp.eq.s32.totalorder %s19, 15
    %p205 = por %p203, %p204
    %p206 = scmp.ne.s32.totalorder %s195, %s196
    %p207 = scmp.eq.s32.totalorder %s19, 0
    %p208 = por %p206, %p207
    %p209 = scmp.ne.s32.totalorder %s195, %s196
    %p210 = scmp.eq.s32.totalorder %s20, 15
    %p211 = por %p209, %p210
    %p213 = scmp.ne.s32.totalorder %s196, %s212
    %p214 = scmp.eq.s32.totalorder %s20, 0
    %p215 = por %p213, %p214
    %s216 = ssub.s32 %s21, %s33
    %s217 = ssub.s32 %s22, %s29
    %s218 = sor.u32 %s216, %s217
    %p219 = scmp.eq.s32.totalorder %s218, 0
    %s221 = sadd.s32 %s220, 1
    %s222 = scalar_select %p219, %s220, %s221
    %p225 = pneg %p219
    %p226 = scmp.eq.s32.totalorder %s14, 15
    %p227 = por %p225, %p226
    %p228 = scmp.ne.s32.totalorder %s220, %s223
    %p229 = scmp.eq.s32.totalorder %s14, 0
    %p230 = por %p228, %p229
    %p231 = scmp.ne.s32.totalorder %s220, %s223
    %p232 = scmp.eq.s32.totalorder %s19, 15
    %p233 = por %p231, %p232
    %p234 = scmp.ne.s32.totalorder %s223, %s224
    %p235 = scmp.eq.s32.totalorder %s19, 0
    %p236 = por %p234, %p235
    %p237 = scmp.ne.s32.totalorder %s223, %s224
    %p238 = scmp.eq.s32.totalorder %s20, 15
    %p239 = por %p237, %p238
    %p241 = scmp.ne.s32.totalorder %s224, %s240
    %p242 = scmp.eq.s32.totalorder %s20, 0
    %p243 = por %p241, %p242
    %p244 = scmp.le.s32.totalorder 1, %s14
    %p245 = scmp.lt.s32.totalorder %s14, 17
    %p246 = pnand %p244, %p245
    %p247 = pneg %p246
    // Predicated region
    $region9: #{_lambda_.22} parent=5 // pred_check
      _
    $region10: #{_lambda_.22} parent=5 // pred_check_branch
      %249 = sbr.rel (%p246) target = $region12
    $region11: #{_lambda_.22} parent=5 // pred_region
      %s250 = ssub.s32 %s14, 1
      // Predicated region
      $region13: #{_lambda_.22} parent=11 // pred_check
        %p251 = pneg %p159
      $region14: #{_lambda_.22} parent=11 // pred_check_branch
        %253 = sbr.rel (%p251) target = $region16
      $region15: #{_lambda_.22} parent=11 // pred_region
        _
      $region16: #{_lambda_.22} parent=11 // pred_fallthru
        _
      // Predicated region
      $region17: #{_lambda_.22} parent=11 // pred_check
        %p254 = pneg %p180
      $region18: #{_lambda_.22} parent=11 // pred_check_branch
        %256 = sbr.rel (%p254) target = $region20
      $region19: #{_lambda_.22} parent=11 // pred_region
        _
      $region20: #{_lambda_.22} parent=11 // pred_fallthru
        _
    $region12: #{_lambda_.22} parent=5 // pred_fallthru
      _
    %p257 = scmp.lt.s32.totalorder %s14, 16
    // Predicated region
    $region21: #{_lambda_.22} parent=5 // pred_check
      %p258 = pneg %p257
    $region22: #{_lambda_.22} parent=5 // pred_check_branch
      %260 = sbr.rel (%p258) target = $region24
    $region23: #{_lambda_.22} parent=5 // pred_region
      // Predicated region
      $region25: #{_lambda_.22} parent=23 // pred_check
        %p261 = pneg %p48
      $region26: #{_lambda_.22} parent=23 // pred_check_branch
        %263 = sbr.rel (%p261) target = $region28
      $region27: #{_lambda_.22} parent=23 // pred_region
        %p264 = scmp.lt.s32.totalorder %s21, 1
        %s265 = scalar_select %p264, %s21, 1
        %p266 = scmp.lt.s32.totalorder %s22, 7
        %s267 = scalar_select %p266, %s22, 7
        %s268 = smul.addr %s267, 8
        %s269 = smul.addr %s265, 64
        %s270 = sadd.s32 %s268, %s269
        %s271 = smul.addr %s270, 8
        %s272 = scalar_lea.vmem %s0, %s271
      $region28: #{_lambda_.22} parent=23 // pred_fallthru
        _
      // Predicated region
      $region29: #{_lambda_.22} parent=23 // pred_check
        %p273 = pneg %p76
      $region30: #{_lambda_.22} parent=23 // pred_check_branch
        %275 = sbr.rel (%p273) target = $region32
      $region31: #{_lambda_.22} parent=23 // pred_region
        %p276 = scmp.lt.s32.totalorder %s21, 1
        %s277 = scalar_select %p276, %s21, 1
        %p278 = scmp.lt.s32.totalorder %s22, 7
        %s279 = scalar_select %p278, %s22, 7
        %s280 = smul.addr %s279, 8
        %s281 = smul.addr %s277, 64
        %s282 = sadd.s32 %s280, %s281
        %s283 = smul.addr %s282, 8
        %s284 = scalar_lea.vmem %s1, %s283
      $region32: #{_lambda_.22} parent=23 // pred_fallthru
        _
      // Predicated region
      $region33: #{_lambda_.22} parent=23 // pred_check
        %p285 = pneg %p104
      $region34: #{_lambda_.22} parent=23 // pred_check_branch
        %287 = sbr.rel (%p285) target = $region36
      $region35: #{_lambda_.22} parent=23 // pred_region
        %p288 = scmp.lt.s32.totalorder %s21, 1
        %s289 = scalar_select %p288, %s21, 1
        %p290 = scmp.lt.s32.totalorder %s22, 7
        %s291 = scalar_select %p290, %s22, 7
        %s292 = smul.addr %s291, 8
        %s293 = smul.addr %s289, 64
        %s294 = sadd.s32 %s292, %s293
        %s295 = smul.addr %s294, 8
        %s296 = scalar_lea.vmem %s2, %s295
      $region36: #{_lambda_.22} parent=23 // pred_fallthru
        _
      // Predicated region
      $region37: #{_lambda_.22} parent=23 // pred_check
        %p297 = pneg %p132
      $region38: #{_lambda_.22} parent=23 // pred_check_branch
        %299 = sbr.rel (%p297) target = $region40
      $region39: #{_lambda_.22} parent=23 // pred_region
        %p300 = scmp.lt.s32.totalorder %s21, 1
        %s301 = scalar_select %p300, %s21, 1
        %p302 = scmp.lt.s32.totalorder %s22, 7
        %s303 = scalar_select %p302, %s22, 7
        %s304 = smul.addr %s303, 8
        %s305 = smul.addr %s301, 64
        %s306 = sadd.s32 %s304, %s305
        %s307 = smul.addr %s306, 8
        %s308 = scalar_lea.vmem %s3, %s307
      $region40: #{_lambda_.22} parent=23 // pred_fallthru
        _
    $region24: #{_lambda_.22} parent=5 // pred_fallthru
      _
    %p309 = scmp.le.s32.totalorder 1, %s14
    %p310 = scmp.lt.s32.totalorder %s14, 17
    %p311 = pnand %p309, %p310
    %p312 = pneg %p311
    // Predicated region
    $region41: #{_lambda_.22} parent=5 // pred_check
      _
    $region42: #{_lambda_.22} parent=5 // pred_check_branch
      %314 = sbr.rel (%p311) target = $region44
    $region43: #{_lambda_.22} parent=5 // pred_region
      %s315 = ssub.s32 %s14, 1
      %p316 = scmp.lt.s32.totalorder %s23, 1
      %s317 = scalar_select %p316, %s23, 1
      %p318 = scmp.lt.s32.totalorder %s24, 7
      %s319 = scalar_select %p318, %s24, 7
      %s320 = smul.addr %s319, 8
      %s321 = smul.addr %s317, 64
      %s322 = sadd.s32 %s320, %s321
      %s323 = smul.addr %s322, 8
      %s324 = scalar_lea.vmem %s0, %s323
      %p325 = pneg %p54
      %p326 = pneg %p51
      %p327 = scmp.lt.s32.totalorder %s23, 1
      %s328 = scalar_select %p327, %s23, 1
      %p329 = scmp.lt.s32.totalorder %s24, 7
      %s330 = scalar_select %p329, %s24, 7
      %s331 = smul.addr %s330, 8
      %s332 = smul.addr %s328, 64
      %s333 = sadd.s32 %s331, %s332
      %s334 = smul.addr %s333, 8
      %s335 = scalar_lea.vmem %s1, %s334
      %p336 = pneg %p82
      %p337 = pneg %p79
      %p338 = scmp.lt.s32.totalorder %s23, 1
      %s339 = scalar_select %p338, %s23, 1
      %p340 = scmp.lt.s32.totalorder %s24, 7
      %s341 = scalar_select %p340, %s24, 7
      %s342 = smul.addr %s341, 8
      %s343 = smul.addr %s339, 64
      %s344 = sadd.s32 %s342, %s343
      %s345 = smul.addr %s344, 8
      %s346 = scalar_lea.vmem %s2, %s345
      %p347 = pneg %p110
      %p348 = pneg %p107
      %p349 = scmp.lt.s32.totalorder %s23, 1
      %s350 = scalar_select %p349, %s23, 1
      %p351 = scmp.lt.s32.totalorder %s24, 7
      %s352 = scalar_select %p351, %s24, 7
      %s353 = smul.addr %s352, 8
      %s354 = smul.addr %s350, 64
      %s355 = sadd.s32 %s353, %s354
      %s356 = smul.addr %s355, 8
      %s357 = scalar_lea.vmem %s3, %s356
      %p358 = pneg %p138
      %p359 = pneg %p135
      %p360 = pneg %p159
      %p361 = pneg %p156
      %p362 = pneg %p180
      %p363 = pneg %p177
      %p364 = pneg %p208
      %p365 = pneg %p205
      %p366 = scmp.lt.s32.totalorder %s23, 1
      %s367 = scalar_select %p366, %s23, 1
      %p368 = scmp.lt.s32.totalorder %s24, 7
      %s369 = scalar_select %p368, %s24, 7
      %s370 = smul.addr %s369, 8
      %s371 = smul.addr %s367, 64
      %s372 = sadd.s32 %s370, %s371
      %s373 = smul.addr %s372, 8
      %s374 = scalar_lea.vmem %s6, %s373
      %p375 = pneg %p236
      %p376 = pneg %p233
      %p377 = scmp.lt.s32.totalorder %s23, 1
      %s378 = scalar_select %p377, %s23, 1
      %p379 = scmp.lt.s32.totalorder %s24, 7
      %s380 = scalar_select %p379, %s24, 7
      %s381 = smul.addr %s378, 8
      %s382 = sadd.s32 %s380, %s381
      %s383 = smul.addr %s382, 2
      %s384 = scalar_lea.vmem %s7, %s383
      %p385 = scmp.lt.s32.totalorder %s23, 1
      %s386 = scalar_select %p385, %s23, 1
      %p387 = scmp.lt.s32.totalorder %s24, 7
      %s388 = scalar_select %p387, %s24, 7
      %s389 = smul.addr %s388, 8
      %s390 = smul.addr %s386, 64
      %s391 = sadd.s32 %s389, %s390
      %s392 = smul.addr %s391, 8
      %s393 = scalar_lea.vmem %s0, %s392
      %p394 = scmp.lt.s32.totalorder %s23, 1
      %s395 = scalar_select %p394, %s23, 1
      %p396 = scmp.lt.s32.totalorder %s24, 7
      %s397 = scalar_select %p396, %s24, 7
      %s398 = smul.addr %s397, 8
      %s399 = smul.addr %s395, 64
      %s400 = sadd.s32 %s398, %s399
      %s401 = smul.addr %s400, 8
      %s402 = scalar_lea.vmem %s1, %s401
      %p403 = scmp.lt.s32.totalorder %s23, 1
      %s404 = scalar_select %p403, %s23, 1
      %p405 = scmp.lt.s32.totalorder %s24, 7
      %s406 = scalar_select %p405, %s24, 7
      %s407 = smul.addr %s406, 8
      %s408 = smul.addr %s404, 64
      %s409 = sadd.s32 %s407, %s408
      %s410 = smul.addr %s409, 8
      %s411 = scalar_lea.vmem %s2, %s410
      %p412 = scmp.lt.s32.totalorder %s23, 1
      %s413 = scalar_select %p412, %s23, 1
      %p414 = scmp.lt.s32.totalorder %s24, 7
      %s415 = scalar_select %p414, %s24, 7
      %s416 = smul.addr %s415, 8
      %s417 = smul.addr %s413, 64
      %s418 = sadd.s32 %s416, %s417
      %s419 = smul.addr %s418, 8
      %s420 = scalar_lea.vmem %s3, %s419
      %p421 = scmp.lt.s32.totalorder %s23, 1
      %s422 = scalar_select %p421, %s23, 1
      %p423 = scmp.lt.s32.totalorder %s24, 7
      %s424 = scalar_select %p423, %s24, 7
      %s425 = smul.addr %s424, 8
      %s426 = smul.addr %s422, 64
      %s427 = sadd.s32 %s425, %s426
      %s428 = smul.addr %s427, 8
      %s429 = scalar_lea.vmem %s6, %s428
      %p430 = scmp.lt.s32.totalorder %s23, 1
      %s431 = scalar_select %p430, %s23, 1
      %p432 = scmp.lt.s32.totalorder %s24, 7
      %s433 = scalar_select %p432, %s24, 7
      %s434 = smul.addr %s431, 8
      %s435 = sadd.s32 %s433, %s434
      %s436 = smul.addr %s435, 2
      %s437 = scalar_lea.vmem %s7, %s436
      %v439 = vld [vmem:[%s393] sm:$0xff]
      %v440 = vld [vmem:[%s393 + $0x8] sm:$0xff]
      %v441 = vld [vmem:[%s393 + $0x10] sm:$0xff]
      %v442 = vld [vmem:[%s393 + $0x18] sm:$0xff]
      %v443 = vld [vmem:[%s393 + $0x20] sm:$0xff]
      %v444 = vld [vmem:[%s393 + $0x28] sm:$0xff]
      %v445 = vld [vmem:[%s393 + $0x30] sm:$0xff]
      %v446 = vld [vmem:[%s393 + $0x38] sm:$0xff]
      %v447 = vpack.c.bf16 %v440, %v439
      %v448 = vpack.c.bf16 %v442, %v441
      %v449 = vpack.c.bf16 %v444, %v443
      %v450 = vpack.c.bf16 %v446, %v445
      %v451 = vld [vmem:[%s4] sm:$0xf]
      %v452 = vld [vmem:[%s402] sm:$0xff]
      %v453 = vld [vmem:[%s402 + $0x8] sm:$0xff]
      %v454 = vld [vmem:[%s402 + $0x10] sm:$0xff]
      %v455 = vld [vmem:[%s402 + $0x18] sm:$0xff]
      %v456 = vld [vmem:[%s402 + $0x20] sm:$0xff]
      %v457 = vld [vmem:[%s402 + $0x28] sm:$0xff]
      %v458 = vld [vmem:[%s402 + $0x30] sm:$0xff]
      %v459 = vld [vmem:[%s402 + $0x38] sm:$0xff]
      %v460 = vld [vmem:[%s411] sm:$0xff]
      %v461 = vld [vmem:[%s411 + $0x8] sm:$0xff]
      %v462 = vld [vmem:[%s411 + $0x10] sm:$0xff]
      %v463 = vld [vmem:[%s411 + $0x18] sm:$0xff]
      %v464 = vld [vmem:[%s411 + $0x20] sm:$0xff]
      %v465 = vld [vmem:[%s411 + $0x28] sm:$0xff]
      %v466 = vld [vmem:[%s411 + $0x30] sm:$0xff]
      %v467 = vld [vmem:[%s411 + $0x38] sm:$0xff]
      %v468 = vld [vmem:[%s420] sm:$0xff]
      %v469 = vld [vmem:[%s420 + $0x8] sm:$0xff]
      %v470 = vld [vmem:[%s420 + $0x10] sm:$0xff]
      %v471 = vld [vmem:[%s420 + $0x18] sm:$0xff]
      %v472 = vld [vmem:[%s420 + $0x20] sm:$0xff]
      %v473 = vld [vmem:[%s420 + $0x28] sm:$0xff]
      %v474 = vld [vmem:[%s420 + $0x30] sm:$0xff]
      %v475 = vld [vmem:[%s420 + $0x38] sm:$0xff]
      %484 = vrot.lane.b32.xlu0 %v460, 4
      %v485 = vpop.permute.xlu0 %484
      %486 = vrot.lane.b32.xlu0 %v461, 4
      %v487 = vpop.permute.xlu0 %486
      %488 = vrot.lane.b32.xlu0 %v462, 4
      %v489 = vpop.permute.xlu0 %488
      %490 = vrot.lane.b32.xlu0 %v463, 4
      %v491 = vpop.permute.xlu0 %490
      %492 = vrot.lane.b32.xlu0 %v464, 4
      %v493 = vpop.permute.xlu0 %492
      %494 = vrot.lane.b32.xlu0 %v465, 4
      %v495 = vpop.permute.xlu0 %494
      %496 = vrot.lane.b32.xlu0 %v466, 4
      %v497 = vpop.permute.xlu0 %496
      %498 = vrot.lane.b32.xlu0 %v467, 4
      %v499 = vpop.permute.xlu0 %498
      %516 = vrot.lane.b32.xlu0 %v468, 6
      %v517 = vpop.permute.xlu0 %516
      %518 = vrot.lane.b32.xlu0 %v469, 6
      %v519 = vpop.permute.xlu0 %518
      %520 = vrot.lane.b32.xlu0 %v470, 6
      %v521 = vpop.permute.xlu0 %520
      %522 = vrot.lane.b32.xlu0 %v471, 6
      %v523 = vpop.permute.xlu0 %522
      %524 = vrot.lane.b32.xlu0 %v472, 6
      %v525 = vpop.permute.xlu0 %524
      %526 = vrot.lane.b32.xlu0 %v473, 6
      %v527 = vpop.permute.xlu0 %526
      %528 = vrot.lane.b32.xlu0 %v474, 6
      %v529 = vpop.permute.xlu0 %528
      %530 = vrot.lane.b32.xlu0 %v475, 6
      %v531 = vpop.permute.xlu0 %530
      %vm540 = vcmask 31744
      %v541 = vsel %vm540, %v452, %v485
      %v542 = vsel %vm540, %v453, %v487
      %v543 = vsel %vm540, %v454, %v489
      %v544 = vsel %vm540, %v455, %v491
      %v545 = vsel %vm540, %v456, %v493
      %v546 = vsel %vm540, %v457, %v495
      %v547 = vsel %vm540, %v458, %v497
      %v548 = vsel %vm540, %v459, %v499
      %vm549 = vcmask 48128
      %v550 = vsel %vm549, %v541, %v517
      %v551 = vsel %vm549, %v542, %v519
      %v552 = vsel %vm549, %v543, %v521
      %v553 = vsel %vm549, %v544, %v523
      %v554 = vsel %vm549, %v545, %v525
      %v555 = vsel %vm549, %v546, %v527
      %v556 = vsel %vm549, %v547, %v529
      %v557 = vsel %vm549, %v548, %v531
      %v558 = vld [vmem:[%s5] sm:$0x1]
      %v560 = vperm.slane %v558, 0
      %vm562 = vcmask 64512
      %v564 = vsel %vm562, %v447, 0
      %v567 = vsel %vm562, %v448, 0
      %v570 = vsel %vm562, %v449, 0
      %v573 = vsel %vm562, %v450, 0
      %vm575 = vcmask 1043456
      %v577 = vsel %vm575, %v451, 0
      %579 = vmatpush.bf16.msra.mxu0 0
      %580 = vmatpush.bf16.msra.mxu0 0
      %581 = vmatpush.bf16.msra.mxu0 0
      %582 = vmatpush.bf16.msra.mxu0 0
      %583 = vmatpush.bf16.msra.mxu0 0
      %584 = vmatpush.bf16.msra.mxu0 0
      %585 = vmatpush.bf16.msra.mxu0 0
      %586 = vmatpush.bf16.msra.mxu0 %v577
      %587 = vmatmul.bf16.gmra.mxu0 %v564
      %v588 = vpop.f32.mrf.mxu0
      %v589 = vadd.f32 %v560, %v588
      %v590 = vpop.f32.mrf.mxu0
      %v591 = vadd.f32 %v560, %v590
      %592 = vmatmul.bf16.gmra.mxu0 %v567
      %v593 = vpop.f32.mrf.mxu0
      %v594 = vadd.f32 %v560, %v593
      %v595 = vpop.f32.mrf.mxu0
      %v596 = vadd.f32 %v560, %v595
      %597 = vmatmul.bf16.gmra.mxu0 %v570
      %v598 = vpop.f32.mrf.mxu0
      %v599 = vadd.f32 %v560, %v598
      %v600 = vpop.f32.mrf.mxu0
      %v601 = vadd.f32 %v560, %v600
      %602 = vmatmul.bf16.gmra.mxu0 %v573
      %v603 = vpop.f32.mrf.mxu0
      %v604 = vadd.f32 %v560, %v603
      %v605 = vpop.f32.mrf.mxu0
      %v606 = vadd.f32 %v560, %v605
      %607 = vdwg.mxu0
      %v608 = vadd.f32 %v589, %v550
      %v609 = vadd.f32 %v591, %v551
      %v610 = vadd.f32 %v594, %v552
      %v611 = vadd.f32 %v596, %v553
      %v612 = vadd.f32 %v599, %v554
      %v613 = vadd.f32 %v601, %v555
      %v614 = vadd.f32 %v604, %v556
      %v615 = vadd.f32 %v606, %v557
      %v616 = vsel %vm562, %v608, 0.0
      %v617 = vsel %vm562, %v609, 0.0
      %v618 = vadd.f32 %v616, %v617
      %v619 = vsel %vm562, %v610, 0.0
      %v620 = vadd.f32 %v618, %v619
      %v621 = vsel %vm562, %v611, 0.0
      %v622 = vadd.f32 %v620, %v621
      %v623 = vsel %vm562, %v612, 0.0
      %v624 = vadd.f32 %v622, %v623
      %v625 = vsel %vm562, %v613, 0.0
      %v626 = vadd.f32 %v624, %v625
      %v627 = vsel %vm562, %v614, 0.0
      %v628 = vadd.f32 %v626, %v627
      %v629 = vsel %vm562, %v615, 0.0
      %v630 = vadd.f32 %v628, %v629
      %631 = vadd.xlane.f32.xlu0 %v630
      %v632 = vpop.xlane.xlu0 %631
      %v633 = vrot.slane %v632, 4
      %v634 = vadd.f32 %v632, %v633
      %v635 = vrot.slane %v634, 2
      %v636 = vadd.f32 %v634, %v635
      %v637 = vrot.slane %v636, 1
      %v638 = vadd.f32 %v636, %v637
      %s639 = vtos %v638
      %v640 = vmul.f32 %v608, %v608
      %v641 = vmul.f32 %v609, %v609
      %v642 = vmul.f32 %v610, %v610
      %v643 = vmul.f32 %v611, %v611
      %v644 = vmul.f32 %v612, %v612
      %v645 = vmul.f32 %v613, %v613
      %v646 = vmul.f32 %v614, %v614
      %v647 = vmul.f32 %v615, %v615
      %v648 = vsel %vm562, %v640, 0.0
      %v649 = vsel %vm562, %v641, 0.0
      %v650 = vadd.f32 %v648, %v649
      %v651 = vsel %vm562, %v642, 0.0
      %v652 = vadd.f32 %v650, %v651
      %v653 = vsel %vm562, %v643, 0.0
      %v654 = vadd.f32 %v652, %v653
      %v655 = vsel %vm562, %v644, 0.0
      %v656 = vadd.f32 %v654, %v655
      %v657 = vsel %vm562, %v645, 0.0
      %v658 = vadd.f32 %v656, %v657
      %v659 = vsel %vm562, %v646, 0.0
      %v660 = vadd.f32 %v658, %v659
      %v661 = vsel %vm562, %v647, 0.0
      %v662 = vadd.f32 %v660, %v661
      %663 = vadd.xlane.f32.xlu0 %v662
      %v664 = vpop.xlane.xlu0 %663
      %v665 = vrot.slane %v664, 4
      %v666 = vadd.f32 %v664, %v665
      %v667 = vrot.slane %v666, 2
      %v668 = vadd.f32 %v666, %v667
      %v669 = vrot.slane %v668, 1
      %v670 = vadd.f32 %v668, %v669
      %s671 = vtos %v670
      %672 = vst.msk [vmem:[%s429] sm:$0xff] %vm562, %v608
      %673 = vst.msk [vmem:[%s429 + $0x8] sm:$0xff] %vm562, %v609
      %674 = vst.msk [vmem:[%s429 + $0x10] sm:$0xff] %vm562, %v610
      %675 = vst.msk [vmem:[%s429 + $0x18] sm:$0xff] %vm562, %v611
      %676 = vst.msk [vmem:[%s429 + $0x20] sm:$0xff] %vm562, %v612
      %677 = vst.msk [vmem:[%s429 + $0x28] sm:$0xff] %vm562, %v613
      %678 = vst.msk [vmem:[%s429 + $0x30] sm:$0xff] %vm562, %v614
      %679 = vst.msk [vmem:[%s429 + $0x38] sm:$0xff] %vm562, %v615
      %v680 = vstv %s639
      %v681 = vstv %s671
      %vm682 = vcmask 1040384
      %v683 = vsel %vm682, %v680, %v681
      %684 = vst [vmem:[%s437] sm:$0x3] %v683
      %p685 = scmp.lt.s32.totalorder %s23, 1
      %s686 = scalar_select %p685, %s23, 1
      %p687 = scmp.lt.s32.totalorder %s24, 7
      %s688 = scalar_select %p687, %s24, 7
      %s689 = smul.addr %s688, 8
      %s690 = smul.addr %s686, 64
      %s691 = sadd.s32 %s689, %s690
      %s692 = smul.addr %s691, 8
      %s693 = scalar_lea.vmem %s6, %s692
      %p694 = scmp.lt.s32.totalorder %s23, 1
      %s695 = scalar_select %p694, %s23, 1
      %p696 = scmp.lt.s32.totalorder %s24, 7
      %s697 = scalar_select %p696, %s24, 7
      %s698 = smul.addr %s695, 8
      %s699 = sadd.s32 %s697, %s698
      %s700 = smul.addr %s699, 2
      %s701 = scalar_lea.vmem %s7, %s700
      // Predicated region
      $region45: #{_lambda_.22} parent=43 // pred_check
        %p702 = pneg %p205
      $region46: #{_lambda_.22} parent=43 // pred_check_branch
        %704 = sbr.rel (%p702) target = $region48
      $region47: #{_lambda_.22} parent=43 // pred_region
        _
      $region48: #{_lambda_.22} parent=43 // pred_fallthru
        _
      // Predicated region
      $region49: #{_lambda_.22} parent=43 // pred_check
        %p705 = pneg %p233
      $region50: #{_lambda_.22} parent=43 // pred_check_branch
        %707 = sbr.rel (%p705) target = $region52
      $region51: #{_lambda_.22} parent=43 // pred_region
        _
      $region52: #{_lambda_.22} parent=43 // pred_fallthru
        _
    $region44: #{_lambda_.22} parent=5 // pred_fallthru
      _
    %p708 = scmp.le.s32.totalorder 2, %s14
    // Predicated region
    $region53: #{_lambda_.22} parent=5 // pred_check
      %p709 = pneg %p708
    $region54: #{_lambda_.22} parent=5 // pred_check_branch
      %711 = sbr.rel (%p709) target = $region56
    $region55: #{_lambda_.22} parent=5 // pred_region
      %s712 = ssub.s32 %s14, 2
      // Predicated region
      $region57: #{_lambda_.22} parent=55 // pred_check
        %p713 = pneg %p211
      $region58: #{_lambda_.22} parent=55 // pred_check_branch
        %715 = sbr.rel (%p713) target = $region60
      $region59: #{_lambda_.22} parent=55 // pred_region
        %p716 = scmp.lt.s32.totalorder %s25, 1
        %s717 = scalar_select %p716, %s25, 1
        %p718 = scmp.lt.s32.totalorder %s26, 7
        %s719 = scalar_select %p718, %s26, 7
        %s720 = smul.addr %s719, 8
        %s721 = smul.addr %s717, 64
        %s722 = sadd.s32 %s720, %s721
        %s723 = smul.addr %s722, 8
        %s724 = scalar_lea.vmem %s6, %s723
      $region60: #{_lambda_.22} parent=55 // pred_fallthru
        _
      // Predicated region
      $region61: #{_lambda_.22} parent=55 // pred_check
        %p725 = pneg %p239
      $region62: #{_lambda_.22} parent=55 // pred_check_branch
        %727 = sbr.rel (%p725) target = $region64
      $region63: #{_lambda_.22} parent=55 // pred_region
        %p728 = scmp.lt.s32.totalorder %s25, 1
        %s729 = scalar_select %p728, %s25, 1
        %p730 = scmp.lt.s32.totalorder %s26, 7
        %s731 = scalar_select %p730, %s26, 7
        %s732 = smul.addr %s729, 8
        %s733 = sadd.s32 %s731, %s732
        %s734 = smul.addr %s733, 2
        %s735 = scalar_lea.vmem %s7, %s734
      $region64: #{_lambda_.22} parent=55 // pred_fallthru
        _
    $region56: #{_lambda_.22} parent=5 // pred_fallthru
      _
  $region6: #{_lambda_.22} parent=0 // loop_footer
    %s18 = sadd.s32 1, %s14
  $region7: #{_lambda_.22} parent=0 // loop_footer_branch
    %13 = sbr.rel target = $region3
  $region8: #{_lambda_.22} parent=0 // loop_exit
    _

// kernel: _lambda_.18
$region0: #{_lambda_.18}
  #allocation0 [shape = 'u32[]', space=smem, size = 0x4, offset = 0x4, fixed_abs, tag = 'smem constant byte address 0x4 - core index']
  #allocation1 [shape = 'u32[72,128]{1,0:T(1,128)}', space=vmem, size = 0x9000, scoped, tag = 'internal scratch']
  %s0 = inlined_call_operand.vmem [shape: f32[2,10,10,10,4], index: 0, kind: input, shape index: {}, may-alias: {0,1,2}]
  %s1 = inlined_call_operand.vmem [shape: f32[2,10,10,10,4], index: 1, kind: input, shape index: {}, may-alias: {0,1,2}]
  %s2 = inlined_call_operand.vmem [shape: f32[2,10,10,10,4], index: 2, kind: input, shape index: {}, may-alias: {0,1,2}]
  %s3 = inlined_call_operand.vmem [shape: bf16[27,4,2], index: 3, kind: input, shape index: {}]
  %s4 = inlined_call_operand.vmem [shape: f32[1,2], index: 4, kind: input, shape index: {}]
  %s5 = inlined_call_operand.vmem [shape: f32[2,8,8,8,2], index: 5, kind: output, shape index: {0}]
  %s6 = inlined_call_operand.vmem [shape: f32[2,8,2,128], index: 6, kind: output, shape index: {1}]
  %7 = xla_tuple %s5, %s6
  %s8 = sld [smem:[#allocation0]]
  $region61: #{_lambda_.18} parent=0
    _
  %s10 = ssub.s32 1, %s8
  %s11 = scalar_select 0, %s10, %s8
  loop: start=0, step=1, limit=18
  $region2: #{_lambda_.18} parent=0 // loop_pre_header
    _
  $region3: #{_lambda_.18} parent=0 // loop_header
    %s13 = sphi 0, %s17
    %p14 = scmp.ge.s32.totalorder %s13, 18
    %s20 = sphi 0, %s32
    %s21 = sphi 0, %s28
    %s22 = sphi 0, %s20
    %s23 = sphi 0, %s21
    %s24 = sphi 0, %s22
    %s25 = sphi 0, %s23
    %s37 = sphi 0, %s39
    %s40 = sphi 0, %s37
    %s41 = sphi 0, %s40
    %s57 = sphi 0, %s41
    %s67 = sphi 0, %s69
    %s70 = sphi 0, %s67
    %s71 = sphi 0, %s70
    %s87 = sphi 0, %s71
    %s97 = sphi 0, %s99
    %s100 = sphi 0, %s97
    %s101 = sphi 0, %s100
    %s117 = sphi 0, %s101
    %s121 = sphi 0, %s121
    %s123 = sphi 0, %s121
    %s124 = sphi 0, %s123
    %s138 = sphi 0, %s124
    %s142 = sphi 0, %s142
    %s144 = sphi 0, %s142
    %s145 = sphi 0, %s144
    %s159 = sphi 0, %s145
    %s167 = sphi 0, %s169
    %s170 = sphi 0, %s167
    %s171 = sphi 0, %s170
    %s187 = sphi 0, %s171
    %s195 = sphi 0, %s197
    %s198 = sphi 0, %s195
    %s199 = sphi 0, %s198
    %s215 = sphi 0, %s199
  $region4: #{_lambda_.18} parent=0 // loop_header_branch
    %16 = sbr.rel (%p14) target = $region8
  $region5: #{_lambda_.18} parent=0 // loop_body
    %s18 = ssub.s32 %s13, 1
    %s19 = ssub.s32 %s13, 2
    %s26 = sadd.s32 1, %s21
    %p27 = scmp.ge.s32.totalorder %s26, 8
    %s28 = scalar_select %p27, 0, %s26
    %s29 = sadd.s32 1, %s20
    %s30 = scalar_select %p27, %s29, %s20
    %p31 = scmp.ge.s32.totalorder %s30, 2
    %s32 = scalar_select %p31, 0, %s30
    %s33 = ssub.s32 %s20, %s32
    %s34 = ssub.s32 %s21, %s28
    %s35 = sor.u32 %s33, %s34
    %p36 = scmp.eq.s32.totalorder %s35, 0
    %s38 = sadd.s32 %s37, 1
    %s39 = scalar_select %p36, %s37, %s38
    %p42 = pneg %p36
    %p43 = scmp.eq.s32.totalorder %s13, 15
    %p44 = por %p42, %p43
    %p45 = scmp.ne.s32.totalorder %s37, %s40
    %p46 = scmp.eq.s32.totalorder %s13, 0
    %p47 = por %p45, %p46
    %p48 = scmp.ne.s32.totalorder %s37, %s40
    %p49 = scmp.eq.s32.totalorder %s18, 15
    %p50 = por %p48, %p49
    %p51 = scmp.ne.s32.totalorder %s40, %s41
    %p52 = scmp.eq.s32.totalorder %s18, 0
    %p53 = por %p51, %p52
    %p54 = scmp.ne.s32.totalorder %s40, %s41
    %p55 = scmp.eq.s32.totalorder %s19, 15
    %p56 = por %p54, %p55
    %p58 = scmp.ne.s32.totalorder %s41, %s57
    %p59 = scmp.eq.s32.totalorder %s19, 0
    %p60 = por %p58, %p59
    %s61 = sadd.s32 %s21, 1
    %s62 = sadd.s32 %s28, 1
    %s63 = ssub.s32 %s20, %s32
    %s64 = ssub.s32 %s61, %s62
    %s65 = sor.u32 %s63, %s64
    %p66 = scmp.eq.s32.totalorder %s65, 0
    %s68 = sadd.s32 %s67, 1
    %s69 = scalar_select %p66, %s67, %s68
    %p72 = pneg %p66
    %p73 = scmp.eq.s32.totalorder %s13, 15
    %p74 = por %p72, %p73
    %p75 = scmp.ne.s32.totalorder %s67, %s70
    %p76 = scmp.eq.s32.totalorder %s13, 0
    %p77 = por %p75, %p76
    %p78 = scmp.ne.s32.totalorder %s67, %s70
    %p79 = scmp.eq.s32.totalorder %s18, 15
    %p80 = por %p78, %p79
    %p81 = scmp.ne.s32.totalorder %s70, %s71
    %p82 = scmp.eq.s32.totalorder %s18, 0
    %p83 = por %p81, %p82
    %p84 = scmp.ne.s32.totalorder %s70, %s71
    %p85 = scmp.eq.s32.totalorder %s19, 15
    %p86 = por %p84, %p85
    %p88 = scmp.ne.s32.totalorder %s71, %s87
    %p89 = scmp.eq.s32.totalorder %s19, 0
    %p90 = por %p88, %p89
    %s91 = sadd.s32 %s21, 2
    %s92 = sadd.s32 %s28, 2
    %s93 = ssub.s32 %s20, %s32
    %s94 = ssub.s32 %s91, %s92
    %s95 = sor.u32 %s93, %s94
    %p96 = scmp.eq.s32.totalorder %s95, 0
    %s98 = sadd.s32 %s97, 1
    %s99 = scalar_select %p96, %s97, %s98
    %p102 = pneg %p96
    %p103 = scmp.eq.s32.totalorder %s13, 15
    %p104 = por %p102, %p103
    %p105 = scmp.ne.s32.totalorder %s97, %s100
    %p106 = scmp.eq.s32.totalorder %s13, 0
    %p107 = por %p105, %p106
    %p108 = scmp.ne.s32.totalorder %s97, %s100
    %p109 = scmp.eq.s32.totalorder %s18, 15
    %p110 = por %p108, %p109
    %p111 = scmp.ne.s32.totalorder %s100, %s101
    %p112 = scmp.eq.s32.totalorder %s18, 0
    %p113 = por %p111, %p112
    %p114 = scmp.ne.s32.totalorder %s100, %s101
    %p115 = scmp.eq.s32.totalorder %s19, 15
    %p116 = por %p114, %p115
    %p118 = scmp.ne.s32.totalorder %s101, %s117
    %p119 = scmp.eq.s32.totalorder %s19, 0
    %p120 = por %p118, %p119
    %s122 = sadd.s32 %s121, 1
    %p125 = scmp.eq.s32.totalorder %s13, 15
    %p126 = scmp.ne.s32.totalorder %s121, %s123
    %p127 = scmp.eq.s32.totalorder %s13, 0
    %p128 = por %p126, %p127
    %p129 = scmp.ne.s32.totalorder %s121, %s123
    %p130 = scmp.eq.s32.totalorder %s18, 15
    %p131 = por %p129, %p130
    %p132 = scmp.ne.s32.totalorder %s123, %s124
    %p133 = scmp.eq.s32.totalorder %s18, 0
    %p134 = por %p132, %p133
    %p135 = scmp.ne.s32.totalorder %s123, %s124
    %p136 = scmp.eq.s32.totalorder %s19, 15
    %p137 = por %p135, %p136
    %p139 = scmp.ne.s32.totalorder %s124, %s138
    %p140 = scmp.eq.s32.totalorder %s19, 0
    %p141 = por %p139, %p140
    %s143 = sadd.s32 %s142, 1
    %p146 = scmp.eq.s32.totalorder %s13, 15
    %p147 = scmp.ne.s32.totalorder %s142, %s144
    %p148 = scmp.eq.s32.totalorder %s13, 0
    %p149 = por %p147, %p148
    %p150 = scmp.ne.s32.totalorder %s142, %s144
    %p151 = scmp.eq.s32.totalorder %s18, 15
    %p152 = por %p150, %p151
    %p153 = scmp.ne.s32.totalorder %s144, %s145
    %p154 = scmp.eq.s32.totalorder %s18, 0
    %p155 = por %p153, %p154
    %p156 = scmp.ne.s32.totalorder %s144, %s145
    %p157 = scmp.eq.s32.totalorder %s19, 15
    %p158 = por %p156, %p157
    %p160 = scmp.ne.s32.totalorder %s145, %s159
    %p161 = scmp.eq.s32.totalorder %s19, 0
    %p162 = por %p160, %p161
    %s163 = ssub.s32 %s20, %s32
    %s164 = ssub.s32 %s21, %s28
    %s165 = sor.u32 %s163, %s164
    %p166 = scmp.eq.s32.totalorder %s165, 0
    %s168 = sadd.s32 %s167, 1
    %s169 = scalar_select %p166, %s167, %s168
    %p172 = pneg %p166
    %p173 = scmp.eq.s32.totalorder %s13, 15
    %p174 = por %p172, %p173
    %p175 = scmp.ne.s32.totalorder %s167, %s170
    %p176 = scmp.eq.s32.totalorder %s13, 0
    %p177 = por %p175, %p176
    %p178 = scmp.ne.s32.totalorder %s167, %s170
    %p179 = scmp.eq.s32.totalorder %s18, 15
    %p180 = por %p178, %p179
    %p181 = scmp.ne.s32.totalorder %s170, %s171
    %p182 = scmp.eq.s32.totalorder %s18, 0
    %p183 = por %p181, %p182
    %p184 = scmp.ne.s32.totalorder %s170, %s171
    %p185 = scmp.eq.s32.totalorder %s19, 15
    %p186 = por %p184, %p185
    %p188 = scmp.ne.s32.totalorder %s171, %s187
    %p189 = scmp.eq.s32.totalorder %s19, 0
    %p190 = por %p188, %p189
    %s191 = ssub.s32 %s20, %s32
    %s192 = ssub.s32 %s21, %s28
    %s193 = sor.u32 %s191, %s192
    %p194 = scmp.eq.s32.totalorder %s193, 0
    %s196 = sadd.s32 %s195, 1
    %s197 = scalar_select %p194, %s195, %s196
    %p200 = pneg %p194
    %p201 = scmp.eq.s32.totalorder %s13, 15
    %p202 = por %p200, %p201
    %p203 = scmp.ne.s32.totalorder %s195, %s198
    %p204 = scmp.eq.s32.totalorder %s13, 0
    %p205 = por %p203, %p204
    %p206 = scmp.ne.s32.totalorder %s195, %s198
    %p207 = scmp.eq.s32.totalorder %s18, 15
    %p208 = por %p206, %p207
    %p209 = scmp.ne.s32.totalorder %s198, %s199
    %p210 = scmp.eq.s32.totalorder %s18, 0
    %p211 = por %p209, %p210
    %p212 = scmp.ne.s32.totalorder %s198, %s199
    %p213 = scmp.eq.s32.totalorder %s19, 15
    %p214 = por %p212, %p213
    %p216 = scmp.ne.s32.totalorder %s199, %s215
    %p217 = scmp.eq.s32.totalorder %s19, 0
    %p218 = por %p216, %p217
    %p219 = scmp.le.s32.totalorder 1, %s13
    %p220 = scmp.lt.s32.totalorder %s13, 17
    %p221 = pnand %p219, %p220
    %p222 = pneg %p221
    // Predicated region
    $region9: #{_lambda_.18} parent=5 // pred_check
      _
    $region10: #{_lambda_.18} parent=5 // pred_check_branch
      %224 = sbr.rel (%p221) target = $region12
    $region11: #{_lambda_.18} parent=5 // pred_region
      %s225 = ssub.s32 %s13, 1
      // Predicated region
      $region13: #{_lambda_.18} parent=11 // pred_check
        %p226 = pneg %p134
      $region14: #{_lambda_.18} parent=11 // pred_check_branch
        %228 = sbr.rel (%p226) target = $region16
      $region15: #{_lambda_.18} parent=11 // pred_region
        _
      $region16: #{_lambda_.18} parent=11 // pred_fallthru
        _
      // Predicated region
      $region17: #{_lambda_.18} parent=11 // pred_check
        %p229 = pneg %p155
      $region18: #{_lambda_.18} parent=11 // pred_check_branch
        %231 = sbr.rel (%p229) target = $region20
      $region19: #{_lambda_.18} parent=11 // pred_region
        _
      $region20: #{_lambda_.18} parent=11 // pred_fallthru
        _
    $region12: #{_lambda_.18} parent=5 // pred_fallthru
      _
    %p232 = scmp.lt.s32.totalorder %s13, 16
    // Predicated region
    $region21: #{_lambda_.18} parent=5 // pred_check
      %p233 = pneg %p232
    $region22: #{_lambda_.18} parent=5 // pred_check_branch
      %235 = sbr.rel (%p233) target = $region24
    $region23: #{_lambda_.18} parent=5 // pred_region
      // Predicated region
      $region25: #{_lambda_.18} parent=23 // pred_check
        %p236 = pneg %p47
      $region26: #{_lambda_.18} parent=23 // pred_check_branch
        %238 = sbr.rel (%p236) target = $region28
      $region27: #{_lambda_.18} parent=23 // pred_region
        %p239 = scmp.lt.s32.totalorder %s20, 1
        %s240 = scalar_select %p239, %s20, 1
        %p241 = scmp.lt.s32.totalorder %s21, 9
        %s242 = scalar_select %p241, %s21, 9
        %s243 = smul.addr %s242, 20
        %s244 = smul.addr %s240, 200
        %s245 = sadd.s32 %s243, %s244
        %s246 = smul.addr %s245, 8
        %s247 = scalar_lea.vmem %s0, %s246
      $region28: #{_lambda_.18} parent=23 // pred_fallthru
        _
      // Predicated region
      $region29: #{_lambda_.18} parent=23 // pred_check
        %p248 = pneg %p77
      $region30: #{_lambda_.18} parent=23 // pred_check_branch
        %250 = sbr.rel (%p248) target = $region32
      $region31: #{_lambda_.18} parent=23 // pred_region
        %s251 = sadd.s32 %s21, 1
        %p252 = scmp.lt.s32.totalorder %s20, 1
        %s253 = scalar_select %p252, %s20, 1
        %p254 = scmp.lt.s32.totalorder %s251, 9
        %s255 = scalar_select %p254, %s251, 9
        %s256 = smul.addr %s255, 20
        %s257 = smul.addr %s253, 200
        %s258 = sadd.s32 %s256, %s257
        %s259 = smul.addr %s258, 8
        %s260 = scalar_lea.vmem %s1, %s259
        %s261 = sadd.s32 %s21, 1
      $region32: #{_lambda_.18} parent=23 // pred_fallthru
        _
      // Predicated region
      $region33: #{_lambda_.18} parent=23 // pred_check
        %p262 = pneg %p107
      $region34: #{_lambda_.18} parent=23 // pred_check_branch
        %264 = sbr.rel (%p262) target = $region36
      $region35: #{_lambda_.18} parent=23 // pred_region
        %s265 = sadd.s32 %s21, 2
        %p266 = scmp.lt.s32.totalorder %s20, 1
        %s267 = scalar_select %p266, %s20, 1
        %p268 = scmp.lt.s32.totalorder %s265, 9
        %s269 = scalar_select %p268, %s265, 9
        %s270 = smul.addr %s269, 20
        %s271 = smul.addr %s267, 200
        %s272 = sadd.s32 %s270, %s271
        %s273 = smul.addr %s272, 8
        %s274 = scalar_lea.vmem %s2, %s273
        %s275 = sadd.s32 %s21, 2
      $region36: #{_lambda_.18} parent=23 // pred_fallthru
        _
    $region24: #{_lambda_.18} parent=5 // pred_fallthru
      _
    %p276 = scmp.le.s32.totalorder 1, %s13
    %p277 = scmp.lt.s32.totalorder %s13, 17
    %p278 = pnand %p276, %p277
    %p279 = pneg %p278
    // Predicated region
    $region37: #{_lambda_.18} parent=5 // pred_check
      _
    $region38: #{_lambda_.18} parent=5 // pred_check_branch
      %281 = sbr.rel (%p278) target = $region40
    $region39: #{_lambda_.18} parent=5 // pred_region
      %s282 = ssub.s32 %s13, 1
      %p283 = scmp.lt.s32.totalorder %s22, 1
      %s284 = scalar_select %p283, %s22, 1
      %p285 = scmp.lt.s32.totalorder %s23, 9
      %s286 = scalar_select %p285, %s23, 9
      %s287 = smul.addr %s286, 20
      %s288 = smul.addr %s284, 200
      %s289 = sadd.s32 %s287, %s288
      %s290 = smul.addr %s289, 8
      %s291 = scalar_lea.vmem %s0, %s290
      %p292 = pneg %p53
      %p293 = pneg %p50
      %s294 = sadd.s32 %s23, 1
      %p295 = scmp.lt.s32.totalorder %s22, 1
      %s296 = scalar_select %p295, %s22, 1
      %p297 = scmp.lt.s32.totalorder %s294, 9
      %s298 = scalar_select %p297, %s294, 9
      %s299 = smul.addr %s298, 20
      %s300 = smul.addr %s296, 200
      %s301 = sadd.s32 %s299, %s300
      %s302 = smul.addr %s301, 8
      %s303 = scalar_lea.vmem %s1, %s302
      %p304 = pneg %p83
      %p305 = pneg %p80
      %s306 = sadd.s32 %s23, 2
      %p307 = scmp.lt.s32.totalorder %s22, 1
      %s308 = scalar_select %p307, %s22, 1
      %p309 = scmp.lt.s32.totalorder %s306, 9
      %s310 = scalar_select %p309, %s306, 9
      %s311 = smul.addr %s310, 20
      %s312 = smul.addr %s308, 200
      %s313 = sadd.s32 %s311, %s312
      %s314 = smul.addr %s313, 8
      %s315 = scalar_lea.vmem %s2, %s314
      %p316 = pneg %p113
      %p317 = pneg %p110
      %p318 = pneg %p134
      %p319 = pneg %p131
      %p320 = pneg %p155
      %p321 = pneg %p152
      %p322 = pneg %p183
      %p323 = pneg %p180
      %p324 = scmp.lt.s32.totalorder %s22, 1
      %s325 = scalar_select %p324, %s22, 1
      %p326 = scmp.lt.s32.totalorder %s23, 7
      %s327 = scalar_select %p326, %s23, 7
      %s328 = smul.addr %s327, 8
      %s329 = smul.addr %s325, 64
      %s330 = sadd.s32 %s328, %s329
      %s331 = smul.addr %s330, 8
      %s332 = scalar_lea.vmem %s5, %s331
      %p333 = pneg %p211
      %p334 = pneg %p208
      %p335 = scmp.lt.s32.totalorder %s22, 1
      %s336 = scalar_select %p335, %s22, 1
      %p337 = scmp.lt.s32.totalorder %s23, 7
      %s338 = scalar_select %p337, %s23, 7
      %s339 = smul.addr %s336, 8
      %s340 = sadd.s32 %s338, %s339
      %s341 = smul.addr %s340, 2
      %s342 = scalar_lea.vmem %s6, %s341
      %p343 = scmp.lt.s32.totalorder %s22, 1
      %s344 = scalar_select %p343, %s22, 1
      %p345 = scmp.lt.s32.totalorder %s23, 9
      %s346 = scalar_select %p345, %s23, 9
      %s347 = smul.addr %s346, 20
      %s348 = smul.addr %s344, 200
      %s349 = sadd.s32 %s347, %s348
      %s350 = smul.addr %s349, 8
      %s351 = scalar_lea.vmem %s0, %s350
      %s352 = sadd.s32 %s23, 1
      %p353 = scmp.lt.s32.totalorder %s22, 1
      %s354 = scalar_select %p353, %s22, 1
      %p355 = scmp.lt.s32.totalorder %s352, 9
      %s356 = scalar_select %p355, %s352, 9
      %s357 = smul.addr %s356, 20
      %s358 = smul.addr %s354, 200
      %s359 = sadd.s32 %s357, %s358
      %s360 = smul.addr %s359, 8
      %s361 = scalar_lea.vmem %s1, %s360
      %s362 = sadd.s32 %s23, 1
      %s363 = sadd.s32 %s23, 2
      %p364 = scmp.lt.s32.totalorder %s22, 1
      %s365 = scalar_select %p364, %s22, 1
      %p366 = scmp.lt.s32.totalorder %s363, 9
      %s367 = scalar_select %p366, %s363, 9
      %s368 = smul.addr %s367, 20
      %s369 = smul.addr %s365, 200
      %s370 = sadd.s32 %s368, %s369
      %s371 = smul.addr %s370, 8
      %s372 = scalar_lea.vmem %s2, %s371
      %s373 = sadd.s32 %s23, 2
      %p374 = scmp.lt.s32.totalorder %s22, 1
      %s375 = scalar_select %p374, %s22, 1
      %p376 = scmp.lt.s32.totalorder %s23, 7
      %s377 = scalar_select %p376, %s23, 7
      %s378 = smul.addr %s377, 8
      %s379 = smul.addr %s375, 64
      %s380 = sadd.s32 %s378, %s379
      %s381 = smul.addr %s380, 8
      %s382 = scalar_lea.vmem %s5, %s381
      %p383 = scmp.lt.s32.totalorder %s22, 1
      %s384 = scalar_select %p383, %s22, 1
      %p385 = scmp.lt.s32.totalorder %s23, 7
      %s386 = scalar_select %p385, %s23, 7
      %s387 = smul.addr %s384, 8
      %s388 = sadd.s32 %s386, %s387
      %s389 = smul.addr %s388, 2
      %s390 = scalar_lea.vmem %s6, %s389
      %v392 = vld [vmem:[%s351] sm:$0xff]
      %v393 = vld [vmem:[%s351 + $0x10] sm:$0xff]
      %v394 = vld [vmem:[%s351 + $0x20] sm:$0xff]
      %v395 = vld [vmem:[%s351 + $0x30] sm:$0xff]
      %v396 = vld [vmem:[%s351 + $0x40] sm:$0xff]
      %v397 = vld [vmem:[%s351 + $0x50] sm:$0xff]
      %v398 = vld [vmem:[%s351 + $0x60] sm:$0xff]
      %v399 = vld [vmem:[%s351 + $0x70] sm:$0xff]
      %v400 = vpack.c.bf16 %v393, %v392
      %v401 = vpack.c.bf16 %v395, %v394
      %v402 = vpack.c.bf16 %v397, %v396
      %v403 = vpack.c.bf16 %v399, %v398
      %v404 = vld [vmem:[%s3] sm:$0x3]
      %v405 = vld [vmem:[%s351 + $0x1] sm:$0xff]
      %v406 = vld [vmem:[%s351 + $0x11] sm:$0xff]
      %v407 = vld [vmem:[%s351 + $0x21] sm:$0xff]
      %v408 = vld [vmem:[%s351 + $0x31] sm:$0xff]
      %v409 = vld [vmem:[%s351 + $0x41] sm:$0xff]
      %v410 = vld [vmem:[%s351 + $0x51] sm:$0xff]
      %v411 = vld [vmem:[%s351 + $0x61] sm:$0xff]
      %v412 = vld [vmem:[%s351 + $0x71] sm:$0xff]
      %v413 = vpack.c.bf16 %v406, %v405
      %v414 = vpack.c.bf16 %v408, %v407
      %v415 = vpack.c.bf16 %v410, %v409
      %v416 = vpack.c.bf16 %v412, %v411
      %s417 = scalar_lea.vmem %s3, 2
      %v418 = vld [vmem:[%s417] sm:$0x3]
      %vm419 = vcmask 31744
      %v421 = vsel %vm419, %v413, 0
      %v424 = vsel %vm419, %v414, 0
      %v427 = vsel %vm419, %v415, 0
      %v430 = vsel %vm419, %v416, 0
      %vm432 = vcmask 1041408
      %v434 = vsel %vm432, %v418, 0
      %436 = vmatpush.bf16.msra.mxu0 0
      %437 = vmatpush.bf16.msra.mxu0 0
      %438 = vmatpush.bf16.msra.mxu0 0
      %439 = vmatpush.bf16.msra.mxu0 0
      %440 = vmatpush.bf16.msra.mxu0 0
      %441 = vmatpush.bf16.msra.mxu0 0
      %442 = vmatpush.bf16.msra.mxu0 0
      %443 = vmatpush.bf16.msra.mxu0 %v434
      %444 = vmatmul.bf16.gmra.mxu0 %v421
      %v445 = vpop.f32.mrf.mxu0
      %v446 = vadd.f32 0.0, %v445
      %v447 = vpop.f32.mrf.mxu0
      %v448 = vadd.f32 0.0, %v447
      %449 = vmatmul.bf16.gmra.mxu0 %v424
      %v450 = vpop.f32.mrf.mxu0
      %v451 = vadd.f32 0.0, %v450
      %v452 = vpop.f32.mrf.mxu0
      %v453 = vadd.f32 0.0, %v452
      %454 = vmatmul.bf16.gmra.mxu0 %v427
      %v455 = vpop.f32.mrf.mxu0
      %v456 = vadd.f32 0.0, %v455
      %v457 = vpop.f32.mrf.mxu0
      %v458 = vadd.f32 0.0, %v457
      %459 = vmatmul.bf16.gmra.mxu0 %v430
      %v460 = vpop.f32.mrf.mxu0
      %v461 = vadd.f32 0.0, %v460
      %v462 = vpop.f32.mrf.mxu0
      %v463 = vadd.f32 0.0, %v462
      %464 = vdwg.mxu0
      %v466 = vsel %vm419, %v400, 0
      %v469 = vsel %vm419, %v401, 0
      %v472 = vsel %vm419, %v402, 0
      %v475 = vsel %vm419, %v403, 0
      %v478 = vsel %vm432, %v404, 0
      %480 = vmatpush.bf16.msra.mxu0 0
      %481 = vmatpush.bf16.msra.mxu0 0
      %482 = vmatpush.bf16.msra.mxu0 0
      %483 = vmatpush.bf16.msra.mxu0 0
      %484 = vmatpush.bf16.msra.mxu0 0
      %485 = vmatpush.bf16.msra.mxu0 0
      %486 = vmatpush.bf16.msra.mxu0 0
      %487 = vmatpush.bf16.msra.mxu0 %v478
      %488 = vmatmul.bf16.gmra.mxu0 %v466
      %v489 = vpop.f32.mrf.mxu0
      %v490 = vadd.f32 %v446, %v489
      %v491 = vpop.f32.mrf.mxu0
      %v492 = vadd.f32 %v448, %v491
      %493 = vmatmul.bf16.gmra.mxu0 %v469
      %v494 = vpop.f32.mrf.mxu0
      %v495 = vadd.f32 %v451, %v494
      %v496 = vpop.f32.mrf.mxu0
      %v497 = vadd.f32 %v453, %v496
      %498 = vmatmul.bf16.gmra.mxu0 %v472
      %v499 = vpop.f32.mrf.mxu0
      %v500 = vadd.f32 %v456, %v499
      %v501 = vpop.f32.mrf.mxu0
      %v502 = vadd.f32 %v458, %v501
      %503 = vmatmul.bf16.gmra.mxu0 %v475
      %v504 = vpop.f32.mrf.mxu0
      %v505 = vadd.f32 %v461, %v504
      %v506 = vpop.f32.mrf.mxu0
      %v507 = vadd.f32 %v463, %v506
      %508 = vdwg.mxu0
      %v509 = vld [vmem:[%s351 + $0x2] sm:$0xff]
      %v510 = vld [vmem:[%s351 + $0x12] sm:$0xff]
      %v511 = vld [vmem:[%s351 + $0x22] sm:$0xff]
      %v512 = vld [vmem:[%s351 + $0x32] sm:$0xff]
      %v513 = vld [vmem:[%s351 + $0x42] sm:$0xff]
      %v514 = vld [vmem:[%s351 + $0x52] sm:$0xff]
      %v515 = vld [vmem:[%s351 + $0x62] sm:$0xff]
      %v516 = vld [vmem:[%s351 + $0x72] sm:$0xff]
      %v517 = vpack.c.bf16 %v510, %v509
      %v518 = vpack.c.bf16 %v512, %v511
      %v519 = vpack.c.bf16 %v514, %v513
      %v520 = vpack.c.bf16 %v516, %v515
      %s521 = scalar_lea.vmem %s3, 4
      %v522 = vld [vmem:[%s521] sm:$0x3]
      %v524 = vsel %vm419, %v517, 0
      %v527 = vsel %vm419, %v518, 0
      %v530 = vsel %vm419, %v519, 0
      %v533 = vsel %vm419, %v520, 0
      %v536 = vsel %vm432, %v522, 0
      %538 = vmatpush.bf16.msra.mxu0 0
      %539 = vmatpush.bf16.msra.mxu0 0
      %540 = vmatpush.bf16.msra.mxu0 0
      %541 = vmatpush.bf16.msra.mxu0 0
      %542 = vmatpush.bf16.msra.mxu0 0
      %543 = vmatpush.bf16.msra.mxu0 0
      %544 = vmatpush.bf16.msra.mxu0 0
      %545 = vmatpush.bf16.msra.mxu0 %v536
      %546 = vmatmul.bf16.gmra.mxu0 %v524
      %v547 = vpop.f32.mrf.mxu0
      %v548 = vadd.f32 0.0, %v547
      %v549 = vpop.f32.mrf.mxu0
      %v550 = vadd.f32 0.0, %v549
      %551 = vmatmul.bf16.gmra.mxu0 %v527
      %v552 = vpop.f32.mrf.mxu0
      %v553 = vadd.f32 0.0, %v552
      %v554 = vpop.f32.mrf.mxu0
      %v555 = vadd.f32 0.0, %v554
      %556 = vmatmul.bf16.gmra.mxu0 %v530
      %v557 = vpop.f32.mrf.mxu0
      %v558 = vadd.f32 0.0, %v557
      %v559 = vpop.f32.mrf.mxu0
      %v560 = vadd.f32 0.0, %v559
      %561 = vmatmul.bf16.gmra.mxu0 %v533
      %v562 = vpop.f32.mrf.mxu0
      %v563 = vadd.f32 0.0, %v562
      %v564 = vpop.f32.mrf.mxu0
      %v565 = vadd.f32 0.0, %v564
      %566 = vdwg.mxu0
      %v567 = vadd.f32 %v490, %v548
      %v568 = vadd.f32 %v492, %v550
      %v569 = vadd.f32 %v495, %v553
      %v570 = vadd.f32 %v497, %v555
      %v571 = vadd.f32 %v500, %v558
      %v572 = vadd.f32 %v502, %v560
      %v573 = vadd.f32 %v505, %v563
      %v574 = vadd.f32 %v507, %v565
      %s575 = scalar_lea.vmem %s351, 16
      %v576 = vld [vmem:[%s575] sm:$0xff]
      %v577 = vld [vmem:[%s575 + $0x10] sm:$0xff]
      %v578 = vld [vmem:[%s575 + $0x20] sm:$0xff]
      %v579 = vld [vmem:[%s575 + $0x30] sm:$0xff]
      %v580 = vld [vmem:[%s575 + $0x40] sm:$0xff]
      %v581 = vld [vmem:[%s575 + $0x50] sm:$0xff]
      %v582 = vld [vmem:[%s575 + $0x60] sm:$0xff]
      %v583 = vld [vmem:[%s575 + $0x70] sm:$0xff]
      %v584 = vpack.c.bf16 %v577, %v576
      %v585 = vpack.c.bf16 %v579, %v578
      %v586 = vpack.c.bf16 %v581, %v580
      %v587 = vpack.c.bf16 %v583, %v582
      %s588 = scalar_lea.vmem %s3, 6
      %v589 = vld [vmem:[%s588] sm:$0x3]
      %v591 = vsel %vm419, %v584, 0
      %v594 = vsel %vm419, %v585, 0
      %v597 = vsel %vm419, %v586, 0
      %v600 = vsel %vm419, %v587, 0
      %v603 = vsel %vm432, %v589, 0
      %605 = vmatpush.bf16.msra.mxu0 0
      %606 = vmatpush.bf16.msra.mxu0 0
      %607 = vmatpush.bf16.msra.mxu0 0
      %608 = vmatpush.bf16.msra.mxu0 0
      %609 = vmatpush.bf16.msra.mxu0 0
      %610 = vmatpush.bf16.msra.mxu0 0
      %611 = vmatpush.bf16.msra.mxu0 0
      %612 = vmatpush.bf16.msra.mxu0 %v603
      %613 = vmatmul.bf16.gmra.mxu0 %v591
      %v614 = vpop.f32.mrf.mxu0
      %v615 = vadd.f32 0.0, %v614
      %v616 = vpop.f32.mrf.mxu0
      %v617 = vadd.f32 0.0, %v616
      %618 = vmatmul.bf16.gmra.mxu0 %v594
      %v619 = vpop.f32.mrf.mxu0
      %v620 = vadd.f32 0.0, %v619
      %v621 = vpop.f32.mrf.mxu0
      %v622 = vadd.f32 0.0, %v621
      %623 = vmatmul.bf16.gmra.mxu0 %v597
      %v624 = vpop.f32.mrf.mxu0
      %v625 = vadd.f32 0.0, %v624
      %v626 = vpop.f32.mrf.mxu0
      %v627 = vadd.f32 0.0, %v626
      %628 = vmatmul.bf16.gmra.mxu0 %v600
      %v629 = vpop.f32.mrf.mxu0
      %v630 = vadd.f32 0.0, %v629
      %v631 = vpop.f32.mrf.mxu0
      %v632 = vadd.f32 0.0, %v631
      %633 = vdwg.mxu0
      %v634 = vadd.f32 %v567, %v615
      %v635 = vadd.f32 %v568, %v617
      %v636 = vadd.f32 %v569, %v620
      %v637 = vadd.f32 %v570, %v622
      %v638 = vadd.f32 %v571, %v625
      %v639 = vadd.f32 %v572, %v627
      %v640 = vadd.f32 %v573, %v630
      %v641 = vadd.f32 %v574, %v632
      %v642 = vld [vmem:[%s575 + $0x1] sm:$0xff]
      %v643 = vld [vmem:[%s575 + $0x11] sm:$0xff]
      %v644 = vld [vmem:[%s575 + $0x21] sm:$0xff]
      %v645 = vld [vmem:[%s575 + $0x31] sm:$0xff]
      %v646 = vld [vmem:[%s575 + $0x41] sm:$0xff]
      %v647 = vld [vmem:[%s575 + $0x51] sm:$0xff]
      %v648 = vld [vmem:[%s575 + $0x61] sm:$0xff]
      %v649 = vld [vmem:[%s575 + $0x71] sm:$0xff]
      %v650 = vpack.c.bf16 %v643, %v642
      %v651 = vpack.c.bf16 %v645, %v644
      %v652 = vpack.c.bf16 %v647, %v646
      %v653 = vpack.c.bf16 %v649, %v648
      %s654 = scalar_lea.vmem %s3, 8
      %v655 = vld [vmem:[%s654] sm:$0x3]
      %v657 = vsel %vm419, %v650, 0
      %v660 = vsel %vm419, %v651, 0
      %v663 = vsel %vm419, %v652, 0
      %v666 = vsel %vm419, %v653, 0
      %v669 = vsel %vm432, %v655, 0
      %671 = vmatpush.bf16.msra.mxu0 0
      %672 = vmatpush.bf16.msra.mxu0 0
      %673 = vmatpush.bf16.msra.mxu0 0
      %674 = vmatpush.bf16.msra.mxu0 0
      %675 = vmatpush.bf16.msra.mxu0 0
      %676 = vmatpush.bf16.msra.mxu0 0
      %677 = vmatpush.bf16.msra.mxu0 0
      %678 = vmatpush.bf16.msra.mxu0 %v669
      %679 = vmatmul.bf16.gmra.mxu0 %v657
      %v680 = vpop.f32.mrf.mxu0
      %v681 = vadd.f32 0.0, %v680
      %v682 = vpop.f32.mrf.mxu0
      %v683 = vadd.f32 0.0, %v682
      %684 = vmatmul.bf16.gmra.mxu0 %v660
      %v685 = vpop.f32.mrf.mxu0
      %v686 = vadd.f32 0.0, %v685
      %v687 = vpop.f32.mrf.mxu0
      %v688 = vadd.f32 0.0, %v687
      %689 = vmatmul.bf16.gmra.mxu0 %v663
      %v690 = vpop.f32.mrf.mxu0
      %v691 = vadd.f32 0.0, %v690
      %v692 = vpop.f32.mrf.mxu0
      %v693 = vadd.f32 0.0, %v692
      %694 = vmatmul.bf16.gmra.mxu0 %v666
      %v695 = vpop.f32.mrf.mxu0
      %v696 = vadd.f32 0.0, %v695
      %v697 = vpop.f32.mrf.mxu0
      %v698 = vadd.f32 0.0, %v697
      %699 = vdwg.mxu0
      %v700 = vadd.f32 %v634, %v681
      %v701 = vadd.f32 %v635, %v683
      %v702 = vadd.f32 %v636, %v686
      %v703 = vadd.f32 %v637, %v688
      %v704 = vadd.f32 %v638, %v691
      %v705 = vadd.f32 %v639, %v693
      %v706 = vadd.f32 %v640, %v696
      %v707 = vadd.f32 %v641, %v698
      %v708 = vld [vmem:[%s575 + $0x2] sm:$0xff]
      %v709 = vld [vmem:[%s575 + $0x12] sm:$0xff]
      %v710 = vld [vmem:[%s575 + $0x22] sm:$0xff]
      %v711 = vld [vmem:[%s575 + $0x32] sm:$0xff]
      %v712 = vld [vmem:[%s575 + $0x42] sm:$0xff]
      %v713 = vld [vmem:[%s575 + $0x52] sm:$0xff]
      %v714 = vld [vmem:[%s575 + $0x62] sm:$0xff]
      %v715 = vld [vmem:[%s575 + $0x72] sm:$0xff]
      %v716 = vpack.c.bf16 %v709, %v708
      %v717 = vpack.c.bf16 %v711, %v710
      %v718 = vpack.c.bf16 %v713, %v712
      %v719 = vpack.c.bf16 %v715, %v714
      %s720 = scalar_lea.vmem %s3, 10
      %v721 = vld [vmem:[%s720] sm:$0x3]
      %v723 = vsel %vm419, %v716, 0
      %v726 = vsel %vm419, %v717, 0
      %v729 = vsel %vm419, %v718, 0
      %v732 = vsel %vm419, %v719, 0
      %v735 = vsel %vm432, %v721, 0
      %737 = vmatpush.bf16.msra.mxu0 0
      %738 = vmatpush.bf16.msra.mxu0 0
      %739 = vmatpush.bf16.msra.mxu0 0
      %740 = vmatpush.bf16.msra.mxu0 0
      %741 = vmatpush.bf16.msra.mxu0 0
      %742 = vmatpush.bf16.msra.mxu0 0
      %743 = vmatpush.bf16.msra.mxu0 0
      %744 = vmatpush.bf16.msra.mxu0 %v735
      %745 = vmatmul.bf16.gmra.mxu0 %v723
      %v746 = vpop.f32.mrf.mxu0
      %v747 = vadd.f32 0.0, %v746
      %v748 = vpop.f32.mrf.mxu0
      %v749 = vadd.f32 0.0, %v748
      %750 = vmatmul.bf16.gmra.mxu0 %v726
      %v751 = vpop.f32.mrf.mxu0
      %v752 = vadd.f32 0.0, %v751
      %v753 = vpop.f32.mrf.mxu0
      %v754 = vadd.f32 0.0, %v753
      %755 = vmatmul.bf16.gmra.mxu0 %v729
      %v756 = vpop.f32.mrf.mxu0
      %v757 = vadd.f32 0.0, %v756
      %v758 = vpop.f32.mrf.mxu0
      %v759 = vadd.f32 0.0, %v758
      %760 = vmatmul.bf16.gmra.mxu0 %v732
      %v761 = vpop.f32.mrf.mxu0
      %v762 = vadd.f32 0.0, %v761
      %v763 = vpop.f32.mrf.mxu0
      %v764 = vadd.f32 0.0, %v763
      %765 = vdwg.mxu0
      %v766 = vadd.f32 %v700, %v747
      %v767 = vadd.f32 %v701, %v749
      %v768 = vadd.f32 %v702, %v752
      %v769 = vadd.f32 %v703, %v754
      %v770 = vadd.f32 %v704, %v757
      %v771 = vadd.f32 %v705, %v759
      %v772 = vadd.f32 %v706, %v762
      %v773 = vadd.f32 %v707, %v764
      %s774 = scalar_lea.vmem %s351, 32
      %v775 = vld [vmem:[%s774] sm:$0xff]
      %v776 = vld [vmem:[%s774 + $0x10] sm:$0xff]
      %v777 = vld [vmem:[%s774 + $0x20] sm:$0xff]
      %v778 = vld [vmem:[%s774 + $0x30] sm:$0xff]
      %v779 = vld [vmem:[%s774 + $0x40] sm:$0xff]
      %v780 = vld [vmem:[%s774 + $0x50] sm:$0xff]
      %v781 = vld [vmem:[%s774 + $0x60] sm:$0xff]
      %v782 = vld [vmem:[%s774 + $0x70] sm:$0xff]
      %v783 = vpack.c.bf16 %v776, %v775
      %v784 = vpack.c.bf16 %v778, %v777
      %v785 = vpack.c.bf16 %v780, %v779
      %v786 = vpack.c.bf16 %v782, %v781
      %s787 = scalar_lea.vmem %s3, 12
      %v788 = vld [vmem:[%s787] sm:$0x3]
      %v790 = vsel %vm419, %v783, 0
      %v793 = vsel %vm419, %v784, 0
      %v796 = vsel %vm419, %v785, 0
      %v799 = vsel %vm419, %v786, 0
      %v802 = vsel %vm432, %v788, 0
      %804 = vmatpush.bf16.msra.mxu0 0
      %805 = vmatpush.bf16.msra.mxu0 0
      %806 = vmatpush.bf16.msra.mxu0 0
      %807 = vmatpush.bf16.msra.mxu0 0
      %808 = vmatpush.bf16.msra.mxu0 0
      %809 = vmatpush.bf16.msra.mxu0 0
      %810 = vmatpush.bf16.msra.mxu0 0
      %811 = vmatpush.bf16.msra.mxu0 %v802
      %812 = vmatmul.bf16.gmra.mxu0 %v790
      %v813 = vpop.f32.mrf.mxu0
      %v814 = vadd.f32 0.0, %v813
      %v815 = vpop.f32.mrf.mxu0
      %v816 = vadd.f32 0.0, %v815
      %817 = vmatmul.bf16.gmra.mxu0 %v793
      %v818 = vpop.f32.mrf.mxu0
      %v819 = vadd.f32 0.0, %v818
      %v820 = vpop.f32.mrf.mxu0
      %v821 = vadd.f32 0.0, %v820
      %822 = vmatmul.bf16.gmra.mxu0 %v796
      %v823 = vpop.f32.mrf.mxu0
      %v824 = vadd.f32 0.0, %v823
      %v825 = vpop.f32.mrf.mxu0
      %v826 = vadd.f32 0.0, %v825
      %827 = vmatmul.bf16.gmra.mxu0 %v799
      %v828 = vpop.f32.mrf.mxu0
      %v829 = vadd.f32 0.0, %v828
      %v830 = vpop.f32.mrf.mxu0
      %v831 = vadd.f32 0.0, %v830
      %832 = vdwg.mxu0
      %v833 = vadd.f32 %v766, %v814
      %v834 = vadd.f32 %v767, %v816
      %v835 = vadd.f32 %v768, %v819
      %v836 = vadd.f32 %v769, %v821
      %v837 = vadd.f32 %v770, %v824
      %v838 = vadd.f32 %v771, %v826
      %v839 = vadd.f32 %v772, %v829
      %v840 = vadd.f32 %v773, %v831
      %v841 = vld [vmem:[%s774 + $0x1] sm:$0xff]
      %v842 = vld [vmem:[%s774 + $0x11] sm:$0xff]
      %v843 = vld [vmem:[%s774 + $0x21] sm:$0xff]
      %v844 = vld [vmem:[%s774 + $0x31] sm:$0xff]
      %v845 = vld [vmem:[%s774 + $0x41] sm:$0xff]
      %v846 = vld [vmem:[%s774 + $0x51] sm:$0xff]
      %v847 = vld [vmem:[%s774 + $0x61] sm:$0xff]
      %v848 = vld [vmem:[%s774 + $0x71] sm:$0xff]
      %v849 = vpack.c.bf16 %v842, %v841
      %v850 = vpack.c.bf16 %v844, %v843
      %v851 = vpack.c.bf16 %v846, %v845
      %v852 = vpack.c.bf16 %v848, %v847
      %s853 = scalar_lea.vmem %s3, 14
      %v854 = vld [vmem:[%s853] sm:$0x3]
      %v856 = vsel %vm419, %v849, 0
      %v859 = vsel %vm419, %v850, 0
      %v862 = vsel %vm419, %v851, 0
      %v865 = vsel %vm419, %v852, 0
      %v868 = vsel %vm432, %v854, 0
      %870 = vmatpush.bf16.msra.mxu0 0
      %871 = vmatpush.bf16.msra.mxu0 0
      %872 = vmatpush.bf16.msra.mxu0 0
      %873 = vmatpush.bf16.msra.mxu0 0
      %874 = vmatpush.bf16.msra.mxu0 0
      %875 = vmatpush.bf16.msra.mxu0 0
      %876 = vmatpush.bf16.msra.mxu0 0
      %877 = vmatpush.bf16.msra.mxu0 %v868
      %878 = vmatmul.bf16.gmra.mxu0 %v856
      %v879 = vpop.f32.mrf.mxu0
      %v880 = vadd.f32 0.0, %v879
      %v881 = vpop.f32.mrf.mxu0
      %v882 = vadd.f32 0.0, %v881
      %883 = vmatmul.bf16.gmra.mxu0 %v859
      %v884 = vpop.f32.mrf.mxu0
      %v885 = vadd.f32 0.0, %v884
      %v886 = vpop.f32.mrf.mxu0
      %v887 = vadd.f32 0.0, %v886
      %888 = vmatmul.bf16.gmra.mxu0 %v862
      %v889 = vpop.f32.mrf.mxu0
      %v890 = vadd.f32 0.0, %v889
      %v891 = vpop.f32.mrf.mxu0
      %v892 = vadd.f32 0.0, %v891
      %893 = vmatmul.bf16.gmra.mxu0 %v865
      %v894 = vpop.f32.mrf.mxu0
      %v895 = vadd.f32 0.0, %v894
      %v896 = vpop.f32.mrf.mxu0
      %v897 = vadd.f32 0.0, %v896
      %898 = vdwg.mxu0
      %v899 = vadd.f32 %v833, %v880
      %v900 = vadd.f32 %v834, %v882
      %v901 = vadd.f32 %v835, %v885
      %v902 = vadd.f32 %v836, %v887
      %v903 = vadd.f32 %v837, %v890
      %v904 = vadd.f32 %v838, %v892
      %v905 = vadd.f32 %v839, %v895
      %v906 = vadd.f32 %v840, %v897
      %v907 = vld [vmem:[%s774 + $0x2] sm:$0xff]
      %v908 = vld [vmem:[%s774 + $0x12] sm:$0xff]
      %v909 = vld [vmem:[%s774 + $0x22] sm:$0xff]
      %v910 = vld [vmem:[%s774 + $0x32] sm:$0xff]
      %v911 = vld [vmem:[%s774 + $0x42] sm:$0xff]
      %v912 = vld [vmem:[%s774 + $0x52] sm:$0xff]
      %v913 = vld [vmem:[%s774 + $0x62] sm:$0xff]
      %v914 = vld [vmem:[%s774 + $0x72] sm:$0xff]
      %v915 = vpack.c.bf16 %v908, %v907
      %v916 = vpack.c.bf16 %v910, %v909
      %v917 = vpack.c.bf16 %v912, %v911
      %v918 = vpack.c.bf16 %v914, %v913
      %s919 = scalar_lea.vmem %s3, 16
      %v920 = vld [vmem:[%s919] sm:$0x3]
      %v922 = vsel %vm419, %v915, 0
      %v925 = vsel %vm419, %v916, 0
      %v928 = vsel %vm419, %v917, 0
      %v931 = vsel %vm419, %v918, 0
      %v934 = vsel %vm432, %v920, 0
      %936 = vmatpush.bf16.msra.mxu0 0
      %937 = vmatpush.bf16.msra.mxu0 0
      %938 = vmatpush.bf16.msra.mxu0 0
      %939 = vmatpush.bf16.msra.mxu0 0
      %940 = vmatpush.bf16.msra.mxu0 0
      %941 = vmatpush.bf16.msra.mxu0 0
      %942 = vmatpush.bf16.msra.mxu0 0
      %943 = vmatpush.bf16.msra.mxu0 %v934
      %944 = vmatmul.bf16.gmra.mxu0 %v922
      %v945 = vpop.f32.mrf.mxu0
      %v946 = vadd.f32 0.0, %v945
      %v947 = vpop.f32.mrf.mxu0
      %v948 = vadd.f32 0.0, %v947
      %949 = vmatmul.bf16.gmra.mxu0 %v925
      %v950 = vpop.f32.mrf.mxu0
      %v951 = vadd.f32 0.0, %v950
      %v952 = vpop.f32.mrf.mxu0
      %v953 = vadd.f32 0.0, %v952
      %954 = vmatmul.bf16.gmra.mxu0 %v928
      %v955 = vpop.f32.mrf.mxu0
      %v956 = vadd.f32 0.0, %v955
      %v957 = vpop.f32.mrf.mxu0
      %v958 = vadd.f32 0.0, %v957
      %959 = vmatmul.bf16.gmra.mxu0 %v931
      %v960 = vpop.f32.mrf.mxu0
      %v961 = vadd.f32 0.0, %v960
      %v962 = vpop.f32.mrf.mxu0
      %v963 = vadd.f32 0.0, %v962
      %964 = vdwg.mxu0
      %v965 = vadd.f32 %v899, %v946
      %v966 = vadd.f32 %v900, %v948
      %v967 = vadd.f32 %v901, %v951
      %v968 = vadd.f32 %v902, %v953
      %v969 = vadd.f32 %v903, %v956
      %v970 = vadd.f32 %v904, %v958
      %v971 = vadd.f32 %v905, %v961
      %v972 = vadd.f32 %v906, %v963
      %v973 = vld [vmem:[%s361] sm:$0xff]
      %v974 = vld [vmem:[%s361 + $0x10] sm:$0xff]
      %v975 = vld [vmem:[%s361 + $0x20] sm:$0xff]
      %v976 = vld [vmem:[%s361 + $0x30] sm:$0xff]
      %v977 = vld [vmem:[%s361 + $0x40] sm:$0xff]
      %v978 = vld [vmem:[%s361 + $0x50] sm:$0xff]
      %v979 = vld [vmem:[%s361 + $0x60] sm:$0xff]
      %v980 = vld [vmem:[%s361 + $0x70] sm:$0xff]
      %v981 = vpack.c.bf16 %v974, %v973
      %v982 = vpack.c.bf16 %v976, %v975
      %v983 = vpack.c.bf16 %v978, %v977
      %v984 = vpack.c.bf16 %v980, %v979
      %s985 = scalar_lea.vmem %s3, 18
      %v986 = vld [vmem:[%s985] sm:$0x3]
      %v988 = vsel %vm419, %v981, 0
      %v991 = vsel %vm419, %v982, 0
      %v994 = vsel %vm419, %v983, 0
      %v997 = vsel %vm419, %v984, 0
      %v1000 = vsel %vm432, %v986, 0
      %1002 = vmatpush.bf16.msra.mxu0 0
      %1003 = vmatpush.bf16.msra.mxu0 0
      %1004 = vmatpush.bf16.msra.mxu0 0
      %1005 = vmatpush.bf16.msra.mxu0 0
      %1006 = vmatpush.bf16.msra.mxu0 0
      %1007 = vmatpush.bf16.msra.mxu0 0
      %1008 = vmatpush.bf16.msra.mxu0 0
      %1009 = vmatpush.bf16.msra.mxu0 %v1000
      %1010 = vmatmul.bf16.gmra.mxu0 %v988
      %v1011 = vpop.f32.mrf.mxu0
      %v1012 = vadd.f32 0.0, %v1011
      %v1013 = vpop.f32.mrf.mxu0
      %v1014 = vadd.f32 0.0, %v1013
      %1015 = vmatmul.bf16.gmra.mxu0 %v991
      %v1016 = vpop.f32.mrf.mxu0
      %v1017 = vadd.f32 0.0, %v1016
      %v1018 = vpop.f32.mrf.mxu0
      %v1019 = vadd.f32 0.0, %v1018
      %1020 = vmatmul.bf16.gmra.mxu0 %v994
      %v1021 = vpop.f32.mrf.mxu0
      %v1022 = vadd.f32 0.0, %v1021
      %v1023 = vpop.f32.mrf.mxu0
      %v1024 = vadd.f32 0.0, %v1023
      %1025 = vmatmul.bf16.gmra.mxu0 %v997
      %v1026 = vpop.f32.mrf.mxu0
      %v1027 = vadd.f32 0.0, %v1026
      %v1028 = vpop.f32.mrf.mxu0
      %v1029 = vadd.f32 0.0, %v1028
      %1030 = vdwg.mxu0
      %v1031 = vadd.f32 %v965, %v1012
      %v1032 = vadd.f32 %v966, %v1014
      %v1033 = vadd.f32 %v967, %v1017
      %v1034 = vadd.f32 %v968, %v1019
      %v1035 = vadd.f32 %v969, %v1022
      %v1036 = vadd.f32 %v970, %v1024
      %v1037 = vadd.f32 %v971, %v1027
      %v1038 = vadd.f32 %v972, %v1029
      %v1039 = vld [vmem:[%s361 + $0x1] sm:$0xff]
      %v1040 = vld [vmem:[%s361 + $0x11] sm:$0xff]
      %v1041 = vld [vmem:[%s361 + $0x21] sm:$0xff]
      %v1042 = vld [vmem:[%s361 + $0x31] sm:$0xff]
      %v1043 = vld [vmem:[%s361 + $0x41] sm:$0xff]
      %v1044 = vld [vmem:[%s361 + $0x51] sm:$0xff]
      %v1045 = vld [vmem:[%s361 + $0x61] sm:$0xff]
      %v1046 = vld [vmem:[%s361 + $0x71] sm:$0xff]
      %v1047 = vpack.c.bf16 %v1040, %v1039
      %v1048 = vpack.c.bf16 %v1042, %v1041
      %v1049 = vpack.c.bf16 %v1044, %v1043
      %v1050 = vpack.c.bf16 %v1046, %v1045
      %s1051 = scalar_lea.vmem %s3, 20
      %v1052 = vld [vmem:[%s1051] sm:$0x3]
      %v1054 = vsel %vm419, %v1047, 0
      %v1057 = vsel %vm419, %v1048, 0
      %v1060 = vsel %vm419, %v1049, 0
      %v1063 = vsel %vm419, %v1050, 0
      %v1066 = vsel %vm432, %v1052, 0
      %1068 = vmatpush.bf16.msra.mxu0 0
      %1069 = vmatpush.bf16.msra.mxu0 0
      %1070 = vmatpush.bf16.msra.mxu0 0
      %1071 = vmatpush.bf16.msra.mxu0 0
      %1072 = vmatpush.bf16.msra.mxu0 0
      %1073 = vmatpush.bf16.msra.mxu0 0
      %1074 = vmatpush.bf16.msra.mxu0 0
      %1075 = vmatpush.bf16.msra.mxu0 %v1066
      %1076 = vmatmul.bf16.gmra.mxu0 %v1054
      %v1077 = vpop.f32.mrf.mxu0
      %v1078 = vadd.f32 0.0, %v1077
      %v1079 = vpop.f32.mrf.mxu0
      %v1080 = vadd.f32 0.0, %v1079
      %1081 = vmatmul.bf16.gmra.mxu0 %v1057
      %v1082 = vpop.f32.mrf.mxu0
      %v1083 = vadd.f32 0.0, %v1082
      %v1084 = vpop.f32.mrf.mxu0
      %v1085 = vadd.f32 0.0, %v1084
      %1086 = vmatmul.bf16.gmra.mxu0 %v1060
      %v1087 = vpop.f32.mrf.mxu0
      %v1088 = vadd.f32 0.0, %v1087
      %v1089 = vpop.f32.mrf.mxu0
      %v1090 = vadd.f32 0.0, %v1089
      %1091 = vmatmul.bf16.gmra.mxu0 %v1063
      %v1092 = vpop.f32.mrf.mxu0
      %v1093 = vadd.f32 0.0, %v1092
      %v1094 = vpop.f32.mrf.mxu0
      %v1095 = vadd.f32 0.0, %v1094
      %1096 = vdwg.mxu0
      %v1097 = vadd.f32 %v1031, %v1078
      %v1098 = vadd.f32 %v1032, %v1080
      %v1099 = vadd.f32 %v1033, %v1083
      %v1100 = vadd.f32 %v1034, %v1085
      %v1101 = vadd.f32 %v1035, %v1088
      %v1102 = vadd.f32 %v1036, %v1090
      %v1103 = vadd.f32 %v1037, %v1093
      %v1104 = vadd.f32 %v1038, %v1095
      %v1105 = vld [vmem:[%s361 + $0x2] sm:$0xff]
      %v1106 = vld [vmem:[%s361 + $0x12] sm:$0xff]
      %v1107 = vld [vmem:[%s361 + $0x22] sm:$0xff]
      %v1108 = vld [vmem:[%s361 + $0x32] sm:$0xff]
      %v1109 = vld [vmem:[%s361 + $0x42] sm:$0xff]
      %v1110 = vld [vmem:[%s361 + $0x52] sm:$0xff]
      %v1111 = vld [vmem:[%s361 + $0x62] sm:$0xff]
      %v1112 = vld [vmem:[%s361 + $0x72] sm:$0xff]
      %v1113 = vpack.c.bf16 %v1106, %v1105
      %v1114 = vpack.c.bf16 %v1108, %v1107
      %v1115 = vpack.c.bf16 %v1110, %v1109
      %v1116 = vpack.c.bf16 %v1112, %v1111
      %s1117 = scalar_lea.vmem %s3, 22
      %v1118 = vld [vmem:[%s1117] sm:$0x3]
      %v1120 = vsel %vm419, %v1113, 0
      %v1123 = vsel %vm419, %v1114, 0
      %v1126 = vsel %vm419, %v1115, 0
      %v1129 = vsel %vm419, %v1116, 0
      %v1132 = vsel %vm432, %v1118, 0
      %1134 = vmatpush.bf16.msra.mxu0 0
      %1135 = vmatpush.bf16.msra.mxu0 0
      %1136 = vmatpush.bf16.msra.mxu0 0
      %1137 = vmatpush.bf16.msra.mxu0 0
      %1138 = vmatpush.bf16.msra.mxu0 0
      %1139 = vmatpush.bf16.msra.mxu0 0
      %1140 = vmatpush.bf16.msra.mxu0 0
      %1141 = vmatpush.bf16.msra.mxu0 %v1132
      %1142 = vmatmul.bf16.gmra.mxu0 %v1120
      %v1143 = vpop.f32.mrf.mxu0
      %v1144 = vadd.f32 0.0, %v1143
      %v1145 = vpop.f32.mrf.mxu0
      %v1146 = vadd.f32 0.0, %v1145
      %1147 = vmatmul.bf16.gmra.mxu0 %v1123
      %v1148 = vpop.f32.mrf.mxu0
      %v1149 = vadd.f32 0.0, %v1148
      %v1150 = vpop.f32.mrf.mxu0
      %v1151 = vadd.f32 0.0, %v1150
      %1152 = vmatmul.bf16.gmra.mxu0 %v1126
      %v1153 = vpop.f32.mrf.mxu0
      %v1154 = vadd.f32 0.0, %v1153
      %v1155 = vpop.f32.mrf.mxu0
      %v1156 = vadd.f32 0.0, %v1155
      %1157 = vmatmul.bf16.gmra.mxu0 %v1129
      %v1158 = vpop.f32.mrf.mxu0
      %v1159 = vadd.f32 0.0, %v1158
      %v1160 = vpop.f32.mrf.mxu0
      %v1161 = vadd.f32 0.0, %v1160
      %1162 = vdwg.mxu0
      %v1163 = vadd.f32 %v1097, %v1144
      %v1164 = vadd.f32 %v1098, %v1146
      %v1165 = vadd.f32 %v1099, %v1149
      %v1166 = vadd.f32 %v1100, %v1151
      %v1167 = vadd.f32 %v1101, %v1154
      %v1168 = vadd.f32 %v1102, %v1156
      %v1169 = vadd.f32 %v1103, %v1159
      %v1170 = vadd.f32 %v1104, %v1161
      %s1171 = scalar_lea.vmem %s361, 16
      %v1172 = vld [vmem:[%s1171] sm:$0xff]
      %v1173 = vld [vmem:[%s1171 + $0x10] sm:$0xff]
      %v1174 = vld [vmem:[%s1171 + $0x20] sm:$0xff]
      %v1175 = vld [vmem:[%s1171 + $0x30] sm:$0xff]
      %v1176 = vld [vmem:[%s1171 + $0x40] sm:$0xff]
      %v1177 = vld [vmem:[%s1171 + $0x50] sm:$0xff]
      %v1178 = vld [vmem:[%s1171 + $0x60] sm:$0xff]
      %v1179 = vld [vmem:[%s1171 + $0x70] sm:$0xff]
      %v1180 = vpack.c.bf16 %v1173, %v1172
      %v1181 = vpack.c.bf16 %v1175, %v1174
      %v1182 = vpack.c.bf16 %v1177, %v1176
      %v1183 = vpack.c.bf16 %v1179, %v1178
      %s1184 = scalar_lea.vmem %s3, 24
      %v1185 = vld [vmem:[%s1184] sm:$0x3]
      %v1187 = vsel %vm419, %v1180, 0
      %v1190 = vsel %vm419, %v1181, 0
      %v1193 = vsel %vm419, %v1182, 0
      %v1196 = vsel %vm419, %v1183, 0
      %v1199 = vsel %vm432, %v1185, 0
      %1201 = vmatpush.bf16.msra.mxu0 0
      %1202 = vmatpush.bf16.msra.mxu0 0
      %1203 = vmatpush.bf16.msra.mxu0 0
      %1204 = vmatpush.bf16.msra.mxu0 0
      %1205 = vmatpush.bf16.msra.mxu0 0
      %1206 = vmatpush.bf16.msra.mxu0 0
      %1207 = vmatpush.bf16.msra.mxu0 0
      %1208 = vmatpush.bf16.msra.mxu0 %v1199
      %1209 = vmatmul.bf16.gmra.mxu0 %v1187
      %v1210 = vpop.f32.mrf.mxu0
      %v1211 = vadd.f32 0.0, %v1210
      %v1212 = vpop.f32.mrf.mxu0
      %v1213 = vadd.f32 0.0, %v1212
      %1214 = vmatmul.bf16.gmra.mxu0 %v1190
      %v1215 = vpop.f32.mrf.mxu0
      %v1216 = vadd.f32 0.0, %v1215
      %v1217 = vpop.f32.mrf.mxu0
      %v1218 = vadd.f32 0.0, %v1217
      %1219 = vmatmul.bf16.gmra.mxu0 %v1193
      %v1220 = vpop.f32.mrf.mxu0
      %v1221 = vadd.f32 0.0, %v1220
      %v1222 = vpop.f32.mrf.mxu0
      %v1223 = vadd.f32 0.0, %v1222
      %1224 = vmatmul.bf16.gmra.mxu0 %v1196
      %v1225 = vpop.f32.mrf.mxu0
      %v1226 = vadd.f32 0.0, %v1225
      %v1227 = vpop.f32.mrf.mxu0
      %v1228 = vadd.f32 0.0, %v1227
      %1229 = vdwg.mxu0
      %v1230 = vadd.f32 %v1163, %v1211
      %v1231 = vadd.f32 %v1164, %v1213
      %v1232 = vadd.f32 %v1165, %v1216
      %v1233 = vadd.f32 %v1166, %v1218
      %v1234 = vadd.f32 %v1167, %v1221
      %v1235 = vadd.f32 %v1168, %v1223
      %v1236 = vadd.f32 %v1169, %v1226
      %v1237 = vadd.f32 %v1170, %v1228
      %v1238 = vld [vmem:[%s1171 + $0x1] sm:$0xff]
      %v1239 = vld [vmem:[%s1171 + $0x11] sm:$0xff]
      %v1240 = vld [vmem:[%s1171 + $0x21] sm:$0xff]
      %v1241 = vld [vmem:[%s1171 + $0x31] sm:$0xff]
      %v1242 = vld [vmem:[%s1171 + $0x41] sm:$0xff]
      %v1243 = vld [vmem:[%s1171 + $0x51] sm:$0xff]
      %v1244 = vld [vmem:[%s1171 + $0x61] sm:$0xff]
      %v1245 = vld [vmem:[%s1171 + $0x71] sm:$0xff]
      %v1246 = vpack.c.bf16 %v1239, %v1238
      %v1247 = vpack.c.bf16 %v1241, %v1240
      %v1248 = vpack.c.bf16 %v1243, %v1242
      %v1249 = vpack.c.bf16 %v1245, %v1244
      %s1250 = scalar_lea.vmem %s3, 26
      %v1251 = vld [vmem:[%s1250] sm:$0x3]
      %v1253 = vsel %vm419, %v1246, 0
      %v1256 = vsel %vm419, %v1247, 0
      %v1259 = vsel %vm419, %v1248, 0
      %v1262 = vsel %vm419, %v1249, 0
      %v1265 = vsel %vm432, %v1251, 0
      %1267 = vmatpush.bf16.msra.mxu0 0
      %1268 = vmatpush.bf16.msra.mxu0 0
      %1269 = vmatpush.bf16.msra.mxu0 0
      %1270 = vmatpush.bf16.msra.mxu0 0
      %1271 = vmatpush.bf16.msra.mxu0 0
      %1272 = vmatpush.bf16.msra.mxu0 0
      %1273 = vmatpush.bf16.msra.mxu0 0
      %1274 = vmatpush.bf16.msra.mxu0 %v1265
      %1275 = vmatmul.bf16.gmra.mxu0 %v1253
      %v1276 = vpop.f32.mrf.mxu0
      %v1277 = vadd.f32 0.0, %v1276
      %v1278 = vpop.f32.mrf.mxu0
      %v1279 = vadd.f32 0.0, %v1278
      %1280 = vmatmul.bf16.gmra.mxu0 %v1256
      %v1281 = vpop.f32.mrf.mxu0
      %v1282 = vadd.f32 0.0, %v1281
      %v1283 = vpop.f32.mrf.mxu0
      %v1284 = vadd.f32 0.0, %v1283
      %1285 = vmatmul.bf16.gmra.mxu0 %v1259
      %v1286 = vpop.f32.mrf.mxu0
      %v1287 = vadd.f32 0.0, %v1286
      %v1288 = vpop.f32.mrf.mxu0
      %v1289 = vadd.f32 0.0, %v1288
      %1290 = vmatmul.bf16.gmra.mxu0 %v1262
      %v1291 = vpop.f32.mrf.mxu0
      %v1292 = vadd.f32 0.0, %v1291
      %v1293 = vpop.f32.mrf.mxu0
      %v1294 = vadd.f32 0.0, %v1293
      %1295 = vdwg.mxu0
      %v1296 = vadd.f32 %v1230, %v1277
      %v1297 = vadd.f32 %v1231, %v1279
      %v1298 = vadd.f32 %v1232, %v1282
      %v1299 = vadd.f32 %v1233, %v1284
      %v1300 = vadd.f32 %v1234, %v1287
      %v1301 = vadd.f32 %v1235, %v1289
      %v1302 = vadd.f32 %v1236, %v1292
      %v1303 = vadd.f32 %v1237, %v1294
      %v1304 = vld [vmem:[%s1171 + $0x2] sm:$0xff]
      %v1305 = vld [vmem:[%s1171 + $0x12] sm:$0xff]
      %v1306 = vld [vmem:[%s1171 + $0x22] sm:$0xff]
      %v1307 = vld [vmem:[%s1171 + $0x32] sm:$0xff]
      %v1308 = vld [vmem:[%s1171 + $0x42] sm:$0xff]
      %v1309 = vld [vmem:[%s1171 + $0x52] sm:$0xff]
      %v1310 = vld [vmem:[%s1171 + $0x62] sm:$0xff]
      %v1311 = vld [vmem:[%s1171 + $0x72] sm:$0xff]
      %v1312 = vpack.c.bf16 %v1305, %v1304
      %v1313 = vpack.c.bf16 %v1307, %v1306
      %v1314 = vpack.c.bf16 %v1309, %v1308
      %v1315 = vpack.c.bf16 %v1311, %v1310
      %s1316 = scalar_lea.vmem %s3, 28
      %v1317 = vld [vmem:[%s1316] sm:$0x3]
      %v1319 = vsel %vm419, %v1312, 0
      %v1322 = vsel %vm419, %v1313, 0
      %v1325 = vsel %vm419, %v1314, 0
      %v1328 = vsel %vm419, %v1315, 0
      %v1331 = vsel %vm432, %v1317, 0
      %1333 = vmatpush.bf16.msra.mxu0 0
      %1334 = vmatpush.bf16.msra.mxu0 0
      %1335 = vmatpush.bf16.msra.mxu0 0
      %1336 = vmatpush.bf16.msra.mxu0 0
      %1337 = vmatpush.bf16.msra.mxu0 0
      %1338 = vmatpush.bf16.msra.mxu0 0
      %1339 = vmatpush.bf16.msra.mxu0 0
      %1340 = vmatpush.bf16.msra.mxu0 %v1331
      %1341 = vmatmul.bf16.gmra.mxu0 %v1319
      %v1342 = vpop.f32.mrf.mxu0
      %v1343 = vadd.f32 0.0, %v1342
      %v1344 = vpop.f32.mrf.mxu0
      %v1345 = vadd.f32 0.0, %v1344
      %1346 = vmatmul.bf16.gmra.mxu0 %v1322
      %v1347 = vpop.f32.mrf.mxu0
      %v1348 = vadd.f32 0.0, %v1347
      %v1349 = vpop.f32.mrf.mxu0
      %v1350 = vadd.f32 0.0, %v1349
      %1351 = vmatmul.bf16.gmra.mxu0 %v1325
      %v1352 = vpop.f32.mrf.mxu0
      %v1353 = vadd.f32 0.0, %v1352
      %v1354 = vpop.f32.mrf.mxu0
      %v1355 = vadd.f32 0.0, %v1354
      %1356 = vmatmul.bf16.gmra.mxu0 %v1328
      %v1357 = vpop.f32.mrf.mxu0
      %v1358 = vadd.f32 0.0, %v1357
      %v1359 = vpop.f32.mrf.mxu0
      %v1360 = vadd.f32 0.0, %v1359
      %1361 = vdwg.mxu0
      %v1362 = vadd.f32 %v1296, %v1343
      %v1363 = vadd.f32 %v1297, %v1345
      %v1364 = vadd.f32 %v1298, %v1348
      %v1365 = vadd.f32 %v1299, %v1350
      %v1366 = vadd.f32 %v1300, %v1353
      %v1367 = vadd.f32 %v1301, %v1355
      %v1368 = vadd.f32 %v1302, %v1358
      %v1369 = vadd.f32 %v1303, %v1360
      %s1370 = scalar_lea.vmem %s361, 32
      %v1371 = vld [vmem:[%s1370] sm:$0xff]
      %v1372 = vld [vmem:[%s1370 + $0x10] sm:$0xff]
      %v1373 = vld [vmem:[%s1370 + $0x20] sm:$0xff]
      %v1374 = vld [vmem:[%s1370 + $0x30] sm:$0xff]
      %v1375 = vld [vmem:[%s1370 + $0x40] sm:$0xff]
      %v1376 = vld [vmem:[%s1370 + $0x50] sm:$0xff]
      %v1377 = vld [vmem:[%s1370 + $0x60] sm:$0xff]
      %v1378 = vld [vmem:[%s1370 + $0x70] sm:$0xff]
      %v1379 = vpack.c.bf16 %v1372, %v1371
      %v1380 = vpack.c.bf16 %v1374, %v1373
      %v1381 = vpack.c.bf16 %v1376, %v1375
      %v1382 = vpack.c.bf16 %v1378, %v1377
      %s1383 = scalar_lea.vmem %s3, 30
      %v1384 = vld [vmem:[%s1383] sm:$0x3]
      %v1386 = vsel %vm419, %v1379, 0
      %v1389 = vsel %vm419, %v1380, 0
      %v1392 = vsel %vm419, %v1381, 0
      %v1395 = vsel %vm419, %v1382, 0
      %v1398 = vsel %vm432, %v1384, 0
      %1400 = vmatpush.bf16.msra.mxu0 0
      %1401 = vmatpush.bf16.msra.mxu0 0
      %1402 = vmatpush.bf16.msra.mxu0 0
      %1403 = vmatpush.bf16.msra.mxu0 0
      %1404 = vmatpush.bf16.msra.mxu0 0
      %1405 = vmatpush.bf16.msra.mxu0 0
      %1406 = vmatpush.bf16.msra.mxu0 0
      %1407 = vmatpush.bf16.msra.mxu0 %v1398
      %1408 = vmatmul.bf16.gmra.mxu0 %v1386
      %v1409 = vpop.f32.mrf.mxu0
      %v1410 = vadd.f32 0.0, %v1409
      %v1411 = vpop.f32.mrf.mxu0
      %v1412 = vadd.f32 0.0, %v1411
      %1413 = vmatmul.bf16.gmra.mxu0 %v1389
      %v1414 = vpop.f32.mrf.mxu0
      %v1415 = vadd.f32 0.0, %v1414
      %v1416 = vpop.f32.mrf.mxu0
      %v1417 = vadd.f32 0.0, %v1416
      %1418 = vmatmul.bf16.gmra.mxu0 %v1392
      %v1419 = vpop.f32.mrf.mxu0
      %v1420 = vadd.f32 0.0, %v1419
      %v1421 = vpop.f32.mrf.mxu0
      %v1422 = vadd.f32 0.0, %v1421
      %1423 = vmatmul.bf16.gmra.mxu0 %v1395
      %v1424 = vpop.f32.mrf.mxu0
      %v1425 = vadd.f32 0.0, %v1424
      %v1426 = vpop.f32.mrf.mxu0
      %v1427 = vadd.f32 0.0, %v1426
      %1428 = vdwg.mxu0
      %v1429 = vadd.f32 %v1362, %v1410
      %v1430 = vadd.f32 %v1363, %v1412
      %v1431 = vadd.f32 %v1364, %v1415
      %v1432 = vadd.f32 %v1365, %v1417
      %v1433 = vadd.f32 %v1366, %v1420
      %v1434 = vadd.f32 %v1367, %v1422
      %v1435 = vadd.f32 %v1368, %v1425
      %v1436 = vadd.f32 %v1369, %v1427
      %v1437 = vld [vmem:[%s1370 + $0x1] sm:$0xff]
      %v1438 = vld [vmem:[%s1370 + $0x11] sm:$0xff]
      %v1439 = vld [vmem:[%s1370 + $0x21] sm:$0xff]
      %v1440 = vld [vmem:[%s1370 + $0x31] sm:$0xff]
      %v1441 = vld [vmem:[%s1370 + $0x41] sm:$0xff]
      %v1442 = vld [vmem:[%s1370 + $0x51] sm:$0xff]
      %v1443 = vld [vmem:[%s1370 + $0x61] sm:$0xff]
      %v1444 = vld [vmem:[%s1370 + $0x71] sm:$0xff]
      %v1445 = vpack.c.bf16 %v1438, %v1437
      %v1446 = vpack.c.bf16 %v1440, %v1439
      %v1447 = vpack.c.bf16 %v1442, %v1441
      %v1448 = vpack.c.bf16 %v1444, %v1443
      %s1449 = scalar_lea.vmem %s3, 32
      %v1450 = vld [vmem:[%s1449] sm:$0x3]
      %v1452 = vsel %vm419, %v1445, 0
      %v1455 = vsel %vm419, %v1446, 0
      %v1458 = vsel %vm419, %v1447, 0
      %v1461 = vsel %vm419, %v1448, 0
      %v1464 = vsel %vm432, %v1450, 0
      %1466 = vmatpush.bf16.msra.mxu0 0
      %1467 = vmatpush.bf16.msra.mxu0 0
      %1468 = vmatpush.bf16.msra.mxu0 0
      %1469 = vmatpush.bf16.msra.mxu0 0
      %1470 = vmatpush.bf16.msra.mxu0 0
      %1471 = vmatpush.bf16.msra.mxu0 0
      %1472 = vmatpush.bf16.msra.mxu0 0
      %1473 = vmatpush.bf16.msra.mxu0 %v1464
      %1474 = vmatmul.bf16.gmra.mxu0 %v1452
      %v1475 = vpop.f32.mrf.mxu0
      %v1476 = vadd.f32 0.0, %v1475
      %v1477 = vpop.f32.mrf.mxu0
      %v1478 = vadd.f32 0.0, %v1477
      %1479 = vmatmul.bf16.gmra.mxu0 %v1455
      %v1480 = vpop.f32.mrf.mxu0
      %v1481 = vadd.f32 0.0, %v1480
      %v1482 = vpop.f32.mrf.mxu0
      %v1483 = vadd.f32 0.0, %v1482
      %1484 = vmatmul.bf16.gmra.mxu0 %v1458
      %v1485 = vpop.f32.mrf.mxu0
      %v1486 = vadd.f32 0.0, %v1485
      %v1487 = vpop.f32.mrf.mxu0
      %v1488 = vadd.f32 0.0, %v1487
      %1489 = vmatmul.bf16.gmra.mxu0 %v1461
      %v1490 = vpop.f32.mrf.mxu0
      %v1491 = vadd.f32 0.0, %v1490
      %v1492 = vpop.f32.mrf.mxu0
      %v1493 = vadd.f32 0.0, %v1492
      %1494 = vdwg.mxu0
      %v1495 = vadd.f32 %v1429, %v1476
      %v1496 = vadd.f32 %v1430, %v1478
      %v1497 = vadd.f32 %v1431, %v1481
      %v1498 = vadd.f32 %v1432, %v1483
      %v1499 = vadd.f32 %v1433, %v1486
      %v1500 = vadd.f32 %v1434, %v1488
      %v1501 = vadd.f32 %v1435, %v1491
      %v1502 = vadd.f32 %v1436, %v1493
      %v1503 = vld [vmem:[%s1370 + $0x2] sm:$0xff]
      %v1504 = vld [vmem:[%s1370 + $0x12] sm:$0xff]
      %v1505 = vld [vmem:[%s1370 + $0x22] sm:$0xff]
      %v1506 = vld [vmem:[%s1370 + $0x32] sm:$0xff]
      %v1507 = vld [vmem:[%s1370 + $0x42] sm:$0xff]
      %v1508 = vld [vmem:[%s1370 + $0x52] sm:$0xff]
      %v1509 = vld [vmem:[%s1370 + $0x62] sm:$0xff]
      %v1510 = vld [vmem:[%s1370 + $0x72] sm:$0xff]
      %v1511 = vpack.c.bf16 %v1504, %v1503
      %v1512 = vpack.c.bf16 %v1506, %v1505
      %v1513 = vpack.c.bf16 %v1508, %v1507
      %v1514 = vpack.c.bf16 %v1510, %v1509
      %s1515 = scalar_lea.vmem %s3, 34
      %v1516 = vld [vmem:[%s1515] sm:$0x3]
      %v1518 = vsel %vm419, %v1511, 0
      %v1521 = vsel %vm419, %v1512, 0
      %v1524 = vsel %vm419, %v1513, 0
      %v1527 = vsel %vm419, %v1514, 0
      %v1530 = vsel %vm432, %v1516, 0
      %1532 = vmatpush.bf16.msra.mxu0 0
      %1533 = vmatpush.bf16.msra.mxu0 0
      %1534 = vmatpush.bf16.msra.mxu0 0
      %1535 = vmatpush.bf16.msra.mxu0 0
      %1536 = vmatpush.bf16.msra.mxu0 0
      %1537 = vmatpush.bf16.msra.mxu0 0
      %1538 = vmatpush.bf16.msra.mxu0 0
      %1539 = vmatpush.bf16.msra.mxu0 %v1530
      %1540 = vmatmul.bf16.gmra.mxu0 %v1518
      %v1541 = vpop.f32.mrf.mxu0
      %v1542 = vadd.f32 0.0, %v1541
      %v1543 = vpop.f32.mrf.mxu0
      %v1544 = vadd.f32 0.0, %v1543
      %1545 = vmatmul.bf16.gmra.mxu0 %v1521
      %v1546 = vpop.f32.mrf.mxu0
      %v1547 = vadd.f32 0.0, %v1546
      %v1548 = vpop.f32.mrf.mxu0
      %v1549 = vadd.f32 0.0, %v1548
      %1550 = vmatmul.bf16.gmra.mxu0 %v1524
      %v1551 = vpop.f32.mrf.mxu0
      %v1552 = vadd.f32 0.0, %v1551
      %v1553 = vpop.f32.mrf.mxu0
      %v1554 = vadd.f32 0.0, %v1553
      %1555 = vmatmul.bf16.gmra.mxu0 %v1527
      %v1556 = vpop.f32.mrf.mxu0
      %v1557 = vadd.f32 0.0, %v1556
      %v1558 = vpop.f32.mrf.mxu0
      %v1559 = vadd.f32 0.0, %v1558
      %1560 = vdwg.mxu0
      %v1561 = vadd.f32 %v1495, %v1542
      %v1562 = vadd.f32 %v1496, %v1544
      %v1563 = vadd.f32 %v1497, %v1547
      %v1564 = vadd.f32 %v1498, %v1549
      %v1565 = vadd.f32 %v1499, %v1552
      %v1566 = vadd.f32 %v1500, %v1554
      %v1567 = vadd.f32 %v1501, %v1557
      %v1568 = vadd.f32 %v1502, %v1559
      %v1569 = vld [vmem:[%s372] sm:$0xff]
      %v1570 = vld [vmem:[%s372 + $0x10] sm:$0xff]
      %v1571 = vld [vmem:[%s372 + $0x20] sm:$0xff]
      %v1572 = vld [vmem:[%s372 + $0x30] sm:$0xff]
      %v1573 = vld [vmem:[%s372 + $0x40] sm:$0xff]
      %v1574 = vld [vmem:[%s372 + $0x50] sm:$0xff]
      %v1575 = vld [vmem:[%s372 + $0x60] sm:$0xff]
      %v1576 = vld [vmem:[%s372 + $0x70] sm:$0xff]
      %v1577 = vpack.c.bf16 %v1570, %v1569
      %v1578 = vpack.c.bf16 %v1572, %v1571
      %v1579 = vpack.c.bf16 %v1574, %v1573
      %v1580 = vpack.c.bf16 %v1576, %v1575
      %s1581 = scalar_lea.vmem %s3, 36
      %v1582 = vld [vmem:[%s1581] sm:$0x3]
      %v1584 = vsel %vm419, %v1577, 0
      %v1587 = vsel %vm419, %v1578, 0
      %v1590 = vsel %vm419, %v1579, 0
      %v1593 = vsel %vm419, %v1580, 0
      %v1596 = vsel %vm432, %v1582, 0
      %1598 = vmatpush.bf16.msra.mxu0 0
      %1599 = vmatpush.bf16.msra.mxu0 0
      %1600 = vmatpush.bf16.msra.mxu0 0
      %1601 = vmatpush.bf16.msra.mxu0 0
      %1602 = vmatpush.bf16.msra.mxu0 0
      %1603 = vmatpush.bf16.msra.mxu0 0
      %1604 = vmatpush.bf16.msra.mxu0 0
      %1605 = vmatpush.bf16.msra.mxu0 %v1596
      %1606 = vmatmul.bf16.gmra.mxu0 %v1584
      %v1607 = vpop.f32.mrf.mxu0
      %v1608 = vadd.f32 0.0, %v1607
      %v1609 = vpop.f32.mrf.mxu0
      %v1610 = vadd.f32 0.0, %v1609
      %1611 = vmatmul.bf16.gmra.mxu0 %v1587
      %v1612 = vpop.f32.mrf.mxu0
      %v1613 = vadd.f32 0.0, %v1612
      %v1614 = vpop.f32.mrf.mxu0
      %v1615 = vadd.f32 0.0, %v1614
      %1616 = vmatmul.bf16.gmra.mxu0 %v1590
      %v1617 = vpop.f32.mrf.mxu0
      %v1618 = vadd.f32 0.0, %v1617
      %v1619 = vpop.f32.mrf.mxu0
      %v1620 = vadd.f32 0.0, %v1619
      %1621 = vmatmul.bf16.gmra.mxu0 %v1593
      %v1622 = vpop.f32.mrf.mxu0
      %v1623 = vadd.f32 0.0, %v1622
      %v1624 = vpop.f32.mrf.mxu0
      %v1625 = vadd.f32 0.0, %v1624
      %1626 = vdwg.mxu0
      %v1627 = vadd.f32 %v1561, %v1608
      %v1628 = vadd.f32 %v1562, %v1610
      %v1629 = vadd.f32 %v1563, %v1613
      %v1630 = vadd.f32 %v1564, %v1615
      %v1631 = vadd.f32 %v1565, %v1618
      %v1632 = vadd.f32 %v1566, %v1620
      %v1633 = vadd.f32 %v1567, %v1623
      %v1634 = vadd.f32 %v1568, %v1625
      %v1635 = vld [vmem:[%s372 + $0x1] sm:$0xff]
      %v1636 = vld [vmem:[%s372 + $0x11] sm:$0xff]
      %v1637 = vld [vmem:[%s372 + $0x21] sm:$0xff]
      %v1638 = vld [vmem:[%s372 + $0x31] sm:$0xff]
      %v1639 = vld [vmem:[%s372 + $0x41] sm:$0xff]
      %v1640 = vld [vmem:[%s372 + $0x51] sm:$0xff]
      %v1641 = vld [vmem:[%s372 + $0x61] sm:$0xff]
      %v1642 = vld [vmem:[%s372 + $0x71] sm:$0xff]
      %v1643 = vpack.c.bf16 %v1636, %v1635
      %v1644 = vpack.c.bf16 %v1638, %v1637
      %v1645 = vpack.c.bf16 %v1640, %v1639
      %v1646 = vpack.c.bf16 %v1642, %v1641
      %s1647 = scalar_lea.vmem %s3, 38
      %v1648 = vld [vmem:[%s1647] sm:$0x3]
      %v1650 = vsel %vm419, %v1643, 0
      %v1653 = vsel %vm419, %v1644, 0
      %v1656 = vsel %vm419, %v1645, 0
      %v1659 = vsel %vm419, %v1646, 0
      %v1662 = vsel %vm432, %v1648, 0
      %1664 = vmatpush.bf16.msra.mxu0 0
      %1665 = vmatpush.bf16.msra.mxu0 0
      %1666 = vmatpush.bf16.msra.mxu0 0
      %1667 = vmatpush.bf16.msra.mxu0 0
      %1668 = vmatpush.bf16.msra.mxu0 0
      %1669 = vmatpush.bf16.msra.mxu0 0
      %1670 = vmatpush.bf16.msra.mxu0 0
      %1671 = vmatpush.bf16.msra.mxu0 %v1662
      %1672 = vmatmul.bf16.gmra.mxu0 %v1650
      %v1673 = vpop.f32.mrf.mxu0
      %v1674 = vadd.f32 0.0, %v1673
      %v1675 = vpop.f32.mrf.mxu0
      %v1676 = vadd.f32 0.0, %v1675
      %1677 = vmatmul.bf16.gmra.mxu0 %v1653
      %v1678 = vpop.f32.mrf.mxu0
      %v1679 = vadd.f32 0.0, %v1678
      %v1680 = vpop.f32.mrf.mxu0
      %v1681 = vadd.f32 0.0, %v1680
      %1682 = vmatmul.bf16.gmra.mxu0 %v1656
      %v1683 = vpop.f32.mrf.mxu0
      %v1684 = vadd.f32 0.0, %v1683
      %v1685 = vpop.f32.mrf.mxu0
      %v1686 = vadd.f32 0.0, %v1685
      %1687 = vmatmul.bf16.gmra.mxu0 %v1659
      %v1688 = vpop.f32.mrf.mxu0
      %v1689 = vadd.f32 0.0, %v1688
      %v1690 = vpop.f32.mrf.mxu0
      %v1691 = vadd.f32 0.0, %v1690
      %1692 = vdwg.mxu0
      %v1693 = vadd.f32 %v1627, %v1674
      %v1694 = vadd.f32 %v1628, %v1676
      %v1695 = vadd.f32 %v1629, %v1679
      %v1696 = vadd.f32 %v1630, %v1681
      %v1697 = vadd.f32 %v1631, %v1684
      %v1698 = vadd.f32 %v1632, %v1686
      %v1699 = vadd.f32 %v1633, %v1689
      %v1700 = vadd.f32 %v1634, %v1691
      %v1701 = vld [vmem:[%s372 + $0x2] sm:$0xff]
      %v1702 = vld [vmem:[%s372 + $0x12] sm:$0xff]
      %v1703 = vld [vmem:[%s372 + $0x22] sm:$0xff]
      %v1704 = vld [vmem:[%s372 + $0x32] sm:$0xff]
      %v1705 = vld [vmem:[%s372 + $0x42] sm:$0xff]
      %v1706 = vld [vmem:[%s372 + $0x52] sm:$0xff]
      %v1707 = vld [vmem:[%s372 + $0x62] sm:$0xff]
      %v1708 = vld [vmem:[%s372 + $0x72] sm:$0xff]
      %v1709 = vpack.c.bf16 %v1702, %v1701
      %v1710 = vpack.c.bf16 %v1704, %v1703
      %v1711 = vpack.c.bf16 %v1706, %v1705
      %v1712 = vpack.c.bf16 %v1708, %v1707
      %s1713 = scalar_lea.vmem %s3, 40
      %v1714 = vld [vmem:[%s1713] sm:$0x3]
      %v1716 = vsel %vm419, %v1709, 0
      %v1719 = vsel %vm419, %v1710, 0
      %v1722 = vsel %vm419, %v1711, 0
      %v1725 = vsel %vm419, %v1712, 0
      %v1728 = vsel %vm432, %v1714, 0
      %1730 = vmatpush.bf16.msra.mxu0 0
      %1731 = vmatpush.bf16.msra.mxu0 0
      %1732 = vmatpush.bf16.msra.mxu0 0
      %1733 = vmatpush.bf16.msra.mxu0 0
      %1734 = vmatpush.bf16.msra.mxu0 0
      %1735 = vmatpush.bf16.msra.mxu0 0
      %1736 = vmatpush.bf16.msra.mxu0 0
      %1737 = vmatpush.bf16.msra.mxu0 %v1728
      %1738 = vmatmul.bf16.gmra.mxu0 %v1716
      %v1739 = vpop.f32.mrf.mxu0
      %v1740 = vadd.f32 0.0, %v1739
      %v1741 = vpop.f32.mrf.mxu0
      %v1742 = vadd.f32 0.0, %v1741
      %1743 = vmatmul.bf16.gmra.mxu0 %v1719
      %v1744 = vpop.f32.mrf.mxu0
      %v1745 = vadd.f32 0.0, %v1744
      %v1746 = vpop.f32.mrf.mxu0
      %v1747 = vadd.f32 0.0, %v1746
      %1748 = vmatmul.bf16.gmra.mxu0 %v1722
      %v1749 = vpop.f32.mrf.mxu0
      %v1750 = vadd.f32 0.0, %v1749
      %v1751 = vpop.f32.mrf.mxu0
      %v1752 = vadd.f32 0.0, %v1751
      %1753 = vmatmul.bf16.gmra.mxu0 %v1725
      %v1754 = vpop.f32.mrf.mxu0
      %v1755 = vadd.f32 0.0, %v1754
      %v1756 = vpop.f32.mrf.mxu0
      %v1757 = vadd.f32 0.0, %v1756
      %1758 = vdwg.mxu0
      %v1759 = vadd.f32 %v1693, %v1740
      %v1760 = vadd.f32 %v1694, %v1742
      %v1761 = vadd.f32 %v1695, %v1745
      %v1762 = vadd.f32 %v1696, %v1747
      %v1763 = vadd.f32 %v1697, %v1750
      %v1764 = vadd.f32 %v1698, %v1752
      %v1765 = vadd.f32 %v1699, %v1755
      %v1766 = vadd.f32 %v1700, %v1757
      %s1767 = scalar_lea.vmem %s372, 16
      %v1768 = vld [vmem:[%s1767] sm:$0xff]
      %v1769 = vld [vmem:[%s1767 + $0x10] sm:$0xff]
      %v1770 = vld [vmem:[%s1767 + $0x20] sm:$0xff]
      %v1771 = vld [vmem:[%s1767 + $0x30] sm:$0xff]
      %v1772 = vld [vmem:[%s1767 + $0x40] sm:$0xff]
      %v1773 = vld [vmem:[%s1767 + $0x50] sm:$0xff]
      %v1774 = vld [vmem:[%s1767 + $0x60] sm:$0xff]
      %v1775 = vld [vmem:[%s1767 + $0x70] sm:$0xff]
      %v1776 = vpack.c.bf16 %v1769, %v1768
      %v1777 = vpack.c.bf16 %v1771, %v1770
      %v1778 = vpack.c.bf16 %v1773, %v1772
      %v1779 = vpack.c.bf16 %v1775, %v1774
      %s1780 = scalar_lea.vmem %s3, 42
      %v1781 = vld [vmem:[%s1780] sm:$0x3]
      %v1783 = vsel %vm419, %v1776, 0
      %v1786 = vsel %vm419, %v1777, 0
      %v1789 = vsel %vm419, %v1778, 0
      %v1792 = vsel %vm419, %v1779, 0
      %v1795 = vsel %vm432, %v1781, 0
      %1797 = vmatpush.bf16.msra.mxu0 0
      %1798 = vmatpush.bf16.msra.mxu0 0
      %1799 = vmatpush.bf16.msra.mxu0 0
      %1800 = vmatpush.bf16.msra.mxu0 0
      %1801 = vmatpush.bf16.msra.mxu0 0
      %1802 = vmatpush.bf16.msra.mxu0 0
      %1803 = vmatpush.bf16.msra.mxu0 0
      %1804 = vmatpush.bf16.msra.mxu0 %v1795
      %1805 = vmatmul.bf16.gmra.mxu0 %v1783
      %v1806 = vpop.f32.mrf.mxu0
      %v1807 = vadd.f32 0.0, %v1806
      %v1808 = vpop.f32.mrf.mxu0
      %v1809 = vadd.f32 0.0, %v1808
      %1810 = vmatmul.bf16.gmra.mxu0 %v1786
      %v1811 = vpop.f32.mrf.mxu0
      %v1812 = vadd.f32 0.0, %v1811
      %v1813 = vpop.f32.mrf.mxu0
      %v1814 = vadd.f32 0.0, %v1813
      %1815 = vmatmul.bf16.gmra.mxu0 %v1789
      %v1816 = vpop.f32.mrf.mxu0
      %v1817 = vadd.f32 0.0, %v1816
      %v1818 = vpop.f32.mrf.mxu0
      %v1819 = vadd.f32 0.0, %v1818
      %1820 = vmatmul.bf16.gmra.mxu0 %v1792
      %v1821 = vpop.f32.mrf.mxu0
      %v1822 = vadd.f32 0.0, %v1821
      %v1823 = vpop.f32.mrf.mxu0
      %v1824 = vadd.f32 0.0, %v1823
      %1825 = vdwg.mxu0
      %v1826 = vadd.f32 %v1759, %v1807
      %v1827 = vadd.f32 %v1760, %v1809
      %v1828 = vadd.f32 %v1761, %v1812
      %v1829 = vadd.f32 %v1762, %v1814
      %v1830 = vadd.f32 %v1763, %v1817
      %v1831 = vadd.f32 %v1764, %v1819
      %v1832 = vadd.f32 %v1765, %v1822
      %v1833 = vadd.f32 %v1766, %v1824
      %v1834 = vld [vmem:[%s1767 + $0x1] sm:$0xff]
      %v1835 = vld [vmem:[%s1767 + $0x11] sm:$0xff]
      %v1836 = vld [vmem:[%s1767 + $0x21] sm:$0xff]
      %v1837 = vld [vmem:[%s1767 + $0x31] sm:$0xff]
      %v1838 = vld [vmem:[%s1767 + $0x41] sm:$0xff]
      %v1839 = vld [vmem:[%s1767 + $0x51] sm:$0xff]
      %v1840 = vld [vmem:[%s1767 + $0x61] sm:$0xff]
      %v1841 = vld [vmem:[%s1767 + $0x71] sm:$0xff]
      %v1842 = vpack.c.bf16 %v1835, %v1834
      %v1843 = vpack.c.bf16 %v1837, %v1836
      %v1844 = vpack.c.bf16 %v1839, %v1838
      %v1845 = vpack.c.bf16 %v1841, %v1840
      %s1846 = scalar_lea.vmem %s3, 44
      %v1847 = vld [vmem:[%s1846] sm:$0x3]
      %v1849 = vsel %vm419, %v1842, 0
      %v1852 = vsel %vm419, %v1843, 0
      %v1855 = vsel %vm419, %v1844, 0
      %v1858 = vsel %vm419, %v1845, 0
      %v1861 = vsel %vm432, %v1847, 0
      %1863 = vmatpush.bf16.msra.mxu0 0
      %1864 = vmatpush.bf16.msra.mxu0 0
      %1865 = vmatpush.bf16.msra.mxu0 0
      %1866 = vmatpush.bf16.msra.mxu0 0
      %1867 = vmatpush.bf16.msra.mxu0 0
      %1868 = vmatpush.bf16.msra.mxu0 0
      %1869 = vmatpush.bf16.msra.mxu0 0
      %1870 = vmatpush.bf16.msra.mxu0 %v1861
      %1871 = vmatmul.bf16.gmra.mxu0 %v1849
      %v1872 = vpop.f32.mrf.mxu0
      %v1873 = vadd.f32 0.0, %v1872
      %v1874 = vpop.f32.mrf.mxu0
      %v1875 = vadd.f32 0.0, %v1874
      %1876 = vmatmul.bf16.gmra.mxu0 %v1852
      %v1877 = vpop.f32.mrf.mxu0
      %v1878 = vadd.f32 0.0, %v1877
      %v1879 = vpop.f32.mrf.mxu0
      %v1880 = vadd.f32 0.0, %v1879
      %1881 = vmatmul.bf16.gmra.mxu0 %v1855
      %v1882 = vpop.f32.mrf.mxu0
      %v1883 = vadd.f32 0.0, %v1882
      %v1884 = vpop.f32.mrf.mxu0
      %v1885 = vadd.f32 0.0, %v1884
      %1886 = vmatmul.bf16.gmra.mxu0 %v1858
      %v1887 = vpop.f32.mrf.mxu0
      %v1888 = vadd.f32 0.0, %v1887
      %v1889 = vpop.f32.mrf.mxu0
      %v1890 = vadd.f32 0.0, %v1889
      %1891 = vdwg.mxu0
      %v1892 = vadd.f32 %v1826, %v1873
      %v1893 = vadd.f32 %v1827, %v1875
      %v1894 = vadd.f32 %v1828, %v1878
      %v1895 = vadd.f32 %v1829, %v1880
      %v1896 = vadd.f32 %v1830, %v1883
      %v1897 = vadd.f32 %v1831, %v1885
      %v1898 = vadd.f32 %v1832, %v1888
      %v1899 = vadd.f32 %v1833, %v1890
      %v1900 = vld [vmem:[%s1767 + $0x2] sm:$0xff]
      %v1901 = vld [vmem:[%s1767 + $0x12] sm:$0xff]
      %v1902 = vld [vmem:[%s1767 + $0x22] sm:$0xff]
      %v1903 = vld [vmem:[%s1767 + $0x32] sm:$0xff]
      %v1904 = vld [vmem:[%s1767 + $0x42] sm:$0xff]
      %v1905 = vld [vmem:[%s1767 + $0x52] sm:$0xff]
      %v1906 = vld [vmem:[%s1767 + $0x62] sm:$0xff]
      %v1907 = vld [vmem:[%s1767 + $0x72] sm:$0xff]
      %v1908 = vpack.c.bf16 %v1901, %v1900
      %v1909 = vpack.c.bf16 %v1903, %v1902
      %v1910 = vpack.c.bf16 %v1905, %v1904
      %v1911 = vpack.c.bf16 %v1907, %v1906
      %s1912 = scalar_lea.vmem %s3, 46
      %v1913 = vld [vmem:[%s1912] sm:$0x3]
      %v1915 = vsel %vm419, %v1908, 0
      %v1918 = vsel %vm419, %v1909, 0
      %v1921 = vsel %vm419, %v1910, 0
      %v1924 = vsel %vm419, %v1911, 0
      %v1927 = vsel %vm432, %v1913, 0
      %1929 = vmatpush.bf16.msra.mxu0 0
      %1930 = vmatpush.bf16.msra.mxu0 0
      %1931 = vmatpush.bf16.msra.mxu0 0
      %1932 = vmatpush.bf16.msra.mxu0 0
      %1933 = vmatpush.bf16.msra.mxu0 0
      %1934 = vmatpush.bf16.msra.mxu0 0
      %1935 = vmatpush.bf16.msra.mxu0 0
      %1936 = vmatpush.bf16.msra.mxu0 %v1927
      %1937 = vmatmul.bf16.gmra.mxu0 %v1915
      %v1938 = vpop.f32.mrf.mxu0
      %v1939 = vadd.f32 0.0, %v1938
      %v1940 = vpop.f32.mrf.mxu0
      %v1941 = vadd.f32 0.0, %v1940
      %1942 = vmatmul.bf16.gmra.mxu0 %v1918
      %v1943 = vpop.f32.mrf.mxu0
      %v1944 = vadd.f32 0.0, %v1943
      %v1945 = vpop.f32.mrf.mxu0
      %v1946 = vadd.f32 0.0, %v1945
      %1947 = vmatmul.bf16.gmra.mxu0 %v1921
      %v1948 = vpop.f32.mrf.mxu0
      %v1949 = vadd.f32 0.0, %v1948
      %v1950 = vpop.f32.mrf.mxu0
      %v1951 = vadd.f32 0.0, %v1950
      %1952 = vmatmul.bf16.gmra.mxu0 %v1924
      %v1953 = vpop.f32.mrf.mxu0
      %v1954 = vadd.f32 0.0, %v1953
      %v1955 = vpop.f32.mrf.mxu0
      %v1956 = vadd.f32 0.0, %v1955
      %1957 = vdwg.mxu0
      %v1958 = vadd.f32 %v1892, %v1939
      %v1959 = vadd.f32 %v1893, %v1941
      %v1960 = vadd.f32 %v1894, %v1944
      %v1961 = vadd.f32 %v1895, %v1946
      %v1962 = vadd.f32 %v1896, %v1949
      %v1963 = vadd.f32 %v1897, %v1951
      %v1964 = vadd.f32 %v1898, %v1954
      %v1965 = vadd.f32 %v1899, %v1956
      %s1966 = scalar_lea.vmem %s372, 32
      %v1967 = vld [vmem:[%s1966] sm:$0xff]
      %v1968 = vld [vmem:[%s1966 + $0x10] sm:$0xff]
      %v1969 = vld [vmem:[%s1966 + $0x20] sm:$0xff]
      %v1970 = vld [vmem:[%s1966 + $0x30] sm:$0xff]
      %v1971 = vld [vmem:[%s1966 + $0x40] sm:$0xff]
      %v1972 = vld [vmem:[%s1966 + $0x50] sm:$0xff]
      %v1973 = vld [vmem:[%s1966 + $0x60] sm:$0xff]
      %v1974 = vld [vmem:[%s1966 + $0x70] sm:$0xff]
      %v1975 = vpack.c.bf16 %v1968, %v1967
      %v1976 = vpack.c.bf16 %v1970, %v1969
      %v1977 = vpack.c.bf16 %v1972, %v1971
      %v1978 = vpack.c.bf16 %v1974, %v1973
      %s1979 = scalar_lea.vmem %s3, 48
      %v1980 = vld [vmem:[%s1979] sm:$0x3]
      %v1982 = vsel %vm419, %v1975, 0
      %v1985 = vsel %vm419, %v1976, 0
      %v1988 = vsel %vm419, %v1977, 0
      %v1991 = vsel %vm419, %v1978, 0
      %v1994 = vsel %vm432, %v1980, 0
      %1996 = vmatpush.bf16.msra.mxu0 0
      %1997 = vmatpush.bf16.msra.mxu0 0
      %1998 = vmatpush.bf16.msra.mxu0 0
      %1999 = vmatpush.bf16.msra.mxu0 0
      %2000 = vmatpush.bf16.msra.mxu0 0
      %2001 = vmatpush.bf16.msra.mxu0 0
      %2002 = vmatpush.bf16.msra.mxu0 0
      %2003 = vmatpush.bf16.msra.mxu0 %v1994
      %2004 = vmatmul.bf16.gmra.mxu0 %v1982
      %v2005 = vpop.f32.mrf.mxu0
      %v2006 = vadd.f32 0.0, %v2005
      %v2007 = vpop.f32.mrf.mxu0
      %v2008 = vadd.f32 0.0, %v2007
      %2009 = vmatmul.bf16.gmra.mxu0 %v1985
      %v2010 = vpop.f32.mrf.mxu0
      %v2011 = vadd.f32 0.0, %v2010
      %v2012 = vpop.f32.mrf.mxu0
      %v2013 = vadd.f32 0.0, %v2012
      %2014 = vmatmul.bf16.gmra.mxu0 %v1988
      %v2015 = vpop.f32.mrf.mxu0
      %v2016 = vadd.f32 0.0, %v2015
      %v2017 = vpop.f32.mrf.mxu0
      %v2018 = vadd.f32 0.0, %v2017
      %2019 = vmatmul.bf16.gmra.mxu0 %v1991
      %v2020 = vpop.f32.mrf.mxu0
      %v2021 = vadd.f32 0.0, %v2020
      %v2022 = vpop.f32.mrf.mxu0
      %v2023 = vadd.f32 0.0, %v2022
      %2024 = vdwg.mxu0
      %v2025 = vadd.f32 %v1958, %v2006
      %v2026 = vadd.f32 %v1959, %v2008
      %v2027 = vadd.f32 %v1960, %v2011
      %v2028 = vadd.f32 %v1961, %v2013
      %v2029 = vadd.f32 %v1962, %v2016
      %v2030 = vadd.f32 %v1963, %v2018
      %v2031 = vadd.f32 %v1964, %v2021
      %v2032 = vadd.f32 %v1965, %v2023
      %v2033 = vld [vmem:[%s1966 + $0x1] sm:$0xff]
      %v2034 = vld [vmem:[%s1966 + $0x11] sm:$0xff]
      %v2035 = vld [vmem:[%s1966 + $0x21] sm:$0xff]
      %v2036 = vld [vmem:[%s1966 + $0x31] sm:$0xff]
      %v2037 = vld [vmem:[%s1966 + $0x41] sm:$0xff]
      %v2038 = vld [vmem:[%s1966 + $0x51] sm:$0xff]
      %v2039 = vld [vmem:[%s1966 + $0x61] sm:$0xff]
      %v2040 = vld [vmem:[%s1966 + $0x71] sm:$0xff]
      %v2041 = vpack.c.bf16 %v2034, %v2033
      %v2042 = vpack.c.bf16 %v2036, %v2035
      %v2043 = vpack.c.bf16 %v2038, %v2037
      %v2044 = vpack.c.bf16 %v2040, %v2039
      %s2045 = scalar_lea.vmem %s3, 50
      %v2046 = vld [vmem:[%s2045] sm:$0x3]
      %v2048 = vsel %vm419, %v2041, 0
      %v2051 = vsel %vm419, %v2042, 0
      %v2054 = vsel %vm419, %v2043, 0
      %v2057 = vsel %vm419, %v2044, 0
      %v2060 = vsel %vm432, %v2046, 0
      %2062 = vmatpush.bf16.msra.mxu0 0
      %2063 = vmatpush.bf16.msra.mxu0 0
      %2064 = vmatpush.bf16.msra.mxu0 0
      %2065 = vmatpush.bf16.msra.mxu0 0
      %2066 = vmatpush.bf16.msra.mxu0 0
      %2067 = vmatpush.bf16.msra.mxu0 0
      %2068 = vmatpush.bf16.msra.mxu0 0
      %2069 = vmatpush.bf16.msra.mxu0 %v2060
      %2070 = vmatmul.bf16.gmra.mxu0 %v2048
      %v2071 = vpop.f32.mrf.mxu0
      %v2072 = vadd.f32 0.0, %v2071
      %v2073 = vpop.f32.mrf.mxu0
      %v2074 = vadd.f32 0.0, %v2073
      %2075 = vmatmul.bf16.gmra.mxu0 %v2051
      %v2076 = vpop.f32.mrf.mxu0
      %v2077 = vadd.f32 0.0, %v2076
      %v2078 = vpop.f32.mrf.mxu0
      %v2079 = vadd.f32 0.0, %v2078
      %2080 = vmatmul.bf16.gmra.mxu0 %v2054
      %v2081 = vpop.f32.mrf.mxu0
      %v2082 = vadd.f32 0.0, %v2081
      %v2083 = vpop.f32.mrf.mxu0
      %v2084 = vadd.f32 0.0, %v2083
      %2085 = vmatmul.bf16.gmra.mxu0 %v2057
      %v2086 = vpop.f32.mrf.mxu0
      %v2087 = vadd.f32 0.0, %v2086
      %v2088 = vpop.f32.mrf.mxu0
      %v2089 = vadd.f32 0.0, %v2088
      %2090 = vdwg.mxu0
      %v2091 = vadd.f32 %v2025, %v2072
      %v2092 = vadd.f32 %v2026, %v2074
      %v2093 = vadd.f32 %v2027, %v2077
      %v2094 = vadd.f32 %v2028, %v2079
      %v2095 = vadd.f32 %v2029, %v2082
      %v2096 = vadd.f32 %v2030, %v2084
      %v2097 = vadd.f32 %v2031, %v2087
      %v2098 = vadd.f32 %v2032, %v2089
      %v2099 = vld [vmem:[%s1966 + $0x2] sm:$0xff]
      %v2100 = vld [vmem:[%s1966 + $0x12] sm:$0xff]
      %v2101 = vld [vmem:[%s1966 + $0x22] sm:$0xff]
      %v2102 = vld [vmem:[%s1966 + $0x32] sm:$0xff]
      %v2103 = vld [vmem:[%s1966 + $0x42] sm:$0xff]
      %v2104 = vld [vmem:[%s1966 + $0x52] sm:$0xff]
      %v2105 = vld [vmem:[%s1966 + $0x62] sm:$0xff]
      %v2106 = vld [vmem:[%s1966 + $0x72] sm:$0xff]
      %v2107 = vpack.c.bf16 %v2100, %v2099
      %v2108 = vpack.c.bf16 %v2102, %v2101
      %v2109 = vpack.c.bf16 %v2104, %v2103
      %v2110 = vpack.c.bf16 %v2106, %v2105
      %s2111 = scalar_lea.vmem %s3, 52
      %v2112 = vld [vmem:[%s2111] sm:$0x3]
      %v2114 = vsel %vm419, %v2107, 0
      %v2117 = vsel %vm419, %v2108, 0
      %v2120 = vsel %vm419, %v2109, 0
      %v2123 = vsel %vm419, %v2110, 0
      %v2126 = vsel %vm432, %v2112, 0
      %2128 = vmatpush.bf16.msra.mxu0 0
      %2129 = vmatpush.bf16.msra.mxu0 0
      %2130 = vmatpush.bf16.msra.mxu0 0
      %2131 = vmatpush.bf16.msra.mxu0 0
      %2132 = vmatpush.bf16.msra.mxu0 0
      %2133 = vmatpush.bf16.msra.mxu0 0
      %2134 = vmatpush.bf16.msra.mxu0 0
      %2135 = vmatpush.bf16.msra.mxu0 %v2126
      %2136 = vmatmul.bf16.gmra.mxu0 %v2114
      %v2137 = vpop.f32.mrf.mxu0
      %v2138 = vadd.f32 0.0, %v2137
      %v2139 = vpop.f32.mrf.mxu0
      %v2140 = vadd.f32 0.0, %v2139
      %2141 = vmatmul.bf16.gmra.mxu0 %v2117
      %v2142 = vpop.f32.mrf.mxu0
      %v2143 = vadd.f32 0.0, %v2142
      %v2144 = vpop.f32.mrf.mxu0
      %v2145 = vadd.f32 0.0, %v2144
      %2146 = vmatmul.bf16.gmra.mxu0 %v2120
      %v2147 = vpop.f32.mrf.mxu0
      %v2148 = vadd.f32 0.0, %v2147
      %v2149 = vpop.f32.mrf.mxu0
      %v2150 = vadd.f32 0.0, %v2149
      %2151 = vmatmul.bf16.gmra.mxu0 %v2123
      %v2152 = vpop.f32.mrf.mxu0
      %v2153 = vadd.f32 0.0, %v2152
      %v2154 = vpop.f32.mrf.mxu0
      %v2155 = vadd.f32 0.0, %v2154
      %2156 = vdwg.mxu0
      %v2157 = vadd.f32 %v2091, %v2138
      %v2158 = vadd.f32 %v2092, %v2140
      %v2159 = vadd.f32 %v2093, %v2143
      %v2160 = vadd.f32 %v2094, %v2145
      %v2161 = vadd.f32 %v2095, %v2148
      %v2162 = vadd.f32 %v2096, %v2150
      %v2163 = vadd.f32 %v2097, %v2153
      %v2164 = vadd.f32 %v2098, %v2155
      %v2165 = vld [vmem:[%s4] sm:$0x1]
      %v2167 = vperm.slane %v2165, 0
      %v2169 = vadd.f32 %v2157, %v2167
      %v2170 = vadd.f32 %v2158, %v2167
      %v2171 = vadd.f32 %v2159, %v2167
      %v2172 = vadd.f32 %v2160, %v2167
      %v2173 = vadd.f32 %v2161, %v2167
      %v2174 = vadd.f32 %v2162, %v2167
      %v2175 = vadd.f32 %v2163, %v2167
      %v2176 = vadd.f32 %v2164, %v2167
      %vm2177 = vcmask 15360
      %v2178 = vsel %vm2177, %v2169, 0.0
      %v2179 = vsel %vm2177, %v2170, 0.0
      %v2180 = vadd.f32 %v2178, %v2179
      %v2181 = vsel %vm2177, %v2171, 0.0
      %v2182 = vadd.f32 %v2180, %v2181
      %v2183 = vsel %vm2177, %v2172, 0.0
      %v2184 = vadd.f32 %v2182, %v2183
      %v2185 = vsel %vm2177, %v2173, 0.0
      %v2186 = vadd.f32 %v2184, %v2185
      %v2187 = vsel %vm2177, %v2174, 0.0
      %v2188 = vadd.f32 %v2186, %v2187
      %v2189 = vsel %vm2177, %v2175, 0.0
      %v2190 = vadd.f32 %v2188, %v2189
      %v2191 = vsel %vm2177, %v2176, 0.0
      %v2192 = vadd.f32 %v2190, %v2191
      %2193 = vadd.xlane.f32.xlu0 %v2192
      %v2194 = vpop.xlane.xlu0 %2193
      %v2195 = vrot.slane %v2194, 4
      %v2196 = vadd.f32 %v2194, %v2195
      %v2197 = vrot.slane %v2196, 2
      %v2198 = vadd.f32 %v2196, %v2197
      %v2199 = vrot.slane %v2198, 1
      %v2200 = vadd.f32 %v2198, %v2199
      %s2201 = vtos %v2200
      %v2202 = vmul.f32 %v2169, %v2169
      %v2203 = vmul.f32 %v2170, %v2170
      %v2204 = vmul.f32 %v2171, %v2171
      %v2205 = vmul.f32 %v2172, %v2172
      %v2206 = vmul.f32 %v2173, %v2173
      %v2207 = vmul.f32 %v2174, %v2174
      %v2208 = vmul.f32 %v2175, %v2175
      %v2209 = vmul.f32 %v2176, %v2176
      %v2210 = vsel %vm2177, %v2202, 0.0
      %v2211 = vsel %vm2177, %v2203, 0.0
      %v2212 = vadd.f32 %v2210, %v2211
      %v2213 = vsel %vm2177, %v2204, 0.0
      %v2214 = vadd.f32 %v2212, %v2213
      %v2215 = vsel %vm2177, %v2205, 0.0
      %v2216 = vadd.f32 %v2214, %v2215
      %v2217 = vsel %vm2177, %v2206, 0.0
      %v2218 = vadd.f32 %v2216, %v2217
      %v2219 = vsel %vm2177, %v2207, 0.0
      %v2220 = vadd.f32 %v2218, %v2219
      %v2221 = vsel %vm2177, %v2208, 0.0
      %v2222 = vadd.f32 %v2220, %v2221
      %v2223 = vsel %vm2177, %v2209, 0.0
      %v2224 = vadd.f32 %v2222, %v2223
      %2225 = vadd.xlane.f32.xlu0 %v2224
      %v2226 = vpop.xlane.xlu0 %2225
      %v2227 = vrot.slane %v2226, 4
      %v2228 = vadd.f32 %v2226, %v2227
      %v2229 = vrot.slane %v2228, 2
      %v2230 = vadd.f32 %v2228, %v2229
      %v2231 = vrot.slane %v2230, 1
      %v2232 = vadd.f32 %v2230, %v2231
      %s2233 = vtos %v2232
      %2234 = vst.msk [vmem:[%s382] sm:$0xff] %vm2177, %v2169
      %2235 = vst.msk [vmem:[%s382 + $0x8] sm:$0xff] %vm2177, %v2170
      %2236 = vst.msk [vmem:[%s382 + $0x10] sm:$0xff] %vm2177, %v2171
      %2237 = vst.msk [vmem:[%s382 + $0x18] sm:$0xff] %vm2177, %v2172
      %2238 = vst.msk [vmem:[%s382 + $0x20] sm:$0xff] %vm2177, %v2173
      %2239 = vst.msk [vmem:[%s382 + $0x28] sm:$0xff] %vm2177, %v2174
      %2240 = vst.msk [vmem:[%s382 + $0x30] sm:$0xff] %vm2177, %v2175
      %2241 = vst.msk [vmem:[%s382 + $0x38] sm:$0xff] %vm2177, %v2176
      %v2242 = vstv %s2201
      %v2243 = vstv %s2233
      %vm2244 = vcmask 1040384
      %v2245 = vsel %vm2244, %v2242, %v2243
      %2246 = vst [vmem:[%s390] sm:$0x3] %v2245
      %p2247 = scmp.lt.s32.totalorder %s22, 1
      %s2248 = scalar_select %p2247, %s22, 1
      %p2249 = scmp.lt.s32.totalorder %s23, 7
      %s2250 = scalar_select %p2249, %s23, 7
      %s2251 = smul.addr %s2250, 8
      %s2252 = smul.addr %s2248, 64
      %s2253 = sadd.s32 %s2251, %s2252
      %s2254 = smul.addr %s2253, 8
      %s2255 = scalar_lea.vmem %s5, %s2254
      %p2256 = scmp.lt.s32.totalorder %s22, 1
      %s2257 = scalar_select %p2256, %s22, 1
      %p2258 = scmp.lt.s32.totalorder %s23, 7
      %s2259 = scalar_select %p2258, %s23, 7
      %s2260 = smul.addr %s2257, 8
      %s2261 = sadd.s32 %s2259, %s2260
      %s2262 = smul.addr %s2261, 2
      %s2263 = scalar_lea.vmem %s6, %s2262
      // Predicated region
      $region41: #{_lambda_.18} parent=39 // pred_check
        %p2264 = pneg %p180
      $region42: #{_lambda_.18} parent=39 // pred_check_branch
        %2266 = sbr.rel (%p2264) target = $region44
      $region43: #{_lambda_.18} parent=39 // pred_region
        _
      $region44: #{_lambda_.18} parent=39 // pred_fallthru
        _
      // Predicated region
      $region45: #{_lambda_.18} parent=39 // pred_check
        %p2267 = pneg %p208
      $region46: #{_lambda_.18} parent=39 // pred_check_branch
        %2269 = sbr.rel (%p2267) target = $region48
      $region47: #{_lambda_.18} parent=39 // pred_region
        _
      $region48: #{_lambda_.18} parent=39 // pred_fallthru
        _
    $region40: #{_lambda_.18} parent=5 // pred_fallthru
      _
    %p2270 = scmp.le.s32.totalorder 2, %s13
    // Predicated region
    $region49: #{_lambda_.18} parent=5 // pred_check
      %p2271 = pneg %p2270
    $region50: #{_lambda_.18} parent=5 // pred_check_branch
      %2273 = sbr.rel (%p2271) target = $region52
    $region51: #{_lambda_.18} parent=5 // pred_region
      %s2274 = ssub.s32 %s13, 2
      // Predicated region
      $region53: #{_lambda_.18} parent=51 // pred_check
        %p2275 = pneg %p186
      $region54: #{_lambda_.18} parent=51 // pred_check_branch
        %2277 = sbr.rel (%p2275) target = $region56
      $region55: #{_lambda_.18} parent=51 // pred_region
        %p2278 = scmp.lt.s32.totalorder %s24, 1
        %s2279 = scalar_select %p2278, %s24, 1
        %p2280 = scmp.lt.s32.totalorder %s25, 7
        %s2281 = scalar_select %p2280, %s25, 7
        %s2282 = smul.addr %s2281, 8
        %s2283 = smul.addr %s2279, 64
        %s2284 = sadd.s32 %s2282, %s2283
        %s2285 = smul.addr %s2284, 8
        %s2286 = scalar_lea.vmem %s5, %s2285
      $region56: #{_lambda_.18} parent=51 // pred_fallthru
        _
      // Predicated region
      $region57: #{_lambda_.18} parent=51 // pred_check
        %p2287 = pneg %p214
      $region58: #{_lambda_.18} parent=51 // pred_check_branch
        %2289 = sbr.rel (%p2287) target = $region60
      $region59: #{_lambda_.18} parent=51 // pred_region
        %p2290 = scmp.lt.s32.totalorder %s24, 1
        %s2291 = scalar_select %p2290, %s24, 1
        %p2292 = scmp.lt.s32.totalorder %s25, 7
        %s2293 = scalar_select %p2292, %s25, 7
        %s2294 = smul.addr %s2291, 8
        %s2295 = sadd.s32 %s2293, %s2294
        %s2296 = smul.addr %s2295, 2
        %s2297 = scalar_lea.vmem %s6, %s2296
      $region60: #{_lambda_.18} parent=51 // pred_fallthru
        _
    $region52: #{_lambda_.18} parent=5 // pred_fallthru
      _
  $region6: #{_lambda_.18} parent=0 // loop_footer
    %s17 = sadd.s32 1, %s13
  $region7: #{_lambda_.18} parent=0 // loop_footer_branch
    %12 = sbr.rel target = $region3
  $region8: #{_lambda_.18} parent=0 // loop_exit
    _

// kernel: _lambda_.23
$region0: #{_lambda_.23}
  #allocation0 [shape = 'u32[]', space=smem, size = 0x4, offset = 0x4, fixed_abs, tag = 'smem constant byte address 0x4 - core index']
  #allocation1 [shape = 'u32[72,128]{1,0:T(1,128)}', space=vmem, size = 0x9000, scoped, tag = 'internal scratch']
  %s0 = inlined_call_operand.vmem [shape: f32[2,8,8,8,8], index: 0, kind: input, shape index: {}]
  %s1 = inlined_call_operand.vmem [shape: f32[2,1,8], index: 1, kind: input, shape index: {}]
  %s2 = inlined_call_operand.vmem [shape: f32[2,1,8], index: 2, kind: input, shape index: {}]
  %s3 = inlined_call_operand.vmem [shape: f32[2,8,8,8,8], index: 3, kind: output, shape index: {}]
  %s4 = sld [smem:[#allocation0]]
  $region45: #{_lambda_.23} parent=0
    _
  %s6 = ssub.s32 1, %s4
  %s7 = scalar_select 0, %s6, %s4
  loop: start=0, step=1, limit=18
  $region2: #{_lambda_.23} parent=0 // loop_pre_header
    _
  $region3: #{_lambda_.23} parent=0 // loop_header
    %s9 = sphi 0, %s13
    %p10 = scmp.ge.s32.totalorder %s9, 18
    %s16 = sphi 0, %s28
    %s17 = sphi 0, %s24
    %s18 = sphi 0, %s16
    %s19 = sphi 0, %s17
    %s20 = sphi 0, %s18
    %s21 = sphi 0, %s19
    %s33 = sphi 0, %s35
    %s36 = sphi 0, %s33
    %s37 = sphi 0, %s36
    %s53 = sphi 0, %s37
    %s59 = sphi 0, %s61
    %s62 = sphi 0, %s59
    %s63 = sphi 0, %s62
    %s79 = sphi 0, %s63
    %s85 = sphi 0, %s87
    %s88 = sphi 0, %s85
    %s89 = sphi 0, %s88
    %s105 = sphi 0, %s89
    %s113 = sphi 0, %s115
    %s116 = sphi 0, %s113
    %s117 = sphi 0, %s116
    %s133 = sphi 0, %s117
  $region4: #{_lambda_.23} parent=0 // loop_header_branch
    %12 = sbr.rel (%p10) target = $region8
  $region5: #{_lambda_.23} parent=0 // loop_body
    %s14 = ssub.s32 %s9, 1
    %s15 = ssub.s32 %s9, 2
    %s22 = sadd.s32 1, %s17
    %p23 = scmp.ge.s32.totalorder %s22, 8
    %s24 = scalar_select %p23, 0, %s22
    %s25 = sadd.s32 1, %s16
    %s26 = scalar_select %p23, %s25, %s16
    %p27 = scmp.ge.s32.totalorder %s26, 2
    %s28 = scalar_select %p27, 0, %s26
    %s29 = ssub.s32 %s16, %s28
    %s30 = ssub.s32 %s17, %s24
    %s31 = sor.u32 %s29, %s30
    %p32 = scmp.eq.s32.totalorder %s31, 0
    %s34 = sadd.s32 %s33, 1
    %s35 = scalar_select %p32, %s33, %s34
    %p38 = pneg %p32
    %p39 = scmp.eq.s32.totalorder %s9, 15
    %p40 = por %p38, %p39
    %p41 = scmp.ne.s32.totalorder %s33, %s36
    %p42 = scmp.eq.s32.totalorder %s9, 0
    %p43 = por %p41, %p42
    %p44 = scmp.ne.s32.totalorder %s33, %s36
    %p45 = scmp.eq.s32.totalorder %s14, 15
    %p46 = por %p44, %p45
    %p47 = scmp.ne.s32.totalorder %s36, %s37
    %p48 = scmp.eq.s32.totalorder %s14, 0
    %p49 = por %p47, %p48
    %p50 = scmp.ne.s32.totalorder %s36, %s37
    %p51 = scmp.eq.s32.totalorder %s15, 15
    %p52 = por %p50, %p51
    %p54 = scmp.ne.s32.totalorder %s37, %s53
    %p55 = scmp.eq.s32.totalorder %s15, 0
    %p56 = por %p54, %p55
    %s57 = ssub.s32 %s16, %s28
    %p58 = scmp.eq.s32.totalorder %s57, 0
    %s60 = sadd.s32 %s59, 1
    %s61 = scalar_select %p58, %s59, %s60
    %p64 = pneg %p58
    %p65 = scmp.eq.s32.totalorder %s9, 15
    %p66 = por %p64, %p65
    %p67 = scmp.ne.s32.totalorder %s59, %s62
    %p68 = scmp.eq.s32.totalorder %s9, 0
    %p69 = por %p67, %p68
    %p70 = scmp.ne.s32.totalorder %s59, %s62
    %p71 = scmp.eq.s32.totalorder %s14, 15
    %p72 = por %p70, %p71
    %p73 = scmp.ne.s32.totalorder %s62, %s63
    %p74 = scmp.eq.s32.totalorder %s14, 0
    %p75 = por %p73, %p74
    %p76 = scmp.ne.s32.totalorder %s62, %s63
    %p77 = scmp.eq.s32.totalorder %s15, 15
    %p78 = por %p76, %p77
    %p80 = scmp.ne.s32.totalorder %s63, %s79
    %p81 = scmp.eq.s32.totalorder %s15, 0
    %p82 = por %p80, %p81
    %s83 = ssub.s32 %s16, %s28
    %p84 = scmp.eq.s32.totalorder %s83, 0
    %s86 = sadd.s32 %s85, 1
    %s87 = scalar_select %p84, %s85, %s86
    %p90 = pneg %p84
    %p91 = scmp.eq.s32.totalorder %s9, 15
    %p92 = por %p90, %p91
    %p93 = scmp.ne.s32.totalorder %s85, %s88
    %p94 = scmp.eq.s32.totalorder %s9, 0
    %p95 = por %p93, %p94
    %p96 = scmp.ne.s32.totalorder %s85, %s88
    %p97 = scmp.eq.s32.totalorder %s14, 15
    %p98 = por %p96, %p97
    %p99 = scmp.ne.s32.totalorder %s88, %s89
    %p100 = scmp.eq.s32.totalorder %s14, 0
    %p101 = por %p99, %p100
    %p102 = scmp.ne.s32.totalorder %s88, %s89
    %p103 = scmp.eq.s32.totalorder %s15, 15
    %p104 = por %p102, %p103
    %p106 = scmp.ne.s32.totalorder %s89, %s105
    %p107 = scmp.eq.s32.totalorder %s15, 0
    %p108 = por %p106, %p107
    %s109 = ssub.s32 %s16, %s28
    %s110 = ssub.s32 %s17, %s24
    %s111 = sor.u32 %s109, %s110
    %p112 = scmp.eq.s32.totalorder %s111, 0
    %s114 = sadd.s32 %s113, 1
    %s115 = scalar_select %p112, %s113, %s114
    %p118 = pneg %p112
    %p119 = scmp.eq.s32.totalorder %s9, 15
    %p120 = por %p118, %p119
    %p121 = scmp.ne.s32.totalorder %s113, %s116
    %p122 = scmp.eq.s32.totalorder %s9, 0
    %p123 = por %p121, %p122
    %p124 = scmp.ne.s32.totalorder %s113, %s116
    %p125 = scmp.eq.s32.totalorder %s14, 15
    %p126 = por %p124, %p125
    %p127 = scmp.ne.s32.totalorder %s116, %s117
    %p128 = scmp.eq.s32.totalorder %s14, 0
    %p129 = por %p127, %p128
    %p130 = scmp.ne.s32.totalorder %s116, %s117
    %p131 = scmp.eq.s32.totalorder %s15, 15
    %p132 = por %p130, %p131
    %p134 = scmp.ne.s32.totalorder %s117, %s133
    %p135 = scmp.eq.s32.totalorder %s15, 0
    %p136 = por %p134, %p135
    %p137 = scmp.le.s32.totalorder 1, %s9
    %p138 = scmp.lt.s32.totalorder %s9, 17
    %p139 = pnand %p137, %p138
    %p140 = pneg %p139
    // Predicated region
    $region9: #{_lambda_.23} parent=5 // pred_check
      _
    $region10: #{_lambda_.23} parent=5 // pred_check_branch
      %142 = sbr.rel (%p139) target = $region12
    $region11: #{_lambda_.23} parent=5 // pred_region
      %s143 = ssub.s32 %s9, 1
    $region12: #{_lambda_.23} parent=5 // pred_fallthru
      _
    %p144 = scmp.lt.s32.totalorder %s9, 16
    // Predicated region
    $region13: #{_lambda_.23} parent=5 // pred_check
      %p145 = pneg %p144
    $region14: #{_lambda_.23} parent=5 // pred_check_branch
      %147 = sbr.rel (%p145) target = $region16
    $region15: #{_lambda_.23} parent=5 // pred_region
      // Predicated region
      $region17: #{_lambda_.23} parent=15 // pred_check
        %p148 = pneg %p43
      $region18: #{_lambda_.23} parent=15 // pred_check_branch
        %150 = sbr.rel (%p148) target = $region20
      $region19: #{_lambda_.23} parent=15 // pred_region
        %p151 = scmp.lt.s32.totalorder %s16, 1
        %s152 = scalar_select %p151, %s16, 1
        %p153 = scmp.lt.s32.totalorder %s17, 7
        %s154 = scalar_select %p153, %s17, 7
        %s155 = smul.addr %s154, 8
        %s156 = smul.addr %s152, 64
        %s157 = sadd.s32 %s155, %s156
        %s158 = smul.addr %s157, 8
        %s159 = scalar_lea.vmem %s0, %s158
      $region20: #{_lambda_.23} parent=15 // pred_fallthru
        _
      // Predicated region
      $region21: #{_lambda_.23} parent=15 // pred_check
        %p160 = pneg %p69
      $region22: #{_lambda_.23} parent=15 // pred_check_branch
        %162 = sbr.rel (%p160) target = $region24
      $region23: #{_lambda_.23} parent=15 // pred_region
        %p163 = scmp.lt.s32.totalorder %s16, 1
        %s164 = scalar_select %p163, %s16, 1
        %s165 = scalar_lea.vmem %s1, %s164
      $region24: #{_lambda_.23} parent=15 // pred_fallthru
        _
      // Predicated region
      $region25: #{_lambda_.23} parent=15 // pred_check
        %p166 = pneg %p95
      $region26: #{_lambda_.23} parent=15 // pred_check_branch
        %168 = sbr.rel (%p166) target = $region28
      $region27: #{_lambda_.23} parent=15 // pred_region
        %p169 = scmp.lt.s32.totalorder %s16, 1
        %s170 = scalar_select %p169, %s16, 1
        %s171 = scalar_lea.vmem %s2, %s170
      $region28: #{_lambda_.23} parent=15 // pred_fallthru
        _
    $region16: #{_lambda_.23} parent=5 // pred_fallthru
      _
    %p172 = scmp.le.s32.totalorder 1, %s9
    %p173 = scmp.lt.s32.totalorder %s9, 17
    %p174 = pnand %p172, %p173
    %p175 = pneg %p174
    // Predicated region
    $region29: #{_lambda_.23} parent=5 // pred_check
      _
    $region30: #{_lambda_.23} parent=5 // pred_check_branch
      %177 = sbr.rel (%p174) target = $region32
    $region31: #{_lambda_.23} parent=5 // pred_region
      %s178 = ssub.s32 %s9, 1
      %p179 = scmp.lt.s32.totalorder %s18, 1
      %s180 = scalar_select %p179, %s18, 1
      %p181 = scmp.lt.s32.totalorder %s19, 7
      %s182 = scalar_select %p181, %s19, 7
      %s183 = smul.addr %s182, 8
      %s184 = smul.addr %s180, 64
      %s185 = sadd.s32 %s183, %s184
      %s186 = smul.addr %s185, 8
      %s187 = scalar_lea.vmem %s0, %s186
      %p188 = pneg %p49
      %p189 = pneg %p46
      %p190 = scmp.lt.s32.totalorder %s18, 1
      %s191 = scalar_select %p190, %s18, 1
      %s192 = scalar_lea.vmem %s1, %s191
      %p193 = pneg %p75
      %p194 = pneg %p72
      %p195 = scmp.lt.s32.totalorder %s18, 1
      %s196 = scalar_select %p195, %s18, 1
      %s197 = scalar_lea.vmem %s2, %s196
      %p198 = pneg %p101
      %p199 = pneg %p98
      %p200 = pneg %p129
      %p201 = pneg %p126
      %p202 = scmp.lt.s32.totalorder %s18, 1
      %s203 = scalar_select %p202, %s18, 1
      %p204 = scmp.lt.s32.totalorder %s19, 7
      %s205 = scalar_select %p204, %s19, 7
      %s206 = smul.addr %s205, 8
      %s207 = smul.addr %s203, 64
      %s208 = sadd.s32 %s206, %s207
      %s209 = smul.addr %s208, 8
      %s210 = scalar_lea.vmem %s3, %s209
      %p211 = scmp.lt.s32.totalorder %s18, 1
      %s212 = scalar_select %p211, %s18, 1
      %p213 = scmp.lt.s32.totalorder %s19, 7
      %s214 = scalar_select %p213, %s19, 7
      %s215 = smul.addr %s214, 8
      %s216 = smul.addr %s212, 64
      %s217 = sadd.s32 %s215, %s216
      %s218 = smul.addr %s217, 8
      %s219 = scalar_lea.vmem %s0, %s218
      %p220 = scmp.lt.s32.totalorder %s18, 1
      %s221 = scalar_select %p220, %s18, 1
      %s222 = scalar_lea.vmem %s1, %s221
      %p223 = scmp.lt.s32.totalorder %s18, 1
      %s224 = scalar_select %p223, %s18, 1
      %s225 = scalar_lea.vmem %s2, %s224
      %p226 = scmp.lt.s32.totalorder %s18, 1
      %s227 = scalar_select %p226, %s18, 1
      %p228 = scmp.lt.s32.totalorder %s19, 7
      %s229 = scalar_select %p228, %s19, 7
      %s230 = smul.addr %s229, 8
      %s231 = smul.addr %s227, 64
      %s232 = sadd.s32 %s230, %s231
      %s233 = smul.addr %s232, 8
      %s234 = scalar_lea.vmem %s3, %s233
      %v235 = vld [vmem:[%s219] sm:$0xff]
      %v236 = vld [vmem:[%s219 + $0x8] sm:$0xff]
      %v237 = vld [vmem:[%s219 + $0x10] sm:$0xff]
      %v238 = vld [vmem:[%s219 + $0x18] sm:$0xff]
      %v239 = vld [vmem:[%s219 + $0x20] sm:$0xff]
      %v240 = vld [vmem:[%s219 + $0x28] sm:$0xff]
      %v241 = vld [vmem:[%s219 + $0x30] sm:$0xff]
      %v242 = vld [vmem:[%s219 + $0x38] sm:$0xff]
      %v243 = vld [vmem:[%s222] sm:$0x1]
      %v245 = vperm.slane %v243, 0
      %v247 = vmul.f32 %v235, %v245
      %v248 = vmul.f32 %v236, %v245
      %v249 = vmul.f32 %v237, %v245
      %v250 = vmul.f32 %v238, %v245
      %v251 = vmul.f32 %v239, %v245
      %v252 = vmul.f32 %v240, %v245
      %v253 = vmul.f32 %v241, %v245
      %v254 = vmul.f32 %v242, %v245
      %v255 = vld [vmem:[%s225] sm:$0x1]
      %v257 = vperm.slane %v255, 0
      %v259 = vadd.f32 %v247, %v257
      %v260 = vadd.f32 %v248, %v257
      %v261 = vadd.f32 %v249, %v257
      %v262 = vadd.f32 %v250, %v257
      %v263 = vadd.f32 %v251, %v257
      %v264 = vadd.f32 %v252, %v257
      %v265 = vadd.f32 %v253, %v257
      %v266 = vadd.f32 %v254, %v257
      %v267 = vxor.u32 %v259, 2147483648
      %v268 = vxor.u32 %v260, 2147483648
      %v269 = vxor.u32 %v261, 2147483648
      %v270 = vxor.u32 %v262, 2147483648
      %v271 = vxor.u32 %v263, 2147483648
      %v272 = vxor.u32 %v264, 2147483648
      %v273 = vxor.u32 %v265, 2147483648
      %v274 = vxor.u32 %v266, 2147483648
      %v275 = vmul.f32 %v267, 1.442695
      %v276 = vpow.pop %v275
      %v277 = vmul.f32 %v268, 1.442695
      %v278 = vpow.pop %v277
      %v279 = vmul.f32 %v269, 1.442695
      %v280 = vpow.pop %v279
      %v281 = vmul.f32 %v270, 1.442695
      %v282 = vpow.pop %v281
      %v283 = vmul.f32 %v271, 1.442695
      %v284 = vpow.pop %v283
      %v285 = vmul.f32 %v272, 1.442695
      %v286 = vpow.pop %v285
      %v287 = vmul.f32 %v273, 1.442695
      %v288 = vpow.pop %v287
      %v289 = vmul.f32 %v274, 1.442695
      %v290 = vpow.pop %v289
      %v291 = vadd.f32 %v276, 1.0
      %v292 = vadd.f32 %v278, 1.0
      %v293 = vadd.f32 %v280, 1.0
      %v294 = vadd.f32 %v282, 1.0
      %v295 = vadd.f32 %v284, 1.0
      %v296 = vadd.f32 %v286, 1.0
      %v297 = vadd.f32 %v288, 1.0
      %v298 = vadd.f32 %v290, 1.0
      %v299 = vrcp.pop %v291
      %v300 = vmul.f32 %v291, %v299
      %v301 = vsub.f32 1.0, %v300
      %v302 = vmul.f32 %v299, %v301
      %v303 = vadd.f32 %v299, %v302
      %vm304 = vweird.f32 %v291
      %vm305 = vweird.f32 %v299
      %vm306 = vmor %vm304, %vm305
      %v307 = vsel %vm306, %v299, %v303
      %v308 = vand.u32 2147483647, %v291
      %vm309 = vcmp.eq.f32.partialorder %v308, 8.507059e+37
      %v310 = vand.u32 %v291, 2147483648
      %v311 = vor.u32 1.1754944e-38, %v310
      %v312 = vsel %vm309, %v311, %v307
      %v313 = vmul.f32 1.0, %v312
      %v314 = vrcp.pop %v292
      %v315 = vmul.f32 %v292, %v314
      %v316 = vsub.f32 1.0, %v315
      %v317 = vmul.f32 %v314, %v316
      %v318 = vadd.f32 %v314, %v317
      %vm319 = vweird.f32 %v292
      %vm320 = vweird.f32 %v314
      %vm321 = vmor %vm319, %vm320
      %v322 = vsel %vm321, %v314, %v318
      %v323 = vand.u32 2147483647, %v292
      %vm324 = vcmp.eq.f32.partialorder %v323, 8.507059e+37
      %v325 = vand.u32 %v292, 2147483648
      %v326 = vor.u32 1.1754944e-38, %v325
      %v327 = vsel %vm324, %v326, %v322
      %v328 = vmul.f32 1.0, %v327
      %v329 = vrcp.pop %v293
      %v330 = vmul.f32 %v293, %v329
      %v331 = vsub.f32 1.0, %v330
      %v332 = vmul.f32 %v329, %v331
      %v333 = vadd.f32 %v329, %v332
      %vm334 = vweird.f32 %v293
      %vm335 = vweird.f32 %v329
      %vm336 = vmor %vm334, %vm335
      %v337 = vsel %vm336, %v329, %v333
      %v338 = vand.u32 2147483647, %v293
      %vm339 = vcmp.eq.f32.partialorder %v338, 8.507059e+37
      %v340 = vand.u32 %v293, 2147483648
      %v341 = vor.u32 1.1754944e-38, %v340
      %v342 = vsel %vm339, %v341, %v337
      %v343 = vmul.f32 1.0, %v342
      %v344 = vrcp.pop %v294
      %v345 = vmul.f32 %v294, %v344
      %v346 = vsub.f32 1.0, %v345
      %v347 = vmul.f32 %v344, %v346
      %v348 = vadd.f32 %v344, %v347
      %vm349 = vweird.f32 %v294
      %vm350 = vweird.f32 %v344
      %vm351 = vmor %vm349, %vm350
      %v352 = vsel %vm351, %v344, %v348
      %v353 = vand.u32 2147483647, %v294
      %vm354 = vcmp.eq.f32.partialorder %v353, 8.507059e+37
      %v355 = vand.u32 %v294, 2147483648
      %v356 = vor.u32 1.1754944e-38, %v355
      %v357 = vsel %vm354, %v356, %v352
      %v358 = vmul.f32 1.0, %v357
      %v359 = vrcp.pop %v295
      %v360 = vmul.f32 %v295, %v359
      %v361 = vsub.f32 1.0, %v360
      %v362 = vmul.f32 %v359, %v361
      %v363 = vadd.f32 %v359, %v362
      %vm364 = vweird.f32 %v295
      %vm365 = vweird.f32 %v359
      %vm366 = vmor %vm364, %vm365
      %v367 = vsel %vm366, %v359, %v363
      %v368 = vand.u32 2147483647, %v295
      %vm369 = vcmp.eq.f32.partialorder %v368, 8.507059e+37
      %v370 = vand.u32 %v295, 2147483648
      %v371 = vor.u32 1.1754944e-38, %v370
      %v372 = vsel %vm369, %v371, %v367
      %v373 = vmul.f32 1.0, %v372
      %v374 = vrcp.pop %v296
      %v375 = vmul.f32 %v296, %v374
      %v376 = vsub.f32 1.0, %v375
      %v377 = vmul.f32 %v374, %v376
      %v378 = vadd.f32 %v374, %v377
      %vm379 = vweird.f32 %v296
      %vm380 = vweird.f32 %v374
      %vm381 = vmor %vm379, %vm380
      %v382 = vsel %vm381, %v374, %v378
      %v383 = vand.u32 2147483647, %v296
      %vm384 = vcmp.eq.f32.partialorder %v383, 8.507059e+37
      %v385 = vand.u32 %v296, 2147483648
      %v386 = vor.u32 1.1754944e-38, %v385
      %v387 = vsel %vm384, %v386, %v382
      %v388 = vmul.f32 1.0, %v387
      %v389 = vrcp.pop %v297
      %v390 = vmul.f32 %v297, %v389
      %v391 = vsub.f32 1.0, %v390
      %v392 = vmul.f32 %v389, %v391
      %v393 = vadd.f32 %v389, %v392
      %vm394 = vweird.f32 %v297
      %vm395 = vweird.f32 %v389
      %vm396 = vmor %vm394, %vm395
      %v397 = vsel %vm396, %v389, %v393
      %v398 = vand.u32 2147483647, %v297
      %vm399 = vcmp.eq.f32.partialorder %v398, 8.507059e+37
      %v400 = vand.u32 %v297, 2147483648
      %v401 = vor.u32 1.1754944e-38, %v400
      %v402 = vsel %vm399, %v401, %v397
      %v403 = vmul.f32 1.0, %v402
      %v404 = vrcp.pop %v298
      %v405 = vmul.f32 %v298, %v404
      %v406 = vsub.f32 1.0, %v405
      %v407 = vmul.f32 %v404, %v406
      %v408 = vadd.f32 %v404, %v407
      %vm409 = vweird.f32 %v298
      %vm410 = vweird.f32 %v404
      %vm411 = vmor %vm409, %vm410
      %v412 = vsel %vm411, %v404, %v408
      %v413 = vand.u32 2147483647, %v298
      %vm414 = vcmp.eq.f32.partialorder %v413, 8.507059e+37
      %v415 = vand.u32 %v298, 2147483648
      %v416 = vor.u32 1.1754944e-38, %v415
      %v417 = vsel %vm414, %v416, %v412
      %v418 = vmul.f32 1.0, %v417
      %v419 = vmul.f32 %v259, %v313
      %v420 = vmul.f32 %v260, %v328
      %v421 = vmul.f32 %v261, %v343
      %v422 = vmul.f32 %v262, %v358
      %v423 = vmul.f32 %v263, %v373
      %v424 = vmul.f32 %v264, %v388
      %v425 = vmul.f32 %v265, %v403
      %v426 = vmul.f32 %v266, %v418
      %vm427 = vcmask 64512
      %428 = vst.msk [vmem:[%s234] sm:$0xff] %vm427, %v419
      %429 = vst.msk [vmem:[%s234 + $0x8] sm:$0xff] %vm427, %v420
      %430 = vst.msk [vmem:[%s234 + $0x10] sm:$0xff] %vm427, %v421
      %431 = vst.msk [vmem:[%s234 + $0x18] sm:$0xff] %vm427, %v422
      %432 = vst.msk [vmem:[%s234 + $0x20] sm:$0xff] %vm427, %v423
      %433 = vst.msk [vmem:[%s234 + $0x28] sm:$0xff] %vm427, %v424
      %434 = vst.msk [vmem:[%s234 + $0x30] sm:$0xff] %vm427, %v425
      %435 = vst.msk [vmem:[%s234 + $0x38] sm:$0xff] %vm427, %v426
      %p436 = scmp.lt.s32.totalorder %s18, 1
      %s437 = scalar_select %p436, %s18, 1
      %p438 = scmp.lt.s32.totalorder %s19, 7
      %s439 = scalar_select %p438, %s19, 7
      %s440 = smul.addr %s439, 8
      %s441 = smul.addr %s437, 64
      %s442 = sadd.s32 %s440, %s441
      %s443 = smul.addr %s442, 8
      %s444 = scalar_lea.vmem %s3, %s443
      // Predicated region
      $region33: #{_lambda_.23} parent=31 // pred_check
        %p445 = pneg %p126
      $region34: #{_lambda_.23} parent=31 // pred_check_branch
        %447 = sbr.rel (%p445) target = $region36
      $region35: #{_lambda_.23} parent=31 // pred_region
        _
      $region36: #{_lambda_.23} parent=31 // pred_fallthru
        _
    $region32: #{_lambda_.23} parent=5 // pred_fallthru
      _
    %p448 = scmp.le.s32.totalorder 2, %s9
    // Predicated region
    $region37: #{_lambda_.23} parent=5 // pred_check
      %p449 = pneg %p448
    $region38: #{_lambda_.23} parent=5 // pred_check_branch
      %451 = sbr.rel (%p449) target = $region40
    $region39: #{_lambda_.23} parent=5 // pred_region
      %s452 = ssub.s32 %s9, 2
      // Predicated region
      $region41: #{_lambda_.23} parent=39 // pred_check
        %p453 = pneg %p132
      $region42: #{_lambda_.23} parent=39 // pred_check_branch
        %455 = sbr.rel (%p453) target = $region44
      $region43: #{_lambda_.23} parent=39 // pred_region
        %p456 = scmp.lt.s32.totalorder %s20, 1
        %s457 = scalar_select %p456, %s20, 1
        %p458 = scmp.lt.s32.totalorder %s21, 7
        %s459 = scalar_select %p458, %s21, 7
        %s460 = smul.addr %s459, 8
        %s461 = smul.addr %s457, 64
        %s462 = sadd.s32 %s460, %s461
        %s463 = smul.addr %s462, 8
        %s464 = scalar_lea.vmem %s3, %s463
      $region44: #{_lambda_.23} parent=39 // pred_fallthru
        _
    $region40: #{_lambda_.23} parent=5 // pred_fallthru
      _
  $region6: #{_lambda_.23} parent=0 // loop_footer
    %s13 = sadd.s32 1, %s9
  $region7: #{_lambda_.23} parent=0 // loop_footer_branch
    %8 = sbr.rel target = $region3
  $region8: #{_lambda_.23} parent=0 // loop_exit
    _

// kernel: _lambda_.20
$region0: #{_lambda_.20}
  #allocation0 [shape = 'u32[]', space=smem, size = 0x4, offset = 0x4, fixed_abs, tag = 'smem constant byte address 0x4 - core index']
  #allocation1 [shape = 'u32[72,128]{1,0:T(1,128)}', space=vmem, size = 0x9000, scoped, tag = 'internal scratch']
  %s0 = inlined_call_operand.vmem [shape: f32[2,10,10,10,2], index: 0, kind: input, shape index: {}, may-alias: {0,1,2}]
  %s1 = inlined_call_operand.vmem [shape: f32[2,10,10,10,2], index: 1, kind: input, shape index: {}, may-alias: {0,1,2}]
  %s2 = inlined_call_operand.vmem [shape: f32[2,10,10,10,2], index: 2, kind: input, shape index: {}, may-alias: {0,1,2}]
  %s3 = inlined_call_operand.vmem [shape: bf16[27,2,2], index: 3, kind: input, shape index: {}]
  %s4 = inlined_call_operand.vmem [shape: f32[1,2], index: 4, kind: input, shape index: {}]
  %s5 = inlined_call_operand.vmem [shape: f32[2,8,8,8,2], index: 5, kind: output, shape index: {0}]
  %s6 = inlined_call_operand.vmem [shape: f32[2,8,2,128], index: 6, kind: output, shape index: {1}]
  %7 = xla_tuple %s5, %s6
  %s8 = sld [smem:[#allocation0]]
  $region61: #{_lambda_.20} parent=0
    _
  %s10 = ssub.s32 1, %s8
  %s11 = scalar_select 0, %s10, %s8
  loop: start=0, step=1, limit=18
  $region2: #{_lambda_.20} parent=0 // loop_pre_header
    _
  $region3: #{_lambda_.20} parent=0 // loop_header
    %s13 = sphi 0, %s17
    %p14 = scmp.ge.s32.totalorder %s13, 18
    %s20 = sphi 0, %s32
    %s21 = sphi 0, %s28
    %s22 = sphi 0, %s20
    %s23 = sphi 0, %s21
    %s24 = sphi 0, %s22
    %s25 = sphi 0, %s23
    %s37 = sphi 0, %s39
    %s40 = sphi 0, %s37
    %s41 = sphi 0, %s40
    %s57 = sphi 0, %s41
    %s67 = sphi 0, %s69
    %s70 = sphi 0, %s67
    %s71 = sphi 0, %s70
    %s87 = sphi 0, %s71
    %s97 = sphi 0, %s99
    %s100 = sphi 0, %s97
    %s101 = sphi 0, %s100
    %s117 = sphi 0, %s101
    %s121 = sphi 0, %s121
    %s123 = sphi 0, %s121
    %s124 = sphi 0, %s123
    %s138 = sphi 0, %s124
    %s142 = sphi 0, %s142
    %s144 = sphi 0, %s142
    %s145 = sphi 0, %s144
    %s159 = sphi 0, %s145
    %s167 = sphi 0, %s169
    %s170 = sphi 0, %s167
    %s171 = sphi 0, %s170
    %s187 = sphi 0, %s171
    %s195 = sphi 0, %s197
    %s198 = sphi 0, %s195
    %s199 = sphi 0, %s198
    %s215 = sphi 0, %s199
  $region4: #{_lambda_.20} parent=0 // loop_header_branch
    %16 = sbr.rel (%p14) target = $region8
  $region5: #{_lambda_.20} parent=0 // loop_body
    %s18 = ssub.s32 %s13, 1
    %s19 = ssub.s32 %s13, 2
    %s26 = sadd.s32 1, %s21
    %p27 = scmp.ge.s32.totalorder %s26, 8
    %s28 = scalar_select %p27, 0, %s26
    %s29 = sadd.s32 1, %s20
    %s30 = scalar_select %p27, %s29, %s20
    %p31 = scmp.ge.s32.totalorder %s30, 2
    %s32 = scalar_select %p31, 0, %s30
    %s33 = ssub.s32 %s20, %s32
    %s34 = ssub.s32 %s21, %s28
    %s35 = sor.u32 %s33, %s34
    %p36 = scmp.eq.s32.totalorder %s35, 0
    %s38 = sadd.s32 %s37, 1
    %s39 = scalar_select %p36, %s37, %s38
    %p42 = pneg %p36
    %p43 = scmp.eq.s32.totalorder %s13, 15
    %p44 = por %p42, %p43
    %p45 = scmp.ne.s32.totalorder %s37, %s40
    %p46 = scmp.eq.s32.totalorder %s13, 0
    %p47 = por %p45, %p46
    %p48 = scmp.ne.s32.totalorder %s37, %s40
    %p49 = scmp.eq.s32.totalorder %s18, 15
    %p50 = por %p48, %p49
    %p51 = scmp.ne.s32.totalorder %s40, %s41
    %p52 = scmp.eq.s32.totalorder %s18, 0
    %p53 = por %p51, %p52
    %p54 = scmp.ne.s32.totalorder %s40, %s41
    %p55 = scmp.eq.s32.totalorder %s19, 15
    %p56 = por %p54, %p55
    %p58 = scmp.ne.s32.totalorder %s41, %s57
    %p59 = scmp.eq.s32.totalorder %s19, 0
    %p60 = por %p58, %p59
    %s61 = sadd.s32 %s21, 1
    %s62 = sadd.s32 %s28, 1
    %s63 = ssub.s32 %s20, %s32
    %s64 = ssub.s32 %s61, %s62
    %s65 = sor.u32 %s63, %s64
    %p66 = scmp.eq.s32.totalorder %s65, 0
    %s68 = sadd.s32 %s67, 1
    %s69 = scalar_select %p66, %s67, %s68
    %p72 = pneg %p66
    %p73 = scmp.eq.s32.totalorder %s13, 15
    %p74 = por %p72, %p73
    %p75 = scmp.ne.s32.totalorder %s67, %s70
    %p76 = scmp.eq.s32.totalorder %s13, 0
    %p77 = por %p75, %p76
    %p78 = scmp.ne.s32.totalorder %s67, %s70
    %p79 = scmp.eq.s32.totalorder %s18, 15
    %p80 = por %p78, %p79
    %p81 = scmp.ne.s32.totalorder %s70, %s71
    %p82 = scmp.eq.s32.totalorder %s18, 0
    %p83 = por %p81, %p82
    %p84 = scmp.ne.s32.totalorder %s70, %s71
    %p85 = scmp.eq.s32.totalorder %s19, 15
    %p86 = por %p84, %p85
    %p88 = scmp.ne.s32.totalorder %s71, %s87
    %p89 = scmp.eq.s32.totalorder %s19, 0
    %p90 = por %p88, %p89
    %s91 = sadd.s32 %s21, 2
    %s92 = sadd.s32 %s28, 2
    %s93 = ssub.s32 %s20, %s32
    %s94 = ssub.s32 %s91, %s92
    %s95 = sor.u32 %s93, %s94
    %p96 = scmp.eq.s32.totalorder %s95, 0
    %s98 = sadd.s32 %s97, 1
    %s99 = scalar_select %p96, %s97, %s98
    %p102 = pneg %p96
    %p103 = scmp.eq.s32.totalorder %s13, 15
    %p104 = por %p102, %p103
    %p105 = scmp.ne.s32.totalorder %s97, %s100
    %p106 = scmp.eq.s32.totalorder %s13, 0
    %p107 = por %p105, %p106
    %p108 = scmp.ne.s32.totalorder %s97, %s100
    %p109 = scmp.eq.s32.totalorder %s18, 15
    %p110 = por %p108, %p109
    %p111 = scmp.ne.s32.totalorder %s100, %s101
    %p112 = scmp.eq.s32.totalorder %s18, 0
    %p113 = por %p111, %p112
    %p114 = scmp.ne.s32.totalorder %s100, %s101
    %p115 = scmp.eq.s32.totalorder %s19, 15
    %p116 = por %p114, %p115
    %p118 = scmp.ne.s32.totalorder %s101, %s117
    %p119 = scmp.eq.s32.totalorder %s19, 0
    %p120 = por %p118, %p119
    %s122 = sadd.s32 %s121, 1
    %p125 = scmp.eq.s32.totalorder %s13, 15
    %p126 = scmp.ne.s32.totalorder %s121, %s123
    %p127 = scmp.eq.s32.totalorder %s13, 0
    %p128 = por %p126, %p127
    %p129 = scmp.ne.s32.totalorder %s121, %s123
    %p130 = scmp.eq.s32.totalorder %s18, 15
    %p131 = por %p129, %p130
    %p132 = scmp.ne.s32.totalorder %s123, %s124
    %p133 = scmp.eq.s32.totalorder %s18, 0
    %p134 = por %p132, %p133
    %p135 = scmp.ne.s32.totalorder %s123, %s124
    %p136 = scmp.eq.s32.totalorder %s19, 15
    %p137 = por %p135, %p136
    %p139 = scmp.ne.s32.totalorder %s124, %s138
    %p140 = scmp.eq.s32.totalorder %s19, 0
    %p141 = por %p139, %p140
    %s143 = sadd.s32 %s142, 1
    %p146 = scmp.eq.s32.totalorder %s13, 15
    %p147 = scmp.ne.s32.totalorder %s142, %s144
    %p148 = scmp.eq.s32.totalorder %s13, 0
    %p149 = por %p147, %p148
    %p150 = scmp.ne.s32.totalorder %s142, %s144
    %p151 = scmp.eq.s32.totalorder %s18, 15
    %p152 = por %p150, %p151
    %p153 = scmp.ne.s32.totalorder %s144, %s145
    %p154 = scmp.eq.s32.totalorder %s18, 0
    %p155 = por %p153, %p154
    %p156 = scmp.ne.s32.totalorder %s144, %s145
    %p157 = scmp.eq.s32.totalorder %s19, 15
    %p158 = por %p156, %p157
    %p160 = scmp.ne.s32.totalorder %s145, %s159
    %p161 = scmp.eq.s32.totalorder %s19, 0
    %p162 = por %p160, %p161
    %s163 = ssub.s32 %s20, %s32
    %s164 = ssub.s32 %s21, %s28
    %s165 = sor.u32 %s163, %s164
    %p166 = scmp.eq.s32.totalorder %s165, 0
    %s168 = sadd.s32 %s167, 1
    %s169 = scalar_select %p166, %s167, %s168
    %p172 = pneg %p166
    %p173 = scmp.eq.s32.totalorder %s13, 15
    %p174 = por %p172, %p173
    %p175 = scmp.ne.s32.totalorder %s167, %s170
    %p176 = scmp.eq.s32.totalorder %s13, 0
    %p177 = por %p175, %p176
    %p178 = scmp.ne.s32.totalorder %s167, %s170
    %p179 = scmp.eq.s32.totalorder %s18, 15
    %p180 = por %p178, %p179
    %p181 = scmp.ne.s32.totalorder %s170, %s171
    %p182 = scmp.eq.s32.totalorder %s18, 0
    %p183 = por %p181, %p182
    %p184 = scmp.ne.s32.totalorder %s170, %s171
    %p185 = scmp.eq.s32.totalorder %s19, 15
    %p186 = por %p184, %p185
    %p188 = scmp.ne.s32.totalorder %s171, %s187
    %p189 = scmp.eq.s32.totalorder %s19, 0
    %p190 = por %p188, %p189
    %s191 = ssub.s32 %s20, %s32
    %s192 = ssub.s32 %s21, %s28
    %s193 = sor.u32 %s191, %s192
    %p194 = scmp.eq.s32.totalorder %s193, 0
    %s196 = sadd.s32 %s195, 1
    %s197 = scalar_select %p194, %s195, %s196
    %p200 = pneg %p194
    %p201 = scmp.eq.s32.totalorder %s13, 15
    %p202 = por %p200, %p201
    %p203 = scmp.ne.s32.totalorder %s195, %s198
    %p204 = scmp.eq.s32.totalorder %s13, 0
    %p205 = por %p203, %p204
    %p206 = scmp.ne.s32.totalorder %s195, %s198
    %p207 = scmp.eq.s32.totalorder %s18, 15
    %p208 = por %p206, %p207
    %p209 = scmp.ne.s32.totalorder %s198, %s199
    %p210 = scmp.eq.s32.totalorder %s18, 0
    %p211 = por %p209, %p210
    %p212 = scmp.ne.s32.totalorder %s198, %s199
    %p213 = scmp.eq.s32.totalorder %s19, 15
    %p214 = por %p212, %p213
    %p216 = scmp.ne.s32.totalorder %s199, %s215
    %p217 = scmp.eq.s32.totalorder %s19, 0
    %p218 = por %p216, %p217
    %p219 = scmp.le.s32.totalorder 1, %s13
    %p220 = scmp.lt.s32.totalorder %s13, 17
    %p221 = pnand %p219, %p220
    %p222 = pneg %p221
    // Predicated region
    $region9: #{_lambda_.20} parent=5 // pred_check
      _
    $region10: #{_lambda_.20} parent=5 // pred_check_branch
      %224 = sbr.rel (%p221) target = $region12
    $region11: #{_lambda_.20} parent=5 // pred_region
      %s225 = ssub.s32 %s13, 1
      // Predicated region
      $region13: #{_lambda_.20} parent=11 // pred_check
        %p226 = pneg %p134
      $region14: #{_lambda_.20} parent=11 // pred_check_branch
        %228 = sbr.rel (%p226) target = $region16
      $region15: #{_lambda_.20} parent=11 // pred_region
        _
      $region16: #{_lambda_.20} parent=11 // pred_fallthru
        _
      // Predicated region
      $region17: #{_lambda_.20} parent=11 // pred_check
        %p229 = pneg %p155
      $region18: #{_lambda_.20} parent=11 // pred_check_branch
        %231 = sbr.rel (%p229) target = $region20
      $region19: #{_lambda_.20} parent=11 // pred_region
        _
      $region20: #{_lambda_.20} parent=11 // pred_fallthru
        _
    $region12: #{_lambda_.20} parent=5 // pred_fallthru
      _
    %p232 = scmp.lt.s32.totalorder %s13, 16
    // Predicated region
    $region21: #{_lambda_.20} parent=5 // pred_check
      %p233 = pneg %p232
    $region22: #{_lambda_.20} parent=5 // pred_check_branch
      %235 = sbr.rel (%p233) target = $region24
    $region23: #{_lambda_.20} parent=5 // pred_region
      // Predicated region
      $region25: #{_lambda_.20} parent=23 // pred_check
        %p236 = pneg %p47
      $region26: #{_lambda_.20} parent=23 // pred_check_branch
        %238 = sbr.rel (%p236) target = $region28
      $region27: #{_lambda_.20} parent=23 // pred_region
        %p239 = scmp.lt.s32.totalorder %s20, 1
        %s240 = scalar_select %p239, %s20, 1
        %p241 = scmp.lt.s32.totalorder %s21, 9
        %s242 = scalar_select %p241, %s21, 9
        %s243 = smul.addr %s242, 20
        %s244 = smul.addr %s240, 200
        %s245 = sadd.s32 %s243, %s244
        %s246 = smul.addr %s245, 8
        %s247 = scalar_lea.vmem %s0, %s246
      $region28: #{_lambda_.20} parent=23 // pred_fallthru
        _
      // Predicated region
      $region29: #{_lambda_.20} parent=23 // pred_check
        %p248 = pneg %p77
      $region30: #{_lambda_.20} parent=23 // pred_check_branch
        %250 = sbr.rel (%p248) target = $region32
      $region31: #{_lambda_.20} parent=23 // pred_region
        %s251 = sadd.s32 %s21, 1
        %p252 = scmp.lt.s32.totalorder %s20, 1
        %s253 = scalar_select %p252, %s20, 1
        %p254 = scmp.lt.s32.totalorder %s251, 9
        %s255 = scalar_select %p254, %s251, 9
        %s256 = smul.addr %s255, 20
        %s257 = smul.addr %s253, 200
        %s258 = sadd.s32 %s256, %s257
        %s259 = smul.addr %s258, 8
        %s260 = scalar_lea.vmem %s1, %s259
        %s261 = sadd.s32 %s21, 1
      $region32: #{_lambda_.20} parent=23 // pred_fallthru
        _
      // Predicated region
      $region33: #{_lambda_.20} parent=23 // pred_check
        %p262 = pneg %p107
      $region34: #{_lambda_.20} parent=23 // pred_check_branch
        %264 = sbr.rel (%p262) target = $region36
      $region35: #{_lambda_.20} parent=23 // pred_region
        %s265 = sadd.s32 %s21, 2
        %p266 = scmp.lt.s32.totalorder %s20, 1
        %s267 = scalar_select %p266, %s20, 1
        %p268 = scmp.lt.s32.totalorder %s265, 9
        %s269 = scalar_select %p268, %s265, 9
        %s270 = smul.addr %s269, 20
        %s271 = smul.addr %s267, 200
        %s272 = sadd.s32 %s270, %s271
        %s273 = smul.addr %s272, 8
        %s274 = scalar_lea.vmem %s2, %s273
        %s275 = sadd.s32 %s21, 2
      $region36: #{_lambda_.20} parent=23 // pred_fallthru
        _
    $region24: #{_lambda_.20} parent=5 // pred_fallthru
      _
    %p276 = scmp.le.s32.totalorder 1, %s13
    %p277 = scmp.lt.s32.totalorder %s13, 17
    %p278 = pnand %p276, %p277
    %p279 = pneg %p278
    // Predicated region
    $region37: #{_lambda_.20} parent=5 // pred_check
      _
    $region38: #{_lambda_.20} parent=5 // pred_check_branch
      %281 = sbr.rel (%p278) target = $region40
    $region39: #{_lambda_.20} parent=5 // pred_region
      %s282 = ssub.s32 %s13, 1
      %p283 = scmp.lt.s32.totalorder %s22, 1
      %s284 = scalar_select %p283, %s22, 1
      %p285 = scmp.lt.s32.totalorder %s23, 9
      %s286 = scalar_select %p285, %s23, 9
      %s287 = smul.addr %s286, 20
      %s288 = smul.addr %s284, 200
      %s289 = sadd.s32 %s287, %s288
      %s290 = smul.addr %s289, 8
      %s291 = scalar_lea.vmem %s0, %s290
      %p292 = pneg %p53
      %p293 = pneg %p50
      %s294 = sadd.s32 %s23, 1
      %p295 = scmp.lt.s32.totalorder %s22, 1
      %s296 = scalar_select %p295, %s22, 1
      %p297 = scmp.lt.s32.totalorder %s294, 9
      %s298 = scalar_select %p297, %s294, 9
      %s299 = smul.addr %s298, 20
      %s300 = smul.addr %s296, 200
      %s301 = sadd.s32 %s299, %s300
      %s302 = smul.addr %s301, 8
      %s303 = scalar_lea.vmem %s1, %s302
      %p304 = pneg %p83
      %p305 = pneg %p80
      %s306 = sadd.s32 %s23, 2
      %p307 = scmp.lt.s32.totalorder %s22, 1
      %s308 = scalar_select %p307, %s22, 1
      %p309 = scmp.lt.s32.totalorder %s306, 9
      %s310 = scalar_select %p309, %s306, 9
      %s311 = smul.addr %s310, 20
      %s312 = smul.addr %s308, 200
      %s313 = sadd.s32 %s311, %s312
      %s314 = smul.addr %s313, 8
      %s315 = scalar_lea.vmem %s2, %s314
      %p316 = pneg %p113
      %p317 = pneg %p110
      %p318 = pneg %p134
      %p319 = pneg %p131
      %p320 = pneg %p155
      %p321 = pneg %p152
      %p322 = pneg %p183
      %p323 = pneg %p180
      %p324 = scmp.lt.s32.totalorder %s22, 1
      %s325 = scalar_select %p324, %s22, 1
      %p326 = scmp.lt.s32.totalorder %s23, 7
      %s327 = scalar_select %p326, %s23, 7
      %s328 = smul.addr %s327, 8
      %s329 = smul.addr %s325, 64
      %s330 = sadd.s32 %s328, %s329
      %s331 = smul.addr %s330, 8
      %s332 = scalar_lea.vmem %s5, %s331
      %p333 = pneg %p211
      %p334 = pneg %p208
      %p335 = scmp.lt.s32.totalorder %s22, 1
      %s336 = scalar_select %p335, %s22, 1
      %p337 = scmp.lt.s32.totalorder %s23, 7
      %s338 = scalar_select %p337, %s23, 7
      %s339 = smul.addr %s336, 8
      %s340 = sadd.s32 %s338, %s339
      %s341 = smul.addr %s340, 2
      %s342 = scalar_lea.vmem %s6, %s341
      %p343 = scmp.lt.s32.totalorder %s22, 1
      %s344 = scalar_select %p343, %s22, 1
      %p345 = scmp.lt.s32.totalorder %s23, 9
      %s346 = scalar_select %p345, %s23, 9
      %s347 = smul.addr %s346, 20
      %s348 = smul.addr %s344, 200
      %s349 = sadd.s32 %s347, %s348
      %s350 = smul.addr %s349, 8
      %s351 = scalar_lea.vmem %s0, %s350
      %s352 = sadd.s32 %s23, 1
      %p353 = scmp.lt.s32.totalorder %s22, 1
      %s354 = scalar_select %p353, %s22, 1
      %p355 = scmp.lt.s32.totalorder %s352, 9
      %s356 = scalar_select %p355, %s352, 9
      %s357 = smul.addr %s356, 20
      %s358 = smul.addr %s354, 200
      %s359 = sadd.s32 %s357, %s358
      %s360 = smul.addr %s359, 8
      %s361 = scalar_lea.vmem %s1, %s360
      %s362 = sadd.s32 %s23, 1
      %s363 = sadd.s32 %s23, 2
      %p364 = scmp.lt.s32.totalorder %s22, 1
      %s365 = scalar_select %p364, %s22, 1
      %p366 = scmp.lt.s32.totalorder %s363, 9
      %s367 = scalar_select %p366, %s363, 9
      %s368 = smul.addr %s367, 20
      %s369 = smul.addr %s365, 200
      %s370 = sadd.s32 %s368, %s369
      %s371 = smul.addr %s370, 8
      %s372 = scalar_lea.vmem %s2, %s371
      %s373 = sadd.s32 %s23, 2
      %p374 = scmp.lt.s32.totalorder %s22, 1
      %s375 = scalar_select %p374, %s22, 1
      %p376 = scmp.lt.s32.totalorder %s23, 7
      %s377 = scalar_select %p376, %s23, 7
      %s378 = smul.addr %s377, 8
      %s379 = smul.addr %s375, 64
      %s380 = sadd.s32 %s378, %s379
      %s381 = smul.addr %s380, 8
      %s382 = scalar_lea.vmem %s5, %s381
      %p383 = scmp.lt.s32.totalorder %s22, 1
      %s384 = scalar_select %p383, %s22, 1
      %p385 = scmp.lt.s32.totalorder %s23, 7
      %s386 = scalar_select %p385, %s23, 7
      %s387 = smul.addr %s384, 8
      %s388 = sadd.s32 %s386, %s387
      %s389 = smul.addr %s388, 2
      %s390 = scalar_lea.vmem %s6, %s389
      %v392 = vld [vmem:[%s351] sm:$0xff]
      %v393 = vld [vmem:[%s351 + $0x10] sm:$0xff]
      %v394 = vld [vmem:[%s351 + $0x20] sm:$0xff]
      %v395 = vld [vmem:[%s351 + $0x30] sm:$0xff]
      %v396 = vld [vmem:[%s351 + $0x40] sm:$0xff]
      %v397 = vld [vmem:[%s351 + $0x50] sm:$0xff]
      %v398 = vld [vmem:[%s351 + $0x60] sm:$0xff]
      %v399 = vld [vmem:[%s351 + $0x70] sm:$0xff]
      %v400 = vpack.c.bf16 %v393, %v392
      %v401 = vpack.c.bf16 %v395, %v394
      %v402 = vpack.c.bf16 %v397, %v396
      %v403 = vpack.c.bf16 %v399, %v398
      %v404 = vld [vmem:[%s3] sm:$0x1]
      %v405 = vld [vmem:[%s351 + $0x1] sm:$0xff]
      %v406 = vld [vmem:[%s351 + $0x11] sm:$0xff]
      %v407 = vld [vmem:[%s351 + $0x21] sm:$0xff]
      %v408 = vld [vmem:[%s351 + $0x31] sm:$0xff]
      %v409 = vld [vmem:[%s351 + $0x41] sm:$0xff]
      %v410 = vld [vmem:[%s351 + $0x51] sm:$0xff]
      %v411 = vld [vmem:[%s351 + $0x61] sm:$0xff]
      %v412 = vld [vmem:[%s351 + $0x71] sm:$0xff]
      %v413 = vpack.c.bf16 %v406, %v405
      %v414 = vpack.c.bf16 %v408, %v407
      %v415 = vpack.c.bf16 %v410, %v409
      %v416 = vpack.c.bf16 %v412, %v411
      %s417 = scalar_lea.vmem %s3, 1
      %v418 = vld [vmem:[%s417] sm:$0x1]
      %vm419 = vcmask 15360
      %v421 = vsel %vm419, %v413, 0
      %v424 = vsel %vm419, %v414, 0
      %v427 = vsel %vm419, %v415, 0
      %v430 = vsel %vm419, %v416, 0
      %vm432 = vcmask 1040384
      %v434 = vsel %vm432, %v418, 0
      %436 = vmatpush.bf16.msra.mxu0 0
      %437 = vmatpush.bf16.msra.mxu0 0
      %438 = vmatpush.bf16.msra.mxu0 0
      %439 = vmatpush.bf16.msra.mxu0 0
      %440 = vmatpush.bf16.msra.mxu0 0
      %441 = vmatpush.bf16.msra.mxu0 0
      %442 = vmatpush.bf16.msra.mxu0 0
      %443 = vmatpush.bf16.msra.mxu0 %v434
      %444 = vmatmul.bf16.gmra.mxu0 %v421
      %v445 = vpop.f32.mrf.mxu0
      %v446 = vadd.f32 0.0, %v445
      %v447 = vpop.f32.mrf.mxu0
      %v448 = vadd.f32 0.0, %v447
      %449 = vmatmul.bf16.gmra.mxu0 %v424
      %v450 = vpop.f32.mrf.mxu0
      %v451 = vadd.f32 0.0, %v450
      %v452 = vpop.f32.mrf.mxu0
      %v453 = vadd.f32 0.0, %v452
      %454 = vmatmul.bf16.gmra.mxu0 %v427
      %v455 = vpop.f32.mrf.mxu0
      %v456 = vadd.f32 0.0, %v455
      %v457 = vpop.f32.mrf.mxu0
      %v458 = vadd.f32 0.0, %v457
      %459 = vmatmul.bf16.gmra.mxu0 %v430
      %v460 = vpop.f32.mrf.mxu0
      %v461 = vadd.f32 0.0, %v460
      %v462 = vpop.f32.mrf.mxu0
      %v463 = vadd.f32 0.0, %v462
      %464 = vdwg.mxu0
      %v466 = vsel %vm419, %v400, 0
      %v469 = vsel %vm419, %v401, 0
      %v472 = vsel %vm419, %v402, 0
      %v475 = vsel %vm419, %v403, 0
      %v478 = vsel %vm432, %v404, 0
      %480 = vmatpush.bf16.msra.mxu0 0
      %481 = vmatpush.bf16.msra.mxu0 0
      %482 = vmatpush.bf16.msra.mxu0 0
      %483 = vmatpush.bf16.msra.mxu0 0
      %484 = vmatpush.bf16.msra.mxu0 0
      %485 = vmatpush.bf16.msra.mxu0 0
      %486 = vmatpush.bf16.msra.mxu0 0
      %487 = vmatpush.bf16.msra.mxu0 %v478
      %488 = vmatmul.bf16.gmra.mxu0 %v466
      %v489 = vpop.f32.mrf.mxu0
      %v490 = vadd.f32 %v446, %v489
      %v491 = vpop.f32.mrf.mxu0
      %v492 = vadd.f32 %v448, %v491
      %493 = vmatmul.bf16.gmra.mxu0 %v469
      %v494 = vpop.f32.mrf.mxu0
      %v495 = vadd.f32 %v451, %v494
      %v496 = vpop.f32.mrf.mxu0
      %v497 = vadd.f32 %v453, %v496
      %498 = vmatmul.bf16.gmra.mxu0 %v472
      %v499 = vpop.f32.mrf.mxu0
      %v500 = vadd.f32 %v456, %v499
      %v501 = vpop.f32.mrf.mxu0
      %v502 = vadd.f32 %v458, %v501
      %503 = vmatmul.bf16.gmra.mxu0 %v475
      %v504 = vpop.f32.mrf.mxu0
      %v505 = vadd.f32 %v461, %v504
      %v506 = vpop.f32.mrf.mxu0
      %v507 = vadd.f32 %v463, %v506
      %508 = vdwg.mxu0
      %v509 = vld [vmem:[%s351 + $0x2] sm:$0xff]
      %v510 = vld [vmem:[%s351 + $0x12] sm:$0xff]
      %v511 = vld [vmem:[%s351 + $0x22] sm:$0xff]
      %v512 = vld [vmem:[%s351 + $0x32] sm:$0xff]
      %v513 = vld [vmem:[%s351 + $0x42] sm:$0xff]
      %v514 = vld [vmem:[%s351 + $0x52] sm:$0xff]
      %v515 = vld [vmem:[%s351 + $0x62] sm:$0xff]
      %v516 = vld [vmem:[%s351 + $0x72] sm:$0xff]
      %v517 = vpack.c.bf16 %v510, %v509
      %v518 = vpack.c.bf16 %v512, %v511
      %v519 = vpack.c.bf16 %v514, %v513
      %v520 = vpack.c.bf16 %v516, %v515
      %s521 = scalar_lea.vmem %s3, 2
      %v522 = vld [vmem:[%s521] sm:$0x1]
      %v524 = vsel %vm419, %v517, 0
      %v527 = vsel %vm419, %v518, 0
      %v530 = vsel %vm419, %v519, 0
      %v533 = vsel %vm419, %v520, 0
      %v536 = vsel %vm432, %v522, 0
      %538 = vmatpush.bf16.msra.mxu0 0
      %539 = vmatpush.bf16.msra.mxu0 0
      %540 = vmatpush.bf16.msra.mxu0 0
      %541 = vmatpush.bf16.msra.mxu0 0
      %542 = vmatpush.bf16.msra.mxu0 0
      %543 = vmatpush.bf16.msra.mxu0 0
      %544 = vmatpush.bf16.msra.mxu0 0
      %545 = vmatpush.bf16.msra.mxu0 %v536
      %546 = vmatmul.bf16.gmra.mxu0 %v524
      %v547 = vpop.f32.mrf.mxu0
      %v548 = vadd.f32 0.0, %v547
      %v549 = vpop.f32.mrf.mxu0
      %v550 = vadd.f32 0.0, %v549
      %551 = vmatmul.bf16.gmra.mxu0 %v527
      %v552 = vpop.f32.mrf.mxu0
      %v553 = vadd.f32 0.0, %v552
      %v554 = vpop.f32.mrf.mxu0
      %v555 = vadd.f32 0.0, %v554
      %556 = vmatmul.bf16.gmra.mxu0 %v530
      %v557 = vpop.f32.mrf.mxu0
      %v558 = vadd.f32 0.0, %v557
      %v559 = vpop.f32.mrf.mxu0
      %v560 = vadd.f32 0.0, %v559
      %561 = vmatmul.bf16.gmra.mxu0 %v533
      %v562 = vpop.f32.mrf.mxu0
      %v563 = vadd.f32 0.0, %v562
      %v564 = vpop.f32.mrf.mxu0
      %v565 = vadd.f32 0.0, %v564
      %566 = vdwg.mxu0
      %v567 = vadd.f32 %v490, %v548
      %v568 = vadd.f32 %v492, %v550
      %v569 = vadd.f32 %v495, %v553
      %v570 = vadd.f32 %v497, %v555
      %v571 = vadd.f32 %v500, %v558
      %v572 = vadd.f32 %v502, %v560
      %v573 = vadd.f32 %v505, %v563
      %v574 = vadd.f32 %v507, %v565
      %s575 = scalar_lea.vmem %s351, 16
      %v576 = vld [vmem:[%s575] sm:$0xff]
      %v577 = vld [vmem:[%s575 + $0x10] sm:$0xff]
      %v578 = vld [vmem:[%s575 + $0x20] sm:$0xff]
      %v579 = vld [vmem:[%s575 + $0x30] sm:$0xff]
      %v580 = vld [vmem:[%s575 + $0x40] sm:$0xff]
      %v581 = vld [vmem:[%s575 + $0x50] sm:$0xff]
      %v582 = vld [vmem:[%s575 + $0x60] sm:$0xff]
      %v583 = vld [vmem:[%s575 + $0x70] sm:$0xff]
      %v584 = vpack.c.bf16 %v577, %v576
      %v585 = vpack.c.bf16 %v579, %v578
      %v586 = vpack.c.bf16 %v581, %v580
      %v587 = vpack.c.bf16 %v583, %v582
      %s588 = scalar_lea.vmem %s3, 3
      %v589 = vld [vmem:[%s588] sm:$0x1]
      %v591 = vsel %vm419, %v584, 0
      %v594 = vsel %vm419, %v585, 0
      %v597 = vsel %vm419, %v586, 0
      %v600 = vsel %vm419, %v587, 0
      %v603 = vsel %vm432, %v589, 0
      %605 = vmatpush.bf16.msra.mxu0 0
      %606 = vmatpush.bf16.msra.mxu0 0
      %607 = vmatpush.bf16.msra.mxu0 0
      %608 = vmatpush.bf16.msra.mxu0 0
      %609 = vmatpush.bf16.msra.mxu0 0
      %610 = vmatpush.bf16.msra.mxu0 0
      %611 = vmatpush.bf16.msra.mxu0 0
      %612 = vmatpush.bf16.msra.mxu0 %v603
      %613 = vmatmul.bf16.gmra.mxu0 %v591
      %v614 = vpop.f32.mrf.mxu0
      %v615 = vadd.f32 0.0, %v614
      %v616 = vpop.f32.mrf.mxu0
      %v617 = vadd.f32 0.0, %v616
      %618 = vmatmul.bf16.gmra.mxu0 %v594
      %v619 = vpop.f32.mrf.mxu0
      %v620 = vadd.f32 0.0, %v619
      %v621 = vpop.f32.mrf.mxu0
      %v622 = vadd.f32 0.0, %v621
      %623 = vmatmul.bf16.gmra.mxu0 %v597
      %v624 = vpop.f32.mrf.mxu0
      %v625 = vadd.f32 0.0, %v624
      %v626 = vpop.f32.mrf.mxu0
      %v627 = vadd.f32 0.0, %v626
      %628 = vmatmul.bf16.gmra.mxu0 %v600
      %v629 = vpop.f32.mrf.mxu0
      %v630 = vadd.f32 0.0, %v629
      %v631 = vpop.f32.mrf.mxu0
      %v632 = vadd.f32 0.0, %v631
      %633 = vdwg.mxu0
      %v634 = vadd.f32 %v567, %v615
      %v635 = vadd.f32 %v568, %v617
      %v636 = vadd.f32 %v569, %v620
      %v637 = vadd.f32 %v570, %v622
      %v638 = vadd.f32 %v571, %v625
      %v639 = vadd.f32 %v572, %v627
      %v640 = vadd.f32 %v573, %v630
      %v641 = vadd.f32 %v574, %v632
      %v642 = vld [vmem:[%s575 + $0x1] sm:$0xff]
      %v643 = vld [vmem:[%s575 + $0x11] sm:$0xff]
      %v644 = vld [vmem:[%s575 + $0x21] sm:$0xff]
      %v645 = vld [vmem:[%s575 + $0x31] sm:$0xff]
      %v646 = vld [vmem:[%s575 + $0x41] sm:$0xff]
      %v647 = vld [vmem:[%s575 + $0x51] sm:$0xff]
      %v648 = vld [vmem:[%s575 + $0x61] sm:$0xff]
      %v649 = vld [vmem:[%s575 + $0x71] sm:$0xff]
      %v650 = vpack.c.bf16 %v643, %v642
      %v651 = vpack.c.bf16 %v645, %v644
      %v652 = vpack.c.bf16 %v647, %v646
      %v653 = vpack.c.bf16 %v649, %v648
      %s654 = scalar_lea.vmem %s3, 4
      %v655 = vld [vmem:[%s654] sm:$0x1]
      %v657 = vsel %vm419, %v650, 0
      %v660 = vsel %vm419, %v651, 0
      %v663 = vsel %vm419, %v652, 0
      %v666 = vsel %vm419, %v653, 0
      %v669 = vsel %vm432, %v655, 0
      %671 = vmatpush.bf16.msra.mxu0 0
      %672 = vmatpush.bf16.msra.mxu0 0
      %673 = vmatpush.bf16.msra.mxu0 0
      %674 = vmatpush.bf16.msra.mxu0 0
      %675 = vmatpush.bf16.msra.mxu0 0
      %676 = vmatpush.bf16.msra.mxu0 0
      %677 = vmatpush.bf16.msra.mxu0 0
      %678 = vmatpush.bf16.msra.mxu0 %v669
      %679 = vmatmul.bf16.gmra.mxu0 %v657
      %v680 = vpop.f32.mrf.mxu0
      %v681 = vadd.f32 0.0, %v680
      %v682 = vpop.f32.mrf.mxu0
      %v683 = vadd.f32 0.0, %v682
      %684 = vmatmul.bf16.gmra.mxu0 %v660
      %v685 = vpop.f32.mrf.mxu0
      %v686 = vadd.f32 0.0, %v685
      %v687 = vpop.f32.mrf.mxu0
      %v688 = vadd.f32 0.0, %v687
      %689 = vmatmul.bf16.gmra.mxu0 %v663
      %v690 = vpop.f32.mrf.mxu0
      %v691 = vadd.f32 0.0, %v690
      %v692 = vpop.f32.mrf.mxu0
      %v693 = vadd.f32 0.0, %v692
      %694 = vmatmul.bf16.gmra.mxu0 %v666
      %v695 = vpop.f32.mrf.mxu0
      %v696 = vadd.f32 0.0, %v695
      %v697 = vpop.f32.mrf.mxu0
      %v698 = vadd.f32 0.0, %v697
      %699 = vdwg.mxu0
      %v700 = vadd.f32 %v634, %v681
      %v701 = vadd.f32 %v635, %v683
      %v702 = vadd.f32 %v636, %v686
      %v703 = vadd.f32 %v637, %v688
      %v704 = vadd.f32 %v638, %v691
      %v705 = vadd.f32 %v639, %v693
      %v706 = vadd.f32 %v640, %v696
      %v707 = vadd.f32 %v641, %v698
      %v708 = vld [vmem:[%s575 + $0x2] sm:$0xff]
      %v709 = vld [vmem:[%s575 + $0x12] sm:$0xff]
      %v710 = vld [vmem:[%s575 + $0x22] sm:$0xff]
      %v711 = vld [vmem:[%s575 + $0x32] sm:$0xff]
      %v712 = vld [vmem:[%s575 + $0x42] sm:$0xff]
      %v713 = vld [vmem:[%s575 + $0x52] sm:$0xff]
      %v714 = vld [vmem:[%s575 + $0x62] sm:$0xff]
      %v715 = vld [vmem:[%s575 + $0x72] sm:$0xff]
      %v716 = vpack.c.bf16 %v709, %v708
      %v717 = vpack.c.bf16 %v711, %v710
      %v718 = vpack.c.bf16 %v713, %v712
      %v719 = vpack.c.bf16 %v715, %v714
      %s720 = scalar_lea.vmem %s3, 5
      %v721 = vld [vmem:[%s720] sm:$0x1]
      %v723 = vsel %vm419, %v716, 0
      %v726 = vsel %vm419, %v717, 0
      %v729 = vsel %vm419, %v718, 0
      %v732 = vsel %vm419, %v719, 0
      %v735 = vsel %vm432, %v721, 0
      %737 = vmatpush.bf16.msra.mxu0 0
      %738 = vmatpush.bf16.msra.mxu0 0
      %739 = vmatpush.bf16.msra.mxu0 0
      %740 = vmatpush.bf16.msra.mxu0 0
      %741 = vmatpush.bf16.msra.mxu0 0
      %742 = vmatpush.bf16.msra.mxu0 0
      %743 = vmatpush.bf16.msra.mxu0 0
      %744 = vmatpush.bf16.msra.mxu0 %v735
      %745 = vmatmul.bf16.gmra.mxu0 %v723
      %v746 = vpop.f32.mrf.mxu0
      %v747 = vadd.f32 0.0, %v746
      %v748 = vpop.f32.mrf.mxu0
      %v749 = vadd.f32 0.0, %v748
      %750 = vmatmul.bf16.gmra.mxu0 %v726
      %v751 = vpop.f32.mrf.mxu0
      %v752 = vadd.f32 0.0, %v751
      %v753 = vpop.f32.mrf.mxu0
      %v754 = vadd.f32 0.0, %v753
      %755 = vmatmul.bf16.gmra.mxu0 %v729
      %v756 = vpop.f32.mrf.mxu0
      %v757 = vadd.f32 0.0, %v756
      %v758 = vpop.f32.mrf.mxu0
      %v759 = vadd.f32 0.0, %v758
      %760 = vmatmul.bf16.gmra.mxu0 %v732
      %v761 = vpop.f32.mrf.mxu0
      %v762 = vadd.f32 0.0, %v761
      %v763 = vpop.f32.mrf.mxu0
      %v764 = vadd.f32 0.0, %v763
      %765 = vdwg.mxu0
      %v766 = vadd.f32 %v700, %v747
      %v767 = vadd.f32 %v701, %v749
      %v768 = vadd.f32 %v702, %v752
      %v769 = vadd.f32 %v703, %v754
      %v770 = vadd.f32 %v704, %v757
      %v771 = vadd.f32 %v705, %v759
      %v772 = vadd.f32 %v706, %v762
      %v773 = vadd.f32 %v707, %v764
      %s774 = scalar_lea.vmem %s351, 32
      %v775 = vld [vmem:[%s774] sm:$0xff]
      %v776 = vld [vmem:[%s774 + $0x10] sm:$0xff]
      %v777 = vld [vmem:[%s774 + $0x20] sm:$0xff]
      %v778 = vld [vmem:[%s774 + $0x30] sm:$0xff]
      %v779 = vld [vmem:[%s774 + $0x40] sm:$0xff]
      %v780 = vld [vmem:[%s774 + $0x50] sm:$0xff]
      %v781 = vld [vmem:[%s774 + $0x60] sm:$0xff]
      %v782 = vld [vmem:[%s774 + $0x70] sm:$0xff]
      %v783 = vpack.c.bf16 %v776, %v775
      %v784 = vpack.c.bf16 %v778, %v777
      %v785 = vpack.c.bf16 %v780, %v779
      %v786 = vpack.c.bf16 %v782, %v781
      %s787 = scalar_lea.vmem %s3, 6
      %v788 = vld [vmem:[%s787] sm:$0x1]
      %v790 = vsel %vm419, %v783, 0
      %v793 = vsel %vm419, %v784, 0
      %v796 = vsel %vm419, %v785, 0
      %v799 = vsel %vm419, %v786, 0
      %v802 = vsel %vm432, %v788, 0
      %804 = vmatpush.bf16.msra.mxu0 0
      %805 = vmatpush.bf16.msra.mxu0 0
      %806 = vmatpush.bf16.msra.mxu0 0
      %807 = vmatpush.bf16.msra.mxu0 0
      %808 = vmatpush.bf16.msra.mxu0 0
      %809 = vmatpush.bf16.msra.mxu0 0
      %810 = vmatpush.bf16.msra.mxu0 0
      %811 = vmatpush.bf16.msra.mxu0 %v802
      %812 = vmatmul.bf16.gmra.mxu0 %v790
      %v813 = vpop.f32.mrf.mxu0
      %v814 = vadd.f32 0.0, %v813
      %v815 = vpop.f32.mrf.mxu0
      %v816 = vadd.f32 0.0, %v815
      %817 = vmatmul.bf16.gmra.mxu0 %v793
      %v818 = vpop.f32.mrf.mxu0
      %v819 = vadd.f32 0.0, %v818
      %v820 = vpop.f32.mrf.mxu0
      %v821 = vadd.f32 0.0, %v820
      %822 = vmatmul.bf16.gmra.mxu0 %v796
      %v823 = vpop.f32.mrf.mxu0
      %v824 = vadd.f32 0.0, %v823
      %v825 = vpop.f32.mrf.mxu0
      %v826 = vadd.f32 0.0, %v825
      %827 = vmatmul.bf16.gmra.mxu0 %v799
      %v828 = vpop.f32.mrf.mxu0
      %v829 = vadd.f32 0.0, %v828
      %v830 = vpop.f32.mrf.mxu0
      %v831 = vadd.f32 0.0, %v830
      %832 = vdwg.mxu0
      %v833 = vadd.f32 %v766, %v814
      %v834 = vadd.f32 %v767, %v816
      %v835 = vadd.f32 %v768, %v819
      %v836 = vadd.f32 %v769, %v821
      %v837 = vadd.f32 %v770, %v824
      %v838 = vadd.f32 %v771, %v826
      %v839 = vadd.f32 %v772, %v829
      %v840 = vadd.f32 %v773, %v831
      %v841 = vld [vmem:[%s774 + $0x1] sm:$0xff]
      %v842 = vld [vmem:[%s774 + $0x11] sm:$0xff]
      %v843 = vld [vmem:[%s774 + $0x21] sm:$0xff]
      %v844 = vld [vmem:[%s774 + $0x31] sm:$0xff]
      %v845 = vld [vmem:[%s774 + $0x41] sm:$0xff]
      %v846 = vld [vmem:[%s774 + $0x51] sm:$0xff]
      %v847 = vld [vmem:[%s774 + $0x61] sm:$0xff]
      %v848 = vld [vmem:[%s774 + $0x71] sm:$0xff]
      %v849 = vpack.c.bf16 %v842, %v841
      %v850 = vpack.c.bf16 %v844, %v843
      %v851 = vpack.c.bf16 %v846, %v845
      %v852 = vpack.c.bf16 %v848, %v847
      %s853 = scalar_lea.vmem %s3, 7
      %v854 = vld [vmem:[%s853] sm:$0x1]
      %v856 = vsel %vm419, %v849, 0
      %v859 = vsel %vm419, %v850, 0
      %v862 = vsel %vm419, %v851, 0
      %v865 = vsel %vm419, %v852, 0
      %v868 = vsel %vm432, %v854, 0
      %870 = vmatpush.bf16.msra.mxu0 0
      %871 = vmatpush.bf16.msra.mxu0 0
      %872 = vmatpush.bf16.msra.mxu0 0
      %873 = vmatpush.bf16.msra.mxu0 0
      %874 = vmatpush.bf16.msra.mxu0 0
      %875 = vmatpush.bf16.msra.mxu0 0
      %876 = vmatpush.bf16.msra.mxu0 0
      %877 = vmatpush.bf16.msra.mxu0 %v868
      %878 = vmatmul.bf16.gmra.mxu0 %v856
      %v879 = vpop.f32.mrf.mxu0
      %v880 = vadd.f32 0.0, %v879
      %v881 = vpop.f32.mrf.mxu0
      %v882 = vadd.f32 0.0, %v881
      %883 = vmatmul.bf16.gmra.mxu0 %v859
      %v884 = vpop.f32.mrf.mxu0
      %v885 = vadd.f32 0.0, %v884
      %v886 = vpop.f32.mrf.mxu0
      %v887 = vadd.f32 0.0, %v886
      %888 = vmatmul.bf16.gmra.mxu0 %v862
      %v889 = vpop.f32.mrf.mxu0
      %v890 = vadd.f32 0.0, %v889
      %v891 = vpop.f32.mrf.mxu0
      %v892 = vadd.f32 0.0, %v891
      %893 = vmatmul.bf16.gmra.mxu0 %v865
      %v894 = vpop.f32.mrf.mxu0
      %v895 = vadd.f32 0.0, %v894
      %v896 = vpop.f32.mrf.mxu0
      %v897 = vadd.f32 0.0, %v896
      %898 = vdwg.mxu0
      %v899 = vadd.f32 %v833, %v880
      %v900 = vadd.f32 %v834, %v882
      %v901 = vadd.f32 %v835, %v885
      %v902 = vadd.f32 %v836, %v887
      %v903 = vadd.f32 %v837, %v890
      %v904 = vadd.f32 %v838, %v892
      %v905 = vadd.f32 %v839, %v895
      %v906 = vadd.f32 %v840, %v897
      %v907 = vld [vmem:[%s774 + $0x2] sm:$0xff]
      %v908 = vld [vmem:[%s774 + $0x12] sm:$0xff]
      %v909 = vld [vmem:[%s774 + $0x22] sm:$0xff]
      %v910 = vld [vmem:[%s774 + $0x32] sm:$0xff]
      %v911 = vld [vmem:[%s774 + $0x42] sm:$0xff]
      %v912 = vld [vmem:[%s774 + $0x52] sm:$0xff]
      %v913 = vld [vmem:[%s774 + $0x62] sm:$0xff]
      %v914 = vld [vmem:[%s774 + $0x72] sm:$0xff]
      %v915 = vpack.c.bf16 %v908, %v907
      %v916 = vpack.c.bf16 %v910, %v909
      %v917 = vpack.c.bf16 %v912, %v911
      %v918 = vpack.c.bf16 %v914, %v913
      %s919 = scalar_lea.vmem %s3, 8
      %v920 = vld [vmem:[%s919] sm:$0x1]
      %v922 = vsel %vm419, %v915, 0
      %v925 = vsel %vm419, %v916, 0
      %v928 = vsel %vm419, %v917, 0
      %v931 = vsel %vm419, %v918, 0
      %v934 = vsel %vm432, %v920, 0
      %936 = vmatpush.bf16.msra.mxu0 0
      %937 = vmatpush.bf16.msra.mxu0 0
      %938 = vmatpush.bf16.msra.mxu0 0
      %939 = vmatpush.bf16.msra.mxu0 0
      %940 = vmatpush.bf16.msra.mxu0 0
      %941 = vmatpush.bf16.msra.mxu0 0
      %942 = vmatpush.bf16.msra.mxu0 0
      %943 = vmatpush.bf16.msra.mxu0 %v934
      %944 = vmatmul.bf16.gmra.mxu0 %v922
      %v945 = vpop.f32.mrf.mxu0
      %v946 = vadd.f32 0.0, %v945
      %v947 = vpop.f32.mrf.mxu0
      %v948 = vadd.f32 0.0, %v947
      %949 = vmatmul.bf16.gmra.mxu0 %v925
      %v950 = vpop.f32.mrf.mxu0
      %v951 = vadd.f32 0.0, %v950
      %v952 = vpop.f32.mrf.mxu0
      %v953 = vadd.f32 0.0, %v952
      %954 = vmatmul.bf16.gmra.mxu0 %v928
      %v955 = vpop.f32.mrf.mxu0
      %v956 = vadd.f32 0.0, %v955
      %v957 = vpop.f32.mrf.mxu0
      %v958 = vadd.f32 0.0, %v957
      %959 = vmatmul.bf16.gmra.mxu0 %v931
      %v960 = vpop.f32.mrf.mxu0
      %v961 = vadd.f32 0.0, %v960
      %v962 = vpop.f32.mrf.mxu0
      %v963 = vadd.f32 0.0, %v962
      %964 = vdwg.mxu0
      %v965 = vadd.f32 %v899, %v946
      %v966 = vadd.f32 %v900, %v948
      %v967 = vadd.f32 %v901, %v951
      %v968 = vadd.f32 %v902, %v953
      %v969 = vadd.f32 %v903, %v956
      %v970 = vadd.f32 %v904, %v958
      %v971 = vadd.f32 %v905, %v961
      %v972 = vadd.f32 %v906, %v963
      %v973 = vld [vmem:[%s361] sm:$0xff]
      %v974 = vld [vmem:[%s361 + $0x10] sm:$0xff]
      %v975 = vld [vmem:[%s361 + $0x20] sm:$0xff]
      %v976 = vld [vmem:[%s361 + $0x30] sm:$0xff]
      %v977 = vld [vmem:[%s361 + $0x40] sm:$0xff]
      %v978 = vld [vmem:[%s361 + $0x50] sm:$0xff]
      %v979 = vld [vmem:[%s361 + $0x60] sm:$0xff]
      %v980 = vld [vmem:[%s361 + $0x70] sm:$0xff]
      %v981 = vpack.c.bf16 %v974, %v973
      %v982 = vpack.c.bf16 %v976, %v975
      %v983 = vpack.c.bf16 %v978, %v977
      %v984 = vpack.c.bf16 %v980, %v979
      %s985 = scalar_lea.vmem %s3, 9
      %v986 = vld [vmem:[%s985] sm:$0x1]
      %v988 = vsel %vm419, %v981, 0
      %v991 = vsel %vm419, %v982, 0
      %v994 = vsel %vm419, %v983, 0
      %v997 = vsel %vm419, %v984, 0
      %v1000 = vsel %vm432, %v986, 0
      %1002 = vmatpush.bf16.msra.mxu0 0
      %1003 = vmatpush.bf16.msra.mxu0 0
      %1004 = vmatpush.bf16.msra.mxu0 0
      %1005 = vmatpush.bf16.msra.mxu0 0
      %1006 = vmatpush.bf16.msra.mxu0 0
      %1007 = vmatpush.bf16.msra.mxu0 0
      %1008 = vmatpush.bf16.msra.mxu0 0
      %1009 = vmatpush.bf16.msra.mxu0 %v1000
      %1010 = vmatmul.bf16.gmra.mxu0 %v988
      %v1011 = vpop.f32.mrf.mxu0
      %v1012 = vadd.f32 0.0, %v1011
      %v1013 = vpop.f32.mrf.mxu0
      %v1014 = vadd.f32 0.0, %v1013
      %1015 = vmatmul.bf16.gmra.mxu0 %v991
      %v1016 = vpop.f32.mrf.mxu0
      %v1017 = vadd.f32 0.0, %v1016
      %v1018 = vpop.f32.mrf.mxu0
      %v1019 = vadd.f32 0.0, %v1018
      %1020 = vmatmul.bf16.gmra.mxu0 %v994
      %v1021 = vpop.f32.mrf.mxu0
      %v1022 = vadd.f32 0.0, %v1021
      %v1023 = vpop.f32.mrf.mxu0
      %v1024 = vadd.f32 0.0, %v1023
      %1025 = vmatmul.bf16.gmra.mxu0 %v997
      %v1026 = vpop.f32.mrf.mxu0
      %v1027 = vadd.f32 0.0, %v1026
      %v1028 = vpop.f32.mrf.mxu0
      %v1029 = vadd.f32 0.0, %v1028
      %1030 = vdwg.mxu0
      %v1031 = vadd.f32 %v965, %v1012
      %v1032 = vadd.f32 %v966, %v1014
      %v1033 = vadd.f32 %v967, %v1017
      %v1034 = vadd.f32 %v968, %v1019
      %v1035 = vadd.f32 %v969, %v1022
      %v1036 = vadd.f32 %v970, %v1024
      %v1037 = vadd.f32 %v971, %v1027
      %v1038 = vadd.f32 %v972, %v1029
      %v1039 = vld [vmem:[%s361 + $0x1] sm:$0xff]
      %v1040 = vld [vmem:[%s361 + $0x11] sm:$0xff]
      %v1041 = vld [vmem:[%s361 + $0x21] sm:$0xff]
      %v1042 = vld [vmem:[%s361 + $0x31] sm:$0xff]
      %v1043 = vld [vmem:[%s361 + $0x41] sm:$0xff]
      %v1044 = vld [vmem:[%s361 + $0x51] sm:$0xff]
      %v1045 = vld [vmem:[%s361 + $0x61] sm:$0xff]
      %v1046 = vld [vmem:[%s361 + $0x71] sm:$0xff]
      %v1047 = vpack.c.bf16 %v1040, %v1039
      %v1048 = vpack.c.bf16 %v1042, %v1041
      %v1049 = vpack.c.bf16 %v1044, %v1043
      %v1050 = vpack.c.bf16 %v1046, %v1045
      %s1051 = scalar_lea.vmem %s3, 10
      %v1052 = vld [vmem:[%s1051] sm:$0x1]
      %v1054 = vsel %vm419, %v1047, 0
      %v1057 = vsel %vm419, %v1048, 0
      %v1060 = vsel %vm419, %v1049, 0
      %v1063 = vsel %vm419, %v1050, 0
      %v1066 = vsel %vm432, %v1052, 0
      %1068 = vmatpush.bf16.msra.mxu0 0
      %1069 = vmatpush.bf16.msra.mxu0 0
      %1070 = vmatpush.bf16.msra.mxu0 0
      %1071 = vmatpush.bf16.msra.mxu0 0
      %1072 = vmatpush.bf16.msra.mxu0 0
      %1073 = vmatpush.bf16.msra.mxu0 0
      %1074 = vmatpush.bf16.msra.mxu0 0
      %1075 = vmatpush.bf16.msra.mxu0 %v1066
      %1076 = vmatmul.bf16.gmra.mxu0 %v1054
      %v1077 = vpop.f32.mrf.mxu0
      %v1078 = vadd.f32 0.0, %v1077
      %v1079 = vpop.f32.mrf.mxu0
      %v1080 = vadd.f32 0.0, %v1079
      %1081 = vmatmul.bf16.gmra.mxu0 %v1057
      %v1082 = vpop.f32.mrf.mxu0
      %v1083 = vadd.f32 0.0, %v1082
      %v1084 = vpop.f32.mrf.mxu0
      %v1085 = vadd.f32 0.0, %v1084
      %1086 = vmatmul.bf16.gmra.mxu0 %v1060
      %v1087 = vpop.f32.mrf.mxu0
      %v1088 = vadd.f32 0.0, %v1087
      %v1089 = vpop.f32.mrf.mxu0
      %v1090 = vadd.f32 0.0, %v1089
      %1091 = vmatmul.bf16.gmra.mxu0 %v1063
      %v1092 = vpop.f32.mrf.mxu0
      %v1093 = vadd.f32 0.0, %v1092
      %v1094 = vpop.f32.mrf.mxu0
      %v1095 = vadd.f32 0.0, %v1094
      %1096 = vdwg.mxu0
      %v1097 = vadd.f32 %v1031, %v1078
      %v1098 = vadd.f32 %v1032, %v1080
      %v1099 = vadd.f32 %v1033, %v1083
      %v1100 = vadd.f32 %v1034, %v1085
      %v1101 = vadd.f32 %v1035, %v1088
      %v1102 = vadd.f32 %v1036, %v1090
      %v1103 = vadd.f32 %v1037, %v1093
      %v1104 = vadd.f32 %v1038, %v1095
      %v1105 = vld [vmem:[%s361 + $0x2] sm:$0xff]
      %v1106 = vld [vmem:[%s361 + $0x12] sm:$0xff]
      %v1107 = vld [vmem:[%s361 + $0x22] sm:$0xff]
      %v1108 = vld [vmem:[%s361 + $0x32] sm:$0xff]
      %v1109 = vld [vmem:[%s361 + $0x42] sm:$0xff]
      %v1110 = vld [vmem:[%s361 + $0x52] sm:$0xff]
      %v1111 = vld [vmem:[%s361 + $0x62] sm:$0xff]
      %v1112 = vld [vmem:[%s361 + $0x72] sm:$0xff]
      %v1113 = vpack.c.bf16 %v1106, %v1105
      %v1114 = vpack.c.bf16 %v1108, %v1107
      %v1115 = vpack.c.bf16 %v1110, %v1109
      %v1116 = vpack.c.bf16 %v1112, %v1111
      %s1117 = scalar_lea.vmem %s3, 11
      %v1118 = vld [vmem:[%s1117] sm:$0x1]
      %v1120 = vsel %vm419, %v1113, 0
      %v1123 = vsel %vm419, %v1114, 0
      %v1126 = vsel %vm419, %v1115, 0
      %v1129 = vsel %vm419, %v1116, 0
      %v1132 = vsel %vm432, %v1118, 0
      %1134 = vmatpush.bf16.msra.mxu0 0
      %1135 = vmatpush.bf16.msra.mxu0 0
      %1136 = vmatpush.bf16.msra.mxu0 0
      %1137 = vmatpush.bf16.msra.mxu0 0
      %1138 = vmatpush.bf16.msra.mxu0 0
      %1139 = vmatpush.bf16.msra.mxu0 0
      %1140 = vmatpush.bf16.msra.mxu0 0
      %1141 = vmatpush.bf16.msra.mxu0 %v1132
      %1142 = vmatmul.bf16.gmra.mxu0 %v1120
      %v1143 = vpop.f32.mrf.mxu0
      %v1144 = vadd.f32 0.0, %v1143
      %v1145 = vpop.f32.mrf.mxu0
      %v1146 = vadd.f32 0.0, %v1145
      %1147 = vmatmul.bf16.gmra.mxu0 %v1123
      %v1148 = vpop.f32.mrf.mxu0
      %v1149 = vadd.f32 0.0, %v1148
      %v1150 = vpop.f32.mrf.mxu0
      %v1151 = vadd.f32 0.0, %v1150
      %1152 = vmatmul.bf16.gmra.mxu0 %v1126
      %v1153 = vpop.f32.mrf.mxu0
      %v1154 = vadd.f32 0.0, %v1153
      %v1155 = vpop.f32.mrf.mxu0
      %v1156 = vadd.f32 0.0, %v1155
      %1157 = vmatmul.bf16.gmra.mxu0 %v1129
      %v1158 = vpop.f32.mrf.mxu0
      %v1159 = vadd.f32 0.0, %v1158
      %v1160 = vpop.f32.mrf.mxu0
      %v1161 = vadd.f32 0.0, %v1160
      %1162 = vdwg.mxu0
      %v1163 = vadd.f32 %v1097, %v1144
      %v1164 = vadd.f32 %v1098, %v1146
      %v1165 = vadd.f32 %v1099, %v1149
      %v1166 = vadd.f32 %v1100, %v1151
      %v1167 = vadd.f32 %v1101, %v1154
      %v1168 = vadd.f32 %v1102, %v1156
      %v1169 = vadd.f32 %v1103, %v1159
      %v1170 = vadd.f32 %v1104, %v1161
      %s1171 = scalar_lea.vmem %s361, 16
      %v1172 = vld [vmem:[%s1171] sm:$0xff]
      %v1173 = vld [vmem:[%s1171 + $0x10] sm:$0xff]
      %v1174 = vld [vmem:[%s1171 + $0x20] sm:$0xff]
      %v1175 = vld [vmem:[%s1171 + $0x30] sm:$0xff]
      %v1176 = vld [vmem:[%s1171 + $0x40] sm:$0xff]
      %v1177 = vld [vmem:[%s1171 + $0x50] sm:$0xff]
      %v1178 = vld [vmem:[%s1171 + $0x60] sm:$0xff]
      %v1179 = vld [vmem:[%s1171 + $0x70] sm:$0xff]
      %v1180 = vpack.c.bf16 %v1173, %v1172
      %v1181 = vpack.c.bf16 %v1175, %v1174
      %v1182 = vpack.c.bf16 %v1177, %v1176
      %v1183 = vpack.c.bf16 %v1179, %v1178
      %s1184 = scalar_lea.vmem %s3, 12
      %v1185 = vld [vmem:[%s1184] sm:$0x1]
      %v1187 = vsel %vm419, %v1180, 0
      %v1190 = vsel %vm419, %v1181, 0
      %v1193 = vsel %vm419, %v1182, 0
      %v1196 = vsel %vm419, %v1183, 0
      %v1199 = vsel %vm432, %v1185, 0
      %1201 = vmatpush.bf16.msra.mxu0 0
      %1202 = vmatpush.bf16.msra.mxu0 0
      %1203 = vmatpush.bf16.msra.mxu0 0
      %1204 = vmatpush.bf16.msra.mxu0 0
      %1205 = vmatpush.bf16.msra.mxu0 0
      %1206 = vmatpush.bf16.msra.mxu0 0
      %1207 = vmatpush.bf16.msra.mxu0 0
      %1208 = vmatpush.bf16.msra.mxu0 %v1199
      %1209 = vmatmul.bf16.gmra.mxu0 %v1187
      %v1210 = vpop.f32.mrf.mxu0
      %v1211 = vadd.f32 0.0, %v1210
      %v1212 = vpop.f32.mrf.mxu0
      %v1213 = vadd.f32 0.0, %v1212
      %1214 = vmatmul.bf16.gmra.mxu0 %v1190
      %v1215 = vpop.f32.mrf.mxu0
      %v1216 = vadd.f32 0.0, %v1215
      %v1217 = vpop.f32.mrf.mxu0
      %v1218 = vadd.f32 0.0, %v1217
      %1219 = vmatmul.bf16.gmra.mxu0 %v1193
      %v1220 = vpop.f32.mrf.mxu0
      %v1221 = vadd.f32 0.0, %v1220
      %v1222 = vpop.f32.mrf.mxu0
      %v1223 = vadd.f32 0.0, %v1222
      %1224 = vmatmul.bf16.gmra.mxu0 %v1196
      %v1225 = vpop.f32.mrf.mxu0
      %v1226 = vadd.f32 0.0, %v1225
      %v1227 = vpop.f32.mrf.mxu0
      %v1228 = vadd.f32 0.0, %v1227
      %1229 = vdwg.mxu0
      %v1230 = vadd.f32 %v1163, %v1211
      %v1231 = vadd.f32 %v1164, %v1213
      %v1232 = vadd.f32 %v1165, %v1216
      %v1233 = vadd.f32 %v1166, %v1218
      %v1234 = vadd.f32 %v1167, %v1221
      %v1235 = vadd.f32 %v1168, %v1223
      %v1236 = vadd.f32 %v1169, %v1226
      %v1237 = vadd.f32 %v1170, %v1228
      %v1238 = vld [vmem:[%s1171 + $0x1] sm:$0xff]
      %v1239 = vld [vmem:[%s1171 + $0x11] sm:$0xff]
      %v1240 = vld [vmem:[%s1171 + $0x21] sm:$0xff]
      %v1241 = vld [vmem:[%s1171 + $0x31] sm:$0xff]
      %v1242 = vld [vmem:[%s1171 + $0x41] sm:$0xff]
      %v1243 = vld [vmem:[%s1171 + $0x51] sm:$0xff]
      %v1244 = vld [vmem:[%s1171 + $0x61] sm:$0xff]
      %v1245 = vld [vmem:[%s1171 + $0x71] sm:$0xff]
      %v1246 = vpack.c.bf16 %v1239, %v1238
      %v1247 = vpack.c.bf16 %v1241, %v1240
      %v1248 = vpack.c.bf16 %v1243, %v1242
      %v1249 = vpack.c.bf16 %v1245, %v1244
      %s1250 = scalar_lea.vmem %s3, 13
      %v1251 = vld [vmem:[%s1250] sm:$0x1]
      %v1253 = vsel %vm419, %v1246, 0
      %v1256 = vsel %vm419, %v1247, 0
      %v1259 = vsel %vm419, %v1248, 0
      %v1262 = vsel %vm419, %v1249, 0
      %v1265 = vsel %vm432, %v1251, 0
      %1267 = vmatpush.bf16.msra.mxu0 0
      %1268 = vmatpush.bf16.msra.mxu0 0
      %1269 = vmatpush.bf16.msra.mxu0 0
      %1270 = vmatpush.bf16.msra.mxu0 0
      %1271 = vmatpush.bf16.msra.mxu0 0
      %1272 = vmatpush.bf16.msra.mxu0 0
      %1273 = vmatpush.bf16.msra.mxu0 0
      %1274 = vmatpush.bf16.msra.mxu0 %v1265
      %1275 = vmatmul.bf16.gmra.mxu0 %v1253
      %v1276 = vpop.f32.mrf.mxu0
      %v1277 = vadd.f32 0.0, %v1276
      %v1278 = vpop.f32.mrf.mxu0
      %v1279 = vadd.f32 0.0, %v1278
      %1280 = vmatmul.bf16.gmra.mxu0 %v1256
      %v1281 = vpop.f32.mrf.mxu0
      %v1282 = vadd.f32 0.0, %v1281
      %v1283 = vpop.f32.mrf.mxu0
      %v1284 = vadd.f32 0.0, %v1283
      %1285 = vmatmul.bf16.gmra.mxu0 %v1259
      %v1286 = vpop.f32.mrf.mxu0
      %v1287 = vadd.f32 0.0, %v1286
      %v1288 = vpop.f32.mrf.mxu0
      %v1289 = vadd.f32 0.0, %v1288
      %1290 = vmatmul.bf16.gmra.mxu0 %v1262
      %v1291 = vpop.f32.mrf.mxu0
      %v1292 = vadd.f32 0.0, %v1291
      %v1293 = vpop.f32.mrf.mxu0
      %v1294 = vadd.f32 0.0, %v1293
      %1295 = vdwg.mxu0
      %v1296 = vadd.f32 %v1230, %v1277
      %v1297 = vadd.f32 %v1231, %v1279
      %v1298 = vadd.f32 %v1232, %v1282
      %v1299 = vadd.f32 %v1233, %v1284
      %v1300 = vadd.f32 %v1234, %v1287
      %v1301 = vadd.f32 %v1235, %v1289
      %v1302 = vadd.f32 %v1236, %v1292
      %v1303 = vadd.f32 %v1237, %v1294
      %v1304 = vld [vmem:[%s1171 + $0x2] sm:$0xff]
      %v1305 = vld [vmem:[%s1171 + $0x12] sm:$0xff]
      %v1306 = vld [vmem:[%s1171 + $0x22] sm:$0xff]
      %v1307 = vld [vmem:[%s1171 + $0x32] sm:$0xff]
      %v1308 = vld [vmem:[%s1171 + $0x42] sm:$0xff]
      %v1309 = vld [vmem:[%s1171 + $0x52] sm:$0xff]
      %v1310 = vld [vmem:[%s1171 + $0x62] sm:$0xff]
      %v1311 = vld [vmem:[%s1171 + $0x72] sm:$0xff]
      %v1312 = vpack.c.bf16 %v1305, %v1304
      %v1313 = vpack.c.bf16 %v1307, %v1306
      %v1314 = vpack.c.bf16 %v1309, %v1308
      %v1315 = vpack.c.bf16 %v1311, %v1310
      %s1316 = scalar_lea.vmem %s3, 14
      %v1317 = vld [vmem:[%s1316] sm:$0x1]
      %v1319 = vsel %vm419, %v1312, 0
      %v1322 = vsel %vm419, %v1313, 0
      %v1325 = vsel %vm419, %v1314, 0
      %v1328 = vsel %vm419, %v1315, 0
      %v1331 = vsel %vm432, %v1317, 0
      %1333 = vmatpush.bf16.msra.mxu0 0
      %1334 = vmatpush.bf16.msra.mxu0 0
      %1335 = vmatpush.bf16.msra.mxu0 0
      %1336 = vmatpush.bf16.msra.mxu0 0
      %1337 = vmatpush.bf16.msra.mxu0 0
      %1338 = vmatpush.bf16.msra.mxu0 0
      %1339 = vmatpush.bf16.msra.mxu0 0
      %1340 = vmatpush.bf16.msra.mxu0 %v1331
      %1341 = vmatmul.bf16.gmra.mxu0 %v1319
      %v1342 = vpop.f32.mrf.mxu0
      %v1343 = vadd.f32 0.0, %v1342
      %v1344 = vpop.f32.mrf.mxu0
      %v1345 = vadd.f32 0.0, %v1344
      %1346 = vmatmul.bf16.gmra.mxu0 %v1322
      %v1347 = vpop.f32.mrf.mxu0
      %v1348 = vadd.f32 0.0, %v1347
      %v1349 = vpop.f32.mrf.mxu0
      %v1350 = vadd.f32 0.0, %v1349
      %1351 = vmatmul.bf16.gmra.mxu0 %v1325
      %v1352 = vpop.f32.mrf.mxu0
      %v1353 = vadd.f32 0.0, %v1352
      %v1354 = vpop.f32.mrf.mxu0
      %v1355 = vadd.f32 0.0, %v1354
      %1356 = vmatmul.bf16.gmra.mxu0 %v1328
      %v1357 = vpop.f32.mrf.mxu0
      %v1358 = vadd.f32 0.0, %v1357
      %v1359 = vpop.f32.mrf.mxu0
      %v1360 = vadd.f32 0.0, %v1359
      %1361 = vdwg.mxu0
      %v1362 = vadd.f32 %v1296, %v1343
      %v1363 = vadd.f32 %v1297, %v1345
      %v1364 = vadd.f32 %v1298, %v1348
      %v1365 = vadd.f32 %v1299, %v1350
      %v1366 = vadd.f32 %v1300, %v1353
      %v1367 = vadd.f32 %v1301, %v1355
      %v1368 = vadd.f32 %v1302, %v1358
      %v1369 = vadd.f32 %v1303, %v1360
      %s1370 = scalar_lea.vmem %s361, 32
      %v1371 = vld [vmem:[%s1370] sm:$0xff]
      %v1372 = vld [vmem:[%s1370 + $0x10] sm:$0xff]
      %v1373 = vld [vmem:[%s1370 + $0x20] sm:$0xff]
      %v1374 = vld [vmem:[%s1370 + $0x30] sm:$0xff]
      %v1375 = vld [vmem:[%s1370 + $0x40] sm:$0xff]
      %v1376 = vld [vmem:[%s1370 + $0x50] sm:$0xff]
      %v1377 = vld [vmem:[%s1370 + $0x60] sm:$0xff]
      %v1378 = vld [vmem:[%s1370 + $0x70] sm:$0xff]
      %v1379 = vpack.c.bf16 %v1372, %v1371
      %v1380 = vpack.c.bf16 %v1374, %v1373
      %v1381 = vpack.c.bf16 %v1376, %v1375
      %v1382 = vpack.c.bf16 %v1378, %v1377
      %s1383 = scalar_lea.vmem %s3, 15
      %v1384 = vld [vmem:[%s1383] sm:$0x1]
      %v1386 = vsel %vm419, %v1379, 0
      %v1389 = vsel %vm419, %v1380, 0
      %v1392 = vsel %vm419, %v1381, 0
      %v1395 = vsel %vm419, %v1382, 0
      %v1398 = vsel %vm432, %v1384, 0
      %1400 = vmatpush.bf16.msra.mxu0 0
      %1401 = vmatpush.bf16.msra.mxu0 0
      %1402 = vmatpush.bf16.msra.mxu0 0
      %1403 = vmatpush.bf16.msra.mxu0 0
      %1404 = vmatpush.bf16.msra.mxu0 0
      %1405 = vmatpush.bf16.msra.mxu0 0
      %1406 = vmatpush.bf16.msra.mxu0 0
      %1407 = vmatpush.bf16.msra.mxu0 %v1398
      %1408 = vmatmul.bf16.gmra.mxu0 %v1386
      %v1409 = vpop.f32.mrf.mxu0
      %v1410 = vadd.f32 0.0, %v1409
      %v1411 = vpop.f32.mrf.mxu0
      %v1412 = vadd.f32 0.0, %v1411
      %1413 = vmatmul.bf16.gmra.mxu0 %v1389
      %v1414 = vpop.f32.mrf.mxu0
      %v1415 = vadd.f32 0.0, %v1414
      %v1416 = vpop.f32.mrf.mxu0
      %v1417 = vadd.f32 0.0, %v1416
      %1418 = vmatmul.bf16.gmra.mxu0 %v1392
      %v1419 = vpop.f32.mrf.mxu0
      %v1420 = vadd.f32 0.0, %v1419
      %v1421 = vpop.f32.mrf.mxu0
      %v1422 = vadd.f32 0.0, %v1421
      %1423 = vmatmul.bf16.gmra.mxu0 %v1395
      %v1424 = vpop.f32.mrf.mxu0
      %v1425 = vadd.f32 0.0, %v1424
      %v1426 = vpop.f32.mrf.mxu0
      %v1427 = vadd.f32 0.0, %v1426
      %1428 = vdwg.mxu0
      %v1429 = vadd.f32 %v1362, %v1410
      %v1430 = vadd.f32 %v1363, %v1412
      %v1431 = vadd.f32 %v1364, %v1415
      %v1432 = vadd.f32 %v1365, %v1417
      %v1433 = vadd.f32 %v1366, %v1420
      %v1434 = vadd.f32 %v1367, %v1422
      %v1435 = vadd.f32 %v1368, %v1425
      %v1436 = vadd.f32 %v1369, %v1427
      %v1437 = vld [vmem:[%s1370 + $0x1] sm:$0xff]
      %v1438 = vld [vmem:[%s1370 + $0x11] sm:$0xff]
      %v1439 = vld [vmem:[%s1370 + $0x21] sm:$0xff]
      %v1440 = vld [vmem:[%s1370 + $0x31] sm:$0xff]
      %v1441 = vld [vmem:[%s1370 + $0x41] sm:$0xff]
      %v1442 = vld [vmem:[%s1370 + $0x51] sm:$0xff]
      %v1443 = vld [vmem:[%s1370 + $0x61] sm:$0xff]
      %v1444 = vld [vmem:[%s1370 + $0x71] sm:$0xff]
      %v1445 = vpack.c.bf16 %v1438, %v1437
      %v1446 = vpack.c.bf16 %v1440, %v1439
      %v1447 = vpack.c.bf16 %v1442, %v1441
      %v1448 = vpack.c.bf16 %v1444, %v1443
      %s1449 = scalar_lea.vmem %s3, 16
      %v1450 = vld [vmem:[%s1449] sm:$0x1]
      %v1452 = vsel %vm419, %v1445, 0
      %v1455 = vsel %vm419, %v1446, 0
      %v1458 = vsel %vm419, %v1447, 0
      %v1461 = vsel %vm419, %v1448, 0
      %v1464 = vsel %vm432, %v1450, 0
      %1466 = vmatpush.bf16.msra.mxu0 0
      %1467 = vmatpush.bf16.msra.mxu0 0
      %1468 = vmatpush.bf16.msra.mxu0 0
      %1469 = vmatpush.bf16.msra.mxu0 0
      %1470 = vmatpush.bf16.msra.mxu0 0
      %1471 = vmatpush.bf16.msra.mxu0 0
      %1472 = vmatpush.bf16.msra.mxu0 0
      %1473 = vmatpush.bf16.msra.mxu0 %v1464
      %1474 = vmatmul.bf16.gmra.mxu0 %v1452
      %v1475 = vpop.f32.mrf.mxu0
      %v1476 = vadd.f32 0.0, %v1475
      %v1477 = vpop.f32.mrf.mxu0
      %v1478 = vadd.f32 0.0, %v1477
      %1479 = vmatmul.bf16.gmra.mxu0 %v1455
      %v1480 = vpop.f32.mrf.mxu0
      %v1481 = vadd.f32 0.0, %v1480
      %v1482 = vpop.f32.mrf.mxu0
      %v1483 = vadd.f32 0.0, %v1482
      %1484 = vmatmul.bf16.gmra.mxu0 %v1458
      %v1485 = vpop.f32.mrf.mxu0
      %v1486 = vadd.f32 0.0, %v1485
      %v1487 = vpop.f32.mrf.mxu0
      %v1488 = vadd.f32 0.0, %v1487
      %1489 = vmatmul.bf16.gmra.mxu0 %v1461
      %v1490 = vpop.f32.mrf.mxu0
      %v1491 = vadd.f32 0.0, %v1490
      %v1492 = vpop.f32.mrf.mxu0
      %v1493 = vadd.f32 0.0, %v1492
      %1494 = vdwg.mxu0
      %v1495 = vadd.f32 %v1429, %v1476
      %v1496 = vadd.f32 %v1430, %v1478
      %v1497 = vadd.f32 %v1431, %v1481
      %v1498 = vadd.f32 %v1432, %v1483
      %v1499 = vadd.f32 %v1433, %v1486
      %v1500 = vadd.f32 %v1434, %v1488
      %v1501 = vadd.f32 %v1435, %v1491
      %v1502 = vadd.f32 %v1436, %v1493
      %v1503 = vld [vmem:[%s1370 + $0x2] sm:$0xff]
      %v1504 = vld [vmem:[%s1370 + $0x12] sm:$0xff]
      %v1505 = vld [vmem:[%s1370 + $0x22] sm:$0xff]
      %v1506 = vld [vmem:[%s1370 + $0x32] sm:$0xff]
      %v1507 = vld [vmem:[%s1370 + $0x42] sm:$0xff]
      %v1508 = vld [vmem:[%s1370 + $0x52] sm:$0xff]
      %v1509 = vld [vmem:[%s1370 + $0x62] sm:$0xff]
      %v1510 = vld [vmem:[%s1370 + $0x72] sm:$0xff]
      %v1511 = vpack.c.bf16 %v1504, %v1503
      %v1512 = vpack.c.bf16 %v1506, %v1505
      %v1513 = vpack.c.bf16 %v1508, %v1507
      %v1514 = vpack.c.bf16 %v1510, %v1509
      %s1515 = scalar_lea.vmem %s3, 17
      %v1516 = vld [vmem:[%s1515] sm:$0x1]
      %v1518 = vsel %vm419, %v1511, 0
      %v1521 = vsel %vm419, %v1512, 0
      %v1524 = vsel %vm419, %v1513, 0
      %v1527 = vsel %vm419, %v1514, 0
      %v1530 = vsel %vm432, %v1516, 0
      %1532 = vmatpush.bf16.msra.mxu0 0
      %1533 = vmatpush.bf16.msra.mxu0 0
      %1534 = vmatpush.bf16.msra.mxu0 0
      %1535 = vmatpush.bf16.msra.mxu0 0
      %1536 = vmatpush.bf16.msra.mxu0 0
      %1537 = vmatpush.bf16.msra.mxu0 0
      %1538 = vmatpush.bf16.msra.mxu0 0
      %1539 = vmatpush.bf16.msra.mxu0 %v1530
      %1540 = vmatmul.bf16.gmra.mxu0 %v1518
      %v1541 = vpop.f32.mrf.mxu0
      %v1542 = vadd.f32 0.0, %v1541
      %v1543 = vpop.f32.mrf.mxu0
      %v1544 = vadd.f32 0.0, %v1543
      %1545 = vmatmul.bf16.gmra.mxu0 %v1521
      %v1546 = vpop.f32.mrf.mxu0
      %v1547 = vadd.f32 0.0, %v1546
      %v1548 = vpop.f32.mrf.mxu0
      %v1549 = vadd.f32 0.0, %v1548
      %1550 = vmatmul.bf16.gmra.mxu0 %v1524
      %v1551 = vpop.f32.mrf.mxu0
      %v1552 = vadd.f32 0.0, %v1551
      %v1553 = vpop.f32.mrf.mxu0
      %v1554 = vadd.f32 0.0, %v1553
      %1555 = vmatmul.bf16.gmra.mxu0 %v1527
      %v1556 = vpop.f32.mrf.mxu0
      %v1557 = vadd.f32 0.0, %v1556
      %v1558 = vpop.f32.mrf.mxu0
      %v1559 = vadd.f32 0.0, %v1558
      %1560 = vdwg.mxu0
      %v1561 = vadd.f32 %v1495, %v1542
      %v1562 = vadd.f32 %v1496, %v1544
      %v1563 = vadd.f32 %v1497, %v1547
      %v1564 = vadd.f32 %v1498, %v1549
      %v1565 = vadd.f32 %v1499, %v1552
      %v1566 = vadd.f32 %v1500, %v1554
      %v1567 = vadd.f32 %v1501, %v1557
      %v1568 = vadd.f32 %v1502, %v1559
      %v1569 = vld [vmem:[%s372] sm:$0xff]
      %v1570 = vld [vmem:[%s372 + $0x10] sm:$0xff]
      %v1571 = vld [vmem:[%s372 + $0x20] sm:$0xff]
      %v1572 = vld [vmem:[%s372 + $0x30] sm:$0xff]
      %v1573 = vld [vmem:[%s372 + $0x40] sm:$0xff]
      %v1574 = vld [vmem:[%s372 + $0x50] sm:$0xff]
      %v1575 = vld [vmem:[%s372 + $0x60] sm:$0xff]
      %v1576 = vld [vmem:[%s372 + $0x70] sm:$0xff]
      %v1577 = vpack.c.bf16 %v1570, %v1569
      %v1578 = vpack.c.bf16 %v1572, %v1571
      %v1579 = vpack.c.bf16 %v1574, %v1573
      %v1580 = vpack.c.bf16 %v1576, %v1575
      %s1581 = scalar_lea.vmem %s3, 18
      %v1582 = vld [vmem:[%s1581] sm:$0x1]
      %v1584 = vsel %vm419, %v1577, 0
      %v1587 = vsel %vm419, %v1578, 0
      %v1590 = vsel %vm419, %v1579, 0
      %v1593 = vsel %vm419, %v1580, 0
      %v1596 = vsel %vm432, %v1582, 0
      %1598 = vmatpush.bf16.msra.mxu0 0
      %1599 = vmatpush.bf16.msra.mxu0 0
      %1600 = vmatpush.bf16.msra.mxu0 0
      %1601 = vmatpush.bf16.msra.mxu0 0
      %1602 = vmatpush.bf16.msra.mxu0 0
      %1603 = vmatpush.bf16.msra.mxu0 0
      %1604 = vmatpush.bf16.msra.mxu0 0
      %1605 = vmatpush.bf16.msra.mxu0 %v1596
      %1606 = vmatmul.bf16.gmra.mxu0 %v1584
      %v1607 = vpop.f32.mrf.mxu0
      %v1608 = vadd.f32 0.0, %v1607
      %v1609 = vpop.f32.mrf.mxu0
      %v1610 = vadd.f32 0.0, %v1609
      %1611 = vmatmul.bf16.gmra.mxu0 %v1587
      %v1612 = vpop.f32.mrf.mxu0
      %v1613 = vadd.f32 0.0, %v1612
      %v1614 = vpop.f32.mrf.mxu0
      %v1615 = vadd.f32 0.0, %v1614
      %1616 = vmatmul.bf16.gmra.mxu0 %v1590
      %v1617 = vpop.f32.mrf.mxu0
      %v1618 = vadd.f32 0.0, %v1617
      %v1619 = vpop.f32.mrf.mxu0
      %v1620 = vadd.f32 0.0, %v1619
      %1621 = vmatmul.bf16.gmra.mxu0 %v1593
      %v1622 = vpop.f32.mrf.mxu0
      %v1623 = vadd.f32 0.0, %v1622
      %v1624 = vpop.f32.mrf.mxu0
      %v1625 = vadd.f32 0.0, %v1624
      %1626 = vdwg.mxu0
      %v1627 = vadd.f32 %v1561, %v1608
      %v1628 = vadd.f32 %v1562, %v1610
      %v1629 = vadd.f32 %v1563, %v1613
      %v1630 = vadd.f32 %v1564, %v1615
      %v1631 = vadd.f32 %v1565, %v1618
      %v1632 = vadd.f32 %v1566, %v1620
      %v1633 = vadd.f32 %v1567, %v1623
      %v1634 = vadd.f32 %v1568, %v1625
      %v1635 = vld [vmem:[%s372 + $0x1] sm:$0xff]
      %v1636 = vld [vmem:[%s372 + $0x11] sm:$0xff]
      %v1637 = vld [vmem:[%s372 + $0x21] sm:$0xff]
      %v1638 = vld [vmem:[%s372 + $0x31] sm:$0xff]
      %v1639 = vld [vmem:[%s372 + $0x41] sm:$0xff]
      %v1640 = vld [vmem:[%s372 + $0x51] sm:$0xff]
      %v1641 = vld [vmem:[%s372 + $0x61] sm:$0xff]
      %v1642 = vld [vmem:[%s372 + $0x71] sm:$0xff]
      %v1643 = vpack.c.bf16 %v1636, %v1635
      %v1644 = vpack.c.bf16 %v1638, %v1637
      %v1645 = vpack.c.bf16 %v1640, %v1639
      %v1646 = vpack.c.bf16 %v1642, %v1641
      %s1647 = scalar_lea.vmem %s3, 19
      %v1648 = vld [vmem:[%s1647] sm:$0x1]
      %v1650 = vsel %vm419, %v1643, 0
      %v1653 = vsel %vm419, %v1644, 0
      %v1656 = vsel %vm419, %v1645, 0
      %v1659 = vsel %vm419, %v1646, 0
      %v1662 = vsel %vm432, %v1648, 0
      %1664 = vmatpush.bf16.msra.mxu0 0
      %1665 = vmatpush.bf16.msra.mxu0 0
      %1666 = vmatpush.bf16.msra.mxu0 0
      %1667 = vmatpush.bf16.msra.mxu0 0
      %1668 = vmatpush.bf16.msra.mxu0 0
      %1669 = vmatpush.bf16.msra.mxu0 0
      %1670 = vmatpush.bf16.msra.mxu0 0
      %1671 = vmatpush.bf16.msra.mxu0 %v1662
      %1672 = vmatmul.bf16.gmra.mxu0 %v1650
      %v1673 = vpop.f32.mrf.mxu0
      %v1674 = vadd.f32 0.0, %v1673
      %v1675 = vpop.f32.mrf.mxu0
      %v1676 = vadd.f32 0.0, %v1675
      %1677 = vmatmul.bf16.gmra.mxu0 %v1653
      %v1678 = vpop.f32.mrf.mxu0
      %v1679 = vadd.f32 0.0, %v1678
      %v1680 = vpop.f32.mrf.mxu0
      %v1681 = vadd.f32 0.0, %v1680
      %1682 = vmatmul.bf16.gmra.mxu0 %v1656
      %v1683 = vpop.f32.mrf.mxu0
      %v1684 = vadd.f32 0.0, %v1683
      %v1685 = vpop.f32.mrf.mxu0
      %v1686 = vadd.f32 0.0, %v1685
      %1687 = vmatmul.bf16.gmra.mxu0 %v1659
      %v1688 = vpop.f32.mrf.mxu0
      %v1689 = vadd.f32 0.0, %v1688
      %v1690 = vpop.f32.mrf.mxu0
      %v1691 = vadd.f32 0.0, %v1690
      %1692 = vdwg.mxu0
      %v1693 = vadd.f32 %v1627, %v1674
      %v1694 = vadd.f32 %v1628, %v1676
      %v1695 = vadd.f32 %v1629, %v1679
      %v1696 = vadd.f32 %v1630, %v1681
      %v1697 = vadd.f32 %v1631, %v1684
      %v1698 = vadd.f32 %v1632, %v1686
      %v1699 = vadd.f32 %v1633, %v1689
      %v1700 = vadd.f32 %v1634, %v1691
      %v1701 = vld [vmem:[%s372 + $0x2] sm:$0xff]
      %v1702 = vld [vmem:[%s372 + $0x12] sm:$0xff]
      %v1703 = vld [vmem:[%s372 + $0x22] sm:$0xff]
      %v1704 = vld [vmem:[%s372 + $0x32] sm:$0xff]
      %v1705 = vld [vmem:[%s372 + $0x42] sm:$0xff]
      %v1706 = vld [vmem:[%s372 + $0x52] sm:$0xff]
      %v1707 = vld [vmem:[%s372 + $0x62] sm:$0xff]
      %v1708 = vld [vmem:[%s372 + $0x72] sm:$0xff]
      %v1709 = vpack.c.bf16 %v1702, %v1701
      %v1710 = vpack.c.bf16 %v1704, %v1703
      %v1711 = vpack.c.bf16 %v1706, %v1705
      %v1712 = vpack.c.bf16 %v1708, %v1707
      %s1713 = scalar_lea.vmem %s3, 20
      %v1714 = vld [vmem:[%s1713] sm:$0x1]
      %v1716 = vsel %vm419, %v1709, 0
      %v1719 = vsel %vm419, %v1710, 0
      %v1722 = vsel %vm419, %v1711, 0
      %v1725 = vsel %vm419, %v1712, 0
      %v1728 = vsel %vm432, %v1714, 0
      %1730 = vmatpush.bf16.msra.mxu0 0
      %1731 = vmatpush.bf16.msra.mxu0 0
      %1732 = vmatpush.bf16.msra.mxu0 0
      %1733 = vmatpush.bf16.msra.mxu0 0
      %1734 = vmatpush.bf16.msra.mxu0 0
      %1735 = vmatpush.bf16.msra.mxu0 0
      %1736 = vmatpush.bf16.msra.mxu0 0
      %1737 = vmatpush.bf16.msra.mxu0 %v1728
      %1738 = vmatmul.bf16.gmra.mxu0 %v1716
      %v1739 = vpop.f32.mrf.mxu0
      %v1740 = vadd.f32 0.0, %v1739
      %v1741 = vpop.f32.mrf.mxu0
      %v1742 = vadd.f32 0.0, %v1741
      %1743 = vmatmul.bf16.gmra.mxu0 %v1719
      %v1744 = vpop.f32.mrf.mxu0
      %v1745 = vadd.f32 0.0, %v1744
      %v1746 = vpop.f32.mrf.mxu0
      %v1747 = vadd.f32 0.0, %v1746
      %1748 = vmatmul.bf16.gmra.mxu0 %v1722
      %v1749 = vpop.f32.mrf.mxu0
      %v1750 = vadd.f32 0.0, %v1749
      %v1751 = vpop.f32.mrf.mxu0
      %v1752 = vadd.f32 0.0, %v1751
      %1753 = vmatmul.bf16.gmra.mxu0 %v1725
      %v1754 = vpop.f32.mrf.mxu0
      %v1755 = vadd.f32 0.0, %v1754
      %v1756 = vpop.f32.mrf.mxu0
      %v1757 = vadd.f32 0.0, %v1756
      %1758 = vdwg.mxu0
      %v1759 = vadd.f32 %v1693, %v1740
      %v1760 = vadd.f32 %v1694, %v1742
      %v1761 = vadd.f32 %v1695, %v1745
      %v1762 = vadd.f32 %v1696, %v1747
      %v1763 = vadd.f32 %v1697, %v1750
      %v1764 = vadd.f32 %v1698, %v1752
      %v1765 = vadd.f32 %v1699, %v1755
      %v1766 = vadd.f32 %v1700, %v1757
      %s1767 = scalar_lea.vmem %s372, 16
      %v1768 = vld [vmem:[%s1767] sm:$0xff]
      %v1769 = vld [vmem:[%s1767 + $0x10] sm:$0xff]
      %v1770 = vld [vmem:[%s1767 + $0x20] sm:$0xff]
      %v1771 = vld [vmem:[%s1767 + $0x30] sm:$0xff]
      %v1772 = vld [vmem:[%s1767 + $0x40] sm:$0xff]
      %v1773 = vld [vmem:[%s1767 + $0x50] sm:$0xff]
      %v1774 = vld [vmem:[%s1767 + $0x60] sm:$0xff]
      %v1775 = vld [vmem:[%s1767 + $0x70] sm:$0xff]
      %v1776 = vpack.c.bf16 %v1769, %v1768
      %v1777 = vpack.c.bf16 %v1771, %v1770
      %v1778 = vpack.c.bf16 %v1773, %v1772
      %v1779 = vpack.c.bf16 %v1775, %v1774
      %s1780 = scalar_lea.vmem %s3, 21
      %v1781 = vld [vmem:[%s1780] sm:$0x1]
      %v1783 = vsel %vm419, %v1776, 0
      %v1786 = vsel %vm419, %v1777, 0
      %v1789 = vsel %vm419, %v1778, 0
      %v1792 = vsel %vm419, %v1779, 0
      %v1795 = vsel %vm432, %v1781, 0
      %1797 = vmatpush.bf16.msra.mxu0 0
      %1798 = vmatpush.bf16.msra.mxu0 0
      %1799 = vmatpush.bf16.msra.mxu0 0
      %1800 = vmatpush.bf16.msra.mxu0 0
      %1801 = vmatpush.bf16.msra.mxu0 0
      %1802 = vmatpush.bf16.msra.mxu0 0
      %1803 = vmatpush.bf16.msra.mxu0 0
      %1804 = vmatpush.bf16.msra.mxu0 %v1795
      %1805 = vmatmul.bf16.gmra.mxu0 %v1783
      %v1806 = vpop.f32.mrf.mxu0
      %v1807 = vadd.f32 0.0, %v1806
      %v1808 = vpop.f32.mrf.mxu0
      %v1809 = vadd.f32 0.0, %v1808
      %1810 = vmatmul.bf16.gmra.mxu0 %v1786
      %v1811 = vpop.f32.mrf.mxu0
      %v1812 = vadd.f32 0.0, %v1811
      %v1813 = vpop.f32.mrf.mxu0
      %v1814 = vadd.f32 0.0, %v1813
      %1815 = vmatmul.bf16.gmra.mxu0 %v1789
      %v1816 = vpop.f32.mrf.mxu0
      %v1817 = vadd.f32 0.0, %v1816
      %v1818 = vpop.f32.mrf.mxu0
      %v1819 = vadd.f32 0.0, %v1818
      %1820 = vmatmul.bf16.gmra.mxu0 %v1792
      %v1821 = vpop.f32.mrf.mxu0
      %v1822 = vadd.f32 0.0, %v1821
      %v1823 = vpop.f32.mrf.mxu0
      %v1824 = vadd.f32 0.0, %v1823
      %1825 = vdwg.mxu0
      %v1826 = vadd.f32 %v1759, %v1807
      %v1827 = vadd.f32 %v1760, %v1809
      %v1828 = vadd.f32 %v1761, %v1812
      %v1829 = vadd.f32 %v1762, %v1814
      %v1830 = vadd.f32 %v1763, %v1817
      %v1831 = vadd.f32 %v1764, %v1819
      %v1832 = vadd.f32 %v1765, %v1822
      %v1833 = vadd.f32 %v1766, %v1824
      %v1834 = vld [vmem:[%s1767 + $0x1] sm:$0xff]
      %v1835 = vld [vmem:[%s1767 + $0x11] sm:$0xff]
      %v1836 = vld [vmem:[%s1767 + $0x21] sm:$0xff]
      %v1837 = vld [vmem:[%s1767 + $0x31] sm:$0xff]
      %v1838 = vld [vmem:[%s1767 + $0x41] sm:$0xff]
      %v1839 = vld [vmem:[%s1767 + $0x51] sm:$0xff]
      %v1840 = vld [vmem:[%s1767 + $0x61] sm:$0xff]
      %v1841 = vld [vmem:[%s1767 + $0x71] sm:$0xff]
      %v1842 = vpack.c.bf16 %v1835, %v1834
      %v1843 = vpack.c.bf16 %v1837, %v1836
      %v1844 = vpack.c.bf16 %v1839, %v1838
      %v1845 = vpack.c.bf16 %v1841, %v1840
      %s1846 = scalar_lea.vmem %s3, 22
      %v1847 = vld [vmem:[%s1846] sm:$0x1]
      %v1849 = vsel %vm419, %v1842, 0
      %v1852 = vsel %vm419, %v1843, 0
      %v1855 = vsel %vm419, %v1844, 0
      %v1858 = vsel %vm419, %v1845, 0
      %v1861 = vsel %vm432, %v1847, 0
      %1863 = vmatpush.bf16.msra.mxu0 0
      %1864 = vmatpush.bf16.msra.mxu0 0
      %1865 = vmatpush.bf16.msra.mxu0 0
      %1866 = vmatpush.bf16.msra.mxu0 0
      %1867 = vmatpush.bf16.msra.mxu0 0
      %1868 = vmatpush.bf16.msra.mxu0 0
      %1869 = vmatpush.bf16.msra.mxu0 0
      %1870 = vmatpush.bf16.msra.mxu0 %v1861
      %1871 = vmatmul.bf16.gmra.mxu0 %v1849
      %v1872 = vpop.f32.mrf.mxu0
      %v1873 = vadd.f32 0.0, %v1872
      %v1874 = vpop.f32.mrf.mxu0
      %v1875 = vadd.f32 0.0, %v1874
      %1876 = vmatmul.bf16.gmra.mxu0 %v1852
      %v1877 = vpop.f32.mrf.mxu0
      %v1878 = vadd.f32 0.0, %v1877
      %v1879 = vpop.f32.mrf.mxu0
      %v1880 = vadd.f32 0.0, %v1879
      %1881 = vmatmul.bf16.gmra.mxu0 %v1855
      %v1882 = vpop.f32.mrf.mxu0
      %v1883 = vadd.f32 0.0, %v1882
      %v1884 = vpop.f32.mrf.mxu0
      %v1885 = vadd.f32 0.0, %v1884
      %1886 = vmatmul.bf16.gmra.mxu0 %v1858
      %v1887 = vpop.f32.mrf.mxu0
      %v1888 = vadd.f32 0.0, %v1887
      %v1889 = vpop.f32.mrf.mxu0
      %v1890 = vadd.f32 0.0, %v1889
      %1891 = vdwg.mxu0
      %v1892 = vadd.f32 %v1826, %v1873
      %v1893 = vadd.f32 %v1827, %v1875
      %v1894 = vadd.f32 %v1828, %v1878
      %v1895 = vadd.f32 %v1829, %v1880
      %v1896 = vadd.f32 %v1830, %v1883
      %v1897 = vadd.f32 %v1831, %v1885
      %v1898 = vadd.f32 %v1832, %v1888
      %v1899 = vadd.f32 %v1833, %v1890
      %v1900 = vld [vmem:[%s1767 + $0x2] sm:$0xff]
      %v1901 = vld [vmem:[%s1767 + $0x12] sm:$0xff]
      %v1902 = vld [vmem:[%s1767 + $0x22] sm:$0xff]
      %v1903 = vld [vmem:[%s1767 + $0x32] sm:$0xff]
      %v1904 = vld [vmem:[%s1767 + $0x42] sm:$0xff]
      %v1905 = vld [vmem:[%s1767 + $0x52] sm:$0xff]
      %v1906 = vld [vmem:[%s1767 + $0x62] sm:$0xff]
      %v1907 = vld [vmem:[%s1767 + $0x72] sm:$0xff]
      %v1908 = vpack.c.bf16 %v1901, %v1900
      %v1909 = vpack.c.bf16 %v1903, %v1902
      %v1910 = vpack.c.bf16 %v1905, %v1904
      %v1911 = vpack.c.bf16 %v1907, %v1906
      %s1912 = scalar_lea.vmem %s3, 23
      %v1913 = vld [vmem:[%s1912] sm:$0x1]
      %v1915 = vsel %vm419, %v1908, 0
      %v1918 = vsel %vm419, %v1909, 0
      %v1921 = vsel %vm419, %v1910, 0
      %v1924 = vsel %vm419, %v1911, 0
      %v1927 = vsel %vm432, %v1913, 0
      %1929 = vmatpush.bf16.msra.mxu0 0
      %1930 = vmatpush.bf16.msra.mxu0 0
      %1931 = vmatpush.bf16.msra.mxu0 0
      %1932 = vmatpush.bf16.msra.mxu0 0
      %1933 = vmatpush.bf16.msra.mxu0 0
      %1934 = vmatpush.bf16.msra.mxu0 0
      %1935 = vmatpush.bf16.msra.mxu0 0
      %1936 = vmatpush.bf16.msra.mxu0 %v1927
      %1937 = vmatmul.bf16.gmra.mxu0 %v1915
      %v1938 = vpop.f32.mrf.mxu0
      %v1939 = vadd.f32 0.0, %v1938
      %v1940 = vpop.f32.mrf.mxu0
      %v1941 = vadd.f32 0.0, %v1940
      %1942 = vmatmul.bf16.gmra.mxu0 %v1918
      %v1943 = vpop.f32.mrf.mxu0
      %v1944 = vadd.f32 0.0, %v1943
      %v1945 = vpop.f32.mrf.mxu0
      %v1946 = vadd.f32 0.0, %v1945
      %1947 = vmatmul.bf16.gmra.mxu0 %v1921
      %v1948 = vpop.f32.mrf.mxu0
      %v1949 = vadd.f32 0.0, %v1948
      %v1950 = vpop.f32.mrf.mxu0
      %v1951 = vadd.f32 0.0, %v1950
      %1952 = vmatmul.bf16.gmra.mxu0 %v1924
      %v1953 = vpop.f32.mrf.mxu0
      %v1954 = vadd.f32 0.0, %v1953
      %v1955 = vpop.f32.mrf.mxu0
      %v1956 = vadd.f32 0.0, %v1955
      %1957 = vdwg.mxu0
      %v1958 = vadd.f32 %v1892, %v1939
      %v1959 = vadd.f32 %v1893, %v1941
      %v1960 = vadd.f32 %v1894, %v1944
      %v1961 = vadd.f32 %v1895, %v1946
      %v1962 = vadd.f32 %v1896, %v1949
      %v1963 = vadd.f32 %v1897, %v1951
      %v1964 = vadd.f32 %v1898, %v1954
      %v1965 = vadd.f32 %v1899, %v1956
      %s1966 = scalar_lea.vmem %s372, 32
      %v1967 = vld [vmem:[%s1966] sm:$0xff]
      %v1968 = vld [vmem:[%s1966 + $0x10] sm:$0xff]
      %v1969 = vld [vmem:[%s1966 + $0x20] sm:$0xff]
      %v1970 = vld [vmem:[%s1966 + $0x30] sm:$0xff]
      %v1971 = vld [vmem:[%s1966 + $0x40] sm:$0xff]
      %v1972 = vld [vmem:[%s1966 + $0x50] sm:$0xff]
      %v1973 = vld [vmem:[%s1966 + $0x60] sm:$0xff]
      %v1974 = vld [vmem:[%s1966 + $0x70] sm:$0xff]
      %v1975 = vpack.c.bf16 %v1968, %v1967
      %v1976 = vpack.c.bf16 %v1970, %v1969
      %v1977 = vpack.c.bf16 %v1972, %v1971
      %v1978 = vpack.c.bf16 %v1974, %v1973
      %s1979 = scalar_lea.vmem %s3, 24
      %v1980 = vld [vmem:[%s1979] sm:$0x1]
      %v1982 = vsel %vm419, %v1975, 0
      %v1985 = vsel %vm419, %v1976, 0
      %v1988 = vsel %vm419, %v1977, 0
      %v1991 = vsel %vm419, %v1978, 0
      %v1994 = vsel %vm432, %v1980, 0
      %1996 = vmatpush.bf16.msra.mxu0 0
      %1997 = vmatpush.bf16.msra.mxu0 0
      %1998 = vmatpush.bf16.msra.mxu0 0
      %1999 = vmatpush.bf16.msra.mxu0 0
      %2000 = vmatpush.bf16.msra.mxu0 0
      %2001 = vmatpush.bf16.msra.mxu0 0
      %2002 = vmatpush.bf16.msra.mxu0 0
      %2003 = vmatpush.bf16.msra.mxu0 %v1994
      %2004 = vmatmul.bf16.gmra.mxu0 %v1982
      %v2005 = vpop.f32.mrf.mxu0
      %v2006 = vadd.f32 0.0, %v2005
      %v2007 = vpop.f32.mrf.mxu0
      %v2008 = vadd.f32 0.0, %v2007
      %2009 = vmatmul.bf16.gmra.mxu0 %v1985
      %v2010 = vpop.f32.mrf.mxu0
      %v2011 = vadd.f32 0.0, %v2010
      %v2012 = vpop.f32.mrf.mxu0
      %v2013 = vadd.f32 0.0, %v2012
      %2014 = vmatmul.bf16.gmra.mxu0 %v1988
      %v2015 = vpop.f32.mrf.mxu0
      %v2016 = vadd.f32 0.0, %v2015
      %v2017 = vpop.f32.mrf.mxu0
      %v2018 = vadd.f32 0.0, %v2017
      %2019 = vmatmul.bf16.gmra.mxu0 %v1991
      %v2020 = vpop.f32.mrf.mxu0
      %v2021 = vadd.f32 0.0, %v2020
      %v2022 = vpop.f32.mrf.mxu0
      %v2023 = vadd.f32 0.0, %v2022
      %2024 = vdwg.mxu0
      %v2025 = vadd.f32 %v1958, %v2006
      %v2026 = vadd.f32 %v1959, %v2008
      %v2027 = vadd.f32 %v1960, %v2011
      %v2028 = vadd.f32 %v1961, %v2013
      %v2029 = vadd.f32 %v1962, %v2016
      %v2030 = vadd.f32 %v1963, %v2018
      %v2031 = vadd.f32 %v1964, %v2021
      %v2032 = vadd.f32 %v1965, %v2023
      %v2033 = vld [vmem:[%s1966 + $0x1] sm:$0xff]
      %v2034 = vld [vmem:[%s1966 + $0x11] sm:$0xff]
      %v2035 = vld [vmem:[%s1966 + $0x21] sm:$0xff]
      %v2036 = vld [vmem:[%s1966 + $0x31] sm:$0xff]
      %v2037 = vld [vmem:[%s1966 + $0x41] sm:$0xff]
      %v2038 = vld [vmem:[%s1966 + $0x51] sm:$0xff]
      %v2039 = vld [vmem:[%s1966 + $0x61] sm:$0xff]
      %v2040 = vld [vmem:[%s1966 + $0x71] sm:$0xff]
      %v2041 = vpack.c.bf16 %v2034, %v2033
      %v2042 = vpack.c.bf16 %v2036, %v2035
      %v2043 = vpack.c.bf16 %v2038, %v2037
      %v2044 = vpack.c.bf16 %v2040, %v2039
      %s2045 = scalar_lea.vmem %s3, 25
      %v2046 = vld [vmem:[%s2045] sm:$0x1]
      %v2048 = vsel %vm419, %v2041, 0
      %v2051 = vsel %vm419, %v2042, 0
      %v2054 = vsel %vm419, %v2043, 0
      %v2057 = vsel %vm419, %v2044, 0
      %v2060 = vsel %vm432, %v2046, 0
      %2062 = vmatpush.bf16.msra.mxu0 0
      %2063 = vmatpush.bf16.msra.mxu0 0
      %2064 = vmatpush.bf16.msra.mxu0 0
      %2065 = vmatpush.bf16.msra.mxu0 0
      %2066 = vmatpush.bf16.msra.mxu0 0
      %2067 = vmatpush.bf16.msra.mxu0 0
      %2068 = vmatpush.bf16.msra.mxu0 0
      %2069 = vmatpush.bf16.msra.mxu0 %v2060
      %2070 = vmatmul.bf16.gmra.mxu0 %v2048
      %v2071 = vpop.f32.mrf.mxu0
      %v2072 = vadd.f32 0.0, %v2071
      %v2073 = vpop.f32.mrf.mxu0
      %v2074 = vadd.f32 0.0, %v2073
      %2075 = vmatmul.bf16.gmra.mxu0 %v2051
      %v2076 = vpop.f32.mrf.mxu0
      %v2077 = vadd.f32 0.0, %v2076
      %v2078 = vpop.f32.mrf.mxu0
      %v2079 = vadd.f32 0.0, %v2078
      %2080 = vmatmul.bf16.gmra.mxu0 %v2054
      %v2081 = vpop.f32.mrf.mxu0
      %v2082 = vadd.f32 0.0, %v2081
      %v2083 = vpop.f32.mrf.mxu0
      %v2084 = vadd.f32 0.0, %v2083
      %2085 = vmatmul.bf16.gmra.mxu0 %v2057
      %v2086 = vpop.f32.mrf.mxu0
      %v2087 = vadd.f32 0.0, %v2086
      %v2088 = vpop.f32.mrf.mxu0
      %v2089 = vadd.f32 0.0, %v2088
      %2090 = vdwg.mxu0
      %v2091 = vadd.f32 %v2025, %v2072
      %v2092 = vadd.f32 %v2026, %v2074
      %v2093 = vadd.f32 %v2027, %v2077
      %v2094 = vadd.f32 %v2028, %v2079
      %v2095 = vadd.f32 %v2029, %v2082
      %v2096 = vadd.f32 %v2030, %v2084
      %v2097 = vadd.f32 %v2031, %v2087
      %v2098 = vadd.f32 %v2032, %v2089
      %v2099 = vld [vmem:[%s1966 + $0x2] sm:$0xff]
      %v2100 = vld [vmem:[%s1966 + $0x12] sm:$0xff]
      %v2101 = vld [vmem:[%s1966 + $0x22] sm:$0xff]
      %v2102 = vld [vmem:[%s1966 + $0x32] sm:$0xff]
      %v2103 = vld [vmem:[%s1966 + $0x42] sm:$0xff]
      %v2104 = vld [vmem:[%s1966 + $0x52] sm:$0xff]
      %v2105 = vld [vmem:[%s1966 + $0x62] sm:$0xff]
      %v2106 = vld [vmem:[%s1966 + $0x72] sm:$0xff]
      %v2107 = vpack.c.bf16 %v2100, %v2099
      %v2108 = vpack.c.bf16 %v2102, %v2101
      %v2109 = vpack.c.bf16 %v2104, %v2103
      %v2110 = vpack.c.bf16 %v2106, %v2105
      %s2111 = scalar_lea.vmem %s3, 26
      %v2112 = vld [vmem:[%s2111] sm:$0x1]
      %v2114 = vsel %vm419, %v2107, 0
      %v2117 = vsel %vm419, %v2108, 0
      %v2120 = vsel %vm419, %v2109, 0
      %v2123 = vsel %vm419, %v2110, 0
      %v2126 = vsel %vm432, %v2112, 0
      %2128 = vmatpush.bf16.msra.mxu0 0
      %2129 = vmatpush.bf16.msra.mxu0 0
      %2130 = vmatpush.bf16.msra.mxu0 0
      %2131 = vmatpush.bf16.msra.mxu0 0
      %2132 = vmatpush.bf16.msra.mxu0 0
      %2133 = vmatpush.bf16.msra.mxu0 0
      %2134 = vmatpush.bf16.msra.mxu0 0
      %2135 = vmatpush.bf16.msra.mxu0 %v2126
      %2136 = vmatmul.bf16.gmra.mxu0 %v2114
      %v2137 = vpop.f32.mrf.mxu0
      %v2138 = vadd.f32 0.0, %v2137
      %v2139 = vpop.f32.mrf.mxu0
      %v2140 = vadd.f32 0.0, %v2139
      %2141 = vmatmul.bf16.gmra.mxu0 %v2117
      %v2142 = vpop.f32.mrf.mxu0
      %v2143 = vadd.f32 0.0, %v2142
      %v2144 = vpop.f32.mrf.mxu0
      %v2145 = vadd.f32 0.0, %v2144
      %2146 = vmatmul.bf16.gmra.mxu0 %v2120
      %v2147 = vpop.f32.mrf.mxu0
      %v2148 = vadd.f32 0.0, %v2147
      %v2149 = vpop.f32.mrf.mxu0
      %v2150 = vadd.f32 0.0, %v2149
      %2151 = vmatmul.bf16.gmra.mxu0 %v2123
      %v2152 = vpop.f32.mrf.mxu0
      %v2153 = vadd.f32 0.0, %v2152
      %v2154 = vpop.f32.mrf.mxu0
      %v2155 = vadd.f32 0.0, %v2154
      %2156 = vdwg.mxu0
      %v2157 = vadd.f32 %v2091, %v2138
      %v2158 = vadd.f32 %v2092, %v2140
      %v2159 = vadd.f32 %v2093, %v2143
      %v2160 = vadd.f32 %v2094, %v2145
      %v2161 = vadd.f32 %v2095, %v2148
      %v2162 = vadd.f32 %v2096, %v2150
      %v2163 = vadd.f32 %v2097, %v2153
      %v2164 = vadd.f32 %v2098, %v2155
      %v2165 = vld [vmem:[%s4] sm:$0x1]
      %v2167 = vperm.slane %v2165, 0
      %v2169 = vadd.f32 %v2157, %v2167
      %v2170 = vadd.f32 %v2158, %v2167
      %v2171 = vadd.f32 %v2159, %v2167
      %v2172 = vadd.f32 %v2160, %v2167
      %v2173 = vadd.f32 %v2161, %v2167
      %v2174 = vadd.f32 %v2162, %v2167
      %v2175 = vadd.f32 %v2163, %v2167
      %v2176 = vadd.f32 %v2164, %v2167
      %v2177 = vsel %vm419, %v2169, 0.0
      %v2178 = vsel %vm419, %v2170, 0.0
      %v2179 = vadd.f32 %v2177, %v2178
      %v2180 = vsel %vm419, %v2171, 0.0
      %v2181 = vadd.f32 %v2179, %v2180
      %v2182 = vsel %vm419, %v2172, 0.0
      %v2183 = vadd.f32 %v2181, %v2182
      %v2184 = vsel %vm419, %v2173, 0.0
      %v2185 = vadd.f32 %v2183, %v2184
      %v2186 = vsel %vm419, %v2174, 0.0
      %v2187 = vadd.f32 %v2185, %v2186
      %v2188 = vsel %vm419, %v2175, 0.0
      %v2189 = vadd.f32 %v2187, %v2188
      %v2190 = vsel %vm419, %v2176, 0.0
      %v2191 = vadd.f32 %v2189, %v2190
      %2192 = vadd.xlane.f32.xlu0 %v2191
      %v2193 = vpop.xlane.xlu0 %2192
      %v2194 = vrot.slane %v2193, 4
      %v2195 = vadd.f32 %v2193, %v2194
      %v2196 = vrot.slane %v2195, 2
      %v2197 = vadd.f32 %v2195, %v2196
      %v2198 = vrot.slane %v2197, 1
      %v2199 = vadd.f32 %v2197, %v2198
      %s2200 = vtos %v2199
      %v2201 = vmul.f32 %v2169, %v2169
      %v2202 = vmul.f32 %v2170, %v2170
      %v2203 = vmul.f32 %v2171, %v2171
      %v2204 = vmul.f32 %v2172, %v2172
      %v2205 = vmul.f32 %v2173, %v2173
      %v2206 = vmul.f32 %v2174, %v2174
      %v2207 = vmul.f32 %v2175, %v2175
      %v2208 = vmul.f32 %v2176, %v2176
      %v2209 = vsel %vm419, %v2201, 0.0
      %v2210 = vsel %vm419, %v2202, 0.0
      %v2211 = vadd.f32 %v2209, %v2210
      %v2212 = vsel %vm419, %v2203, 0.0
      %v2213 = vadd.f32 %v2211, %v2212
      %v2214 = vsel %vm419, %v2204, 0.0
      %v2215 = vadd.f32 %v2213, %v2214
      %v2216 = vsel %vm419, %v2205, 0.0
      %v2217 = vadd.f32 %v2215, %v2216
      %v2218 = vsel %vm419, %v2206, 0.0
      %v2219 = vadd.f32 %v2217, %v2218
      %v2220 = vsel %vm419, %v2207, 0.0
      %v2221 = vadd.f32 %v2219, %v2220
      %v2222 = vsel %vm419, %v2208, 0.0
      %v2223 = vadd.f32 %v2221, %v2222
      %2224 = vadd.xlane.f32.xlu0 %v2223
      %v2225 = vpop.xlane.xlu0 %2224
      %v2226 = vrot.slane %v2225, 4
      %v2227 = vadd.f32 %v2225, %v2226
      %v2228 = vrot.slane %v2227, 2
      %v2229 = vadd.f32 %v2227, %v2228
      %v2230 = vrot.slane %v2229, 1
      %v2231 = vadd.f32 %v2229, %v2230
      %s2232 = vtos %v2231
      %2233 = vst.msk [vmem:[%s382] sm:$0xff] %vm419, %v2169
      %2234 = vst.msk [vmem:[%s382 + $0x8] sm:$0xff] %vm419, %v2170
      %2235 = vst.msk [vmem:[%s382 + $0x10] sm:$0xff] %vm419, %v2171
      %2236 = vst.msk [vmem:[%s382 + $0x18] sm:$0xff] %vm419, %v2172
      %2237 = vst.msk [vmem:[%s382 + $0x20] sm:$0xff] %vm419, %v2173
      %2238 = vst.msk [vmem:[%s382 + $0x28] sm:$0xff] %vm419, %v2174
      %2239 = vst.msk [vmem:[%s382 + $0x30] sm:$0xff] %vm419, %v2175
      %2240 = vst.msk [vmem:[%s382 + $0x38] sm:$0xff] %vm419, %v2176
      %v2241 = vstv %s2200
      %v2242 = vstv %s2232
      %v2243 = vsel %vm432, %v2241, %v2242
      %2244 = vst [vmem:[%s390] sm:$0x3] %v2243
      %p2245 = scmp.lt.s32.totalorder %s22, 1
      %s2246 = scalar_select %p2245, %s22, 1
      %p2247 = scmp.lt.s32.totalorder %s23, 7
      %s2248 = scalar_select %p2247, %s23, 7
      %s2249 = smul.addr %s2248, 8
      %s2250 = smul.addr %s2246, 64
      %s2251 = sadd.s32 %s2249, %s2250
      %s2252 = smul.addr %s2251, 8
      %s2253 = scalar_lea.vmem %s5, %s2252
      %p2254 = scmp.lt.s32.totalorder %s22, 1
      %s2255 = scalar_select %p2254, %s22, 1
      %p2256 = scmp.lt.s32.totalorder %s23, 7
      %s2257 = scalar_select %p2256, %s23, 7
      %s2258 = smul.addr %s2255, 8
      %s2259 = sadd.s32 %s2257, %s2258
      %s2260 = smul.addr %s2259, 2
      %s2261 = scalar_lea.vmem %s6, %s2260
      // Predicated region
      $region41: #{_lambda_.20} parent=39 // pred_check
        %p2262 = pneg %p180
      $region42: #{_lambda_.20} parent=39 // pred_check_branch
        %2264 = sbr.rel (%p2262) target = $region44
      $region43: #{_lambda_.20} parent=39 // pred_region
        _
      $region44: #{_lambda_.20} parent=39 // pred_fallthru
        _
      // Predicated region
      $region45: #{_lambda_.20} parent=39 // pred_check
        %p2265 = pneg %p208
      $region46: #{_lambda_.20} parent=39 // pred_check_branch
        %2267 = sbr.rel (%p2265) target = $region48
      $region47: #{_lambda_.20} parent=39 // pred_region
        _
      $region48: #{_lambda_.20} parent=39 // pred_fallthru
        _
    $region40: #{_lambda_.20} parent=5 // pred_fallthru
      _
    %p2268 = scmp.le.s32.totalorder 2, %s13
    // Predicated region
    $region49: #{_lambda_.20} parent=5 // pred_check
      %p2269 = pneg %p2268
    $region50: #{_lambda_.20} parent=5 // pred_check_branch
      %2271 = sbr.rel (%p2269) target = $region52
    $region51: #{_lambda_.20} parent=5 // pred_region
      %s2272 = ssub.s32 %s13, 2
      // Predicated region
      $region53: #{_lambda_.20} parent=51 // pred_check
        %p2273 = pneg %p186
      $region54: #{_lambda_.20} parent=51 // pred_check_branch
        %2275 = sbr.rel (%p2273) target = $region56
      $region55: #{_lambda_.20} parent=51 // pred_region
        %p2276 = scmp.lt.s32.totalorder %s24, 1
        %s2277 = scalar_select %p2276, %s24, 1
        %p2278 = scmp.lt.s32.totalorder %s25, 7
        %s2279 = scalar_select %p2278, %s25, 7
        %s2280 = smul.addr %s2279, 8
        %s2281 = smul.addr %s2277, 64
        %s2282 = sadd.s32 %s2280, %s2281
        %s2283 = smul.addr %s2282, 8
        %s2284 = scalar_lea.vmem %s5, %s2283
      $region56: #{_lambda_.20} parent=51 // pred_fallthru
        _
      // Predicated region
      $region57: #{_lambda_.20} parent=51 // pred_check
        %p2285 = pneg %p214
      $region58: #{_lambda_.20} parent=51 // pred_check_branch
        %2287 = sbr.rel (%p2285) target = $region60
      $region59: #{_lambda_.20} parent=51 // pred_region
        %p2288 = scmp.lt.s32.totalorder %s24, 1
        %s2289 = scalar_select %p2288, %s24, 1
        %p2290 = scmp.lt.s32.totalorder %s25, 7
        %s2291 = scalar_select %p2290, %s25, 7
        %s2292 = smul.addr %s2289, 8
        %s2293 = sadd.s32 %s2291, %s2292
        %s2294 = smul.addr %s2293, 2
        %s2295 = scalar_lea.vmem %s6, %s2294
      $region60: #{_lambda_.20} parent=51 // pred_fallthru
        _
    $region52: #{_lambda_.20} parent=5 // pred_fallthru
      _
  $region6: #{_lambda_.20} parent=0 // loop_footer
    %s17 = sadd.s32 1, %s13
  $region7: #{_lambda_.20} parent=0 // loop_footer_branch
    %12 = sbr.rel target = $region3
  $region8: #{_lambda_.20} parent=0 // loop_exit
    _

</llo_original>
